<compile_context>
chip_gen: v7x
topology: tpu7x:2x2x1
jax: 0.10.0
libtpu: 0.0.40
codegen_flags: <defaults>
</compile_context>

<pallas_src>
import functools

import jax
import jax.numpy as jnp
from jax.experimental import pallas as pl
from jax.experimental.pallas import tpu as pltpu


def _gru_kernel(x_ref, wih_ref, whh_ref, bih_ref, bhn_ref, o_ref, h_ref, *,
                hidden, t_steps):
    """One grid step: `t_steps` timesteps of the GRU for one batch block.

    x_ref  : (Bb, T, D)   input chunk (batch-major, model-native layout)
    wih_ref: (3, D, D)    per-gate W_ih^T, gate order (r, z, n)
    whh_ref: (3, D, D)    per-gate W_hh^T
    bih_ref: (3, 1, D)    input-side biases (b_ir+b_hr, b_iz+b_hz, b_in)
    bhn_ref: (1, D)       b_hn (must stay inside r * (W_hn h + b_hn))
    o_ref  : (T, Bb, D)   outputs (time-major; transposed back in the wrapper)
    h_ref  : (Bb, D) f32  carried hidden state (persists across time chunks)
    """
    D = hidden
    T = t_steps
    Bb = x_ref.shape[0]

    # Reset the carried state at the start of each batch block's time sweep
    # (time chunks are the innermost, "arbitrary" grid axis).
    @pl.when(pl.program_id(1) == 0)
    def _():
        h_ref[...] = jnp.zeros_like(h_ref)

    # ---- chunk-level work (off the serial recurrence path) -----------------
    # Per-gate weights via leading-axis indexing: no in-vreg lane slicing.
    whh_r = whh_ref[0].astype(jnp.float32)
    whh_z = whh_ref[1].astype(jnp.float32)
    whh_n = whh_ref[2].astype(jnp.float32)
    # Hoisted broadcast (JAX does not CSE broadcast_in_dim inside loops).
    b_hn = jnp.broadcast_to(bhn_ref[...].astype(jnp.float32), (Bb, D))

    # Chunked input projection: one MXU pass per gate over all T timesteps.
    x_flat = x_ref[...].reshape(Bb * T, D)

    def in_proj(g):
        y = jnp.dot(x_flat, wih_ref[g], preferred_element_type=jnp.float32)
        return (y + bih_ref[g].astype(jnp.float32)).reshape(Bb, T, D)

    gx_r, gx_z, gx_n = in_proj(0), in_proj(1), in_proj(2)

    # ---- serial recurrence: h stays in vregs, fully unrolled ----------------
    h = h_ref[...]                                         # (Bb, D) f32
    outs = []
    for t in range(T):                                     # T is static: full unroll
        r = jax.nn.sigmoid(
            gx_r[:, t, :] + jnp.dot(h, whh_r, preferred_element_type=jnp.float32))
        z = jax.nn.sigmoid(
            gx_z[:, t, :] + jnp.dot(h, whh_z, preferred_element_type=jnp.float32))
        n = jnp.tanh(
            gx_n[:, t, :]
            + r * (jnp.dot(h, whh_n, preferred_element_type=jnp.float32) + b_hn))
        h = n + z * (h - n)                                # == (1 - z)*n + z*h
        outs.append(h.astype(o_ref.dtype))

    h_ref[...] = h                                         # persist once per chunk
    o_ref[...] = jnp.stack(outs, axis=0)                   # single chunk-level store


def gru_forward(x, w_ih, w_hh, b_ih, b_hh, *, t_chunk=None, b_block=None,
                vmem_limit_bytes=None):
    """Single-layer unidirectional GRU, batch_first, zero initial state.

    x     : (B, L, D)
    w_ih  : (3D, D)  rows ordered [W_ir; W_iz; W_in]  (PyTorch layout)
    w_hh  : (3D, D)  rows ordered [W_hr; W_hz; W_hn]
    b_ih  : (3D,)
    b_hh  : (3D,)
    returns outputs of shape (B, L, D)
    """
    B, L, D = x.shape
    assert w_ih.shape == (3 * D, D) and w_hh.shape == (3 * D, D)

    if b_block is None:
        b_block = B          # on v7x with B >= 16, pass b_block=B//2 for megacore
    assert B % b_block == 0 and (b_block == B or b_block % 8 == 0)

    # Whole sequence in a single grid step when it is short; otherwise chunk so
    # the fully unrolled recurrence stays a reasonable size.
    if t_chunk is None:
        t_chunk = L if L <= 64 else 64
    if t_chunk < L and t_chunk % 8 != 0:
        t_chunk = max(8, (t_chunk // 8) * 8)       # sublane rule for partial blocks
    n_chunks = pl.cdiv(L, t_chunk)
    Lp = n_chunks * t_chunk
    # GRU is causal: end-padding of time never affects the first L outputs.
    xp = x if Lp == L else jnp.pad(x, ((0, 0), (0, Lp - L), (0, 0)))

    # Per-gate transposed weights stacked on a leading axis (r, z, n).
    wihT = jnp.transpose(w_ih.reshape(3, D, D), (0, 2, 1)).astype(x.dtype)
    whhT = jnp.transpose(w_hh.reshape(3, D, D), (0, 2, 1)).astype(x.dtype)
    # Fold b_hr / b_hz into the input-side bias; only b_hn stays separate.
    b_ih3 = b_ih.reshape(3, 1, D).astype(jnp.float32)
    b_hh3 = b_hh.reshape(3, 1, D).astype(jnp.float32)
    bih = jnp.concatenate(
        [b_ih3[0:1] + b_hh3[0:1], b_ih3[1:2] + b_hh3[1:2], b_ih3[2:3]], axis=0)
    bhn = b_hh3[2]                                               # (1, D)

    out_tm = pl.pallas_call(
        functools.partial(_gru_kernel, hidden=D, t_steps=t_chunk),
        out_shape=jax.ShapeDtypeStruct((Lp, B, D), x.dtype),
        grid_spec=pltpu.PrefetchScalarGridSpec(
            num_scalar_prefetch=0,
            # batch blocks (parallel; megacore-splittable) x time chunks
            # (arbitrary: the recurrence is sequential, h carried in scratch).
            grid=(B // b_block, n_chunks),
            in_specs=[
                pl.BlockSpec((b_block, t_chunk, D), lambda b, c: (b, c, 0)),
                pl.BlockSpec((3, D, D), lambda b, c: (0, 0, 0)),   # W_ih^T resident
                pl.BlockSpec((3, D, D), lambda b, c: (0, 0, 0)),   # W_hh^T resident
                pl.BlockSpec((3, 1, D), lambda b, c: (0, 0, 0)),   # biases resident
                pl.BlockSpec((1, D), lambda b, c: (0, 0)),         # b_hn resident
            ],
            out_specs=pl.BlockSpec((t_chunk, b_block, D), lambda b, c: (c, b, 0)),
            scratch_shapes=[
                pltpu.VMEM((b_block, D), jnp.float32),             # carried h
            ],
        ),
        compiler_params=pltpu.CompilerParams(
            dimension_semantics=("parallel", "arbitrary"),
            vmem_limit_bytes=vmem_limit_bytes,
        ),
    )(xp, wihT, whhT, bih, bhn)

    if Lp != L:
        out_tm = out_tm[:L]                       # drop padded timesteps
    return jnp.transpose(out_tm, (1, 0, 2))       # (L, B, D) -> (B, L, D)


def gru_reference(x, w_ih, w_hh, b_ih, b_hh):
    """Pure-JAX reference matching torch.nn.GRU (1 layer, batch_first)."""
    B, L, D = x.shape
    wih_r, wih_z, wih_n = jnp.split(w_ih, 3, axis=0)
    whh_r, whh_z, whh_n = jnp.split(w_hh, 3, axis=0)
    bih_r, bih_z, bih_n = jnp.split(b_ih, 3)
    bhh_r, bhh_z, bhh_n = jnp.split(b_hh, 3)

    def step(h, x_t):
        r = jax.nn.sigmoid(x_t @ wih_r.T + bih_r + h @ whh_r.T + bhh_r)
        z = jax.nn.sigmoid(x_t @ wih_z.T + bih_z + h @ whh_z.T + bhh_z)
        n = jnp.tanh(x_t @ wih_n.T + bih_n + r * (h @ whh_n.T + bhh_n))
        h_new = (1.0 - z) * n + z * h
        return h_new, h_new

    h0 = jnp.zeros((B, D), jnp.float32)
    _, ys = jax.lax.scan(step, h0, jnp.transpose(x, (1, 0, 2)))
    return jnp.transpose(ys, (1, 0, 2)).astype(x.dtype)


if __name__ == "__main__":
    # Shapes implied by temporal_GRU: x is (batch, seq_len, filter_num),
    # hidden size == input size == filter_num.
    B, L, D = 8, 16, 32

    key = jax.random.PRNGKey(0)
    kx, k1, k2, k3, k4 = jax.random.split(key, 5)
    x = jax.random.normal(kx, (B, L, D), dtype=jnp.float32)

    scale = 1.0 / jnp.sqrt(D)
    w_ih = scale * jax.random.normal(k1, (3 * D, D), dtype=jnp.float32)
    w_hh = scale * jax.random.normal(k2, (3 * D, D), dtype=jnp.float32)
    b_ih = scale * jax.random.normal(k3, (3 * D,), dtype=jnp.float32)
    b_hh = scale * jax.random.normal(k4, (3 * D,), dtype=jnp.float32)

    out = gru_forward(x, w_ih, w_hh, b_ih, b_hh)
    jax.block_until_ready(out)

    ref = gru_reference(x, w_ih, w_hh, b_ih, b_hh)
    assert out.shape == (B, L, D)
    assert jnp.allclose(out, ref, atol=1e-4, rtol=1e-4), "mismatch vs reference GRU"

    print("KERNEL_OK")
</pallas_src>

<mosaic_0001>
module attributes {stable_mosaic.version = 11 : i64} {
  func.func @_gru_kernel(%arg0: i32, %arg1: i32, %arg2: memref<8x16x32xf32, #tpu.memory_space<vmem>>, %arg3: memref<3x32x32xf32, #tpu.memory_space<vmem>>, %arg4: memref<3x32x32xf32, #tpu.memory_space<vmem>>, %arg5: memref<3x1x32xf32, #tpu.memory_space<vmem>>, %arg6: memref<1x32xf32, #tpu.memory_space<vmem>>, %arg7: memref<16x8x32xf32, #tpu.memory_space<vmem>>, %arg8: memref<8x32xf32, #tpu.memory_space<vmem>>) attributes {dimension_semantics = [#tpu.dimension_semantics<parallel>, #tpu.dimension_semantics<arbitrary>], iteration_bounds = array<i64: 1, 1>, scalar_prefetch = 0 : i64, scratch_operands = 1 : i64, tpu.core_type = #tpu.core_type<tc>, window_params = [{transform_indices = @transform_0, window_bounds = array<i64: 8, 16, 32>}, {pipeline_mode = #tpu.pipeline_mode<synchronous>, transform_indices = @transform_1, window_bounds = array<i64: 3, 32, 32>}, {pipeline_mode = #tpu.pipeline_mode<synchronous>, transform_indices = @transform_2, window_bounds = array<i64: 3, 32, 32>}, {pipeline_mode = #tpu.pipeline_mode<synchronous>, transform_indices = @transform_3, window_bounds = array<i64: 3, 1, 32>}, {pipeline_mode = #tpu.pipeline_mode<synchronous>, transform_indices = @transform_4, window_bounds = array<i64: 1, 32>}, {transform_indices = @transform_5, window_bounds = array<i64: 16, 8, 32>}]} {
    %c0_i32 = arith.constant 0 : i32
    %0 = arith.cmpi eq, %arg1, %c0_i32 : i32
    %1 = arith.extui %0 : i1 to i32
    %c0_i32_0 = arith.constant 0 : i32
    %2 = arith.cmpi ne, %1, %c0_i32_0 : i32
    scf.if %2 {
      %cst_119 = arith.constant 0.000000e+00 : f32
      %506 = vector.broadcast %cst_119 : f32 to vector<8x32xf32>
      %c0_120 = arith.constant 0 : index
      %c0_121 = arith.constant 0 : index
      %507 = vector.load %arg8[%c0_120, %c0_121] : memref<8x32xf32, #tpu.memory_space<vmem>>, vector<8x32xf32>
      tpu.vector_store %arg8[%c0_120, %c0_121], %506 {strides = array<i32>} : memref<8x32xf32, #tpu.memory_space<vmem>>, vector<8x32xf32>,
    } else {
    }
    %c0 = arith.constant 0 : index
    %c0_1 = arith.constant 0 : index
    %c0_2 = arith.constant 0 : index
    %3 = vector.load %arg4[%c0, %c0_1, %c0_2] : memref<3x32x32xf32, #tpu.memory_space<vmem>>, vector<1x32x32xf32>
    %4 = vector.shape_cast %3 : vector<1x32x32xf32> to vector<32x32xf32>
    %c1 = arith.constant 1 : index
    %c0_3 = arith.constant 0 : index
    %c0_4 = arith.constant 0 : index
    %5 = vector.load %arg4[%c1, %c0_3, %c0_4] : memref<3x32x32xf32, #tpu.memory_space<vmem>>, vector<1x32x32xf32>
    %6 = vector.shape_cast %5 : vector<1x32x32xf32> to vector<32x32xf32>
    %c2 = arith.constant 2 : index
    %c0_5 = arith.constant 0 : index
    %c0_6 = arith.constant 0 : index
    %7 = vector.load %arg4[%c2, %c0_5, %c0_6] : memref<3x32x32xf32, #tpu.memory_space<vmem>>, vector<1x32x32xf32>
    %8 = vector.shape_cast %7 : vector<1x32x32xf32> to vector<32x32xf32>
    %c0_7 = arith.constant 0 : index
    %c0_8 = arith.constant 0 : index
    %9 = vector.load %arg6[%c0_7, %c0_8] : memref<1x32xf32, #tpu.memory_space<vmem>>, vector<1x32xf32>
    %10 = vector.shape_cast %9 : vector<1x32xf32> to vector<1x32xf32>
    %11 = vector.broadcast %10 : vector<1x32xf32> to vector<8x32xf32>
    %c0_9 = arith.constant 0 : index
    %c0_10 = arith.constant 0 : index
    %c0_11 = arith.constant 0 : index
    %12 = vector.load %arg2[%c0_9, %c0_10, %c0_11] : memref<8x16x32xf32, #tpu.memory_space<vmem>>, vector<8x16x32xf32>
    %13 = vector.shape_cast %12 : vector<8x16x32xf32> to vector<128x32xf32>
    %c0_12 = arith.constant 0 : index
    %c0_13 = arith.constant 0 : index
    %c0_14 = arith.constant 0 : index
    %14 = vector.load %arg3[%c0_12, %c0_13, %c0_14] : memref<3x32x32xf32, #tpu.memory_space<vmem>>, vector<1x32x32xf32>
    %15 = vector.shape_cast %14 : vector<1x32x32xf32> to vector<32x32xf32>
    %cst = arith.constant dense<0.000000e+00> : vector<128x32xf32>
    %16 = tpu.matmul %13, %15, %cst {dimension_numbers = #tpu.dot_dimension_numbers<[1], [0], [0], [1], [0, 0, 1, 1], [], []>} : vector<128x32xf32>, vector<32x32xf32>, vector<128x32xf32> -> vector<128x32xf32>
    %c0_15 = arith.constant 0 : index
    %c0_16 = arith.constant 0 : index
    %c0_17 = arith.constant 0 : index
    %17 = vector.load %arg5[%c0_15, %c0_16, %c0_17] : memref<3x1x32xf32, #tpu.memory_space<vmem>>, vector<1x1x32xf32>
    %18 = vector.shape_cast %17 : vector<1x1x32xf32> to vector<1x32xf32>
    %19 = vector.broadcast %18 : vector<1x32xf32> to vector<128x32xf32>
    %20 = arith.addf %16, %19 : vector<128x32xf32>
    %21 = vector.shape_cast %20 : vector<128x32xf32> to vector<8x16x32xf32>
    %c1_18 = arith.constant 1 : index
    %c0_19 = arith.constant 0 : index
    %c0_20 = arith.constant 0 : index
    %22 = vector.load %arg3[%c1_18, %c0_19, %c0_20] : memref<3x32x32xf32, #tpu.memory_space<vmem>>, vector<1x32x32xf32>
    %23 = vector.shape_cast %22 : vector<1x32x32xf32> to vector<32x32xf32>
    %cst_21 = arith.constant dense<0.000000e+00> : vector<128x32xf32>
    %24 = tpu.matmul %13, %23, %cst_21 {dimension_numbers = #tpu.dot_dimension_numbers<[1], [0], [0], [1], [0, 0, 1, 1], [], []>} : vector<128x32xf32>, vector<32x32xf32>, vector<128x32xf32> -> vector<128x32xf32>
    %c1_22 = arith.constant 1 : index
    %c0_23 = arith.constant 0 : index
    %c0_24 = arith.constant 0 : index
    %25 = vector.load %arg5[%c1_22, %c0_23, %c0_24] : memref<3x1x32xf32, #tpu.memory_space<vmem>>, vector<1x1x32xf32>
    %26 = vector.shape_cast %25 : vector<1x1x32xf32> to vector<1x32xf32>
    %27 = vector.broadcast %26 : vector<1x32xf32> to vector<128x32xf32>
    %28 = arith.addf %24, %27 : vector<128x32xf32>
    %29 = vector.shape_cast %28 : vector<128x32xf32> to vector<8x16x32xf32>
    %c2_25 = arith.constant 2 : index
    %c0_26 = arith.constant 0 : index
    %c0_27 = arith.constant 0 : index
    %30 = vector.load %arg3[%c2_25, %c0_26, %c0_27] : memref<3x32x32xf32, #tpu.memory_space<vmem>>, vector<1x32x32xf32>
    %31 = vector.shape_cast %30 : vector<1x32x32xf32> to vector<32x32xf32>
    %cst_28 = arith.constant dense<0.000000e+00> : vector<128x32xf32>
    %32 = tpu.matmul %13, %31, %cst_28 {dimension_numbers = #tpu.dot_dimension_numbers<[1], [0], [0], [1], [0, 0, 1, 1], [], []>} : vector<128x32xf32>, vector<32x32xf32>, vector<128x32xf32> -> vector<128x32xf32>
    %c2_29 = arith.constant 2 : index
    %c0_30 = arith.constant 0 : index
    %c0_31 = arith.constant 0 : index
    %33 = vector.load %arg5[%c2_29, %c0_30, %c0_31] : memref<3x1x32xf32, #tpu.memory_space<vmem>>, vector<1x1x32xf32>
    %34 = vector.shape_cast %33 : vector<1x1x32xf32> to vector<1x32xf32>
    %35 = vector.broadcast %34 : vector<1x32xf32> to vector<128x32xf32>
    %36 = arith.addf %32, %35 : vector<128x32xf32>
    %37 = vector.shape_cast %36 : vector<128x32xf32> to vector<8x16x32xf32>
    %c0_32 = arith.constant 0 : index
    %c0_33 = arith.constant 0 : index
    %38 = vector.load %arg8[%c0_32, %c0_33] : memref<8x32xf32, #tpu.memory_space<vmem>>, vector<8x32xf32>
    %39 = vector.extract_strided_slice %21 {offsets = [0, 0, 0], sizes = [8, 1, 32], strides = [1, 1, 1]} : vector<8x16x32xf32> to vector<8x1x32xf32>
    %40 = vector.shape_cast %39 : vector<8x1x32xf32> to vector<8x32xf32>
    %cst_34 = arith.constant dense<0.000000e+00> : vector<8x32xf32>
    %41 = tpu.matmul %38, %4, %cst_34 {dimension_numbers = #tpu.dot_dimension_numbers<[1], [0], [0], [1], [0, 0, 1, 1], [], []>} : vector<8x32xf32>, vector<32x32xf32>, vector<8x32xf32> -> vector<8x32xf32>
    %42 = arith.addf %40, %41 : vector<8x32xf32>
    %43 = arith.negf %42 : vector<8x32xf32>
    %44 = math.exp %43 : vector<8x32xf32>
    %cst_35 = arith.constant 1.000000e+00 : f32
    %45 = vector.broadcast %cst_35 : f32 to vector<8x32xf32>
    %46 = arith.addf %45, %44 : vector<8x32xf32>
    %47 = arith.divf %45, %46 : vector<8x32xf32>
    %48 = vector.extract_strided_slice %29 {offsets = [0, 0, 0], sizes = [8, 1, 32], strides = [1, 1, 1]} : vector<8x16x32xf32> to vector<8x1x32xf32>
    %49 = vector.shape_cast %48 : vector<8x1x32xf32> to vector<8x32xf32>
    %cst_36 = arith.constant dense<0.000000e+00> : vector<8x32xf32>
    %50 = tpu.matmul %38, %6, %cst_36 {dimension_numbers = #tpu.dot_dimension_numbers<[1], [0], [0], [1], [0, 0, 1, 1], [], []>} : vector<8x32xf32>, vector<32x32xf32>, vector<8x32xf32> -> vector<8x32xf32>
    %51 = arith.addf %49, %50 : vector<8x32xf32>
    %52 = arith.negf %51 : vector<8x32xf32>
    %53 = math.exp %52 : vector<8x32xf32>
    %cst_37 = arith.constant 1.000000e+00 : f32
    %54 = vector.broadcast %cst_37 : f32 to vector<8x32xf32>
    %55 = arith.addf %54, %53 : vector<8x32xf32>
    %56 = arith.divf %54, %55 : vector<8x32xf32>
    %57 = vector.extract_strided_slice %37 {offsets = [0, 0, 0], sizes = [8, 1, 32], strides = [1, 1, 1]} : vector<8x16x32xf32> to vector<8x1x32xf32>
    %58 = vector.shape_cast %57 : vector<8x1x32xf32> to vector<8x32xf32>
    %cst_38 = arith.constant dense<0.000000e+00> : vector<8x32xf32>
    %59 = tpu.matmul %38, %8, %cst_38 {dimension_numbers = #tpu.dot_dimension_numbers<[1], [0], [0], [1], [0, 0, 1, 1], [], []>} : vector<8x32xf32>, vector<32x32xf32>, vector<8x32xf32> -> vector<8x32xf32>
    %60 = arith.addf %59, %11 : vector<8x32xf32>
    %61 = arith.mulf %47, %60 : vector<8x32xf32>
    %62 = arith.addf %58, %61 : vector<8x32xf32>
    %63 = math.tanh %62 : vector<8x32xf32>
    %64 = arith.subf %38, %63 : vector<8x32xf32>
    %65 = arith.mulf %56, %64 : vector<8x32xf32>
    %66 = arith.addf %63, %65 : vector<8x32xf32>
    %67 = vector.extract_strided_slice %21 {offsets = [0, 1, 0], sizes = [8, 1, 32], strides = [1, 1, 1]} : vector<8x16x32xf32> to vector<8x1x32xf32>
    %68 = vector.shape_cast %67 : vector<8x1x32xf32> to vector<8x32xf32>
    %cst_39 = arith.constant dense<0.000000e+00> : vector<8x32xf32>
    %69 = tpu.matmul %66, %4, %cst_39 {dimension_numbers = #tpu.dot_dimension_numbers<[1], [0], [0], [1], [0, 0, 1, 1], [], []>} : vector<8x32xf32>, vector<32x32xf32>, vector<8x32xf32> -> vector<8x32xf32>
    %70 = arith.addf %68, %69 : vector<8x32xf32>
    %71 = arith.negf %70 : vector<8x32xf32>
    %72 = math.exp %71 : vector<8x32xf32>
    %cst_40 = arith.constant 1.000000e+00 : f32
    %73 = vector.broadcast %cst_40 : f32 to vector<8x32xf32>
    %74 = arith.addf %73, %72 : vector<8x32xf32>
    %75 = arith.divf %73, %74 : vector<8x32xf32>
    %76 = vector.extract_strided_slice %29 {offsets = [0, 1, 0], sizes = [8, 1, 32], strides = [1, 1, 1]} : vector<8x16x32xf32> to vector<8x1x32xf32>
    %77 = vector.shape_cast %76 : vector<8x1x32xf32> to vector<8x32xf32>
    %cst_41 = arith.constant dense<0.000000e+00> : vector<8x32xf32>
    %78 = tpu.matmul %66, %6, %cst_41 {dimension_numbers = #tpu.dot_dimension_numbers<[1], [0], [0], [1], [0, 0, 1, 1], [], []>} : vector<8x32xf32>, vector<32x32xf32>, vector<8x32xf32> -> vector<8x32xf32>
    %79 = arith.addf %77, %78 : vector<8x32xf32>
    %80 = arith.negf %79 : vector<8x32xf32>
    %81 = math.exp %80 : vector<8x32xf32>
    %cst_42 = arith.constant 1.000000e+00 : f32
    %82 = vector.broadcast %cst_42 : f32 to vector<8x32xf32>
    %83 = arith.addf %82, %81 : vector<8x32xf32>
    %84 = arith.divf %82, %83 : vector<8x32xf32>
    %85 = vector.extract_strided_slice %37 {offsets = [0, 1, 0], sizes = [8, 1, 32], strides = [1, 1, 1]} : vector<8x16x32xf32> to vector<8x1x32xf32>
    %86 = vector.shape_cast %85 : vector<8x1x32xf32> to vector<8x32xf32>
    %cst_43 = arith.constant dense<0.000000e+00> : vector<8x32xf32>
    %87 = tpu.matmul %66, %8, %cst_43 {dimension_numbers = #tpu.dot_dimension_numbers<[1], [0], [0], [1], [0, 0, 1, 1], [], []>} : vector<8x32xf32>, vector<32x32xf32>, vector<8x32xf32> -> vector<8x32xf32>
    %88 = arith.addf %87, %11 : vector<8x32xf32>
    %89 = arith.mulf %75, %88 : vector<8x32xf32>
    %90 = arith.addf %86, %89 : vector<8x32xf32>
    %91 = math.tanh %90 : vector<8x32xf32>
    %92 = arith.subf %66, %91 : vector<8x32xf32>
    %93 = arith.mulf %84, %92 : vector<8x32xf32>
    %94 = arith.addf %91, %93 : vector<8x32xf32>
    %95 = vector.extract_strided_slice %21 {offsets = [0, 2, 0], sizes = [8, 1, 32], strides = [1, 1, 1]} : vector<8x16x32xf32> to vector<8x1x32xf32>
    %96 = vector.shape_cast %95 : vector<8x1x32xf32> to vector<8x32xf32>
    %cst_44 = arith.constant dense<0.000000e+00> : vector<8x32xf32>
    %97 = tpu.matmul %94, %4, %cst_44 {dimension_numbers = #tpu.dot_dimension_numbers<[1], [0], [0], [1], [0, 0, 1, 1], [], []>} : vector<8x32xf32>, vector<32x32xf32>, vector<8x32xf32> -> vector<8x32xf32>
    %98 = arith.addf %96, %97 : vector<8x32xf32>
    %99 = arith.negf %98 : vector<8x32xf32>
    %100 = math.exp %99 : vector<8x32xf32>
    %cst_45 = arith.constant 1.000000e+00 : f32
    %101 = vector.broadcast %cst_45 : f32 to vector<8x32xf32>
    %102 = arith.addf %101, %100 : vector<8x32xf32>
    %103 = arith.divf %101, %102 : vector<8x32xf32>
    %104 = vector.extract_strided_slice %29 {offsets = [0, 2, 0], sizes = [8, 1, 32], strides = [1, 1, 1]} : vector<8x16x32xf32> to vector<8x1x32xf32>
    %105 = vector.shape_cast %104 : vector<8x1x32xf32> to vector<8x32xf32>
    %cst_46 = arith.constant dense<0.000000e+00> : vector<8x32xf32>
    %106 = tpu.matmul %94, %6, %cst_46 {dimension_numbers = #tpu.dot_dimension_numbers<[1], [0], [0], [1], [0, 0, 1, 1], [], []>} : vector<8x32xf32>, vector<32x32xf32>, vector<8x32xf32> -> vector<8x32xf32>
    %107 = arith.addf %105, %106 : vector<8x32xf32>
    %108 = arith.negf %107 : vector<8x32xf32>
    %109 = math.exp %108 : vector<8x32xf32>
    %cst_47 = arith.constant 1.000000e+00 : f32
    %110 = vector.broadcast %cst_47 : f32 to vector<8x32xf32>
    %111 = arith.addf %110, %109 : vector<8x32xf32>
    %112 = arith.divf %110, %111 : vector<8x32xf32>
    %113 = vector.extract_strided_slice %37 {offsets = [0, 2, 0], sizes = [8, 1, 32], strides = [1, 1, 1]} : vector<8x16x32xf32> to vector<8x1x32xf32>
    %114 = vector.shape_cast %113 : vector<8x1x32xf32> to vector<8x32xf32>
    %cst_48 = arith.constant dense<0.000000e+00> : vector<8x32xf32>
    %115 = tpu.matmul %94, %8, %cst_48 {dimension_numbers = #tpu.dot_dimension_numbers<[1], [0], [0], [1], [0, 0, 1, 1], [], []>} : vector<8x32xf32>, vector<32x32xf32>, vector<8x32xf32> -> vector<8x32xf32>
    %116 = arith.addf %115, %11 : vector<8x32xf32>
    %117 = arith.mulf %103, %116 : vector<8x32xf32>
    %118 = arith.addf %114, %117 : vector<8x32xf32>
    %119 = math.tanh %118 : vector<8x32xf32>
    %120 = arith.subf %94, %119 : vector<8x32xf32>
    %121 = arith.mulf %112, %120 : vector<8x32xf32>
    %122 = arith.addf %119, %121 : vector<8x32xf32>
    %123 = vector.extract_strided_slice %21 {offsets = [0, 3, 0], sizes = [8, 1, 32], strides = [1, 1, 1]} : vector<8x16x32xf32> to vector<8x1x32xf32>
    %124 = vector.shape_cast %123 : vector<8x1x32xf32> to vector<8x32xf32>
    %cst_49 = arith.constant dense<0.000000e+00> : vector<8x32xf32>
    %125 = tpu.matmul %122, %4, %cst_49 {dimension_numbers = #tpu.dot_dimension_numbers<[1], [0], [0], [1], [0, 0, 1, 1], [], []>} : vector<8x32xf32>, vector<32x32xf32>, vector<8x32xf32> -> vector<8x32xf32>
    %126 = arith.addf %124, %125 : vector<8x32xf32>
    %127 = arith.negf %126 : vector<8x32xf32>
    %128 = math.exp %127 : vector<8x32xf32>
    %cst_50 = arith.constant 1.000000e+00 : f32
    %129 = vector.broadcast %cst_50 : f32 to vector<8x32xf32>
    %130 = arith.addf %129, %128 : vector<8x32xf32>
    %131 = arith.divf %129, %130 : vector<8x32xf32>
    %132 = vector.extract_strided_slice %29 {offsets = [0, 3, 0], sizes = [8, 1, 32], strides = [1, 1, 1]} : vector<8x16x32xf32> to vector<8x1x32xf32>
    %133 = vector.shape_cast %132 : vector<8x1x32xf32> to vector<8x32xf32>
    %cst_51 = arith.constant dense<0.000000e+00> : vector<8x32xf32>
    %134 = tpu.matmul %122, %6, %cst_51 {dimension_numbers = #tpu.dot_dimension_numbers<[1], [0], [0], [1], [0, 0, 1, 1], [], []>} : vector<8x32xf32>, vector<32x32xf32>, vector<8x32xf32> -> vector<8x32xf32>
    %135 = arith.addf %133, %134 : vector<8x32xf32>
    %136 = arith.negf %135 : vector<8x32xf32>
    %137 = math.exp %136 : vector<8x32xf32>
    %cst_52 = arith.constant 1.000000e+00 : f32
    %138 = vector.broadcast %cst_52 : f32 to vector<8x32xf32>
    %139 = arith.addf %138, %137 : vector<8x32xf32>
    %140 = arith.divf %138, %139 : vector<8x32xf32>
    %141 = vector.extract_strided_slice %37 {offsets = [0, 3, 0], sizes = [8, 1, 32], strides = [1, 1, 1]} : vector<8x16x32xf32> to vector<8x1x32xf32>
    %142 = vector.shape_cast %141 : vector<8x1x32xf32> to vector<8x32xf32>
    %cst_53 = arith.constant dense<0.000000e+00> : vector<8x32xf32>
    %143 = tpu.matmul %122, %8, %cst_53 {dimension_numbers = #tpu.dot_dimension_numbers<[1], [0], [0], [1], [0, 0, 1, 1], [], []>} : vector<8x32xf32>, vector<32x32xf32>, vector<8x32xf32> -> vector<8x32xf32>
    %144 = arith.addf %143, %11 : vector<8x32xf32>
    %145 = arith.mulf %131, %144 : vector<8x32xf32>
    %146 = arith.addf %142, %145 : vector<8x32xf32>
    %147 = math.tanh %146 : vector<8x32xf32>
    %148 = arith.subf %122, %147 : vector<8x32xf32>
    %149 = arith.mulf %140, %148 : vector<8x32xf32>
    %150 = arith.addf %147, %149 : vector<8x32xf32>
    %151 = vector.extract_strided_slice %21 {offsets = [0, 4, 0], sizes = [8, 1, 32], strides = [1, 1, 1]} : vector<8x16x32xf32> to vector<8x1x32xf32>
    %152 = vector.shape_cast %151 : vector<8x1x32xf32> to vector<8x32xf32>
    %cst_54 = arith.constant dense<0.000000e+00> : vector<8x32xf32>
    %153 = tpu.matmul %150, %4, %cst_54 {dimension_numbers = #tpu.dot_dimension_numbers<[1], [0], [0], [1], [0, 0, 1, 1], [], []>} : vector<8x32xf32>, vector<32x32xf32>, vector<8x32xf32> -> vector<8x32xf32>
    %154 = arith.addf %152, %153 : vector<8x32xf32>
    %155 = arith.negf %154 : vector<8x32xf32>
    %156 = math.exp %155 : vector<8x32xf32>
    %cst_55 = arith.constant 1.000000e+00 : f32
    %157 = vector.broadcast %cst_55 : f32 to vector<8x32xf32>
    %158 = arith.addf %157, %156 : vector<8x32xf32>
    %159 = arith.divf %157, %158 : vector<8x32xf32>
    %160 = vector.extract_strided_slice %29 {offsets = [0, 4, 0], sizes = [8, 1, 32], strides = [1, 1, 1]} : vector<8x16x32xf32> to vector<8x1x32xf32>
    %161 = vector.shape_cast %160 : vector<8x1x32xf32> to vector<8x32xf32>
    %cst_56 = arith.constant dense<0.000000e+00> : vector<8x32xf32>
    %162 = tpu.matmul %150, %6, %cst_56 {dimension_numbers = #tpu.dot_dimension_numbers<[1], [0], [0], [1], [0, 0, 1, 1], [], []>} : vector<8x32xf32>, vector<32x32xf32>, vector<8x32xf32> -> vector<8x32xf32>
    %163 = arith.addf %161, %162 : vector<8x32xf32>
    %164 = arith.negf %163 : vector<8x32xf32>
    %165 = math.exp %164 : vector<8x32xf32>
    %cst_57 = arith.constant 1.000000e+00 : f32
    %166 = vector.broadcast %cst_57 : f32 to vector<8x32xf32>
    %167 = arith.addf %166, %165 : vector<8x32xf32>
    %168 = arith.divf %166, %167 : vector<8x32xf32>
    %169 = vector.extract_strided_slice %37 {offsets = [0, 4, 0], sizes = [8, 1, 32], strides = [1, 1, 1]} : vector<8x16x32xf32> to vector<8x1x32xf32>
    %170 = vector.shape_cast %169 : vector<8x1x32xf32> to vector<8x32xf32>
    %cst_58 = arith.constant dense<0.000000e+00> : vector<8x32xf32>
    %171 = tpu.matmul %150, %8, %cst_58 {dimension_numbers = #tpu.dot_dimension_numbers<[1], [0], [0], [1], [0, 0, 1, 1], [], []>} : vector<8x32xf32>, vector<32x32xf32>, vector<8x32xf32> -> vector<8x32xf32>
    %172 = arith.addf %171, %11 : vector<8x32xf32>
    %173 = arith.mulf %159, %172 : vector<8x32xf32>
    %174 = arith.addf %170, %173 : vector<8x32xf32>
    %175 = math.tanh %174 : vector<8x32xf32>
    %176 = arith.subf %150, %175 : vector<8x32xf32>
    %177 = arith.mulf %168, %176 : vector<8x32xf32>
    %178 = arith.addf %175, %177 : vector<8x32xf32>
    %179 = vector.extract_strided_slice %21 {offsets = [0, 5, 0], sizes = [8, 1, 32], strides = [1, 1, 1]} : vector<8x16x32xf32> to vector<8x1x32xf32>
    %180 = vector.shape_cast %179 : vector<8x1x32xf32> to vector<8x32xf32>
    %cst_59 = arith.constant dense<0.000000e+00> : vector<8x32xf32>
    %181 = tpu.matmul %178, %4, %cst_59 {dimension_numbers = #tpu.dot_dimension_numbers<[1], [0], [0], [1], [0, 0, 1, 1], [], []>} : vector<8x32xf32>, vector<32x32xf32>, vector<8x32xf32> -> vector<8x32xf32>
    %182 = arith.addf %180, %181 : vector<8x32xf32>
    %183 = arith.negf %182 : vector<8x32xf32>
    %184 = math.exp %183 : vector<8x32xf32>
    %cst_60 = arith.constant 1.000000e+00 : f32
    %185 = vector.broadcast %cst_60 : f32 to vector<8x32xf32>
    %186 = arith.addf %185, %184 : vector<8x32xf32>
    %187 = arith.divf %185, %186 : vector<8x32xf32>
    %188 = vector.extract_strided_slice %29 {offsets = [0, 5, 0], sizes = [8, 1, 32], strides = [1, 1, 1]} : vector<8x16x32xf32> to vector<8x1x32xf32>
    %189 = vector.shape_cast %188 : vector<8x1x32xf32> to vector<8x32xf32>
    %cst_61 = arith.constant dense<0.000000e+00> : vector<8x32xf32>
    %190 = tpu.matmul %178, %6, %cst_61 {dimension_numbers = #tpu.dot_dimension_numbers<[1], [0], [0], [1], [0, 0, 1, 1], [], []>} : vector<8x32xf32>, vector<32x32xf32>, vector<8x32xf32> -> vector<8x32xf32>
    %191 = arith.addf %189, %190 : vector<8x32xf32>
    %192 = arith.negf %191 : vector<8x32xf32>
    %193 = math.exp %192 : vector<8x32xf32>
    %cst_62 = arith.constant 1.000000e+00 : f32
    %194 = vector.broadcast %cst_62 : f32 to vector<8x32xf32>
    %195 = arith.addf %194, %193 : vector<8x32xf32>
    %196 = arith.divf %194, %195 : vector<8x32xf32>
    %197 = vector.extract_strided_slice %37 {offsets = [0, 5, 0], sizes = [8, 1, 32], strides = [1, 1, 1]} : vector<8x16x32xf32> to vector<8x1x32xf32>
    %198 = vector.shape_cast %197 : vector<8x1x32xf32> to vector<8x32xf32>
    %cst_63 = arith.constant dense<0.000000e+00> : vector<8x32xf32>
    %199 = tpu.matmul %178, %8, %cst_63 {dimension_numbers = #tpu.dot_dimension_numbers<[1], [0], [0], [1], [0, 0, 1, 1], [], []>} : vector<8x32xf32>, vector<32x32xf32>, vector<8x32xf32> -> vector<8x32xf32>
    %200 = arith.addf %199, %11 : vector<8x32xf32>
    %201 = arith.mulf %187, %200 : vector<8x32xf32>
    %202 = arith.addf %198, %201 : vector<8x32xf32>
    %203 = math.tanh %202 : vector<8x32xf32>
    %204 = arith.subf %178, %203 : vector<8x32xf32>
    %205 = arith.mulf %196, %204 : vector<8x32xf32>
    %206 = arith.addf %203, %205 : vector<8x32xf32>
    %207 = vector.extract_strided_slice %21 {offsets = [0, 6, 0], sizes = [8, 1, 32], strides = [1, 1, 1]} : vector<8x16x32xf32> to vector<8x1x32xf32>
    %208 = vector.shape_cast %207 : vector<8x1x32xf32> to vector<8x32xf32>
    %cst_64 = arith.constant dense<0.000000e+00> : vector<8x32xf32>
    %209 = tpu.matmul %206, %4, %cst_64 {dimension_numbers = #tpu.dot_dimension_numbers<[1], [0], [0], [1], [0, 0, 1, 1], [], []>} : vector<8x32xf32>, vector<32x32xf32>, vector<8x32xf32> -> vector<8x32xf32>
    %210 = arith.addf %208, %209 : vector<8x32xf32>
    %211 = arith.negf %210 : vector<8x32xf32>
    %212 = math.exp %211 : vector<8x32xf32>
    %cst_65 = arith.constant 1.000000e+00 : f32
    %213 = vector.broadcast %cst_65 : f32 to vector<8x32xf32>
    %214 = arith.addf %213, %212 : vector<8x32xf32>
    %215 = arith.divf %213, %214 : vector<8x32xf32>
    %216 = vector.extract_strided_slice %29 {offsets = [0, 6, 0], sizes = [8, 1, 32], strides = [1, 1, 1]} : vector<8x16x32xf32> to vector<8x1x32xf32>
    %217 = vector.shape_cast %216 : vector<8x1x32xf32> to vector<8x32xf32>
    %cst_66 = arith.constant dense<0.000000e+00> : vector<8x32xf32>
    %218 = tpu.matmul %206, %6, %cst_66 {dimension_numbers = #tpu.dot_dimension_numbers<[1], [0], [0], [1], [0, 0, 1, 1], [], []>} : vector<8x32xf32>, vector<32x32xf32>, vector<8x32xf32> -> vector<8x32xf32>
    %219 = arith.addf %217, %218 : vector<8x32xf32>
    %220 = arith.negf %219 : vector<8x32xf32>
    %221 = math.exp %220 : vector<8x32xf32>
    %cst_67 = arith.constant 1.000000e+00 : f32
    %222 = vector.broadcast %cst_67 : f32 to vector<8x32xf32>
    %223 = arith.addf %222, %221 : vector<8x32xf32>
    %224 = arith.divf %222, %223 : vector<8x32xf32>
    %225 = vector.extract_strided_slice %37 {offsets = [0, 6, 0], sizes = [8, 1, 32], strides = [1, 1, 1]} : vector<8x16x32xf32> to vector<8x1x32xf32>
    %226 = vector.shape_cast %225 : vector<8x1x32xf32> to vector<8x32xf32>
    %cst_68 = arith.constant dense<0.000000e+00> : vector<8x32xf32>
    %227 = tpu.matmul %206, %8, %cst_68 {dimension_numbers = #tpu.dot_dimension_numbers<[1], [0], [0], [1], [0, 0, 1, 1], [], []>} : vector<8x32xf32>, vector<32x32xf32>, vector<8x32xf32> -> vector<8x32xf32>
    %228 = arith.addf %227, %11 : vector<8x32xf32>
    %229 = arith.mulf %215, %228 : vector<8x32xf32>
    %230 = arith.addf %226, %229 : vector<8x32xf32>
    %231 = math.tanh %230 : vector<8x32xf32>
    %232 = arith.subf %206, %231 : vector<8x32xf32>
    %233 = arith.mulf %224, %232 : vector<8x32xf32>
    %234 = arith.addf %231, %233 : vector<8x32xf32>
    %235 = vector.extract_strided_slice %21 {offsets = [0, 7, 0], sizes = [8, 1, 32], strides = [1, 1, 1]} : vector<8x16x32xf32> to vector<8x1x32xf32>
    %236 = vector.shape_cast %235 : vector<8x1x32xf32> to vector<8x32xf32>
    %cst_69 = arith.constant dense<0.000000e+00> : vector<8x32xf32>
    %237 = tpu.matmul %234, %4, %cst_69 {dimension_numbers = #tpu.dot_dimension_numbers<[1], [0], [0], [1], [0, 0, 1, 1], [], []>} : vector<8x32xf32>, vector<32x32xf32>, vector<8x32xf32> -> vector<8x32xf32>
    %238 = arith.addf %236, %237 : vector<8x32xf32>
    %239 = arith.negf %238 : vector<8x32xf32>
    %240 = math.exp %239 : vector<8x32xf32>
    %cst_70 = arith.constant 1.000000e+00 : f32
    %241 = vector.broadcast %cst_70 : f32 to vector<8x32xf32>
    %242 = arith.addf %241, %240 : vector<8x32xf32>
    %243 = arith.divf %241, %242 : vector<8x32xf32>
    %244 = vector.extract_strided_slice %29 {offsets = [0, 7, 0], sizes = [8, 1, 32], strides = [1, 1, 1]} : vector<8x16x32xf32> to vector<8x1x32xf32>
    %245 = vector.shape_cast %244 : vector<8x1x32xf32> to vector<8x32xf32>
    %cst_71 = arith.constant dense<0.000000e+00> : vector<8x32xf32>
    %246 = tpu.matmul %234, %6, %cst_71 {dimension_numbers = #tpu.dot_dimension_numbers<[1], [0], [0], [1], [0, 0, 1, 1], [], []>} : vector<8x32xf32>, vector<32x32xf32>, vector<8x32xf32> -> vector<8x32xf32>
    %247 = arith.addf %245, %246 : vector<8x32xf32>
    %248 = arith.negf %247 : vector<8x32xf32>
    %249 = math.exp %248 : vector<8x32xf32>
    %cst_72 = arith.constant 1.000000e+00 : f32
    %250 = vector.broadcast %cst_72 : f32 to vector<8x32xf32>
    %251 = arith.addf %250, %249 : vector<8x32xf32>
    %252 = arith.divf %250, %251 : vector<8x32xf32>
    %253 = vector.extract_strided_slice %37 {offsets = [0, 7, 0], sizes = [8, 1, 32], strides = [1, 1, 1]} : vector<8x16x32xf32> to vector<8x1x32xf32>
    %254 = vector.shape_cast %253 : vector<8x1x32xf32> to vector<8x32xf32>
    %cst_73 = arith.constant dense<0.000000e+00> : vector<8x32xf32>
    %255 = tpu.matmul %234, %8, %cst_73 {dimension_numbers = #tpu.dot_dimension_numbers<[1], [0], [0], [1], [0, 0, 1, 1], [], []>} : vector<8x32xf32>, vector<32x32xf32>, vector<8x32xf32> -> vector<8x32xf32>
    %256 = arith.addf %255, %11 : vector<8x32xf32>
    %257 = arith.mulf %243, %256 : vector<8x32xf32>
    %258 = arith.addf %254, %257 : vector<8x32xf32>
    %259 = math.tanh %258 : vector<8x32xf32>
    %260 = arith.subf %234, %259 : vector<8x32xf32>
    %261 = arith.mulf %252, %260 : vector<8x32xf32>
    %262 = arith.addf %259, %261 : vector<8x32xf32>
    %263 = vector.extract_strided_slice %21 {offsets = [0, 8, 0], sizes = [8, 1, 32], strides = [1, 1, 1]} : vector<8x16x32xf32> to vector<8x1x32xf32>
    %264 = vector.shape_cast %263 : vector<8x1x32xf32> to vector<8x32xf32>
    %cst_74 = arith.constant dense<0.000000e+00> : vector<8x32xf32>
    %265 = tpu.matmul %262, %4, %cst_74 {dimension_numbers = #tpu.dot_dimension_numbers<[1], [0], [0], [1], [0, 0, 1, 1], [], []>} : vector<8x32xf32>, vector<32x32xf32>, vector<8x32xf32> -> vector<8x32xf32>
    %266 = arith.addf %264, %265 : vector<8x32xf32>
    %267 = arith.negf %266 : vector<8x32xf32>
    %268 = math.exp %267 : vector<8x32xf32>
    %cst_75 = arith.constant 1.000000e+00 : f32
    %269 = vector.broadcast %cst_75 : f32 to vector<8x32xf32>
    %270 = arith.addf %269, %268 : vector<8x32xf32>
    %271 = arith.divf %269, %270 : vector<8x32xf32>
    %272 = vector.extract_strided_slice %29 {offsets = [0, 8, 0], sizes = [8, 1, 32], strides = [1, 1, 1]} : vector<8x16x32xf32> to vector<8x1x32xf32>
    %273 = vector.shape_cast %272 : vector<8x1x32xf32> to vector<8x32xf32>
    %cst_76 = arith.constant dense<0.000000e+00> : vector<8x32xf32>
    %274 = tpu.matmul %262, %6, %cst_76 {dimension_numbers = #tpu.dot_dimension_numbers<[1], [0], [0], [1], [0, 0, 1, 1], [], []>} : vector<8x32xf32>, vector<32x32xf32>, vector<8x32xf32> -> vector<8x32xf32>
    %275 = arith.addf %273, %274 : vector<8x32xf32>
    %276 = arith.negf %275 : vector<8x32xf32>
    %277 = math.exp %276 : vector<8x32xf32>
    %cst_77 = arith.constant 1.000000e+00 : f32
    %278 = vector.broadcast %cst_77 : f32 to vector<8x32xf32>
    %279 = arith.addf %278, %277 : vector<8x32xf32>
    %280 = arith.divf %278, %279 : vector<8x32xf32>
    %281 = vector.extract_strided_slice %37 {offsets = [0, 8, 0], sizes = [8, 1, 32], strides = [1, 1, 1]} : vector<8x16x32xf32> to vector<8x1x32xf32>
    %282 = vector.shape_cast %281 : vector<8x1x32xf32> to vector<8x32xf32>
    %cst_78 = arith.constant dense<0.000000e+00> : vector<8x32xf32>
    %283 = tpu.matmul %262, %8, %cst_78 {dimension_numbers = #tpu.dot_dimension_numbers<[1], [0], [0], [1], [0, 0, 1, 1], [], []>} : vector<8x32xf32>, vector<32x32xf32>, vector<8x32xf32> -> vector<8x32xf32>
    %284 = arith.addf %283, %11 : vector<8x32xf32>
    %285 = arith.mulf %271, %284 : vector<8x32xf32>
    %286 = arith.addf %282, %285 : vector<8x32xf32>
    %287 = math.tanh %286 : vector<8x32xf32>
    %288 = arith.subf %262, %287 : vector<8x32xf32>
    %289 = arith.mulf %280, %288 : vector<8x32xf32>
    %290 = arith.addf %287, %289 : vector<8x32xf32>
    %291 = vector.extract_strided_slice %21 {offsets = [0, 9, 0], sizes = [8, 1, 32], strides = [1, 1, 1]} : vector<8x16x32xf32> to vector<8x1x32xf32>
    %292 = vector.shape_cast %291 : vector<8x1x32xf32> to vector<8x32xf32>
    %cst_79 = arith.constant dense<0.000000e+00> : vector<8x32xf32>
    %293 = tpu.matmul %290, %4, %cst_79 {dimension_numbers = #tpu.dot_dimension_numbers<[1], [0], [0], [1], [0, 0, 1, 1], [], []>} : vector<8x32xf32>, vector<32x32xf32>, vector<8x32xf32> -> vector<8x32xf32>
    %294 = arith.addf %292, %293 : vector<8x32xf32>
    %295 = arith.negf %294 : vector<8x32xf32>
    %296 = math.exp %295 : vector<8x32xf32>
    %cst_80 = arith.constant 1.000000e+00 : f32
    %297 = vector.broadcast %cst_80 : f32 to vector<8x32xf32>
    %298 = arith.addf %297, %296 : vector<8x32xf32>
    %299 = arith.divf %297, %298 : vector<8x32xf32>
    %300 = vector.extract_strided_slice %29 {offsets = [0, 9, 0], sizes = [8, 1, 32], strides = [1, 1, 1]} : vector<8x16x32xf32> to vector<8x1x32xf32>
    %301 = vector.shape_cast %300 : vector<8x1x32xf32> to vector<8x32xf32>
    %cst_81 = arith.constant dense<0.000000e+00> : vector<8x32xf32>
    %302 = tpu.matmul %290, %6, %cst_81 {dimension_numbers = #tpu.dot_dimension_numbers<[1], [0], [0], [1], [0, 0, 1, 1], [], []>} : vector<8x32xf32>, vector<32x32xf32>, vector<8x32xf32> -> vector<8x32xf32>
    %303 = arith.addf %301, %302 : vector<8x32xf32>
    %304 = arith.negf %303 : vector<8x32xf32>
    %305 = math.exp %304 : vector<8x32xf32>
    %cst_82 = arith.constant 1.000000e+00 : f32
    %306 = vector.broadcast %cst_82 : f32 to vector<8x32xf32>
    %307 = arith.addf %306, %305 : vector<8x32xf32>
    %308 = arith.divf %306, %307 : vector<8x32xf32>
    %309 = vector.extract_strided_slice %37 {offsets = [0, 9, 0], sizes = [8, 1, 32], strides = [1, 1, 1]} : vector<8x16x32xf32> to vector<8x1x32xf32>
    %310 = vector.shape_cast %309 : vector<8x1x32xf32> to vector<8x32xf32>
    %cst_83 = arith.constant dense<0.000000e+00> : vector<8x32xf32>
    %311 = tpu.matmul %290, %8, %cst_83 {dimension_numbers = #tpu.dot_dimension_numbers<[1], [0], [0], [1], [0, 0, 1, 1], [], []>} : vector<8x32xf32>, vector<32x32xf32>, vector<8x32xf32> -> vector<8x32xf32>
    %312 = arith.addf %311, %11 : vector<8x32xf32>
    %313 = arith.mulf %299, %312 : vector<8x32xf32>
    %314 = arith.addf %310, %313 : vector<8x32xf32>
    %315 = math.tanh %314 : vector<8x32xf32>
    %316 = arith.subf %290, %315 : vector<8x32xf32>
    %317 = arith.mulf %308, %316 : vector<8x32xf32>
    %318 = arith.addf %315, %317 : vector<8x32xf32>
    %319 = vector.extract_strided_slice %21 {offsets = [0, 10, 0], sizes = [8, 1, 32], strides = [1, 1, 1]} : vector<8x16x32xf32> to vector<8x1x32xf32>
    %320 = vector.shape_cast %319 : vector<8x1x32xf32> to vector<8x32xf32>
    %cst_84 = arith.constant dense<0.000000e+00> : vector<8x32xf32>
    %321 = tpu.matmul %318, %4, %cst_84 {dimension_numbers = #tpu.dot_dimension_numbers<[1], [0], [0], [1], [0, 0, 1, 1], [], []>} : vector<8x32xf32>, vector<32x32xf32>, vector<8x32xf32> -> vector<8x32xf32>
    %322 = arith.addf %320, %321 : vector<8x32xf32>
    %323 = arith.negf %322 : vector<8x32xf32>
    %324 = math.exp %323 : vector<8x32xf32>
    %cst_85 = arith.constant 1.000000e+00 : f32
    %325 = vector.broadcast %cst_85 : f32 to vector<8x32xf32>
    %326 = arith.addf %325, %324 : vector<8x32xf32>
    %327 = arith.divf %325, %326 : vector<8x32xf32>
    %328 = vector.extract_strided_slice %29 {offsets = [0, 10, 0], sizes = [8, 1, 32], strides = [1, 1, 1]} : vector<8x16x32xf32> to vector<8x1x32xf32>
    %329 = vector.shape_cast %328 : vector<8x1x32xf32> to vector<8x32xf32>
    %cst_86 = arith.constant dense<0.000000e+00> : vector<8x32xf32>
    %330 = tpu.matmul %318, %6, %cst_86 {dimension_numbers = #tpu.dot_dimension_numbers<[1], [0], [0], [1], [0, 0, 1, 1], [], []>} : vector<8x32xf32>, vector<32x32xf32>, vector<8x32xf32> -> vector<8x32xf32>
    %331 = arith.addf %329, %330 : vector<8x32xf32>
    %332 = arith.negf %331 : vector<8x32xf32>
    %333 = math.exp %332 : vector<8x32xf32>
    %cst_87 = arith.constant 1.000000e+00 : f32
    %334 = vector.broadcast %cst_87 : f32 to vector<8x32xf32>
    %335 = arith.addf %334, %333 : vector<8x32xf32>
    %336 = arith.divf %334, %335 : vector<8x32xf32>
    %337 = vector.extract_strided_slice %37 {offsets = [0, 10, 0], sizes = [8, 1, 32], strides = [1, 1, 1]} : vector<8x16x32xf32> to vector<8x1x32xf32>
    %338 = vector.shape_cast %337 : vector<8x1x32xf32> to vector<8x32xf32>
    %cst_88 = arith.constant dense<0.000000e+00> : vector<8x32xf32>
    %339 = tpu.matmul %318, %8, %cst_88 {dimension_numbers = #tpu.dot_dimension_numbers<[1], [0], [0], [1], [0, 0, 1, 1], [], []>} : vector<8x32xf32>, vector<32x32xf32>, vector<8x32xf32> -> vector<8x32xf32>
    %340 = arith.addf %339, %11 : vector<8x32xf32>
    %341 = arith.mulf %327, %340 : vector<8x32xf32>
    %342 = arith.addf %338, %341 : vector<8x32xf32>
    %343 = math.tanh %342 : vector<8x32xf32>
    %344 = arith.subf %318, %343 : vector<8x32xf32>
    %345 = arith.mulf %336, %344 : vector<8x32xf32>
    %346 = arith.addf %343, %345 : vector<8x32xf32>
    %347 = vector.extract_strided_slice %21 {offsets = [0, 11, 0], sizes = [8, 1, 32], strides = [1, 1, 1]} : vector<8x16x32xf32> to vector<8x1x32xf32>
    %348 = vector.shape_cast %347 : vector<8x1x32xf32> to vector<8x32xf32>
    %cst_89 = arith.constant dense<0.000000e+00> : vector<8x32xf32>
    %349 = tpu.matmul %346, %4, %cst_89 {dimension_numbers = #tpu.dot_dimension_numbers<[1], [0], [0], [1], [0, 0, 1, 1], [], []>} : vector<8x32xf32>, vector<32x32xf32>, vector<8x32xf32> -> vector<8x32xf32>
    %350 = arith.addf %348, %349 : vector<8x32xf32>
    %351 = arith.negf %350 : vector<8x32xf32>
    %352 = math.exp %351 : vector<8x32xf32>
    %cst_90 = arith.constant 1.000000e+00 : f32
    %353 = vector.broadcast %cst_90 : f32 to vector<8x32xf32>
    %354 = arith.addf %353, %352 : vector<8x32xf32>
    %355 = arith.divf %353, %354 : vector<8x32xf32>
    %356 = vector.extract_strided_slice %29 {offsets = [0, 11, 0], sizes = [8, 1, 32], strides = [1, 1, 1]} : vector<8x16x32xf32> to vector<8x1x32xf32>
    %357 = vector.shape_cast %356 : vector<8x1x32xf32> to vector<8x32xf32>
    %cst_91 = arith.constant dense<0.000000e+00> : vector<8x32xf32>
    %358 = tpu.matmul %346, %6, %cst_91 {dimension_numbers = #tpu.dot_dimension_numbers<[1], [0], [0], [1], [0, 0, 1, 1], [], []>} : vector<8x32xf32>, vector<32x32xf32>, vector<8x32xf32> -> vector<8x32xf32>
    %359 = arith.addf %357, %358 : vector<8x32xf32>
    %360 = arith.negf %359 : vector<8x32xf32>
    %361 = math.exp %360 : vector<8x32xf32>
    %cst_92 = arith.constant 1.000000e+00 : f32
    %362 = vector.broadcast %cst_92 : f32 to vector<8x32xf32>
    %363 = arith.addf %362, %361 : vector<8x32xf32>
    %364 = arith.divf %362, %363 : vector<8x32xf32>
    %365 = vector.extract_strided_slice %37 {offsets = [0, 11, 0], sizes = [8, 1, 32], strides = [1, 1, 1]} : vector<8x16x32xf32> to vector<8x1x32xf32>
    %366 = vector.shape_cast %365 : vector<8x1x32xf32> to vector<8x32xf32>
    %cst_93 = arith.constant dense<0.000000e+00> : vector<8x32xf32>
    %367 = tpu.matmul %346, %8, %cst_93 {dimension_numbers = #tpu.dot_dimension_numbers<[1], [0], [0], [1], [0, 0, 1, 1], [], []>} : vector<8x32xf32>, vector<32x32xf32>, vector<8x32xf32> -> vector<8x32xf32>
    %368 = arith.addf %367, %11 : vector<8x32xf32>
    %369 = arith.mulf %355, %368 : vector<8x32xf32>
    %370 = arith.addf %366, %369 : vector<8x32xf32>
    %371 = math.tanh %370 : vector<8x32xf32>
    %372 = arith.subf %346, %371 : vector<8x32xf32>
    %373 = arith.mulf %364, %372 : vector<8x32xf32>
    %374 = arith.addf %371, %373 : vector<8x32xf32>
    %375 = vector.extract_strided_slice %21 {offsets = [0, 12, 0], sizes = [8, 1, 32], strides = [1, 1, 1]} : vector<8x16x32xf32> to vector<8x1x32xf32>
    %376 = vector.shape_cast %375 : vector<8x1x32xf32> to vector<8x32xf32>
    %cst_94 = arith.constant dense<0.000000e+00> : vector<8x32xf32>
    %377 = tpu.matmul %374, %4, %cst_94 {dimension_numbers = #tpu.dot_dimension_numbers<[1], [0], [0], [1], [0, 0, 1, 1], [], []>} : vector<8x32xf32>, vector<32x32xf32>, vector<8x32xf32> -> vector<8x32xf32>
    %378 = arith.addf %376, %377 : vector<8x32xf32>
    %379 = arith.negf %378 : vector<8x32xf32>
    %380 = math.exp %379 : vector<8x32xf32>
    %cst_95 = arith.constant 1.000000e+00 : f32
    %381 = vector.broadcast %cst_95 : f32 to vector<8x32xf32>
    %382 = arith.addf %381, %380 : vector<8x32xf32>
    %383 = arith.divf %381, %382 : vector<8x32xf32>
    %384 = vector.extract_strided_slice %29 {offsets = [0, 12, 0], sizes = [8, 1, 32], strides = [1, 1, 1]} : vector<8x16x32xf32> to vector<8x1x32xf32>
    %385 = vector.shape_cast %384 : vector<8x1x32xf32> to vector<8x32xf32>
    %cst_96 = arith.constant dense<0.000000e+00> : vector<8x32xf32>
    %386 = tpu.matmul %374, %6, %cst_96 {dimension_numbers = #tpu.dot_dimension_numbers<[1], [0], [0], [1], [0, 0, 1, 1], [], []>} : vector<8x32xf32>, vector<32x32xf32>, vector<8x32xf32> -> vector<8x32xf32>
    %387 = arith.addf %385, %386 : vector<8x32xf32>
    %388 = arith.negf %387 : vector<8x32xf32>
    %389 = math.exp %388 : vector<8x32xf32>
    %cst_97 = arith.constant 1.000000e+00 : f32
    %390 = vector.broadcast %cst_97 : f32 to vector<8x32xf32>
    %391 = arith.addf %390, %389 : vector<8x32xf32>
    %392 = arith.divf %390, %391 : vector<8x32xf32>
    %393 = vector.extract_strided_slice %37 {offsets = [0, 12, 0], sizes = [8, 1, 32], strides = [1, 1, 1]} : vector<8x16x32xf32> to vector<8x1x32xf32>
    %394 = vector.shape_cast %393 : vector<8x1x32xf32> to vector<8x32xf32>
    %cst_98 = arith.constant dense<0.000000e+00> : vector<8x32xf32>
    %395 = tpu.matmul %374, %8, %cst_98 {dimension_numbers = #tpu.dot_dimension_numbers<[1], [0], [0], [1], [0, 0, 1, 1], [], []>} : vector<8x32xf32>, vector<32x32xf32>, vector<8x32xf32> -> vector<8x32xf32>
    %396 = arith.addf %395, %11 : vector<8x32xf32>
    %397 = arith.mulf %383, %396 : vector<8x32xf32>
    %398 = arith.addf %394, %397 : vector<8x32xf32>
    %399 = math.tanh %398 : vector<8x32xf32>
    %400 = arith.subf %374, %399 : vector<8x32xf32>
    %401 = arith.mulf %392, %400 : vector<8x32xf32>
    %402 = arith.addf %399, %401 : vector<8x32xf32>
    %403 = vector.extract_strided_slice %21 {offsets = [0, 13, 0], sizes = [8, 1, 32], strides = [1, 1, 1]} : vector<8x16x32xf32> to vector<8x1x32xf32>
    %404 = vector.shape_cast %403 : vector<8x1x32xf32> to vector<8x32xf32>
    %cst_99 = arith.constant dense<0.000000e+00> : vector<8x32xf32>
    %405 = tpu.matmul %402, %4, %cst_99 {dimension_numbers = #tpu.dot_dimension_numbers<[1], [0], [0], [1], [0, 0, 1, 1], [], []>} : vector<8x32xf32>, vector<32x32xf32>, vector<8x32xf32> -> vector<8x32xf32>
    %406 = arith.addf %404, %405 : vector<8x32xf32>
    %407 = arith.negf %406 : vector<8x32xf32>
    %408 = math.exp %407 : vector<8x32xf32>
    %cst_100 = arith.constant 1.000000e+00 : f32
    %409 = vector.broadcast %cst_100 : f32 to vector<8x32xf32>
    %410 = arith.addf %409, %408 : vector<8x32xf32>
    %411 = arith.divf %409, %410 : vector<8x32xf32>
    %412 = vector.extract_strided_slice %29 {offsets = [0, 13, 0], sizes = [8, 1, 32], strides = [1, 1, 1]} : vector<8x16x32xf32> to vector<8x1x32xf32>
    %413 = vector.shape_cast %412 : vector<8x1x32xf32> to vector<8x32xf32>
    %cst_101 = arith.constant dense<0.000000e+00> : vector<8x32xf32>
    %414 = tpu.matmul %402, %6, %cst_101 {dimension_numbers = #tpu.dot_dimension_numbers<[1], [0], [0], [1], [0, 0, 1, 1], [], []>} : vector<8x32xf32>, vector<32x32xf32>, vector<8x32xf32> -> vector<8x32xf32>
    %415 = arith.addf %413, %414 : vector<8x32xf32>
    %416 = arith.negf %415 : vector<8x32xf32>
    %417 = math.exp %416 : vector<8x32xf32>
    %cst_102 = arith.constant 1.000000e+00 : f32
    %418 = vector.broadcast %cst_102 : f32 to vector<8x32xf32>
    %419 = arith.addf %418, %417 : vector<8x32xf32>
    %420 = arith.divf %418, %419 : vector<8x32xf32>
    %421 = vector.extract_strided_slice %37 {offsets = [0, 13, 0], sizes = [8, 1, 32], strides = [1, 1, 1]} : vector<8x16x32xf32> to vector<8x1x32xf32>
    %422 = vector.shape_cast %421 : vector<8x1x32xf32> to vector<8x32xf32>
    %cst_103 = arith.constant dense<0.000000e+00> : vector<8x32xf32>
    %423 = tpu.matmul %402, %8, %cst_103 {dimension_numbers = #tpu.dot_dimension_numbers<[1], [0], [0], [1], [0, 0, 1, 1], [], []>} : vector<8x32xf32>, vector<32x32xf32>, vector<8x32xf32> -> vector<8x32xf32>
    %424 = arith.addf %423, %11 : vector<8x32xf32>
    %425 = arith.mulf %411, %424 : vector<8x32xf32>
    %426 = arith.addf %422, %425 : vector<8x32xf32>
    %427 = math.tanh %426 : vector<8x32xf32>
    %428 = arith.subf %402, %427 : vector<8x32xf32>
    %429 = arith.mulf %420, %428 : vector<8x32xf32>
    %430 = arith.addf %427, %429 : vector<8x32xf32>
    %431 = vector.extract_strided_slice %21 {offsets = [0, 14, 0], sizes = [8, 1, 32], strides = [1, 1, 1]} : vector<8x16x32xf32> to vector<8x1x32xf32>
    %432 = vector.shape_cast %431 : vector<8x1x32xf32> to vector<8x32xf32>
    %cst_104 = arith.constant dense<0.000000e+00> : vector<8x32xf32>
    %433 = tpu.matmul %430, %4, %cst_104 {dimension_numbers = #tpu.dot_dimension_numbers<[1], [0], [0], [1], [0, 0, 1, 1], [], []>} : vector<8x32xf32>, vector<32x32xf32>, vector<8x32xf32> -> vector<8x32xf32>
    %434 = arith.addf %432, %433 : vector<8x32xf32>
    %435 = arith.negf %434 : vector<8x32xf32>
    %436 = math.exp %435 : vector<8x32xf32>
    %cst_105 = arith.constant 1.000000e+00 : f32
    %437 = vector.broadcast %cst_105 : f32 to vector<8x32xf32>
    %438 = arith.addf %437, %436 : vector<8x32xf32>
    %439 = arith.divf %437, %438 : vector<8x32xf32>
    %440 = vector.extract_strided_slice %29 {offsets = [0, 14, 0], sizes = [8, 1, 32], strides = [1, 1, 1]} : vector<8x16x32xf32> to vector<8x1x32xf32>
    %441 = vector.shape_cast %440 : vector<8x1x32xf32> to vector<8x32xf32>
    %cst_106 = arith.constant dense<0.000000e+00> : vector<8x32xf32>
    %442 = tpu.matmul %430, %6, %cst_106 {dimension_numbers = #tpu.dot_dimension_numbers<[1], [0], [0], [1], [0, 0, 1, 1], [], []>} : vector<8x32xf32>, vector<32x32xf32>, vector<8x32xf32> -> vector<8x32xf32>
    %443 = arith.addf %441, %442 : vector<8x32xf32>
    %444 = arith.negf %443 : vector<8x32xf32>
    %445 = math.exp %444 : vector<8x32xf32>
    %cst_107 = arith.constant 1.000000e+00 : f32
    %446 = vector.broadcast %cst_107 : f32 to vector<8x32xf32>
    %447 = arith.addf %446, %445 : vector<8x32xf32>
    %448 = arith.divf %446, %447 : vector<8x32xf32>
    %449 = vector.extract_strided_slice %37 {offsets = [0, 14, 0], sizes = [8, 1, 32], strides = [1, 1, 1]} : vector<8x16x32xf32> to vector<8x1x32xf32>
    %450 = vector.shape_cast %449 : vector<8x1x32xf32> to vector<8x32xf32>
    %cst_108 = arith.constant dense<0.000000e+00> : vector<8x32xf32>
    %451 = tpu.matmul %430, %8, %cst_108 {dimension_numbers = #tpu.dot_dimension_numbers<[1], [0], [0], [1], [0, 0, 1, 1], [], []>} : vector<8x32xf32>, vector<32x32xf32>, vector<8x32xf32> -> vector<8x32xf32>
    %452 = arith.addf %451, %11 : vector<8x32xf32>
    %453 = arith.mulf %439, %452 : vector<8x32xf32>
    %454 = arith.addf %450, %453 : vector<8x32xf32>
    %455 = math.tanh %454 : vector<8x32xf32>
    %456 = arith.subf %430, %455 : vector<8x32xf32>
    %457 = arith.mulf %448, %456 : vector<8x32xf32>
    %458 = arith.addf %455, %457 : vector<8x32xf32>
    %459 = vector.extract_strided_slice %21 {offsets = [0, 15, 0], sizes = [8, 1, 32], strides = [1, 1, 1]} : vector<8x16x32xf32> to vector<8x1x32xf32>
    %460 = vector.shape_cast %459 : vector<8x1x32xf32> to vector<8x32xf32>
    %cst_109 = arith.constant dense<0.000000e+00> : vector<8x32xf32>
    %461 = tpu.matmul %458, %4, %cst_109 {dimension_numbers = #tpu.dot_dimension_numbers<[1], [0], [0], [1], [0, 0, 1, 1], [], []>} : vector<8x32xf32>, vector<32x32xf32>, vector<8x32xf32> -> vector<8x32xf32>
    %462 = arith.addf %460, %461 : vector<8x32xf32>
    %463 = arith.negf %462 : vector<8x32xf32>
    %464 = math.exp %463 : vector<8x32xf32>
    %cst_110 = arith.constant 1.000000e+00 : f32
    %465 = vector.broadcast %cst_110 : f32 to vector<8x32xf32>
    %466 = arith.addf %465, %464 : vector<8x32xf32>
    %467 = arith.divf %465, %466 : vector<8x32xf32>
    %468 = vector.extract_strided_slice %29 {offsets = [0, 15, 0], sizes = [8, 1, 32], strides = [1, 1, 1]} : vector<8x16x32xf32> to vector<8x1x32xf32>
    %469 = vector.shape_cast %468 : vector<8x1x32xf32> to vector<8x32xf32>
    %cst_111 = arith.constant dense<0.000000e+00> : vector<8x32xf32>
    %470 = tpu.matmul %458, %6, %cst_111 {dimension_numbers = #tpu.dot_dimension_numbers<[1], [0], [0], [1], [0, 0, 1, 1], [], []>} : vector<8x32xf32>, vector<32x32xf32>, vector<8x32xf32> -> vector<8x32xf32>
    %471 = arith.addf %469, %470 : vector<8x32xf32>
    %472 = arith.negf %471 : vector<8x32xf32>
    %473 = math.exp %472 : vector<8x32xf32>
    %cst_112 = arith.constant 1.000000e+00 : f32
    %474 = vector.broadcast %cst_112 : f32 to vector<8x32xf32>
    %475 = arith.addf %474, %473 : vector<8x32xf32>
    %476 = arith.divf %474, %475 : vector<8x32xf32>
    %477 = vector.extract_strided_slice %37 {offsets = [0, 15, 0], sizes = [8, 1, 32], strides = [1, 1, 1]} : vector<8x16x32xf32> to vector<8x1x32xf32>
    %478 = vector.shape_cast %477 : vector<8x1x32xf32> to vector<8x32xf32>
    %cst_113 = arith.constant dense<0.000000e+00> : vector<8x32xf32>
    %479 = tpu.matmul %458, %8, %cst_113 {dimension_numbers = #tpu.dot_dimension_numbers<[1], [0], [0], [1], [0, 0, 1, 1], [], []>} : vector<8x32xf32>, vector<32x32xf32>, vector<8x32xf32> -> vector<8x32xf32>
    %480 = arith.addf %479, %11 : vector<8x32xf32>
    %481 = arith.mulf %467, %480 : vector<8x32xf32>
    %482 = arith.addf %478, %481 : vector<8x32xf32>
    %483 = math.tanh %482 : vector<8x32xf32>
    %484 = arith.subf %458, %483 : vector<8x32xf32>
    %485 = arith.mulf %476, %484 : vector<8x32xf32>
    %486 = arith.addf %483, %485 : vector<8x32xf32>
    %c0_114 = arith.constant 0 : index
    %c0_115 = arith.constant 0 : index
    %487 = vector.load %arg8[%c0_114, %c0_115] : memref<8x32xf32, #tpu.memory_space<vmem>>, vector<8x32xf32>
    tpu.vector_store %arg8[%c0_114, %c0_115], %486 {strides = array<i32>} : memref<8x32xf32, #tpu.memory_space<vmem>>, vector<8x32xf32>,
    %488 = vector.shape_cast %66 : vector<8x32xf32> to vector<1x8x32xf32>
    %489 = vector.shape_cast %94 : vector<8x32xf32> to vector<1x8x32xf32>
    %490 = vector.shape_cast %122 : vector<8x32xf32> to vector<1x8x32xf32>
    %491 = vector.shape_cast %150 : vector<8x32xf32> to vector<1x8x32xf32>
    %492 = vector.shape_cast %178 : vector<8x32xf32> to vector<1x8x32xf32>
    %493 = vector.shape_cast %206 : vector<8x32xf32> to vector<1x8x32xf32>
    %494 = vector.shape_cast %234 : vector<8x32xf32> to vector<1x8x32xf32>
    %495 = vector.shape_cast %262 : vector<8x32xf32> to vector<1x8x32xf32>
    %496 = vector.shape_cast %290 : vector<8x32xf32> to vector<1x8x32xf32>
    %497 = vector.shape_cast %318 : vector<8x32xf32> to vector<1x8x32xf32>
    %498 = vector.shape_cast %346 : vector<8x32xf32> to vector<1x8x32xf32>
    %499 = vector.shape_cast %374 : vector<8x32xf32> to vector<1x8x32xf32>
    %500 = vector.shape_cast %402 : vector<8x32xf32> to vector<1x8x32xf32>
    %501 = vector.shape_cast %430 : vector<8x32xf32> to vector<1x8x32xf32>
    %502 = vector.shape_cast %458 : vector<8x32xf32> to vector<1x8x32xf32>
    %503 = vector.shape_cast %486 : vector<8x32xf32> to vector<1x8x32xf32>
    %504 = tpu.concatenate %488, %489, %490, %491, %492, %493, %494, %495, %496, %497, %498, %499, %500, %501, %502, %503 in 0 : vector<1x8x32xf32>, vector<1x8x32xf32>, vector<1x8x32xf32>, vector<1x8x32xf32>, vector<1x8x32xf32>, vector<1x8x32xf32>, vector<1x8x32xf32>, vector<1x8x32xf32>, vector<1x8x32xf32>, vector<1x8x32xf32>, vector<1x8x32xf32>, vector<1x8x32xf32>, vector<1x8x32xf32>, vector<1x8x32xf32>, vector<1x8x32xf32>, vector<1x8x32xf32> -> vector<16x8x32xf32>
    %c0_116 = arith.constant 0 : index
    %c0_117 = arith.constant 0 : index
    %c0_118 = arith.constant 0 : index
    %505 = vector.load %arg7[%c0_116, %c0_117, %c0_118] : memref<16x8x32xf32, #tpu.memory_space<vmem>>, vector<16x8x32xf32>
    tpu.vector_store %arg7[%c0_116, %c0_117, %c0_118], %504 {strides = array<i32>} : memref<16x8x32xf32, #tpu.memory_space<vmem>>, vector<16x8x32xf32>,
    return
  }
  func.func @transform_0(%arg0: i32, %arg1: i32) -> (i32, i32, i32) {
    %c0_i32 = arith.constant 0 : i32
    %c0_i32_0 = arith.constant 0 : i32
    return %arg0, %arg1, %c0_i32 : i32, i32, i32
  }
  func.func @transform_1(%arg0: i32, %arg1: i32) -> (i32, i32, i32) {
    %c0_i32 = arith.constant 0 : i32
    %c0_i32_0 = arith.constant 0 : i32
    %c0_i32_1 = arith.constant 0 : i32
    %c0_i32_2 = arith.constant 0 : i32
    return %c0_i32, %c0_i32_0, %c0_i32_1 : i32, i32, i32
  }
  func.func @transform_2(%arg0: i32, %arg1: i32) -> (i32, i32, i32) {
    %c0_i32 = arith.constant 0 : i32
    %c0_i32_0 = arith.constant 0 : i32
    %c0_i32_1 = arith.constant 0 : i32
    %c0_i32_2 = arith.constant 0 : i32
    return %c0_i32, %c0_i32_0, %c0_i32_1 : i32, i32, i32
  }
  func.func @transform_3(%arg0: i32, %arg1: i32) -> (i32, i32, i32) {
    %c0_i32 = arith.constant 0 : i32
    %c0_i32_0 = arith.constant 0 : i32
    %c0_i32_1 = arith.constant 0 : i32
    %c0_i32_2 = arith.constant 0 : i32
    return %c0_i32, %c0_i32_0, %c0_i32_1 : i32, i32, i32
  }
  func.func @transform_4(%arg0: i32, %arg1: i32) -> (i32, i32) {
    %c0_i32 = arith.constant 0 : i32
    %c0_i32_0 = arith.constant 0 : i32
    %c0_i32_1 = arith.constant 0 : i32
    return %c0_i32, %c0_i32_0 : i32, i32
  }
  func.func @transform_5(%arg0: i32, %arg1: i32) -> (i32, i32, i32) {
    %c0_i32 = arith.constant 0 : i32
    %c0_i32_0 = arith.constant 0 : i32
    return %arg1, %arg0, %c0_i32 : i32, i32, i32
  }
}

</mosaic_0001>

<llo_original>
// kernel: tpu_custom_call.1
$region0: #{tpu_custom_call.1}
  #allocation0 [shape = 'u32[]', space=smem, size = 0x4, offset = 0x4, fixed_abs, tag = 'smem constant byte address 0x4 - core index']
  #allocation1 [shape = 'u32[144,128]{1,0:T(1,128)}', space=vmem, size = 0x12000, scoped, tag = 'internal scratch']
  #allocation2 [shape = 'f32[8,32]{1,0:T(8,128)}', space=vmem, size = 0x1000, scoped, tag = 'scratch operand']
  %s0 = inlined_call_operand.hbm [shape: f32[8,16,32], index: 0, kind: input, shape index: {}]
  %s1 = inlined_call_operand.hbm [shape: f32[3,32,32], index: 1, kind: input, shape index: {}]
  %s2 = inlined_call_operand.hbm [shape: f32[3,32,32], index: 2, kind: input, shape index: {}]
  %s3 = inlined_call_operand.vmem [shape: f32[3,1,32], index: 3, kind: input, shape index: {}]
  %s4 = inlined_call_operand.vmem [shape: f32[1,32], index: 4, kind: input, shape index: {}]
  %s5 = inlined_call_operand.hbm [shape: f32[16,8,32], index: 5, kind: output, shape index: {}]
  %s6 = sld [smem:[#allocation0]]
  $region46: #{tpu_custom_call.1} parent=0
    _
  %s8 = ssub.s32 1, %s6
  %s9 = scalar_select 0, %s8, %s6
  $region1: #{tpu_custom_call.1} parent=0
    #allocation3 [shape = 'u8[65536]{0}', space=vmem, size = 0x10000, scoped, tag = 'input window, operand 0, single buffered']
    #allocation4 [shape = 's32[1]{0}', space=sflag, size = 0x4, scoped, tag = 'scoped memory for tpu_custom_call.1']
    #allocation5 [shape = 's32[1]{0}', space=sflag, size = 0x4, scoped, tag = 'scoped memory for tpu_custom_call.1']
    #allocation6 [shape = 'u8[49152]{0}', space=vmem, size = 0xc000, scoped, tag = 'input window, operand 1, single buffered']
    #allocation7 [shape = 's32[1]{0}', space=sflag, size = 0x4, scoped, tag = 'scoped memory for tpu_custom_call.1']
    #allocation8 [shape = 'u8[49152]{0}', space=vmem, size = 0xc000, scoped, tag = 'input window, operand 2, single buffered']
    #allocation9 [shape = 'u8[65536]{0}', space=vmem, size = 0x10000, scoped, tag = 'output window, operand 0, single buffered']
    %10 = vsyncpa [#allocation4], 0
    %11 = vsyncpa [#allocation7], 0
    %12 = vsyncpa [#allocation5], 0
    // Predicated region
    $region2: #{tpu_custom_call.1} parent=1 // pred_check
      _
    $region3: #{tpu_custom_call.1} parent=1 // pred_check_branch
      %14 = sbr.rel (0) target = $region5
    $region4: #{tpu_custom_call.1} parent=1 // pred_region
      %s16 = ssub.s32 2048, 2048
      %17 = vsyncadd [#allocation4], %s16
      %s18 = sshll.u32 [#allocation3], 4
      %s19 = int_to_ptr.vmem [resolvable:$true] %s18
      %24 = dma.hbm_to_vmem [thread:$0]  %s0, 2048, %s19, [#allocation4], 128, 128, 8
    $region5: #{tpu_custom_call.1} parent=1 // pred_fallthru
      _
    // Predicated region
    $region6: #{tpu_custom_call.1} parent=1 // pred_check
      _
    $region7: #{tpu_custom_call.1} parent=1 // pred_check_branch
      %26 = sbr.rel (0) target = $region9
    $region8: #{tpu_custom_call.1} parent=1 // pred_region
      %s28 = ssub.s32 1536, 1536
      %29 = vsyncadd [#allocation7], %s28
      %s30 = sshll.u32 [#allocation6], 4
      %s31 = int_to_ptr.vmem [resolvable:$true] %s30
      %36 = dma.hbm_to_vmem [thread:$0]  %s1, 1536, %s31, [#allocation7], 128, 128, 8
    $region9: #{tpu_custom_call.1} parent=1 // pred_fallthru
      _
    // Predicated region
    $region10: #{tpu_custom_call.1} parent=1 // pred_check
      _
    $region11: #{tpu_custom_call.1} parent=1 // pred_check_branch
      %38 = sbr.rel (0) target = $region13
    $region12: #{tpu_custom_call.1} parent=1 // pred_region
      %s40 = ssub.s32 1536, 1536
      %41 = vsyncadd [#allocation7], %s40
      %s42 = sshll.u32 [#allocation8], 4
      %s43 = int_to_ptr.vmem [resolvable:$true] %s42
      %48 = dma.hbm_to_vmem [thread:$0]  %s2, 1536, %s43, [#allocation7], 128, 128, 8
    $region13: #{tpu_custom_call.1} parent=1 // pred_fallthru
      _
    // Predicated region
    $region14: #{tpu_custom_call.1} parent=1 // pred_check
      _
    $region15: #{tpu_custom_call.1} parent=1 // pred_check_branch
      %50 = sbr.rel (0) target = $region17
    $region16: #{tpu_custom_call.1} parent=1 // pred_region
      _
    $region17: #{tpu_custom_call.1} parent=1 // pred_fallthru
      _
    // Predicated region
    $region18: #{tpu_custom_call.1} parent=1 // pred_check
      _
    $region19: #{tpu_custom_call.1} parent=1 // pred_check_branch
      %52 = sbr.rel (0) target = $region21
    $region20: #{tpu_custom_call.1} parent=1 // pred_region
      _
    $region21: #{tpu_custom_call.1} parent=1 // pred_fallthru
      _
    // Predicated region
    $region22: #{tpu_custom_call.1} parent=1 // pred_check
      _
    $region23: #{tpu_custom_call.1} parent=1 // pred_check_branch
      %54 = sbr.rel (0) target = $region25
    $region24: #{tpu_custom_call.1} parent=1 // pred_region
      %55 = dma.done [#allocation4], 2048
    $region25: #{tpu_custom_call.1} parent=1 // pred_fallthru
      _
    // Predicated region
    $region26: #{tpu_custom_call.1} parent=1 // pred_check
      _
    $region27: #{tpu_custom_call.1} parent=1 // pred_check_branch
      %57 = sbr.rel (0) target = $region29
    $region28: #{tpu_custom_call.1} parent=1 // pred_region
      %58 = dma.done [#allocation7], 1536
    $region29: #{tpu_custom_call.1} parent=1 // pred_fallthru
      _
    // Predicated region
    $region30: #{tpu_custom_call.1} parent=1 // pred_check
      _
    $region31: #{tpu_custom_call.1} parent=1 // pred_check_branch
      %60 = sbr.rel (0) target = $region33
    $region32: #{tpu_custom_call.1} parent=1 // pred_region
      %61 = dma.done [#allocation7], 1536
    $region33: #{tpu_custom_call.1} parent=1 // pred_fallthru
      _
    %p62 = scmp.eq.s32.totalorder 0, 0
    // Predicated region
    $region34: #{tpu_custom_call.1} parent=1 // pred_check
      %p63 = pneg %p62
    $region35: #{tpu_custom_call.1} parent=1 // pred_check_branch
      %65 = sbr.rel (%p63) target = $region37
    $region36: #{tpu_custom_call.1} parent=1 // pred_region
      %vm66 = vcmask 261120
      %67 = vst.msk [vmem:[#allocation2] sm:$0xff] %vm66, 0.0
    $region37: #{tpu_custom_call.1} parent=1 // pred_fallthru
      _
    %v68 = vld [vmem:[#allocation8] sm:$0xff]
    %v69 = vld [vmem:[#allocation8 + $0x8] sm:$0xff]
    %v70 = vld [vmem:[#allocation8 + $0x10] sm:$0xff]
    %v71 = vld [vmem:[#allocation8 + $0x18] sm:$0xff]
    %s72 = scalar_lea.vmem [#allocation8], 32
    %v73 = vld [vmem:[%s72] sm:$0xff]
    %v74 = vld [vmem:[%s72 + $0x8] sm:$0xff]
    %v75 = vld [vmem:[%s72 + $0x10] sm:$0xff]
    %v76 = vld [vmem:[%s72 + $0x18] sm:$0xff]
    %s77 = scalar_lea.vmem [#allocation8], 64
    %v78 = vld [vmem:[%s77] sm:$0xff]
    %v79 = vld [vmem:[%s77 + $0x8] sm:$0xff]
    %v80 = vld [vmem:[%s77 + $0x10] sm:$0xff]
    %v81 = vld [vmem:[%s77 + $0x18] sm:$0xff]
    %v82 = vld [vmem:[%s4] sm:$0x1]
    %v84 = vlaneseq
    %v85 = vshrl.u32 %v84, 7
    %v86 = vsub.s32 0, %v85
    %v87 = vrot.slane %v82, %v86
    %v89 = vld [vmem:[#allocation3] sm:$0xff]
    %v90 = vld [vmem:[#allocation3 + $0x8] sm:$0xff]
    %v91 = vld [vmem:[#allocation3 + $0x10] sm:$0xff]
    %v92 = vld [vmem:[#allocation3 + $0x18] sm:$0xff]
    %v93 = vld [vmem:[#allocation3 + $0x20] sm:$0xff]
    %v94 = vld [vmem:[#allocation3 + $0x28] sm:$0xff]
    %v95 = vld [vmem:[#allocation3 + $0x30] sm:$0xff]
    %v96 = vld [vmem:[#allocation3 + $0x38] sm:$0xff]
    %v97 = vld [vmem:[#allocation3 + $0x40] sm:$0xff]
    %v98 = vld [vmem:[#allocation3 + $0x48] sm:$0xff]
    %v99 = vld [vmem:[#allocation3 + $0x50] sm:$0xff]
    %v100 = vld [vmem:[#allocation3 + $0x58] sm:$0xff]
    %v101 = vld [vmem:[#allocation3 + $0x60] sm:$0xff]
    %v102 = vld [vmem:[#allocation3 + $0x68] sm:$0xff]
    %v103 = vld [vmem:[#allocation3 + $0x70] sm:$0xff]
    %v104 = vld [vmem:[#allocation3 + $0x78] sm:$0xff]
    %v105 = vld [vmem:[#allocation6] sm:$0xff]
    %v106 = vld [vmem:[#allocation6 + $0x8] sm:$0xff]
    %v107 = vld [vmem:[#allocation6 + $0x10] sm:$0xff]
    %v108 = vld [vmem:[#allocation6 + $0x18] sm:$0xff]
    %v109 = vld [vmem:[%s3] sm:$0x1]
    %v111 = vlaneseq
    %v112 = vshrl.u32 %v111, 7
    %v113 = vsub.s32 0, %v112
    %v114 = vrot.slane %v109, %v113
    %vm116 = vcmask 261120
    %v118 = vsel %vm116, %v89, 0
    %v121 = vsel %vm116, %v90, 0
    %v124 = vsel %vm116, %v91, 0
    %v127 = vsel %vm116, %v92, 0
    %v130 = vsel %vm116, %v93, 0
    %v133 = vsel %vm116, %v94, 0
    %v136 = vsel %vm116, %v95, 0
    %v139 = vsel %vm116, %v96, 0
    %v142 = vsel %vm116, %v97, 0
    %v145 = vsel %vm116, %v98, 0
    %v148 = vsel %vm116, %v99, 0
    %v151 = vsel %vm116, %v100, 0
    %v154 = vsel %vm116, %v101, 0
    %v157 = vsel %vm116, %v102, 0
    %v160 = vsel %vm116, %v103, 0
    %v163 = vsel %vm116, %v104, 0
    %165 = vmatprep.subr.mxu0 0.0
    %166 = vmatpush1.msra.mxu0 %v105
    %167 = vmatprep.subr.mxu0 0.0
    %168 = vmatpush1.msra.mxu0 %v106
    %169 = vmatprep.subr.mxu0 0.0
    %170 = vmatpush1.msra.mxu0 %v107
    %171 = vmatprep.subr.mxu0 0.0
    %172 = vmatpush1.msra.mxu0 %v108
    %173 = vmatprep.subr.mxu0 0.0
    %174 = vmatpush1.msra.mxu0 0.0
    %175 = vmatprep.subr.mxu0 0.0
    %176 = vmatpush1.msra.mxu0 0.0
    %177 = vmatprep.subr.mxu0 0.0
    %178 = vmatpush1.msra.mxu0 0.0
    %179 = vmatprep.subr.mxu0 0.0
    %180 = vmatpush1.msra.mxu0 0.0
    %181 = vmatprep.subr.mxu0 0.0
    %182 = vmatpush1.msra.mxu0 0.0
    %183 = vmatprep.subr.mxu0 0.0
    %184 = vmatpush1.msra.mxu0 0.0
    %185 = vmatprep.subr.mxu0 0.0
    %186 = vmatpush1.msra.mxu0 0.0
    %187 = vmatprep.subr.mxu0 0.0
    %188 = vmatpush1.msra.mxu0 0.0
    %189 = vmatprep.subr.mxu0 0.0
    %190 = vmatpush1.msra.mxu0 0.0
    %191 = vmatprep.subr.mxu0 0.0
    %192 = vmatpush1.msra.mxu0 0.0
    %193 = vmatprep.subr.mxu0 0.0
    %194 = vmatpush1.msra.mxu0 0.0
    %195 = vmatprep.subr.mxu0 0.0
    %196 = vmatpush1.msra.mxu0 0.0
    %197 = vmatprep.subr.mxu0 0.0
    %198 = vmatpush1.msra.mxu0 0.0
    %199 = vmatprep.subr.mxu0 0.0
    %200 = vmatpush1.msra.mxu0 0.0
    %201 = vmatprep.subr.mxu0 0.0
    %202 = vmatpush1.msra.mxu0 0.0
    %203 = vmatprep.subr.mxu0 0.0
    %204 = vmatpush1.msra.mxu0 0.0
    %205 = vmatprep.subr.mxu0 0.0
    %206 = vmatpush1.msra.mxu0 0.0
    %207 = vmatprep.subr.mxu0 0.0
    %208 = vmatpush1.msra.mxu0 0.0
    %209 = vmatprep.subr.mxu0 0.0
    %210 = vmatpush1.msra.mxu0 0.0
    %211 = vmatprep.subr.mxu0 0.0
    %212 = vmatpush1.msra.mxu0 0.0
    %213 = vmatprep.subr.mxu0 0.0
    %214 = vmatpush1.msra.mxu0 0.0
    %215 = vmatprep.subr.mxu0 0.0
    %216 = vmatpush1.msra.mxu0 0.0
    %217 = vmatprep.subr.mxu0 0.0
    %218 = vmatpush1.msra.mxu0 0.0
    %219 = vmatprep.subr.mxu0 0.0
    %220 = vmatpush1.msra.mxu0 0.0
    %221 = vmatprep.subr.mxu0 0.0
    %222 = vmatpush1.msra.mxu0 0.0
    %223 = vmatprep.subr.mxu0 0.0
    %224 = vmatpush1.msra.mxu0 0.0
    %225 = vmatprep.subr.mxu0 0.0
    %226 = vmatpush1.msra.mxu0 0.0
    %227 = vmatprep.subr.mxu0 0.0
    %228 = vmatpush1.msra.mxu0 0.0
    %229 = vmatprep.mubr.f32.mxu0 0.0
    %230 = vmatmul.mubr.f32.gmra.mrb[0].mxu0 %v118
    %v231 = vpop.f32.mrb[0].mxu0
    %v232 = vadd.f32 %v114, %v231
    %v233 = vpop.f32.mrb[0].mxu0
    %234 = vmatprep.mubr.f32.mxu0 0.0
    %235 = vmatmul.mubr.f32.gmra.mrb[0].mxu0 %v121
    %v236 = vpop.f32.mrb[0].mxu0
    %v237 = vadd.f32 %v114, %v236
    %v238 = vpop.f32.mrb[0].mxu0
    %239 = vmatprep.mubr.f32.mxu0 0.0
    %240 = vmatmul.mubr.f32.gmra.mrb[0].mxu0 %v124
    %v241 = vpop.f32.mrb[0].mxu0
    %v242 = vadd.f32 %v114, %v241
    %v243 = vpop.f32.mrb[0].mxu0
    %244 = vmatprep.mubr.f32.mxu0 0.0
    %245 = vmatmul.mubr.f32.gmra.mrb[0].mxu0 %v127
    %v246 = vpop.f32.mrb[0].mxu0
    %v247 = vadd.f32 %v114, %v246
    %v248 = vpop.f32.mrb[0].mxu0
    %249 = vmatprep.mubr.f32.mxu0 0.0
    %250 = vmatmul.mubr.f32.gmra.mrb[0].mxu0 %v130
    %v251 = vpop.f32.mrb[0].mxu0
    %v252 = vadd.f32 %v114, %v251
    %v253 = vpop.f32.mrb[0].mxu0
    %254 = vmatprep.mubr.f32.mxu0 0.0
    %255 = vmatmul.mubr.f32.gmra.mrb[0].mxu0 %v133
    %v256 = vpop.f32.mrb[0].mxu0
    %v257 = vadd.f32 %v114, %v256
    %v258 = vpop.f32.mrb[0].mxu0
    %259 = vmatprep.mubr.f32.mxu0 0.0
    %260 = vmatmul.mubr.f32.gmra.mrb[0].mxu0 %v136
    %v261 = vpop.f32.mrb[0].mxu0
    %v262 = vadd.f32 %v114, %v261
    %v263 = vpop.f32.mrb[0].mxu0
    %264 = vmatprep.mubr.f32.mxu0 0.0
    %265 = vmatmul.mubr.f32.gmra.mrb[0].mxu0 %v139
    %v266 = vpop.f32.mrb[0].mxu0
    %v267 = vadd.f32 %v114, %v266
    %v268 = vpop.f32.mrb[0].mxu0
    %269 = vmatprep.mubr.f32.mxu0 0.0
    %270 = vmatmul.mubr.f32.gmra.mrb[0].mxu0 %v142
    %v271 = vpop.f32.mrb[0].mxu0
    %v272 = vadd.f32 %v114, %v271
    %v273 = vpop.f32.mrb[0].mxu0
    %274 = vmatprep.mubr.f32.mxu0 0.0
    %275 = vmatmul.mubr.f32.gmra.mrb[0].mxu0 %v145
    %v276 = vpop.f32.mrb[0].mxu0
    %v277 = vadd.f32 %v114, %v276
    %v278 = vpop.f32.mrb[0].mxu0
    %279 = vmatprep.mubr.f32.mxu0 0.0
    %280 = vmatmul.mubr.f32.gmra.mrb[0].mxu0 %v148
    %v281 = vpop.f32.mrb[0].mxu0
    %v282 = vadd.f32 %v114, %v281
    %v283 = vpop.f32.mrb[0].mxu0
    %284 = vmatprep.mubr.f32.mxu0 0.0
    %285 = vmatmul.mubr.f32.gmra.mrb[0].mxu0 %v151
    %v286 = vpop.f32.mrb[0].mxu0
    %v287 = vadd.f32 %v114, %v286
    %v288 = vpop.f32.mrb[0].mxu0
    %289 = vmatprep.mubr.f32.mxu0 0.0
    %290 = vmatmul.mubr.f32.gmra.mrb[0].mxu0 %v154
    %v291 = vpop.f32.mrb[0].mxu0
    %v292 = vadd.f32 %v114, %v291
    %v293 = vpop.f32.mrb[0].mxu0
    %294 = vmatprep.mubr.f32.mxu0 0.0
    %295 = vmatmul.mubr.f32.gmra.mrb[0].mxu0 %v157
    %v296 = vpop.f32.mrb[0].mxu0
    %v297 = vadd.f32 %v114, %v296
    %v298 = vpop.f32.mrb[0].mxu0
    %299 = vmatprep.mubr.f32.mxu0 0.0
    %300 = vmatmul.mubr.f32.gmra.mrb[0].mxu0 %v160
    %v301 = vpop.f32.mrb[0].mxu0
    %v302 = vadd.f32 %v114, %v301
    %v303 = vpop.f32.mrb[0].mxu0
    %304 = vmatprep.mubr.f32.mxu0 0.0
    %305 = vmatmul.mubr.f32.gmra.mrb[0].mxu0 %v163
    %v306 = vpop.f32.mrb[0].mxu0
    %v307 = vadd.f32 %v114, %v306
    %v308 = vpop.f32.mrb[0].mxu0
    %309 = vdwg.mxu0
    %s310 = scalar_lea.vmem [#allocation6], 32
    %v311 = vld [vmem:[%s310] sm:$0xff]
    %v312 = vld [vmem:[%s310 + $0x8] sm:$0xff]
    %v313 = vld [vmem:[%s310 + $0x10] sm:$0xff]
    %v314 = vld [vmem:[%s310 + $0x18] sm:$0xff]
    %s315 = scalar_lea.vmem %s3, 1
    %v316 = vld [vmem:[%s315] sm:$0x1]
    %v318 = vlaneseq
    %v319 = vshrl.u32 %v318, 7
    %v320 = vsub.s32 0, %v319
    %v321 = vrot.slane %v316, %v320
    %323 = vmatprep.subr.mxu0 0.0
    %324 = vmatpush1.msra.mxu0 %v311
    %325 = vmatprep.subr.mxu0 0.0
    %326 = vmatpush1.msra.mxu0 %v312
    %327 = vmatprep.subr.mxu0 0.0
    %328 = vmatpush1.msra.mxu0 %v313
    %329 = vmatprep.subr.mxu0 0.0
    %330 = vmatpush1.msra.mxu0 %v314
    %331 = vmatprep.subr.mxu0 0.0
    %332 = vmatpush1.msra.mxu0 0.0
    %333 = vmatprep.subr.mxu0 0.0
    %334 = vmatpush1.msra.mxu0 0.0
    %335 = vmatprep.subr.mxu0 0.0
    %336 = vmatpush1.msra.mxu0 0.0
    %337 = vmatprep.subr.mxu0 0.0
    %338 = vmatpush1.msra.mxu0 0.0
    %339 = vmatprep.subr.mxu0 0.0
    %340 = vmatpush1.msra.mxu0 0.0
    %341 = vmatprep.subr.mxu0 0.0
    %342 = vmatpush1.msra.mxu0 0.0
    %343 = vmatprep.subr.mxu0 0.0
    %344 = vmatpush1.msra.mxu0 0.0
    %345 = vmatprep.subr.mxu0 0.0
    %346 = vmatpush1.msra.mxu0 0.0
    %347 = vmatprep.subr.mxu0 0.0
    %348 = vmatpush1.msra.mxu0 0.0
    %349 = vmatprep.subr.mxu0 0.0
    %350 = vmatpush1.msra.mxu0 0.0
    %351 = vmatprep.subr.mxu0 0.0
    %352 = vmatpush1.msra.mxu0 0.0
    %353 = vmatprep.subr.mxu0 0.0
    %354 = vmatpush1.msra.mxu0 0.0
    %355 = vmatprep.subr.mxu0 0.0
    %356 = vmatpush1.msra.mxu0 0.0
    %357 = vmatprep.subr.mxu0 0.0
    %358 = vmatpush1.msra.mxu0 0.0
    %359 = vmatprep.subr.mxu0 0.0
    %360 = vmatpush1.msra.mxu0 0.0
    %361 = vmatprep.subr.mxu0 0.0
    %362 = vmatpush1.msra.mxu0 0.0
    %363 = vmatprep.subr.mxu0 0.0
    %364 = vmatpush1.msra.mxu0 0.0
    %365 = vmatprep.subr.mxu0 0.0
    %366 = vmatpush1.msra.mxu0 0.0
    %367 = vmatprep.subr.mxu0 0.0
    %368 = vmatpush1.msra.mxu0 0.0
    %369 = vmatprep.subr.mxu0 0.0
    %370 = vmatpush1.msra.mxu0 0.0
    %371 = vmatprep.subr.mxu0 0.0
    %372 = vmatpush1.msra.mxu0 0.0
    %373 = vmatprep.subr.mxu0 0.0
    %374 = vmatpush1.msra.mxu0 0.0
    %375 = vmatprep.subr.mxu0 0.0
    %376 = vmatpush1.msra.mxu0 0.0
    %377 = vmatprep.subr.mxu0 0.0
    %378 = vmatpush1.msra.mxu0 0.0
    %379 = vmatprep.subr.mxu0 0.0
    %380 = vmatpush1.msra.mxu0 0.0
    %381 = vmatprep.subr.mxu0 0.0
    %382 = vmatpush1.msra.mxu0 0.0
    %383 = vmatprep.subr.mxu0 0.0
    %384 = vmatpush1.msra.mxu0 0.0
    %385 = vmatprep.subr.mxu0 0.0
    %386 = vmatpush1.msra.mxu0 0.0
    %387 = vmatprep.mubr.f32.mxu0 0.0
    %388 = vmatmul.mubr.f32.gmra.mrb[0].mxu0 %v118
    %v389 = vpop.f32.mrb[0].mxu0
    %v390 = vadd.f32 %v321, %v389
    %v391 = vpop.f32.mrb[0].mxu0
    %392 = vmatprep.mubr.f32.mxu0 0.0
    %393 = vmatmul.mubr.f32.gmra.mrb[0].mxu0 %v121
    %v394 = vpop.f32.mrb[0].mxu0
    %v395 = vadd.f32 %v321, %v394
    %v396 = vpop.f32.mrb[0].mxu0
    %397 = vmatprep.mubr.f32.mxu0 0.0
    %398 = vmatmul.mubr.f32.gmra.mrb[0].mxu0 %v124
    %v399 = vpop.f32.mrb[0].mxu0
    %v400 = vadd.f32 %v321, %v399
    %v401 = vpop.f32.mrb[0].mxu0
    %402 = vmatprep.mubr.f32.mxu0 0.0
    %403 = vmatmul.mubr.f32.gmra.mrb[0].mxu0 %v127
    %v404 = vpop.f32.mrb[0].mxu0
    %v405 = vadd.f32 %v321, %v404
    %v406 = vpop.f32.mrb[0].mxu0
    %407 = vmatprep.mubr.f32.mxu0 0.0
    %408 = vmatmul.mubr.f32.gmra.mrb[0].mxu0 %v130
    %v409 = vpop.f32.mrb[0].mxu0
    %v410 = vadd.f32 %v321, %v409
    %v411 = vpop.f32.mrb[0].mxu0
    %412 = vmatprep.mubr.f32.mxu0 0.0
    %413 = vmatmul.mubr.f32.gmra.mrb[0].mxu0 %v133
    %v414 = vpop.f32.mrb[0].mxu0
    %v415 = vadd.f32 %v321, %v414
    %v416 = vpop.f32.mrb[0].mxu0
    %417 = vmatprep.mubr.f32.mxu0 0.0
    %418 = vmatmul.mubr.f32.gmra.mrb[0].mxu0 %v136
    %v419 = vpop.f32.mrb[0].mxu0
    %v420 = vadd.f32 %v321, %v419
    %v421 = vpop.f32.mrb[0].mxu0
    %422 = vmatprep.mubr.f32.mxu0 0.0
    %423 = vmatmul.mubr.f32.gmra.mrb[0].mxu0 %v139
    %v424 = vpop.f32.mrb[0].mxu0
    %v425 = vadd.f32 %v321, %v424
    %v426 = vpop.f32.mrb[0].mxu0
    %427 = vmatprep.mubr.f32.mxu0 0.0
    %428 = vmatmul.mubr.f32.gmra.mrb[0].mxu0 %v142
    %v429 = vpop.f32.mrb[0].mxu0
    %v430 = vadd.f32 %v321, %v429
    %v431 = vpop.f32.mrb[0].mxu0
    %432 = vmatprep.mubr.f32.mxu0 0.0
    %433 = vmatmul.mubr.f32.gmra.mrb[0].mxu0 %v145
    %v434 = vpop.f32.mrb[0].mxu0
    %v435 = vadd.f32 %v321, %v434
    %v436 = vpop.f32.mrb[0].mxu0
    %437 = vmatprep.mubr.f32.mxu0 0.0
    %438 = vmatmul.mubr.f32.gmra.mrb[0].mxu0 %v148
    %v439 = vpop.f32.mrb[0].mxu0
    %v440 = vadd.f32 %v321, %v439
    %v441 = vpop.f32.mrb[0].mxu0
    %442 = vmatprep.mubr.f32.mxu0 0.0
    %443 = vmatmul.mubr.f32.gmra.mrb[0].mxu0 %v151
    %v444 = vpop.f32.mrb[0].mxu0
    %v445 = vadd.f32 %v321, %v444
    %v446 = vpop.f32.mrb[0].mxu0
    %447 = vmatprep.mubr.f32.mxu0 0.0
    %448 = vmatmul.mubr.f32.gmra.mrb[0].mxu0 %v154
    %v449 = vpop.f32.mrb[0].mxu0
    %v450 = vadd.f32 %v321, %v449
    %v451 = vpop.f32.mrb[0].mxu0
    %452 = vmatprep.mubr.f32.mxu0 0.0
    %453 = vmatmul.mubr.f32.gmra.mrb[0].mxu0 %v157
    %v454 = vpop.f32.mrb[0].mxu0
    %v455 = vadd.f32 %v321, %v454
    %v456 = vpop.f32.mrb[0].mxu0
    %457 = vmatprep.mubr.f32.mxu0 0.0
    %458 = vmatmul.mubr.f32.gmra.mrb[0].mxu0 %v160
    %v459 = vpop.f32.mrb[0].mxu0
    %v460 = vadd.f32 %v321, %v459
    %v461 = vpop.f32.mrb[0].mxu0
    %462 = vmatprep.mubr.f32.mxu0 0.0
    %463 = vmatmul.mubr.f32.gmra.mrb[0].mxu0 %v163
    %v464 = vpop.f32.mrb[0].mxu0
    %v465 = vadd.f32 %v321, %v464
    %v466 = vpop.f32.mrb[0].mxu0
    %467 = vdwg.mxu0
    %s468 = scalar_lea.vmem [#allocation6], 64
    %v469 = vld [vmem:[%s468] sm:$0xff]
    %v470 = vld [vmem:[%s468 + $0x8] sm:$0xff]
    %v471 = vld [vmem:[%s468 + $0x10] sm:$0xff]
    %v472 = vld [vmem:[%s468 + $0x18] sm:$0xff]
    %s473 = scalar_lea.vmem %s3, 2
    %v474 = vld [vmem:[%s473] sm:$0x1]
    %v476 = vlaneseq
    %v477 = vshrl.u32 %v476, 7
    %v478 = vsub.s32 0, %v477
    %v479 = vrot.slane %v474, %v478
    %481 = vmatprep.subr.mxu0 0.0
    %482 = vmatpush1.msra.mxu0 %v469
    %483 = vmatprep.subr.mxu0 0.0
    %484 = vmatpush1.msra.mxu0 %v470
    %485 = vmatprep.subr.mxu0 0.0
    %486 = vmatpush1.msra.mxu0 %v471
    %487 = vmatprep.subr.mxu0 0.0
    %488 = vmatpush1.msra.mxu0 %v472
    %489 = vmatprep.subr.mxu0 0.0
    %490 = vmatpush1.msra.mxu0 0.0
    %491 = vmatprep.subr.mxu0 0.0
    %492 = vmatpush1.msra.mxu0 0.0
    %493 = vmatprep.subr.mxu0 0.0
    %494 = vmatpush1.msra.mxu0 0.0
    %495 = vmatprep.subr.mxu0 0.0
    %496 = vmatpush1.msra.mxu0 0.0
    %497 = vmatprep.subr.mxu0 0.0
    %498 = vmatpush1.msra.mxu0 0.0
    %499 = vmatprep.subr.mxu0 0.0
    %500 = vmatpush1.msra.mxu0 0.0
    %501 = vmatprep.subr.mxu0 0.0
    %502 = vmatpush1.msra.mxu0 0.0
    %503 = vmatprep.subr.mxu0 0.0
    %504 = vmatpush1.msra.mxu0 0.0
    %505 = vmatprep.subr.mxu0 0.0
    %506 = vmatpush1.msra.mxu0 0.0
    %507 = vmatprep.subr.mxu0 0.0
    %508 = vmatpush1.msra.mxu0 0.0
    %509 = vmatprep.subr.mxu0 0.0
    %510 = vmatpush1.msra.mxu0 0.0
    %511 = vmatprep.subr.mxu0 0.0
    %512 = vmatpush1.msra.mxu0 0.0
    %513 = vmatprep.subr.mxu0 0.0
    %514 = vmatpush1.msra.mxu0 0.0
    %515 = vmatprep.subr.mxu0 0.0
    %516 = vmatpush1.msra.mxu0 0.0
    %517 = vmatprep.subr.mxu0 0.0
    %518 = vmatpush1.msra.mxu0 0.0
    %519 = vmatprep.subr.mxu0 0.0
    %520 = vmatpush1.msra.mxu0 0.0
    %521 = vmatprep.subr.mxu0 0.0
    %522 = vmatpush1.msra.mxu0 0.0
    %523 = vmatprep.subr.mxu0 0.0
    %524 = vmatpush1.msra.mxu0 0.0
    %525 = vmatprep.subr.mxu0 0.0
    %526 = vmatpush1.msra.mxu0 0.0
    %527 = vmatprep.subr.mxu0 0.0
    %528 = vmatpush1.msra.mxu0 0.0
    %529 = vmatprep.subr.mxu0 0.0
    %530 = vmatpush1.msra.mxu0 0.0
    %531 = vmatprep.subr.mxu0 0.0
    %532 = vmatpush1.msra.mxu0 0.0
    %533 = vmatprep.subr.mxu0 0.0
    %534 = vmatpush1.msra.mxu0 0.0
    %535 = vmatprep.subr.mxu0 0.0
    %536 = vmatpush1.msra.mxu0 0.0
    %537 = vmatprep.subr.mxu0 0.0
    %538 = vmatpush1.msra.mxu0 0.0
    %539 = vmatprep.subr.mxu0 0.0
    %540 = vmatpush1.msra.mxu0 0.0
    %541 = vmatprep.subr.mxu0 0.0
    %542 = vmatpush1.msra.mxu0 0.0
    %543 = vmatprep.subr.mxu0 0.0
    %544 = vmatpush1.msra.mxu0 0.0
    %545 = vmatprep.mubr.f32.mxu0 0.0
    %546 = vmatmul.mubr.f32.gmra.mrb[0].mxu0 %v118
    %v547 = vpop.f32.mrb[0].mxu0
    %v548 = vadd.f32 %v479, %v547
    %v549 = vpop.f32.mrb[0].mxu0
    %550 = vmatprep.mubr.f32.mxu0 0.0
    %551 = vmatmul.mubr.f32.gmra.mrb[0].mxu0 %v121
    %v552 = vpop.f32.mrb[0].mxu0
    %v553 = vadd.f32 %v479, %v552
    %v554 = vpop.f32.mrb[0].mxu0
    %555 = vmatprep.mubr.f32.mxu0 0.0
    %556 = vmatmul.mubr.f32.gmra.mrb[0].mxu0 %v124
    %v557 = vpop.f32.mrb[0].mxu0
    %v558 = vadd.f32 %v479, %v557
    %v559 = vpop.f32.mrb[0].mxu0
    %560 = vmatprep.mubr.f32.mxu0 0.0
    %561 = vmatmul.mubr.f32.gmra.mrb[0].mxu0 %v127
    %v562 = vpop.f32.mrb[0].mxu0
    %v563 = vadd.f32 %v479, %v562
    %v564 = vpop.f32.mrb[0].mxu0
    %565 = vmatprep.mubr.f32.mxu0 0.0
    %566 = vmatmul.mubr.f32.gmra.mrb[0].mxu0 %v130
    %v567 = vpop.f32.mrb[0].mxu0
    %v568 = vadd.f32 %v479, %v567
    %v569 = vpop.f32.mrb[0].mxu0
    %570 = vmatprep.mubr.f32.mxu0 0.0
    %571 = vmatmul.mubr.f32.gmra.mrb[0].mxu0 %v133
    %v572 = vpop.f32.mrb[0].mxu0
    %v573 = vadd.f32 %v479, %v572
    %v574 = vpop.f32.mrb[0].mxu0
    %575 = vmatprep.mubr.f32.mxu0 0.0
    %576 = vmatmul.mubr.f32.gmra.mrb[0].mxu0 %v136
    %v577 = vpop.f32.mrb[0].mxu0
    %v578 = vadd.f32 %v479, %v577
    %v579 = vpop.f32.mrb[0].mxu0
    %580 = vmatprep.mubr.f32.mxu0 0.0
    %581 = vmatmul.mubr.f32.gmra.mrb[0].mxu0 %v139
    %v582 = vpop.f32.mrb[0].mxu0
    %v583 = vadd.f32 %v479, %v582
    %v584 = vpop.f32.mrb[0].mxu0
    %585 = vmatprep.mubr.f32.mxu0 0.0
    %586 = vmatmul.mubr.f32.gmra.mrb[0].mxu0 %v142
    %v587 = vpop.f32.mrb[0].mxu0
    %v588 = vadd.f32 %v479, %v587
    %v589 = vpop.f32.mrb[0].mxu0
    %590 = vmatprep.mubr.f32.mxu0 0.0
    %591 = vmatmul.mubr.f32.gmra.mrb[0].mxu0 %v145
    %v592 = vpop.f32.mrb[0].mxu0
    %v593 = vadd.f32 %v479, %v592
    %v594 = vpop.f32.mrb[0].mxu0
    %595 = vmatprep.mubr.f32.mxu0 0.0
    %596 = vmatmul.mubr.f32.gmra.mrb[0].mxu0 %v148
    %v597 = vpop.f32.mrb[0].mxu0
    %v598 = vadd.f32 %v479, %v597
    %v599 = vpop.f32.mrb[0].mxu0
    %600 = vmatprep.mubr.f32.mxu0 0.0
    %601 = vmatmul.mubr.f32.gmra.mrb[0].mxu0 %v151
    %v602 = vpop.f32.mrb[0].mxu0
    %v603 = vadd.f32 %v479, %v602
    %v604 = vpop.f32.mrb[0].mxu0
    %605 = vmatprep.mubr.f32.mxu0 0.0
    %606 = vmatmul.mubr.f32.gmra.mrb[0].mxu0 %v154
    %v607 = vpop.f32.mrb[0].mxu0
    %v608 = vadd.f32 %v479, %v607
    %v609 = vpop.f32.mrb[0].mxu0
    %610 = vmatprep.mubr.f32.mxu0 0.0
    %611 = vmatmul.mubr.f32.gmra.mrb[0].mxu0 %v157
    %v612 = vpop.f32.mrb[0].mxu0
    %v613 = vadd.f32 %v479, %v612
    %v614 = vpop.f32.mrb[0].mxu0
    %615 = vmatprep.mubr.f32.mxu0 0.0
    %616 = vmatmul.mubr.f32.gmra.mrb[0].mxu0 %v160
    %v617 = vpop.f32.mrb[0].mxu0
    %v618 = vadd.f32 %v479, %v617
    %v619 = vpop.f32.mrb[0].mxu0
    %620 = vmatprep.mubr.f32.mxu0 0.0
    %621 = vmatmul.mubr.f32.gmra.mrb[0].mxu0 %v163
    %v622 = vpop.f32.mrb[0].mxu0
    %v623 = vadd.f32 %v479, %v622
    %v624 = vpop.f32.mrb[0].mxu0
    %625 = vdwg.mxu0
    %v626 = vld [vmem:[#allocation2] sm:$0xff]
    %v628 = vsel %vm116, %v626, 0
    %630 = vmatprep.subr.mxu0 0.0
    %631 = vmatpush1.msra.mxu0 %v68
    %632 = vmatprep.subr.mxu0 0.0
    %633 = vmatpush1.msra.mxu0 %v69
    %634 = vmatprep.subr.mxu0 0.0
    %635 = vmatpush1.msra.mxu0 %v70
    %636 = vmatprep.subr.mxu0 0.0
    %637 = vmatpush1.msra.mxu0 %v71
    %638 = vmatprep.subr.mxu0 0.0
    %639 = vmatpush1.msra.mxu0 0.0
    %640 = vmatprep.subr.mxu0 0.0
    %641 = vmatpush1.msra.mxu0 0.0
    %642 = vmatprep.subr.mxu0 0.0
    %643 = vmatpush1.msra.mxu0 0.0
    %644 = vmatprep.subr.mxu0 0.0
    %645 = vmatpush1.msra.mxu0 0.0
    %646 = vmatprep.subr.mxu0 0.0
    %647 = vmatpush1.msra.mxu0 0.0
    %648 = vmatprep.subr.mxu0 0.0
    %649 = vmatpush1.msra.mxu0 0.0
    %650 = vmatprep.subr.mxu0 0.0
    %651 = vmatpush1.msra.mxu0 0.0
    %652 = vmatprep.subr.mxu0 0.0
    %653 = vmatpush1.msra.mxu0 0.0
    %654 = vmatprep.subr.mxu0 0.0
    %655 = vmatpush1.msra.mxu0 0.0
    %656 = vmatprep.subr.mxu0 0.0
    %657 = vmatpush1.msra.mxu0 0.0
    %658 = vmatprep.subr.mxu0 0.0
    %659 = vmatpush1.msra.mxu0 0.0
    %660 = vmatprep.subr.mxu0 0.0
    %661 = vmatpush1.msra.mxu0 0.0
    %662 = vmatprep.subr.mxu0 0.0
    %663 = vmatpush1.msra.mxu0 0.0
    %664 = vmatprep.subr.mxu0 0.0
    %665 = vmatpush1.msra.mxu0 0.0
    %666 = vmatprep.subr.mxu0 0.0
    %667 = vmatpush1.msra.mxu0 0.0
    %668 = vmatprep.subr.mxu0 0.0
    %669 = vmatpush1.msra.mxu0 0.0
    %670 = vmatprep.subr.mxu0 0.0
    %671 = vmatpush1.msra.mxu0 0.0
    %672 = vmatprep.subr.mxu0 0.0
    %673 = vmatpush1.msra.mxu0 0.0
    %674 = vmatprep.subr.mxu0 0.0
    %675 = vmatpush1.msra.mxu0 0.0
    %676 = vmatprep.subr.mxu0 0.0
    %677 = vmatpush1.msra.mxu0 0.0
    %678 = vmatprep.subr.mxu0 0.0
    %679 = vmatpush1.msra.mxu0 0.0
    %680 = vmatprep.subr.mxu0 0.0
    %681 = vmatpush1.msra.mxu0 0.0
    %682 = vmatprep.subr.mxu0 0.0
    %683 = vmatpush1.msra.mxu0 0.0
    %684 = vmatprep.subr.mxu0 0.0
    %685 = vmatpush1.msra.mxu0 0.0
    %686 = vmatprep.subr.mxu0 0.0
    %687 = vmatpush1.msra.mxu0 0.0
    %688 = vmatprep.subr.mxu0 0.0
    %689 = vmatpush1.msra.mxu0 0.0
    %690 = vmatprep.subr.mxu0 0.0
    %691 = vmatpush1.msra.mxu0 0.0
    %692 = vmatprep.subr.mxu0 0.0
    %693 = vmatpush1.msra.mxu0 0.0
    %694 = vmatprep.mubr.f32.mxu0 0.0
    %695 = vmatmul.mubr.f32.gmra.mrb[0].mxu0 %v628
    %v696 = vpop.f32.mrb[0].mxu0
    %v697 = vadd.f32 0.0, %v696
    %v698 = vpop.f32.mrb[0].mxu0
    %699 = vdwg.mxu0
    %v701 = vrot.slane %v697, 1
    %v702 = vrot.slane %v697, 2
    %v703 = vrot.slane %v697, 3
    %v704 = vrot.slane %v697, 4
    %v705 = vrot.slane %v697, 5
    %v706 = vrot.slane %v697, 6
    %v707 = vrot.slane %v697, 7
    %v716 = vadd.f32 %v232, %v697
    %v717 = vadd.f32 %v242, %v701
    %v718 = vadd.f32 %v252, %v702
    %v719 = vadd.f32 %v262, %v703
    %v720 = vadd.f32 %v272, %v704
    %v721 = vadd.f32 %v282, %v705
    %v722 = vadd.f32 %v292, %v706
    %v723 = vadd.f32 %v302, %v707
    %v724 = vxor.u32 %v716, 2147483648
    %v725 = vxor.u32 %v717, 2147483648
    %v726 = vxor.u32 %v718, 2147483648
    %v727 = vxor.u32 %v719, 2147483648
    %v728 = vxor.u32 %v720, 2147483648
    %v729 = vxor.u32 %v721, 2147483648
    %v730 = vxor.u32 %v722, 2147483648
    %v731 = vxor.u32 %v723, 2147483648
    %v732 = vmul.f32 %v724, 1.442695
    %v733 = vpow.pop %v732
    %v734 = vmul.f32 %v725, 1.442695
    %v735 = vpow.pop %v734
    %v736 = vmul.f32 %v726, 1.442695
    %v737 = vpow.pop %v736
    %v738 = vmul.f32 %v727, 1.442695
    %v739 = vpow.pop %v738
    %v740 = vmul.f32 %v728, 1.442695
    %v741 = vpow.pop %v740
    %v742 = vmul.f32 %v729, 1.442695
    %v743 = vpow.pop %v742
    %v744 = vmul.f32 %v730, 1.442695
    %v745 = vpow.pop %v744
    %v746 = vmul.f32 %v731, 1.442695
    %v747 = vpow.pop %v746
    %v748 = vadd.f32 %v733, 1.0
    %v749 = vadd.f32 %v735, 1.0
    %v750 = vadd.f32 %v737, 1.0
    %v751 = vadd.f32 %v739, 1.0
    %v752 = vadd.f32 %v741, 1.0
    %v753 = vadd.f32 %v743, 1.0
    %v754 = vadd.f32 %v745, 1.0
    %v755 = vadd.f32 %v747, 1.0
    %v756 = vrcp.pop %v748
    %v757 = vmul.f32 1.0, %v756
    %v758 = vrcp.pop %v749
    %v759 = vmul.f32 1.0, %v758
    %v760 = vrcp.pop %v750
    %v761 = vmul.f32 1.0, %v760
    %v762 = vrcp.pop %v751
    %v763 = vmul.f32 1.0, %v762
    %v764 = vrcp.pop %v752
    %v765 = vmul.f32 1.0, %v764
    %v766 = vrcp.pop %v753
    %v767 = vmul.f32 1.0, %v766
    %v768 = vrcp.pop %v754
    %v769 = vmul.f32 1.0, %v768
    %v770 = vrcp.pop %v755
    %v771 = vmul.f32 1.0, %v770
    %772 = vmatprep.subr.mxu0 0.0
    %773 = vmatpush1.msra.mxu0 %v73
    %774 = vmatprep.subr.mxu0 0.0
    %775 = vmatpush1.msra.mxu0 %v74
    %776 = vmatprep.subr.mxu0 0.0
    %777 = vmatpush1.msra.mxu0 %v75
    %778 = vmatprep.subr.mxu0 0.0
    %779 = vmatpush1.msra.mxu0 %v76
    %780 = vmatprep.subr.mxu0 0.0
    %781 = vmatpush1.msra.mxu0 0.0
    %782 = vmatprep.subr.mxu0 0.0
    %783 = vmatpush1.msra.mxu0 0.0
    %784 = vmatprep.subr.mxu0 0.0
    %785 = vmatpush1.msra.mxu0 0.0
    %786 = vmatprep.subr.mxu0 0.0
    %787 = vmatpush1.msra.mxu0 0.0
    %788 = vmatprep.subr.mxu0 0.0
    %789 = vmatpush1.msra.mxu0 0.0
    %790 = vmatprep.subr.mxu0 0.0
    %791 = vmatpush1.msra.mxu0 0.0
    %792 = vmatprep.subr.mxu0 0.0
    %793 = vmatpush1.msra.mxu0 0.0
    %794 = vmatprep.subr.mxu0 0.0
    %795 = vmatpush1.msra.mxu0 0.0
    %796 = vmatprep.subr.mxu0 0.0
    %797 = vmatpush1.msra.mxu0 0.0
    %798 = vmatprep.subr.mxu0 0.0
    %799 = vmatpush1.msra.mxu0 0.0
    %800 = vmatprep.subr.mxu0 0.0
    %801 = vmatpush1.msra.mxu0 0.0
    %802 = vmatprep.subr.mxu0 0.0
    %803 = vmatpush1.msra.mxu0 0.0
    %804 = vmatprep.subr.mxu0 0.0
    %805 = vmatpush1.msra.mxu0 0.0
    %806 = vmatprep.subr.mxu0 0.0
    %807 = vmatpush1.msra.mxu0 0.0
    %808 = vmatprep.subr.mxu0 0.0
    %809 = vmatpush1.msra.mxu0 0.0
    %810 = vmatprep.subr.mxu0 0.0
    %811 = vmatpush1.msra.mxu0 0.0
    %812 = vmatprep.subr.mxu0 0.0
    %813 = vmatpush1.msra.mxu0 0.0
    %814 = vmatprep.subr.mxu0 0.0
    %815 = vmatpush1.msra.mxu0 0.0
    %816 = vmatprep.subr.mxu0 0.0
    %817 = vmatpush1.msra.mxu0 0.0
    %818 = vmatprep.subr.mxu0 0.0
    %819 = vmatpush1.msra.mxu0 0.0
    %820 = vmatprep.subr.mxu0 0.0
    %821 = vmatpush1.msra.mxu0 0.0
    %822 = vmatprep.subr.mxu0 0.0
    %823 = vmatpush1.msra.mxu0 0.0
    %824 = vmatprep.subr.mxu0 0.0
    %825 = vmatpush1.msra.mxu0 0.0
    %826 = vmatprep.subr.mxu0 0.0
    %827 = vmatpush1.msra.mxu0 0.0
    %828 = vmatprep.subr.mxu0 0.0
    %829 = vmatpush1.msra.mxu0 0.0
    %830 = vmatprep.subr.mxu0 0.0
    %831 = vmatpush1.msra.mxu0 0.0
    %832 = vmatprep.subr.mxu0 0.0
    %833 = vmatpush1.msra.mxu0 0.0
    %834 = vmatprep.subr.mxu0 0.0
    %835 = vmatpush1.msra.mxu0 0.0
    %836 = vmatprep.mubr.f32.mxu0 0.0
    %837 = vmatmul.mubr.f32.gmra.mrb[0].mxu0 %v628
    %v838 = vpop.f32.mrb[0].mxu0
    %v839 = vadd.f32 0.0, %v838
    %v840 = vpop.f32.mrb[0].mxu0
    %841 = vdwg.mxu0
    %v843 = vrot.slane %v839, 1
    %v844 = vrot.slane %v839, 2
    %v845 = vrot.slane %v839, 3
    %v846 = vrot.slane %v839, 4
    %v847 = vrot.slane %v839, 5
    %v848 = vrot.slane %v839, 6
    %v849 = vrot.slane %v839, 7
    %v858 = vadd.f32 %v390, %v839
    %v859 = vadd.f32 %v400, %v843
    %v860 = vadd.f32 %v410, %v844
    %v861 = vadd.f32 %v420, %v845
    %v862 = vadd.f32 %v430, %v846
    %v863 = vadd.f32 %v440, %v847
    %v864 = vadd.f32 %v450, %v848
    %v865 = vadd.f32 %v460, %v849
    %v866 = vxor.u32 %v858, 2147483648
    %v867 = vxor.u32 %v859, 2147483648
    %v868 = vxor.u32 %v860, 2147483648
    %v869 = vxor.u32 %v861, 2147483648
    %v870 = vxor.u32 %v862, 2147483648
    %v871 = vxor.u32 %v863, 2147483648
    %v872 = vxor.u32 %v864, 2147483648
    %v873 = vxor.u32 %v865, 2147483648
    %v874 = vmul.f32 %v866, 1.442695
    %v875 = vpow.pop %v874
    %v876 = vmul.f32 %v867, 1.442695
    %v877 = vpow.pop %v876
    %v878 = vmul.f32 %v868, 1.442695
    %v879 = vpow.pop %v878
    %v880 = vmul.f32 %v869, 1.442695
    %v881 = vpow.pop %v880
    %v882 = vmul.f32 %v870, 1.442695
    %v883 = vpow.pop %v882
    %v884 = vmul.f32 %v871, 1.442695
    %v885 = vpow.pop %v884
    %v886 = vmul.f32 %v872, 1.442695
    %v887 = vpow.pop %v886
    %v888 = vmul.f32 %v873, 1.442695
    %v889 = vpow.pop %v888
    %v890 = vadd.f32 %v875, 1.0
    %v891 = vadd.f32 %v877, 1.0
    %v892 = vadd.f32 %v879, 1.0
    %v893 = vadd.f32 %v881, 1.0
    %v894 = vadd.f32 %v883, 1.0
    %v895 = vadd.f32 %v885, 1.0
    %v896 = vadd.f32 %v887, 1.0
    %v897 = vadd.f32 %v889, 1.0
    %v898 = vrcp.pop %v890
    %v899 = vmul.f32 1.0, %v898
    %v900 = vrcp.pop %v891
    %v901 = vmul.f32 1.0, %v900
    %v902 = vrcp.pop %v892
    %v903 = vmul.f32 1.0, %v902
    %v904 = vrcp.pop %v893
    %v905 = vmul.f32 1.0, %v904
    %v906 = vrcp.pop %v894
    %v907 = vmul.f32 1.0, %v906
    %v908 = vrcp.pop %v895
    %v909 = vmul.f32 1.0, %v908
    %v910 = vrcp.pop %v896
    %v911 = vmul.f32 1.0, %v910
    %v912 = vrcp.pop %v897
    %v913 = vmul.f32 1.0, %v912
    %914 = vmatprep.subr.mxu0 0.0
    %915 = vmatpush1.msra.mxu0 %v78
    %916 = vmatprep.subr.mxu0 0.0
    %917 = vmatpush1.msra.mxu0 %v79
    %918 = vmatprep.subr.mxu0 0.0
    %919 = vmatpush1.msra.mxu0 %v80
    %920 = vmatprep.subr.mxu0 0.0
    %921 = vmatpush1.msra.mxu0 %v81
    %922 = vmatprep.subr.mxu0 0.0
    %923 = vmatpush1.msra.mxu0 0.0
    %924 = vmatprep.subr.mxu0 0.0
    %925 = vmatpush1.msra.mxu0 0.0
    %926 = vmatprep.subr.mxu0 0.0
    %927 = vmatpush1.msra.mxu0 0.0
    %928 = vmatprep.subr.mxu0 0.0
    %929 = vmatpush1.msra.mxu0 0.0
    %930 = vmatprep.subr.mxu0 0.0
    %931 = vmatpush1.msra.mxu0 0.0
    %932 = vmatprep.subr.mxu0 0.0
    %933 = vmatpush1.msra.mxu0 0.0
    %934 = vmatprep.subr.mxu0 0.0
    %935 = vmatpush1.msra.mxu0 0.0
    %936 = vmatprep.subr.mxu0 0.0
    %937 = vmatpush1.msra.mxu0 0.0
    %938 = vmatprep.subr.mxu0 0.0
    %939 = vmatpush1.msra.mxu0 0.0
    %940 = vmatprep.subr.mxu0 0.0
    %941 = vmatpush1.msra.mxu0 0.0
    %942 = vmatprep.subr.mxu0 0.0
    %943 = vmatpush1.msra.mxu0 0.0
    %944 = vmatprep.subr.mxu0 0.0
    %945 = vmatpush1.msra.mxu0 0.0
    %946 = vmatprep.subr.mxu0 0.0
    %947 = vmatpush1.msra.mxu0 0.0
    %948 = vmatprep.subr.mxu0 0.0
    %949 = vmatpush1.msra.mxu0 0.0
    %950 = vmatprep.subr.mxu0 0.0
    %951 = vmatpush1.msra.mxu0 0.0
    %952 = vmatprep.subr.mxu0 0.0
    %953 = vmatpush1.msra.mxu0 0.0
    %954 = vmatprep.subr.mxu0 0.0
    %955 = vmatpush1.msra.mxu0 0.0
    %956 = vmatprep.subr.mxu0 0.0
    %957 = vmatpush1.msra.mxu0 0.0
    %958 = vmatprep.subr.mxu0 0.0
    %959 = vmatpush1.msra.mxu0 0.0
    %960 = vmatprep.subr.mxu0 0.0
    %961 = vmatpush1.msra.mxu0 0.0
    %962 = vmatprep.subr.mxu0 0.0
    %963 = vmatpush1.msra.mxu0 0.0
    %964 = vmatprep.subr.mxu0 0.0
    %965 = vmatpush1.msra.mxu0 0.0
    %966 = vmatprep.subr.mxu0 0.0
    %967 = vmatpush1.msra.mxu0 0.0
    %968 = vmatprep.subr.mxu0 0.0
    %969 = vmatpush1.msra.mxu0 0.0
    %970 = vmatprep.subr.mxu0 0.0
    %971 = vmatpush1.msra.mxu0 0.0
    %972 = vmatprep.subr.mxu0 0.0
    %973 = vmatpush1.msra.mxu0 0.0
    %974 = vmatprep.subr.mxu0 0.0
    %975 = vmatpush1.msra.mxu0 0.0
    %976 = vmatprep.subr.mxu0 0.0
    %977 = vmatpush1.msra.mxu0 0.0
    %978 = vmatprep.mubr.f32.mxu0 0.0
    %979 = vmatmul.mubr.f32.gmra.mrb[0].mxu0 %v628
    %v980 = vpop.f32.mrb[0].mxu0
    %v981 = vadd.f32 %v87, %v980
    %v982 = vpop.f32.mrb[0].mxu0
    %983 = vdwg.mxu0
    %v985 = vrot.slane %v981, 1
    %v986 = vrot.slane %v981, 2
    %v987 = vrot.slane %v981, 3
    %v988 = vrot.slane %v981, 4
    %v989 = vrot.slane %v981, 5
    %v990 = vrot.slane %v981, 6
    %v991 = vrot.slane %v981, 7
    %v1000 = vmul.f32 %v757, %v981
    %v1001 = vmul.f32 %v759, %v985
    %v1002 = vmul.f32 %v761, %v986
    %v1003 = vmul.f32 %v763, %v987
    %v1004 = vmul.f32 %v765, %v988
    %v1005 = vmul.f32 %v767, %v989
    %v1006 = vmul.f32 %v769, %v990
    %v1007 = vmul.f32 %v771, %v991
    %v1008 = vadd.f32 %v548, %v1000
    %v1009 = vadd.f32 %v558, %v1001
    %v1010 = vadd.f32 %v568, %v1002
    %v1011 = vadd.f32 %v578, %v1003
    %v1012 = vadd.f32 %v588, %v1004
    %v1013 = vadd.f32 %v598, %v1005
    %v1014 = vadd.f32 %v608, %v1006
    %v1015 = vadd.f32 %v618, %v1007
    %v1016 = vtanh.pop %v1008
    %v1017 = vtanh.pop %v1009
    %v1018 = vtanh.pop %v1010
    %v1019 = vtanh.pop %v1011
    %v1020 = vtanh.pop %v1012
    %v1021 = vtanh.pop %v1013
    %v1022 = vtanh.pop %v1014
    %v1023 = vtanh.pop %v1015
    %v1032 = vrot.slane %v1017, 7
    %vm1033 = vcmask 1041409
    %v1034 = vsel %vm1033, %v1032, %v1016
    %v1035 = vrot.slane %v1018, 6
    %vm1036 = vcmask 1042434
    %v1037 = vsel %vm1036, %v1035, %v1034
    %v1038 = vrot.slane %v1019, 5
    %vm1039 = vcmask 1043459
    %v1040 = vsel %vm1039, %v1038, %v1037
    %v1041 = vrot.slane %v1020, 4
    %vm1042 = vcmask 1044484
    %v1043 = vsel %vm1042, %v1041, %v1040
    %v1044 = vrot.slane %v1021, 3
    %vm1045 = vcmask 1045509
    %v1046 = vsel %vm1045, %v1044, %v1043
    %v1047 = vrot.slane %v1022, 2
    %vm1048 = vcmask 1046534
    %v1049 = vsel %vm1048, %v1047, %v1046
    %v1050 = vrot.slane %v1023, 1
    %vm1051 = vcmask 1047559
    %v1052 = vsel %vm1051, %v1050, %v1049
    %v1054 = vsub.f32 %v626, %v1052
    %v1056 = vrot.slane %v1054, 1
    %v1057 = vrot.slane %v1054, 2
    %v1058 = vrot.slane %v1054, 3
    %v1059 = vrot.slane %v1054, 4
    %v1060 = vrot.slane %v1054, 5
    %v1061 = vrot.slane %v1054, 6
    %v1062 = vrot.slane %v1054, 7
    %v1071 = vmul.f32 %v899, %v1054
    %v1072 = vmul.f32 %v901, %v1056
    %v1073 = vmul.f32 %v903, %v1057
    %v1074 = vmul.f32 %v905, %v1058
    %v1075 = vmul.f32 %v907, %v1059
    %v1076 = vmul.f32 %v909, %v1060
    %v1077 = vmul.f32 %v911, %v1061
    %v1078 = vmul.f32 %v913, %v1062
    %v1079 = vadd.f32 %v1016, %v1071
    %v1080 = vadd.f32 %v1017, %v1072
    %v1081 = vadd.f32 %v1018, %v1073
    %v1082 = vadd.f32 %v1019, %v1074
    %v1083 = vadd.f32 %v1020, %v1075
    %v1084 = vadd.f32 %v1021, %v1076
    %v1085 = vadd.f32 %v1022, %v1077
    %v1086 = vadd.f32 %v1023, %v1078
    %v1095 = vrot.slane %v1080, 7
    %v1096 = vsel %vm1033, %v1095, %v1079
    %v1097 = vrot.slane %v1081, 6
    %v1098 = vsel %vm1036, %v1097, %v1096
    %v1099 = vrot.slane %v1082, 5
    %v1100 = vsel %vm1039, %v1099, %v1098
    %v1101 = vrot.slane %v1083, 4
    %v1102 = vsel %vm1042, %v1101, %v1100
    %v1103 = vrot.slane %v1084, 3
    %v1104 = vsel %vm1045, %v1103, %v1102
    %v1105 = vrot.slane %v1085, 2
    %v1106 = vsel %vm1048, %v1105, %v1104
    %v1107 = vrot.slane %v1086, 1
    %v1108 = vsel %vm1051, %v1107, %v1106
    %v1109 = vsel %vm116, %v1108, 0
    %1111 = vmatprep.subr.mxu0 0.0
    %1112 = vmatpush1.msra.mxu0 %v68
    %1113 = vmatprep.subr.mxu0 0.0
    %1114 = vmatpush1.msra.mxu0 %v69
    %1115 = vmatprep.subr.mxu0 0.0
    %1116 = vmatpush1.msra.mxu0 %v70
    %1117 = vmatprep.subr.mxu0 0.0
    %1118 = vmatpush1.msra.mxu0 %v71
    %1119 = vmatprep.subr.mxu0 0.0
    %1120 = vmatpush1.msra.mxu0 0.0
    %1121 = vmatprep.subr.mxu0 0.0
    %1122 = vmatpush1.msra.mxu0 0.0
    %1123 = vmatprep.subr.mxu0 0.0
    %1124 = vmatpush1.msra.mxu0 0.0
    %1125 = vmatprep.subr.mxu0 0.0
    %1126 = vmatpush1.msra.mxu0 0.0
    %1127 = vmatprep.subr.mxu0 0.0
    %1128 = vmatpush1.msra.mxu0 0.0
    %1129 = vmatprep.subr.mxu0 0.0
    %1130 = vmatpush1.msra.mxu0 0.0
    %1131 = vmatprep.subr.mxu0 0.0
    %1132 = vmatpush1.msra.mxu0 0.0
    %1133 = vmatprep.subr.mxu0 0.0
    %1134 = vmatpush1.msra.mxu0 0.0
    %1135 = vmatprep.subr.mxu0 0.0
    %1136 = vmatpush1.msra.mxu0 0.0
    %1137 = vmatprep.subr.mxu0 0.0
    %1138 = vmatpush1.msra.mxu0 0.0
    %1139 = vmatprep.subr.mxu0 0.0
    %1140 = vmatpush1.msra.mxu0 0.0
    %1141 = vmatprep.subr.mxu0 0.0
    %1142 = vmatpush1.msra.mxu0 0.0
    %1143 = vmatprep.subr.mxu0 0.0
    %1144 = vmatpush1.msra.mxu0 0.0
    %1145 = vmatprep.subr.mxu0 0.0
    %1146 = vmatpush1.msra.mxu0 0.0
    %1147 = vmatprep.subr.mxu0 0.0
    %1148 = vmatpush1.msra.mxu0 0.0
    %1149 = vmatprep.subr.mxu0 0.0
    %1150 = vmatpush1.msra.mxu0 0.0
    %1151 = vmatprep.subr.mxu0 0.0
    %1152 = vmatpush1.msra.mxu0 0.0
    %1153 = vmatprep.subr.mxu0 0.0
    %1154 = vmatpush1.msra.mxu0 0.0
    %1155 = vmatprep.subr.mxu0 0.0
    %1156 = vmatpush1.msra.mxu0 0.0
    %1157 = vmatprep.subr.mxu0 0.0
    %1158 = vmatpush1.msra.mxu0 0.0
    %1159 = vmatprep.subr.mxu0 0.0
    %1160 = vmatpush1.msra.mxu0 0.0
    %1161 = vmatprep.subr.mxu0 0.0
    %1162 = vmatpush1.msra.mxu0 0.0
    %1163 = vmatprep.subr.mxu0 0.0
    %1164 = vmatpush1.msra.mxu0 0.0
    %1165 = vmatprep.subr.mxu0 0.0
    %1166 = vmatpush1.msra.mxu0 0.0
    %1167 = vmatprep.subr.mxu0 0.0
    %1168 = vmatpush1.msra.mxu0 0.0
    %1169 = vmatprep.subr.mxu0 0.0
    %1170 = vmatpush1.msra.mxu0 0.0
    %1171 = vmatprep.subr.mxu0 0.0
    %1172 = vmatpush1.msra.mxu0 0.0
    %1173 = vmatprep.subr.mxu0 0.0
    %1174 = vmatpush1.msra.mxu0 0.0
    %1175 = vmatprep.mubr.f32.mxu0 0.0
    %1176 = vmatmul.mubr.f32.gmra.mrb[0].mxu0 %v1109
    %v1177 = vpop.f32.mrb[0].mxu0
    %v1178 = vadd.f32 0.0, %v1177
    %v1179 = vpop.f32.mrb[0].mxu0
    %1180 = vdwg.mxu0
    %v1182 = vrot.slane %v1178, 7
    %v1183 = vrot.slane %v1178, 1
    %v1184 = vrot.slane %v1178, 2
    %v1185 = vrot.slane %v1178, 3
    %v1186 = vrot.slane %v1178, 4
    %v1187 = vrot.slane %v1178, 5
    %v1188 = vrot.slane %v1178, 6
    %v1197 = vadd.f32 %v232, %v1182
    %v1198 = vadd.f32 %v242, %v1178
    %v1199 = vadd.f32 %v252, %v1183
    %v1200 = vadd.f32 %v262, %v1184
    %v1201 = vadd.f32 %v272, %v1185
    %v1202 = vadd.f32 %v282, %v1186
    %v1203 = vadd.f32 %v292, %v1187
    %v1204 = vadd.f32 %v302, %v1188
    %v1205 = vxor.u32 %v1197, 2147483648
    %v1206 = vxor.u32 %v1198, 2147483648
    %v1207 = vxor.u32 %v1199, 2147483648
    %v1208 = vxor.u32 %v1200, 2147483648
    %v1209 = vxor.u32 %v1201, 2147483648
    %v1210 = vxor.u32 %v1202, 2147483648
    %v1211 = vxor.u32 %v1203, 2147483648
    %v1212 = vxor.u32 %v1204, 2147483648
    %v1213 = vmul.f32 %v1205, 1.442695
    %v1214 = vpow.pop %v1213
    %v1215 = vmul.f32 %v1206, 1.442695
    %v1216 = vpow.pop %v1215
    %v1217 = vmul.f32 %v1207, 1.442695
    %v1218 = vpow.pop %v1217
    %v1219 = vmul.f32 %v1208, 1.442695
    %v1220 = vpow.pop %v1219
    %v1221 = vmul.f32 %v1209, 1.442695
    %v1222 = vpow.pop %v1221
    %v1223 = vmul.f32 %v1210, 1.442695
    %v1224 = vpow.pop %v1223
    %v1225 = vmul.f32 %v1211, 1.442695
    %v1226 = vpow.pop %v1225
    %v1227 = vmul.f32 %v1212, 1.442695
    %v1228 = vpow.pop %v1227
    %v1229 = vadd.f32 %v1214, 1.0
    %v1230 = vadd.f32 %v1216, 1.0
    %v1231 = vadd.f32 %v1218, 1.0
    %v1232 = vadd.f32 %v1220, 1.0
    %v1233 = vadd.f32 %v1222, 1.0
    %v1234 = vadd.f32 %v1224, 1.0
    %v1235 = vadd.f32 %v1226, 1.0
    %v1236 = vadd.f32 %v1228, 1.0
    %v1237 = vrcp.pop %v1229
    %v1238 = vmul.f32 1.0, %v1237
    %v1239 = vrcp.pop %v1230
    %v1240 = vmul.f32 1.0, %v1239
    %v1241 = vrcp.pop %v1231
    %v1242 = vmul.f32 1.0, %v1241
    %v1243 = vrcp.pop %v1232
    %v1244 = vmul.f32 1.0, %v1243
    %v1245 = vrcp.pop %v1233
    %v1246 = vmul.f32 1.0, %v1245
    %v1247 = vrcp.pop %v1234
    %v1248 = vmul.f32 1.0, %v1247
    %v1249 = vrcp.pop %v1235
    %v1250 = vmul.f32 1.0, %v1249
    %v1251 = vrcp.pop %v1236
    %v1252 = vmul.f32 1.0, %v1251
    %1253 = vmatprep.subr.mxu0 0.0
    %1254 = vmatpush1.msra.mxu0 %v73
    %1255 = vmatprep.subr.mxu0 0.0
    %1256 = vmatpush1.msra.mxu0 %v74
    %1257 = vmatprep.subr.mxu0 0.0
    %1258 = vmatpush1.msra.mxu0 %v75
    %1259 = vmatprep.subr.mxu0 0.0
    %1260 = vmatpush1.msra.mxu0 %v76
    %1261 = vmatprep.subr.mxu0 0.0
    %1262 = vmatpush1.msra.mxu0 0.0
    %1263 = vmatprep.subr.mxu0 0.0
    %1264 = vmatpush1.msra.mxu0 0.0
    %1265 = vmatprep.subr.mxu0 0.0
    %1266 = vmatpush1.msra.mxu0 0.0
    %1267 = vmatprep.subr.mxu0 0.0
    %1268 = vmatpush1.msra.mxu0 0.0
    %1269 = vmatprep.subr.mxu0 0.0
    %1270 = vmatpush1.msra.mxu0 0.0
    %1271 = vmatprep.subr.mxu0 0.0
    %1272 = vmatpush1.msra.mxu0 0.0
    %1273 = vmatprep.subr.mxu0 0.0
    %1274 = vmatpush1.msra.mxu0 0.0
    %1275 = vmatprep.subr.mxu0 0.0
    %1276 = vmatpush1.msra.mxu0 0.0
    %1277 = vmatprep.subr.mxu0 0.0
    %1278 = vmatpush1.msra.mxu0 0.0
    %1279 = vmatprep.subr.mxu0 0.0
    %1280 = vmatpush1.msra.mxu0 0.0
    %1281 = vmatprep.subr.mxu0 0.0
    %1282 = vmatpush1.msra.mxu0 0.0
    %1283 = vmatprep.subr.mxu0 0.0
    %1284 = vmatpush1.msra.mxu0 0.0
    %1285 = vmatprep.subr.mxu0 0.0
    %1286 = vmatpush1.msra.mxu0 0.0
    %1287 = vmatprep.subr.mxu0 0.0
    %1288 = vmatpush1.msra.mxu0 0.0
    %1289 = vmatprep.subr.mxu0 0.0
    %1290 = vmatpush1.msra.mxu0 0.0
    %1291 = vmatprep.subr.mxu0 0.0
    %1292 = vmatpush1.msra.mxu0 0.0
    %1293 = vmatprep.subr.mxu0 0.0
    %1294 = vmatpush1.msra.mxu0 0.0
    %1295 = vmatprep.subr.mxu0 0.0
    %1296 = vmatpush1.msra.mxu0 0.0
    %1297 = vmatprep.subr.mxu0 0.0
    %1298 = vmatpush1.msra.mxu0 0.0
    %1299 = vmatprep.subr.mxu0 0.0
    %1300 = vmatpush1.msra.mxu0 0.0
    %1301 = vmatprep.subr.mxu0 0.0
    %1302 = vmatpush1.msra.mxu0 0.0
    %1303 = vmatprep.subr.mxu0 0.0
    %1304 = vmatpush1.msra.mxu0 0.0
    %1305 = vmatprep.subr.mxu0 0.0
    %1306 = vmatpush1.msra.mxu0 0.0
    %1307 = vmatprep.subr.mxu0 0.0
    %1308 = vmatpush1.msra.mxu0 0.0
    %1309 = vmatprep.subr.mxu0 0.0
    %1310 = vmatpush1.msra.mxu0 0.0
    %1311 = vmatprep.subr.mxu0 0.0
    %1312 = vmatpush1.msra.mxu0 0.0
    %1313 = vmatprep.subr.mxu0 0.0
    %1314 = vmatpush1.msra.mxu0 0.0
    %1315 = vmatprep.subr.mxu0 0.0
    %1316 = vmatpush1.msra.mxu0 0.0
    %1317 = vmatprep.mubr.f32.mxu0 0.0
    %1318 = vmatmul.mubr.f32.gmra.mrb[0].mxu0 %v1109
    %v1319 = vpop.f32.mrb[0].mxu0
    %v1320 = vadd.f32 0.0, %v1319
    %v1321 = vpop.f32.mrb[0].mxu0
    %1322 = vdwg.mxu0
    %v1324 = vrot.slane %v1320, 7
    %v1325 = vrot.slane %v1320, 1
    %v1326 = vrot.slane %v1320, 2
    %v1327 = vrot.slane %v1320, 3
    %v1328 = vrot.slane %v1320, 4
    %v1329 = vrot.slane %v1320, 5
    %v1330 = vrot.slane %v1320, 6
    %v1339 = vadd.f32 %v390, %v1324
    %v1340 = vadd.f32 %v400, %v1320
    %v1341 = vadd.f32 %v410, %v1325
    %v1342 = vadd.f32 %v420, %v1326
    %v1343 = vadd.f32 %v430, %v1327
    %v1344 = vadd.f32 %v440, %v1328
    %v1345 = vadd.f32 %v450, %v1329
    %v1346 = vadd.f32 %v460, %v1330
    %v1347 = vxor.u32 %v1339, 2147483648
    %v1348 = vxor.u32 %v1340, 2147483648
    %v1349 = vxor.u32 %v1341, 2147483648
    %v1350 = vxor.u32 %v1342, 2147483648
    %v1351 = vxor.u32 %v1343, 2147483648
    %v1352 = vxor.u32 %v1344, 2147483648
    %v1353 = vxor.u32 %v1345, 2147483648
    %v1354 = vxor.u32 %v1346, 2147483648
    %v1355 = vmul.f32 %v1347, 1.442695
    %v1356 = vpow.pop %v1355
    %v1357 = vmul.f32 %v1348, 1.442695
    %v1358 = vpow.pop %v1357
    %v1359 = vmul.f32 %v1349, 1.442695
    %v1360 = vpow.pop %v1359
    %v1361 = vmul.f32 %v1350, 1.442695
    %v1362 = vpow.pop %v1361
    %v1363 = vmul.f32 %v1351, 1.442695
    %v1364 = vpow.pop %v1363
    %v1365 = vmul.f32 %v1352, 1.442695
    %v1366 = vpow.pop %v1365
    %v1367 = vmul.f32 %v1353, 1.442695
    %v1368 = vpow.pop %v1367
    %v1369 = vmul.f32 %v1354, 1.442695
    %v1370 = vpow.pop %v1369
    %v1371 = vadd.f32 %v1356, 1.0
    %v1372 = vadd.f32 %v1358, 1.0
    %v1373 = vadd.f32 %v1360, 1.0
    %v1374 = vadd.f32 %v1362, 1.0
    %v1375 = vadd.f32 %v1364, 1.0
    %v1376 = vadd.f32 %v1366, 1.0
    %v1377 = vadd.f32 %v1368, 1.0
    %v1378 = vadd.f32 %v1370, 1.0
    %v1379 = vrcp.pop %v1371
    %v1380 = vmul.f32 1.0, %v1379
    %v1381 = vrcp.pop %v1372
    %v1382 = vmul.f32 1.0, %v1381
    %v1383 = vrcp.pop %v1373
    %v1384 = vmul.f32 1.0, %v1383
    %v1385 = vrcp.pop %v1374
    %v1386 = vmul.f32 1.0, %v1385
    %v1387 = vrcp.pop %v1375
    %v1388 = vmul.f32 1.0, %v1387
    %v1389 = vrcp.pop %v1376
    %v1390 = vmul.f32 1.0, %v1389
    %v1391 = vrcp.pop %v1377
    %v1392 = vmul.f32 1.0, %v1391
    %v1393 = vrcp.pop %v1378
    %v1394 = vmul.f32 1.0, %v1393
    %1395 = vmatprep.subr.mxu0 0.0
    %1396 = vmatpush1.msra.mxu0 %v78
    %1397 = vmatprep.subr.mxu0 0.0
    %1398 = vmatpush1.msra.mxu0 %v79
    %1399 = vmatprep.subr.mxu0 0.0
    %1400 = vmatpush1.msra.mxu0 %v80
    %1401 = vmatprep.subr.mxu0 0.0
    %1402 = vmatpush1.msra.mxu0 %v81
    %1403 = vmatprep.subr.mxu0 0.0
    %1404 = vmatpush1.msra.mxu0 0.0
    %1405 = vmatprep.subr.mxu0 0.0
    %1406 = vmatpush1.msra.mxu0 0.0
    %1407 = vmatprep.subr.mxu0 0.0
    %1408 = vmatpush1.msra.mxu0 0.0
    %1409 = vmatprep.subr.mxu0 0.0
    %1410 = vmatpush1.msra.mxu0 0.0
    %1411 = vmatprep.subr.mxu0 0.0
    %1412 = vmatpush1.msra.mxu0 0.0
    %1413 = vmatprep.subr.mxu0 0.0
    %1414 = vmatpush1.msra.mxu0 0.0
    %1415 = vmatprep.subr.mxu0 0.0
    %1416 = vmatpush1.msra.mxu0 0.0
    %1417 = vmatprep.subr.mxu0 0.0
    %1418 = vmatpush1.msra.mxu0 0.0
    %1419 = vmatprep.subr.mxu0 0.0
    %1420 = vmatpush1.msra.mxu0 0.0
    %1421 = vmatprep.subr.mxu0 0.0
    %1422 = vmatpush1.msra.mxu0 0.0
    %1423 = vmatprep.subr.mxu0 0.0
    %1424 = vmatpush1.msra.mxu0 0.0
    %1425 = vmatprep.subr.mxu0 0.0
    %1426 = vmatpush1.msra.mxu0 0.0
    %1427 = vmatprep.subr.mxu0 0.0
    %1428 = vmatpush1.msra.mxu0 0.0
    %1429 = vmatprep.subr.mxu0 0.0
    %1430 = vmatpush1.msra.mxu0 0.0
    %1431 = vmatprep.subr.mxu0 0.0
    %1432 = vmatpush1.msra.mxu0 0.0
    %1433 = vmatprep.subr.mxu0 0.0
    %1434 = vmatpush1.msra.mxu0 0.0
    %1435 = vmatprep.subr.mxu0 0.0
    %1436 = vmatpush1.msra.mxu0 0.0
    %1437 = vmatprep.subr.mxu0 0.0
    %1438 = vmatpush1.msra.mxu0 0.0
    %1439 = vmatprep.subr.mxu0 0.0
    %1440 = vmatpush1.msra.mxu0 0.0
    %1441 = vmatprep.subr.mxu0 0.0
    %1442 = vmatpush1.msra.mxu0 0.0
    %1443 = vmatprep.subr.mxu0 0.0
    %1444 = vmatpush1.msra.mxu0 0.0
    %1445 = vmatprep.subr.mxu0 0.0
    %1446 = vmatpush1.msra.mxu0 0.0
    %1447 = vmatprep.subr.mxu0 0.0
    %1448 = vmatpush1.msra.mxu0 0.0
    %1449 = vmatprep.subr.mxu0 0.0
    %1450 = vmatpush1.msra.mxu0 0.0
    %1451 = vmatprep.subr.mxu0 0.0
    %1452 = vmatpush1.msra.mxu0 0.0
    %1453 = vmatprep.subr.mxu0 0.0
    %1454 = vmatpush1.msra.mxu0 0.0
    %1455 = vmatprep.subr.mxu0 0.0
    %1456 = vmatpush1.msra.mxu0 0.0
    %1457 = vmatprep.subr.mxu0 0.0
    %1458 = vmatpush1.msra.mxu0 0.0
    %1459 = vmatprep.mubr.f32.mxu0 0.0
    %1460 = vmatmul.mubr.f32.gmra.mrb[0].mxu0 %v1109
    %v1461 = vpop.f32.mrb[0].mxu0
    %v1462 = vadd.f32 %v87, %v1461
    %v1463 = vpop.f32.mrb[0].mxu0
    %1464 = vdwg.mxu0
    %v1466 = vrot.slane %v1462, 7
    %v1467 = vrot.slane %v1462, 1
    %v1468 = vrot.slane %v1462, 2
    %v1469 = vrot.slane %v1462, 3
    %v1470 = vrot.slane %v1462, 4
    %v1471 = vrot.slane %v1462, 5
    %v1472 = vrot.slane %v1462, 6
    %v1481 = vmul.f32 %v1238, %v1466
    %v1482 = vmul.f32 %v1240, %v1462
    %v1483 = vmul.f32 %v1242, %v1467
    %v1484 = vmul.f32 %v1244, %v1468
    %v1485 = vmul.f32 %v1246, %v1469
    %v1486 = vmul.f32 %v1248, %v1470
    %v1487 = vmul.f32 %v1250, %v1471
    %v1488 = vmul.f32 %v1252, %v1472
    %v1489 = vadd.f32 %v548, %v1481
    %v1490 = vadd.f32 %v558, %v1482
    %v1491 = vadd.f32 %v568, %v1483
    %v1492 = vadd.f32 %v578, %v1484
    %v1493 = vadd.f32 %v588, %v1485
    %v1494 = vadd.f32 %v598, %v1486
    %v1495 = vadd.f32 %v608, %v1487
    %v1496 = vadd.f32 %v618, %v1488
    %v1497 = vtanh.pop %v1489
    %v1498 = vtanh.pop %v1490
    %v1499 = vtanh.pop %v1491
    %v1500 = vtanh.pop %v1492
    %v1501 = vtanh.pop %v1493
    %v1502 = vtanh.pop %v1494
    %v1503 = vtanh.pop %v1495
    %v1504 = vtanh.pop %v1496
    %v1513 = vrot.slane %v1497, 1
    %v1514 = vrot.slane %v1498, 1
    %v1515 = vrot.slane %v1499, 1
    %v1516 = vrot.slane %v1500, 1
    %v1517 = vrot.slane %v1501, 1
    %v1518 = vrot.slane %v1502, 1
    %v1519 = vrot.slane %v1503, 1
    %v1520 = vrot.slane %v1504, 1
    %v1529 = vsub.f32 %v1079, %v1513
    %v1530 = vsub.f32 %v1080, %v1514
    %v1531 = vsub.f32 %v1081, %v1515
    %v1532 = vsub.f32 %v1082, %v1516
    %v1533 = vsub.f32 %v1083, %v1517
    %v1534 = vsub.f32 %v1084, %v1518
    %v1535 = vsub.f32 %v1085, %v1519
    %v1536 = vsub.f32 %v1086, %v1520
    %v1545 = vrot.slane %v1529, 7
    %v1546 = vrot.slane %v1530, 7
    %v1547 = vrot.slane %v1531, 7
    %v1548 = vrot.slane %v1532, 7
    %v1549 = vrot.slane %v1533, 7
    %v1550 = vrot.slane %v1534, 7
    %v1551 = vrot.slane %v1535, 7
    %v1552 = vrot.slane %v1536, 7
    %v1561 = vmul.f32 %v1380, %v1545
    %v1562 = vmul.f32 %v1382, %v1546
    %v1563 = vmul.f32 %v1384, %v1547
    %v1564 = vmul.f32 %v1386, %v1548
    %v1565 = vmul.f32 %v1388, %v1549
    %v1566 = vmul.f32 %v1390, %v1550
    %v1567 = vmul.f32 %v1392, %v1551
    %v1568 = vmul.f32 %v1394, %v1552
    %v1569 = vadd.f32 %v1497, %v1561
    %v1570 = vadd.f32 %v1498, %v1562
    %v1571 = vadd.f32 %v1499, %v1563
    %v1572 = vadd.f32 %v1500, %v1564
    %v1573 = vadd.f32 %v1501, %v1565
    %v1574 = vadd.f32 %v1502, %v1566
    %v1575 = vadd.f32 %v1503, %v1567
    %v1576 = vadd.f32 %v1504, %v1568
    %v1585 = vrot.slane %v1569, 1
    %v1586 = vsel %vm1033, %v1570, %v1585
    %v1587 = vrot.slane %v1571, 7
    %v1588 = vsel %vm1036, %v1587, %v1586
    %v1589 = vrot.slane %v1572, 6
    %v1590 = vsel %vm1039, %v1589, %v1588
    %v1591 = vrot.slane %v1573, 5
    %v1592 = vsel %vm1042, %v1591, %v1590
    %v1593 = vrot.slane %v1574, 4
    %v1594 = vsel %vm1045, %v1593, %v1592
    %v1595 = vrot.slane %v1575, 3
    %v1596 = vsel %vm1048, %v1595, %v1594
    %v1597 = vrot.slane %v1576, 2
    %v1598 = vsel %vm1051, %v1597, %v1596
    %v1599 = vsel %vm116, %v1598, 0
    %1601 = vmatprep.subr.mxu0 0.0
    %1602 = vmatpush1.msra.mxu0 %v68
    %1603 = vmatprep.subr.mxu0 0.0
    %1604 = vmatpush1.msra.mxu0 %v69
    %1605 = vmatprep.subr.mxu0 0.0
    %1606 = vmatpush1.msra.mxu0 %v70
    %1607 = vmatprep.subr.mxu0 0.0
    %1608 = vmatpush1.msra.mxu0 %v71
    %1609 = vmatprep.subr.mxu0 0.0
    %1610 = vmatpush1.msra.mxu0 0.0
    %1611 = vmatprep.subr.mxu0 0.0
    %1612 = vmatpush1.msra.mxu0 0.0
    %1613 = vmatprep.subr.mxu0 0.0
    %1614 = vmatpush1.msra.mxu0 0.0
    %1615 = vmatprep.subr.mxu0 0.0
    %1616 = vmatpush1.msra.mxu0 0.0
    %1617 = vmatprep.subr.mxu0 0.0
    %1618 = vmatpush1.msra.mxu0 0.0
    %1619 = vmatprep.subr.mxu0 0.0
    %1620 = vmatpush1.msra.mxu0 0.0
    %1621 = vmatprep.subr.mxu0 0.0
    %1622 = vmatpush1.msra.mxu0 0.0
    %1623 = vmatprep.subr.mxu0 0.0
    %1624 = vmatpush1.msra.mxu0 0.0
    %1625 = vmatprep.subr.mxu0 0.0
    %1626 = vmatpush1.msra.mxu0 0.0
    %1627 = vmatprep.subr.mxu0 0.0
    %1628 = vmatpush1.msra.mxu0 0.0
    %1629 = vmatprep.subr.mxu0 0.0
    %1630 = vmatpush1.msra.mxu0 0.0
    %1631 = vmatprep.subr.mxu0 0.0
    %1632 = vmatpush1.msra.mxu0 0.0
    %1633 = vmatprep.subr.mxu0 0.0
    %1634 = vmatpush1.msra.mxu0 0.0
    %1635 = vmatprep.subr.mxu0 0.0
    %1636 = vmatpush1.msra.mxu0 0.0
    %1637 = vmatprep.subr.mxu0 0.0
    %1638 = vmatpush1.msra.mxu0 0.0
    %1639 = vmatprep.subr.mxu0 0.0
    %1640 = vmatpush1.msra.mxu0 0.0
    %1641 = vmatprep.subr.mxu0 0.0
    %1642 = vmatpush1.msra.mxu0 0.0
    %1643 = vmatprep.subr.mxu0 0.0
    %1644 = vmatpush1.msra.mxu0 0.0
    %1645 = vmatprep.subr.mxu0 0.0
    %1646 = vmatpush1.msra.mxu0 0.0
    %1647 = vmatprep.subr.mxu0 0.0
    %1648 = vmatpush1.msra.mxu0 0.0
    %1649 = vmatprep.subr.mxu0 0.0
    %1650 = vmatpush1.msra.mxu0 0.0
    %1651 = vmatprep.subr.mxu0 0.0
    %1652 = vmatpush1.msra.mxu0 0.0
    %1653 = vmatprep.subr.mxu0 0.0
    %1654 = vmatpush1.msra.mxu0 0.0
    %1655 = vmatprep.subr.mxu0 0.0
    %1656 = vmatpush1.msra.mxu0 0.0
    %1657 = vmatprep.subr.mxu0 0.0
    %1658 = vmatpush1.msra.mxu0 0.0
    %1659 = vmatprep.subr.mxu0 0.0
    %1660 = vmatpush1.msra.mxu0 0.0
    %1661 = vmatprep.subr.mxu0 0.0
    %1662 = vmatpush1.msra.mxu0 0.0
    %1663 = vmatprep.subr.mxu0 0.0
    %1664 = vmatpush1.msra.mxu0 0.0
    %1665 = vmatprep.mubr.f32.mxu0 0.0
    %1666 = vmatmul.mubr.f32.gmra.mrb[0].mxu0 %v1599
    %v1667 = vpop.f32.mrb[0].mxu0
    %v1668 = vadd.f32 0.0, %v1667
    %v1669 = vpop.f32.mrb[0].mxu0
    %1670 = vdwg.mxu0
    %v1672 = vrot.slane %v1668, 6
    %v1673 = vrot.slane %v1668, 7
    %v1674 = vrot.slane %v1668, 1
    %v1675 = vrot.slane %v1668, 2
    %v1676 = vrot.slane %v1668, 3
    %v1677 = vrot.slane %v1668, 4
    %v1678 = vrot.slane %v1668, 5
    %v1687 = vadd.f32 %v232, %v1672
    %v1688 = vadd.f32 %v242, %v1673
    %v1689 = vadd.f32 %v252, %v1668
    %v1690 = vadd.f32 %v262, %v1674
    %v1691 = vadd.f32 %v272, %v1675
    %v1692 = vadd.f32 %v282, %v1676
    %v1693 = vadd.f32 %v292, %v1677
    %v1694 = vadd.f32 %v302, %v1678
    %v1695 = vxor.u32 %v1687, 2147483648
    %v1696 = vxor.u32 %v1688, 2147483648
    %v1697 = vxor.u32 %v1689, 2147483648
    %v1698 = vxor.u32 %v1690, 2147483648
    %v1699 = vxor.u32 %v1691, 2147483648
    %v1700 = vxor.u32 %v1692, 2147483648
    %v1701 = vxor.u32 %v1693, 2147483648
    %v1702 = vxor.u32 %v1694, 2147483648
    %v1703 = vmul.f32 %v1695, 1.442695
    %v1704 = vpow.pop %v1703
    %v1705 = vmul.f32 %v1696, 1.442695
    %v1706 = vpow.pop %v1705
    %v1707 = vmul.f32 %v1697, 1.442695
    %v1708 = vpow.pop %v1707
    %v1709 = vmul.f32 %v1698, 1.442695
    %v1710 = vpow.pop %v1709
    %v1711 = vmul.f32 %v1699, 1.442695
    %v1712 = vpow.pop %v1711
    %v1713 = vmul.f32 %v1700, 1.442695
    %v1714 = vpow.pop %v1713
    %v1715 = vmul.f32 %v1701, 1.442695
    %v1716 = vpow.pop %v1715
    %v1717 = vmul.f32 %v1702, 1.442695
    %v1718 = vpow.pop %v1717
    %v1719 = vadd.f32 %v1704, 1.0
    %v1720 = vadd.f32 %v1706, 1.0
    %v1721 = vadd.f32 %v1708, 1.0
    %v1722 = vadd.f32 %v1710, 1.0
    %v1723 = vadd.f32 %v1712, 1.0
    %v1724 = vadd.f32 %v1714, 1.0
    %v1725 = vadd.f32 %v1716, 1.0
    %v1726 = vadd.f32 %v1718, 1.0
    %v1727 = vrcp.pop %v1719
    %v1728 = vmul.f32 1.0, %v1727
    %v1729 = vrcp.pop %v1720
    %v1730 = vmul.f32 1.0, %v1729
    %v1731 = vrcp.pop %v1721
    %v1732 = vmul.f32 1.0, %v1731
    %v1733 = vrcp.pop %v1722
    %v1734 = vmul.f32 1.0, %v1733
    %v1735 = vrcp.pop %v1723
    %v1736 = vmul.f32 1.0, %v1735
    %v1737 = vrcp.pop %v1724
    %v1738 = vmul.f32 1.0, %v1737
    %v1739 = vrcp.pop %v1725
    %v1740 = vmul.f32 1.0, %v1739
    %v1741 = vrcp.pop %v1726
    %v1742 = vmul.f32 1.0, %v1741
    %1743 = vmatprep.subr.mxu0 0.0
    %1744 = vmatpush1.msra.mxu0 %v73
    %1745 = vmatprep.subr.mxu0 0.0
    %1746 = vmatpush1.msra.mxu0 %v74
    %1747 = vmatprep.subr.mxu0 0.0
    %1748 = vmatpush1.msra.mxu0 %v75
    %1749 = vmatprep.subr.mxu0 0.0
    %1750 = vmatpush1.msra.mxu0 %v76
    %1751 = vmatprep.subr.mxu0 0.0
    %1752 = vmatpush1.msra.mxu0 0.0
    %1753 = vmatprep.subr.mxu0 0.0
    %1754 = vmatpush1.msra.mxu0 0.0
    %1755 = vmatprep.subr.mxu0 0.0
    %1756 = vmatpush1.msra.mxu0 0.0
    %1757 = vmatprep.subr.mxu0 0.0
    %1758 = vmatpush1.msra.mxu0 0.0
    %1759 = vmatprep.subr.mxu0 0.0
    %1760 = vmatpush1.msra.mxu0 0.0
    %1761 = vmatprep.subr.mxu0 0.0
    %1762 = vmatpush1.msra.mxu0 0.0
    %1763 = vmatprep.subr.mxu0 0.0
    %1764 = vmatpush1.msra.mxu0 0.0
    %1765 = vmatprep.subr.mxu0 0.0
    %1766 = vmatpush1.msra.mxu0 0.0
    %1767 = vmatprep.subr.mxu0 0.0
    %1768 = vmatpush1.msra.mxu0 0.0
    %1769 = vmatprep.subr.mxu0 0.0
    %1770 = vmatpush1.msra.mxu0 0.0
    %1771 = vmatprep.subr.mxu0 0.0
    %1772 = vmatpush1.msra.mxu0 0.0
    %1773 = vmatprep.subr.mxu0 0.0
    %1774 = vmatpush1.msra.mxu0 0.0
    %1775 = vmatprep.subr.mxu0 0.0
    %1776 = vmatpush1.msra.mxu0 0.0
    %1777 = vmatprep.subr.mxu0 0.0
    %1778 = vmatpush1.msra.mxu0 0.0
    %1779 = vmatprep.subr.mxu0 0.0
    %1780 = vmatpush1.msra.mxu0 0.0
    %1781 = vmatprep.subr.mxu0 0.0
    %1782 = vmatpush1.msra.mxu0 0.0
    %1783 = vmatprep.subr.mxu0 0.0
    %1784 = vmatpush1.msra.mxu0 0.0
    %1785 = vmatprep.subr.mxu0 0.0
    %1786 = vmatpush1.msra.mxu0 0.0
    %1787 = vmatprep.subr.mxu0 0.0
    %1788 = vmatpush1.msra.mxu0 0.0
    %1789 = vmatprep.subr.mxu0 0.0
    %1790 = vmatpush1.msra.mxu0 0.0
    %1791 = vmatprep.subr.mxu0 0.0
    %1792 = vmatpush1.msra.mxu0 0.0
    %1793 = vmatprep.subr.mxu0 0.0
    %1794 = vmatpush1.msra.mxu0 0.0
    %1795 = vmatprep.subr.mxu0 0.0
    %1796 = vmatpush1.msra.mxu0 0.0
    %1797 = vmatprep.subr.mxu0 0.0
    %1798 = vmatpush1.msra.mxu0 0.0
    %1799 = vmatprep.subr.mxu0 0.0
    %1800 = vmatpush1.msra.mxu0 0.0
    %1801 = vmatprep.subr.mxu0 0.0
    %1802 = vmatpush1.msra.mxu0 0.0
    %1803 = vmatprep.subr.mxu0 0.0
    %1804 = vmatpush1.msra.mxu0 0.0
    %1805 = vmatprep.subr.mxu0 0.0
    %1806 = vmatpush1.msra.mxu0 0.0
    %1807 = vmatprep.mubr.f32.mxu0 0.0
    %1808 = vmatmul.mubr.f32.gmra.mrb[0].mxu0 %v1599
    %v1809 = vpop.f32.mrb[0].mxu0
    %v1810 = vadd.f32 0.0, %v1809
    %v1811 = vpop.f32.mrb[0].mxu0
    %1812 = vdwg.mxu0
    %v1814 = vrot.slane %v1810, 6
    %v1815 = vrot.slane %v1810, 7
    %v1816 = vrot.slane %v1810, 1
    %v1817 = vrot.slane %v1810, 2
    %v1818 = vrot.slane %v1810, 3
    %v1819 = vrot.slane %v1810, 4
    %v1820 = vrot.slane %v1810, 5
    %v1829 = vadd.f32 %v390, %v1814
    %v1830 = vadd.f32 %v400, %v1815
    %v1831 = vadd.f32 %v410, %v1810
    %v1832 = vadd.f32 %v420, %v1816
    %v1833 = vadd.f32 %v430, %v1817
    %v1834 = vadd.f32 %v440, %v1818
    %v1835 = vadd.f32 %v450, %v1819
    %v1836 = vadd.f32 %v460, %v1820
    %v1837 = vxor.u32 %v1829, 2147483648
    %v1838 = vxor.u32 %v1830, 2147483648
    %v1839 = vxor.u32 %v1831, 2147483648
    %v1840 = vxor.u32 %v1832, 2147483648
    %v1841 = vxor.u32 %v1833, 2147483648
    %v1842 = vxor.u32 %v1834, 2147483648
    %v1843 = vxor.u32 %v1835, 2147483648
    %v1844 = vxor.u32 %v1836, 2147483648
    %v1845 = vmul.f32 %v1837, 1.442695
    %v1846 = vpow.pop %v1845
    %v1847 = vmul.f32 %v1838, 1.442695
    %v1848 = vpow.pop %v1847
    %v1849 = vmul.f32 %v1839, 1.442695
    %v1850 = vpow.pop %v1849
    %v1851 = vmul.f32 %v1840, 1.442695
    %v1852 = vpow.pop %v1851
    %v1853 = vmul.f32 %v1841, 1.442695
    %v1854 = vpow.pop %v1853
    %v1855 = vmul.f32 %v1842, 1.442695
    %v1856 = vpow.pop %v1855
    %v1857 = vmul.f32 %v1843, 1.442695
    %v1858 = vpow.pop %v1857
    %v1859 = vmul.f32 %v1844, 1.442695
    %v1860 = vpow.pop %v1859
    %v1861 = vadd.f32 %v1846, 1.0
    %v1862 = vadd.f32 %v1848, 1.0
    %v1863 = vadd.f32 %v1850, 1.0
    %v1864 = vadd.f32 %v1852, 1.0
    %v1865 = vadd.f32 %v1854, 1.0
    %v1866 = vadd.f32 %v1856, 1.0
    %v1867 = vadd.f32 %v1858, 1.0
    %v1868 = vadd.f32 %v1860, 1.0
    %v1869 = vrcp.pop %v1861
    %v1870 = vmul.f32 1.0, %v1869
    %v1871 = vrcp.pop %v1862
    %v1872 = vmul.f32 1.0, %v1871
    %v1873 = vrcp.pop %v1863
    %v1874 = vmul.f32 1.0, %v1873
    %v1875 = vrcp.pop %v1864
    %v1876 = vmul.f32 1.0, %v1875
    %v1877 = vrcp.pop %v1865
    %v1878 = vmul.f32 1.0, %v1877
    %v1879 = vrcp.pop %v1866
    %v1880 = vmul.f32 1.0, %v1879
    %v1881 = vrcp.pop %v1867
    %v1882 = vmul.f32 1.0, %v1881
    %v1883 = vrcp.pop %v1868
    %v1884 = vmul.f32 1.0, %v1883
    %1885 = vmatprep.subr.mxu0 0.0
    %1886 = vmatpush1.msra.mxu0 %v78
    %1887 = vmatprep.subr.mxu0 0.0
    %1888 = vmatpush1.msra.mxu0 %v79
    %1889 = vmatprep.subr.mxu0 0.0
    %1890 = vmatpush1.msra.mxu0 %v80
    %1891 = vmatprep.subr.mxu0 0.0
    %1892 = vmatpush1.msra.mxu0 %v81
    %1893 = vmatprep.subr.mxu0 0.0
    %1894 = vmatpush1.msra.mxu0 0.0
    %1895 = vmatprep.subr.mxu0 0.0
    %1896 = vmatpush1.msra.mxu0 0.0
    %1897 = vmatprep.subr.mxu0 0.0
    %1898 = vmatpush1.msra.mxu0 0.0
    %1899 = vmatprep.subr.mxu0 0.0
    %1900 = vmatpush1.msra.mxu0 0.0
    %1901 = vmatprep.subr.mxu0 0.0
    %1902 = vmatpush1.msra.mxu0 0.0
    %1903 = vmatprep.subr.mxu0 0.0
    %1904 = vmatpush1.msra.mxu0 0.0
    %1905 = vmatprep.subr.mxu0 0.0
    %1906 = vmatpush1.msra.mxu0 0.0
    %1907 = vmatprep.subr.mxu0 0.0
    %1908 = vmatpush1.msra.mxu0 0.0
    %1909 = vmatprep.subr.mxu0 0.0
    %1910 = vmatpush1.msra.mxu0 0.0
    %1911 = vmatprep.subr.mxu0 0.0
    %1912 = vmatpush1.msra.mxu0 0.0
    %1913 = vmatprep.subr.mxu0 0.0
    %1914 = vmatpush1.msra.mxu0 0.0
    %1915 = vmatprep.subr.mxu0 0.0
    %1916 = vmatpush1.msra.mxu0 0.0
    %1917 = vmatprep.subr.mxu0 0.0
    %1918 = vmatpush1.msra.mxu0 0.0
    %1919 = vmatprep.subr.mxu0 0.0
    %1920 = vmatpush1.msra.mxu0 0.0
    %1921 = vmatprep.subr.mxu0 0.0
    %1922 = vmatpush1.msra.mxu0 0.0
    %1923 = vmatprep.subr.mxu0 0.0
    %1924 = vmatpush1.msra.mxu0 0.0
    %1925 = vmatprep.subr.mxu0 0.0
    %1926 = vmatpush1.msra.mxu0 0.0
    %1927 = vmatprep.subr.mxu0 0.0
    %1928 = vmatpush1.msra.mxu0 0.0
    %1929 = vmatprep.subr.mxu0 0.0
    %1930 = vmatpush1.msra.mxu0 0.0
    %1931 = vmatprep.subr.mxu0 0.0
    %1932 = vmatpush1.msra.mxu0 0.0
    %1933 = vmatprep.subr.mxu0 0.0
    %1934 = vmatpush1.msra.mxu0 0.0
    %1935 = vmatprep.subr.mxu0 0.0
    %1936 = vmatpush1.msra.mxu0 0.0
    %1937 = vmatprep.subr.mxu0 0.0
    %1938 = vmatpush1.msra.mxu0 0.0
    %1939 = vmatprep.subr.mxu0 0.0
    %1940 = vmatpush1.msra.mxu0 0.0
    %1941 = vmatprep.subr.mxu0 0.0
    %1942 = vmatpush1.msra.mxu0 0.0
    %1943 = vmatprep.subr.mxu0 0.0
    %1944 = vmatpush1.msra.mxu0 0.0
    %1945 = vmatprep.subr.mxu0 0.0
    %1946 = vmatpush1.msra.mxu0 0.0
    %1947 = vmatprep.subr.mxu0 0.0
    %1948 = vmatpush1.msra.mxu0 0.0
    %1949 = vmatprep.mubr.f32.mxu0 0.0
    %1950 = vmatmul.mubr.f32.gmra.mrb[0].mxu0 %v1599
    %v1951 = vpop.f32.mrb[0].mxu0
    %v1952 = vadd.f32 %v87, %v1951
    %v1953 = vpop.f32.mrb[0].mxu0
    %1954 = vdwg.mxu0
    %v1956 = vrot.slane %v1952, 6
    %v1957 = vrot.slane %v1952, 7
    %v1958 = vrot.slane %v1952, 1
    %v1959 = vrot.slane %v1952, 2
    %v1960 = vrot.slane %v1952, 3
    %v1961 = vrot.slane %v1952, 4
    %v1962 = vrot.slane %v1952, 5
    %v1971 = vmul.f32 %v1728, %v1956
    %v1972 = vmul.f32 %v1730, %v1957
    %v1973 = vmul.f32 %v1732, %v1952
    %v1974 = vmul.f32 %v1734, %v1958
    %v1975 = vmul.f32 %v1736, %v1959
    %v1976 = vmul.f32 %v1738, %v1960
    %v1977 = vmul.f32 %v1740, %v1961
    %v1978 = vmul.f32 %v1742, %v1962
    %v1979 = vadd.f32 %v548, %v1971
    %v1980 = vadd.f32 %v558, %v1972
    %v1981 = vadd.f32 %v568, %v1973
    %v1982 = vadd.f32 %v578, %v1974
    %v1983 = vadd.f32 %v588, %v1975
    %v1984 = vadd.f32 %v598, %v1976
    %v1985 = vadd.f32 %v608, %v1977
    %v1986 = vadd.f32 %v618, %v1978
    %v1987 = vtanh.pop %v1979
    %v1988 = vtanh.pop %v1980
    %v1989 = vtanh.pop %v1981
    %v1990 = vtanh.pop %v1982
    %v1991 = vtanh.pop %v1983
    %v1992 = vtanh.pop %v1984
    %v1993 = vtanh.pop %v1985
    %v1994 = vtanh.pop %v1986
    %v2003 = vrot.slane %v1987, 1
    %v2004 = vrot.slane %v1988, 1
    %v2005 = vrot.slane %v1989, 1
    %v2006 = vrot.slane %v1990, 1
    %v2007 = vrot.slane %v1991, 1
    %v2008 = vrot.slane %v1992, 1
    %v2009 = vrot.slane %v1993, 1
    %v2010 = vrot.slane %v1994, 1
    %v2019 = vsub.f32 %v1569, %v2003
    %v2020 = vsub.f32 %v1570, %v2004
    %v2021 = vsub.f32 %v1571, %v2005
    %v2022 = vsub.f32 %v1572, %v2006
    %v2023 = vsub.f32 %v1573, %v2007
    %v2024 = vsub.f32 %v1574, %v2008
    %v2025 = vsub.f32 %v1575, %v2009
    %v2026 = vsub.f32 %v1576, %v2010
    %v2035 = vrot.slane %v2019, 7
    %v2036 = vrot.slane %v2020, 7
    %v2037 = vrot.slane %v2021, 7
    %v2038 = vrot.slane %v2022, 7
    %v2039 = vrot.slane %v2023, 7
    %v2040 = vrot.slane %v2024, 7
    %v2041 = vrot.slane %v2025, 7
    %v2042 = vrot.slane %v2026, 7
    %v2051 = vmul.f32 %v1870, %v2035
    %v2052 = vmul.f32 %v1872, %v2036
    %v2053 = vmul.f32 %v1874, %v2037
    %v2054 = vmul.f32 %v1876, %v2038
    %v2055 = vmul.f32 %v1878, %v2039
    %v2056 = vmul.f32 %v1880, %v2040
    %v2057 = vmul.f32 %v1882, %v2041
    %v2058 = vmul.f32 %v1884, %v2042
    %v2059 = vadd.f32 %v1987, %v2051
    %v2060 = vadd.f32 %v1988, %v2052
    %v2061 = vadd.f32 %v1989, %v2053
    %v2062 = vadd.f32 %v1990, %v2054
    %v2063 = vadd.f32 %v1991, %v2055
    %v2064 = vadd.f32 %v1992, %v2056
    %v2065 = vadd.f32 %v1993, %v2057
    %v2066 = vadd.f32 %v1994, %v2058
    %v2075 = vrot.slane %v2059, 2
    %v2076 = vrot.slane %v2060, 1
    %v2077 = vsel %vm1033, %v2076, %v2075
    %v2078 = vsel %vm1036, %v2061, %v2077
    %v2079 = vrot.slane %v2062, 7
    %v2080 = vsel %vm1039, %v2079, %v2078
    %v2081 = vrot.slane %v2063, 6
    %v2082 = vsel %vm1042, %v2081, %v2080
    %v2083 = vrot.slane %v2064, 5
    %v2084 = vsel %vm1045, %v2083, %v2082
    %v2085 = vrot.slane %v2065, 4
    %v2086 = vsel %vm1048, %v2085, %v2084
    %v2087 = vrot.slane %v2066, 3
    %v2088 = vsel %vm1051, %v2087, %v2086
    %v2089 = vsel %vm116, %v2088, 0
    %2091 = vmatprep.subr.mxu0 0.0
    %2092 = vmatpush1.msra.mxu0 %v68
    %2093 = vmatprep.subr.mxu0 0.0
    %2094 = vmatpush1.msra.mxu0 %v69
    %2095 = vmatprep.subr.mxu0 0.0
    %2096 = vmatpush1.msra.mxu0 %v70
    %2097 = vmatprep.subr.mxu0 0.0
    %2098 = vmatpush1.msra.mxu0 %v71
    %2099 = vmatprep.subr.mxu0 0.0
    %2100 = vmatpush1.msra.mxu0 0.0
    %2101 = vmatprep.subr.mxu0 0.0
    %2102 = vmatpush1.msra.mxu0 0.0
    %2103 = vmatprep.subr.mxu0 0.0
    %2104 = vmatpush1.msra.mxu0 0.0
    %2105 = vmatprep.subr.mxu0 0.0
    %2106 = vmatpush1.msra.mxu0 0.0
    %2107 = vmatprep.subr.mxu0 0.0
    %2108 = vmatpush1.msra.mxu0 0.0
    %2109 = vmatprep.subr.mxu0 0.0
    %2110 = vmatpush1.msra.mxu0 0.0
    %2111 = vmatprep.subr.mxu0 0.0
    %2112 = vmatpush1.msra.mxu0 0.0
    %2113 = vmatprep.subr.mxu0 0.0
    %2114 = vmatpush1.msra.mxu0 0.0
    %2115 = vmatprep.subr.mxu0 0.0
    %2116 = vmatpush1.msra.mxu0 0.0
    %2117 = vmatprep.subr.mxu0 0.0
    %2118 = vmatpush1.msra.mxu0 0.0
    %2119 = vmatprep.subr.mxu0 0.0
    %2120 = vmatpush1.msra.mxu0 0.0
    %2121 = vmatprep.subr.mxu0 0.0
    %2122 = vmatpush1.msra.mxu0 0.0
    %2123 = vmatprep.subr.mxu0 0.0
    %2124 = vmatpush1.msra.mxu0 0.0
    %2125 = vmatprep.subr.mxu0 0.0
    %2126 = vmatpush1.msra.mxu0 0.0
    %2127 = vmatprep.subr.mxu0 0.0
    %2128 = vmatpush1.msra.mxu0 0.0
    %2129 = vmatprep.subr.mxu0 0.0
    %2130 = vmatpush1.msra.mxu0 0.0
    %2131 = vmatprep.subr.mxu0 0.0
    %2132 = vmatpush1.msra.mxu0 0.0
    %2133 = vmatprep.subr.mxu0 0.0
    %2134 = vmatpush1.msra.mxu0 0.0
    %2135 = vmatprep.subr.mxu0 0.0
    %2136 = vmatpush1.msra.mxu0 0.0
    %2137 = vmatprep.subr.mxu0 0.0
    %2138 = vmatpush1.msra.mxu0 0.0
    %2139 = vmatprep.subr.mxu0 0.0
    %2140 = vmatpush1.msra.mxu0 0.0
    %2141 = vmatprep.subr.mxu0 0.0
    %2142 = vmatpush1.msra.mxu0 0.0
    %2143 = vmatprep.subr.mxu0 0.0
    %2144 = vmatpush1.msra.mxu0 0.0
    %2145 = vmatprep.subr.mxu0 0.0
    %2146 = vmatpush1.msra.mxu0 0.0
    %2147 = vmatprep.subr.mxu0 0.0
    %2148 = vmatpush1.msra.mxu0 0.0
    %2149 = vmatprep.subr.mxu0 0.0
    %2150 = vmatpush1.msra.mxu0 0.0
    %2151 = vmatprep.subr.mxu0 0.0
    %2152 = vmatpush1.msra.mxu0 0.0
    %2153 = vmatprep.subr.mxu0 0.0
    %2154 = vmatpush1.msra.mxu0 0.0
    %2155 = vmatprep.mubr.f32.mxu0 0.0
    %2156 = vmatmul.mubr.f32.gmra.mrb[0].mxu0 %v2089
    %v2157 = vpop.f32.mrb[0].mxu0
    %v2158 = vadd.f32 0.0, %v2157
    %v2159 = vpop.f32.mrb[0].mxu0
    %2160 = vdwg.mxu0
    %v2162 = vrot.slane %v2158, 5
    %v2163 = vrot.slane %v2158, 6
    %v2164 = vrot.slane %v2158, 7
    %v2165 = vrot.slane %v2158, 1
    %v2166 = vrot.slane %v2158, 2
    %v2167 = vrot.slane %v2158, 3
    %v2168 = vrot.slane %v2158, 4
    %v2177 = vadd.f32 %v232, %v2162
    %v2178 = vadd.f32 %v242, %v2163
    %v2179 = vadd.f32 %v252, %v2164
    %v2180 = vadd.f32 %v262, %v2158
    %v2181 = vadd.f32 %v272, %v2165
    %v2182 = vadd.f32 %v282, %v2166
    %v2183 = vadd.f32 %v292, %v2167
    %v2184 = vadd.f32 %v302, %v2168
    %v2185 = vxor.u32 %v2177, 2147483648
    %v2186 = vxor.u32 %v2178, 2147483648
    %v2187 = vxor.u32 %v2179, 2147483648
    %v2188 = vxor.u32 %v2180, 2147483648
    %v2189 = vxor.u32 %v2181, 2147483648
    %v2190 = vxor.u32 %v2182, 2147483648
    %v2191 = vxor.u32 %v2183, 2147483648
    %v2192 = vxor.u32 %v2184, 2147483648
    %v2193 = vmul.f32 %v2185, 1.442695
    %v2194 = vpow.pop %v2193
    %v2195 = vmul.f32 %v2186, 1.442695
    %v2196 = vpow.pop %v2195
    %v2197 = vmul.f32 %v2187, 1.442695
    %v2198 = vpow.pop %v2197
    %v2199 = vmul.f32 %v2188, 1.442695
    %v2200 = vpow.pop %v2199
    %v2201 = vmul.f32 %v2189, 1.442695
    %v2202 = vpow.pop %v2201
    %v2203 = vmul.f32 %v2190, 1.442695
    %v2204 = vpow.pop %v2203
    %v2205 = vmul.f32 %v2191, 1.442695
    %v2206 = vpow.pop %v2205
    %v2207 = vmul.f32 %v2192, 1.442695
    %v2208 = vpow.pop %v2207
    %v2209 = vadd.f32 %v2194, 1.0
    %v2210 = vadd.f32 %v2196, 1.0
    %v2211 = vadd.f32 %v2198, 1.0
    %v2212 = vadd.f32 %v2200, 1.0
    %v2213 = vadd.f32 %v2202, 1.0
    %v2214 = vadd.f32 %v2204, 1.0
    %v2215 = vadd.f32 %v2206, 1.0
    %v2216 = vadd.f32 %v2208, 1.0
    %v2217 = vrcp.pop %v2209
    %v2218 = vmul.f32 1.0, %v2217
    %v2219 = vrcp.pop %v2210
    %v2220 = vmul.f32 1.0, %v2219
    %v2221 = vrcp.pop %v2211
    %v2222 = vmul.f32 1.0, %v2221
    %v2223 = vrcp.pop %v2212
    %v2224 = vmul.f32 1.0, %v2223
    %v2225 = vrcp.pop %v2213
    %v2226 = vmul.f32 1.0, %v2225
    %v2227 = vrcp.pop %v2214
    %v2228 = vmul.f32 1.0, %v2227
    %v2229 = vrcp.pop %v2215
    %v2230 = vmul.f32 1.0, %v2229
    %v2231 = vrcp.pop %v2216
    %v2232 = vmul.f32 1.0, %v2231
    %2233 = vmatprep.subr.mxu0 0.0
    %2234 = vmatpush1.msra.mxu0 %v73
    %2235 = vmatprep.subr.mxu0 0.0
    %2236 = vmatpush1.msra.mxu0 %v74
    %2237 = vmatprep.subr.mxu0 0.0
    %2238 = vmatpush1.msra.mxu0 %v75
    %2239 = vmatprep.subr.mxu0 0.0
    %2240 = vmatpush1.msra.mxu0 %v76
    %2241 = vmatprep.subr.mxu0 0.0
    %2242 = vmatpush1.msra.mxu0 0.0
    %2243 = vmatprep.subr.mxu0 0.0
    %2244 = vmatpush1.msra.mxu0 0.0
    %2245 = vmatprep.subr.mxu0 0.0
    %2246 = vmatpush1.msra.mxu0 0.0
    %2247 = vmatprep.subr.mxu0 0.0
    %2248 = vmatpush1.msra.mxu0 0.0
    %2249 = vmatprep.subr.mxu0 0.0
    %2250 = vmatpush1.msra.mxu0 0.0
    %2251 = vmatprep.subr.mxu0 0.0
    %2252 = vmatpush1.msra.mxu0 0.0
    %2253 = vmatprep.subr.mxu0 0.0
    %2254 = vmatpush1.msra.mxu0 0.0
    %2255 = vmatprep.subr.mxu0 0.0
    %2256 = vmatpush1.msra.mxu0 0.0
    %2257 = vmatprep.subr.mxu0 0.0
    %2258 = vmatpush1.msra.mxu0 0.0
    %2259 = vmatprep.subr.mxu0 0.0
    %2260 = vmatpush1.msra.mxu0 0.0
    %2261 = vmatprep.subr.mxu0 0.0
    %2262 = vmatpush1.msra.mxu0 0.0
    %2263 = vmatprep.subr.mxu0 0.0
    %2264 = vmatpush1.msra.mxu0 0.0
    %2265 = vmatprep.subr.mxu0 0.0
    %2266 = vmatpush1.msra.mxu0 0.0
    %2267 = vmatprep.subr.mxu0 0.0
    %2268 = vmatpush1.msra.mxu0 0.0
    %2269 = vmatprep.subr.mxu0 0.0
    %2270 = vmatpush1.msra.mxu0 0.0
    %2271 = vmatprep.subr.mxu0 0.0
    %2272 = vmatpush1.msra.mxu0 0.0
    %2273 = vmatprep.subr.mxu0 0.0
    %2274 = vmatpush1.msra.mxu0 0.0
    %2275 = vmatprep.subr.mxu0 0.0
    %2276 = vmatpush1.msra.mxu0 0.0
    %2277 = vmatprep.subr.mxu0 0.0
    %2278 = vmatpush1.msra.mxu0 0.0
    %2279 = vmatprep.subr.mxu0 0.0
    %2280 = vmatpush1.msra.mxu0 0.0
    %2281 = vmatprep.subr.mxu0 0.0
    %2282 = vmatpush1.msra.mxu0 0.0
    %2283 = vmatprep.subr.mxu0 0.0
    %2284 = vmatpush1.msra.mxu0 0.0
    %2285 = vmatprep.subr.mxu0 0.0
    %2286 = vmatpush1.msra.mxu0 0.0
    %2287 = vmatprep.subr.mxu0 0.0
    %2288 = vmatpush1.msra.mxu0 0.0
    %2289 = vmatprep.subr.mxu0 0.0
    %2290 = vmatpush1.msra.mxu0 0.0
    %2291 = vmatprep.subr.mxu0 0.0
    %2292 = vmatpush1.msra.mxu0 0.0
    %2293 = vmatprep.subr.mxu0 0.0
    %2294 = vmatpush1.msra.mxu0 0.0
    %2295 = vmatprep.subr.mxu0 0.0
    %2296 = vmatpush1.msra.mxu0 0.0
    %2297 = vmatprep.mubr.f32.mxu0 0.0
    %2298 = vmatmul.mubr.f32.gmra.mrb[0].mxu0 %v2089
    %v2299 = vpop.f32.mrb[0].mxu0
    %v2300 = vadd.f32 0.0, %v2299
    %v2301 = vpop.f32.mrb[0].mxu0
    %2302 = vdwg.mxu0
    %v2304 = vrot.slane %v2300, 5
    %v2305 = vrot.slane %v2300, 6
    %v2306 = vrot.slane %v2300, 7
    %v2307 = vrot.slane %v2300, 1
    %v2308 = vrot.slane %v2300, 2
    %v2309 = vrot.slane %v2300, 3
    %v2310 = vrot.slane %v2300, 4
    %v2319 = vadd.f32 %v390, %v2304
    %v2320 = vadd.f32 %v400, %v2305
    %v2321 = vadd.f32 %v410, %v2306
    %v2322 = vadd.f32 %v420, %v2300
    %v2323 = vadd.f32 %v430, %v2307
    %v2324 = vadd.f32 %v440, %v2308
    %v2325 = vadd.f32 %v450, %v2309
    %v2326 = vadd.f32 %v460, %v2310
    %v2327 = vxor.u32 %v2319, 2147483648
    %v2328 = vxor.u32 %v2320, 2147483648
    %v2329 = vxor.u32 %v2321, 2147483648
    %v2330 = vxor.u32 %v2322, 2147483648
    %v2331 = vxor.u32 %v2323, 2147483648
    %v2332 = vxor.u32 %v2324, 2147483648
    %v2333 = vxor.u32 %v2325, 2147483648
    %v2334 = vxor.u32 %v2326, 2147483648
    %v2335 = vmul.f32 %v2327, 1.442695
    %v2336 = vpow.pop %v2335
    %v2337 = vmul.f32 %v2328, 1.442695
    %v2338 = vpow.pop %v2337
    %v2339 = vmul.f32 %v2329, 1.442695
    %v2340 = vpow.pop %v2339
    %v2341 = vmul.f32 %v2330, 1.442695
    %v2342 = vpow.pop %v2341
    %v2343 = vmul.f32 %v2331, 1.442695
    %v2344 = vpow.pop %v2343
    %v2345 = vmul.f32 %v2332, 1.442695
    %v2346 = vpow.pop %v2345
    %v2347 = vmul.f32 %v2333, 1.442695
    %v2348 = vpow.pop %v2347
    %v2349 = vmul.f32 %v2334, 1.442695
    %v2350 = vpow.pop %v2349
    %v2351 = vadd.f32 %v2336, 1.0
    %v2352 = vadd.f32 %v2338, 1.0
    %v2353 = vadd.f32 %v2340, 1.0
    %v2354 = vadd.f32 %v2342, 1.0
    %v2355 = vadd.f32 %v2344, 1.0
    %v2356 = vadd.f32 %v2346, 1.0
    %v2357 = vadd.f32 %v2348, 1.0
    %v2358 = vadd.f32 %v2350, 1.0
    %v2359 = vrcp.pop %v2351
    %v2360 = vmul.f32 1.0, %v2359
    %v2361 = vrcp.pop %v2352
    %v2362 = vmul.f32 1.0, %v2361
    %v2363 = vrcp.pop %v2353
    %v2364 = vmul.f32 1.0, %v2363
    %v2365 = vrcp.pop %v2354
    %v2366 = vmul.f32 1.0, %v2365
    %v2367 = vrcp.pop %v2355
    %v2368 = vmul.f32 1.0, %v2367
    %v2369 = vrcp.pop %v2356
    %v2370 = vmul.f32 1.0, %v2369
    %v2371 = vrcp.pop %v2357
    %v2372 = vmul.f32 1.0, %v2371
    %v2373 = vrcp.pop %v2358
    %v2374 = vmul.f32 1.0, %v2373
    %2375 = vmatprep.subr.mxu0 0.0
    %2376 = vmatpush1.msra.mxu0 %v78
    %2377 = vmatprep.subr.mxu0 0.0
    %2378 = vmatpush1.msra.mxu0 %v79
    %2379 = vmatprep.subr.mxu0 0.0
    %2380 = vmatpush1.msra.mxu0 %v80
    %2381 = vmatprep.subr.mxu0 0.0
    %2382 = vmatpush1.msra.mxu0 %v81
    %2383 = vmatprep.subr.mxu0 0.0
    %2384 = vmatpush1.msra.mxu0 0.0
    %2385 = vmatprep.subr.mxu0 0.0
    %2386 = vmatpush1.msra.mxu0 0.0
    %2387 = vmatprep.subr.mxu0 0.0
    %2388 = vmatpush1.msra.mxu0 0.0
    %2389 = vmatprep.subr.mxu0 0.0
    %2390 = vmatpush1.msra.mxu0 0.0
    %2391 = vmatprep.subr.mxu0 0.0
    %2392 = vmatpush1.msra.mxu0 0.0
    %2393 = vmatprep.subr.mxu0 0.0
    %2394 = vmatpush1.msra.mxu0 0.0
    %2395 = vmatprep.subr.mxu0 0.0
    %2396 = vmatpush1.msra.mxu0 0.0
    %2397 = vmatprep.subr.mxu0 0.0
    %2398 = vmatpush1.msra.mxu0 0.0
    %2399 = vmatprep.subr.mxu0 0.0
    %2400 = vmatpush1.msra.mxu0 0.0
    %2401 = vmatprep.subr.mxu0 0.0
    %2402 = vmatpush1.msra.mxu0 0.0
    %2403 = vmatprep.subr.mxu0 0.0
    %2404 = vmatpush1.msra.mxu0 0.0
    %2405 = vmatprep.subr.mxu0 0.0
    %2406 = vmatpush1.msra.mxu0 0.0
    %2407 = vmatprep.subr.mxu0 0.0
    %2408 = vmatpush1.msra.mxu0 0.0
    %2409 = vmatprep.subr.mxu0 0.0
    %2410 = vmatpush1.msra.mxu0 0.0
    %2411 = vmatprep.subr.mxu0 0.0
    %2412 = vmatpush1.msra.mxu0 0.0
    %2413 = vmatprep.subr.mxu0 0.0
    %2414 = vmatpush1.msra.mxu0 0.0
    %2415 = vmatprep.subr.mxu0 0.0
    %2416 = vmatpush1.msra.mxu0 0.0
    %2417 = vmatprep.subr.mxu0 0.0
    %2418 = vmatpush1.msra.mxu0 0.0
    %2419 = vmatprep.subr.mxu0 0.0
    %2420 = vmatpush1.msra.mxu0 0.0
    %2421 = vmatprep.subr.mxu0 0.0
    %2422 = vmatpush1.msra.mxu0 0.0
    %2423 = vmatprep.subr.mxu0 0.0
    %2424 = vmatpush1.msra.mxu0 0.0
    %2425 = vmatprep.subr.mxu0 0.0
    %2426 = vmatpush1.msra.mxu0 0.0
    %2427 = vmatprep.subr.mxu0 0.0
    %2428 = vmatpush1.msra.mxu0 0.0
    %2429 = vmatprep.subr.mxu0 0.0
    %2430 = vmatpush1.msra.mxu0 0.0
    %2431 = vmatprep.subr.mxu0 0.0
    %2432 = vmatpush1.msra.mxu0 0.0
    %2433 = vmatprep.subr.mxu0 0.0
    %2434 = vmatpush1.msra.mxu0 0.0
    %2435 = vmatprep.subr.mxu0 0.0
    %2436 = vmatpush1.msra.mxu0 0.0
    %2437 = vmatprep.subr.mxu0 0.0
    %2438 = vmatpush1.msra.mxu0 0.0
    %2439 = vmatprep.mubr.f32.mxu0 0.0
    %2440 = vmatmul.mubr.f32.gmra.mrb[0].mxu0 %v2089
    %v2441 = vpop.f32.mrb[0].mxu0
    %v2442 = vadd.f32 %v87, %v2441
    %v2443 = vpop.f32.mrb[0].mxu0
    %2444 = vdwg.mxu0
    %v2446 = vrot.slane %v2442, 5
    %v2447 = vrot.slane %v2442, 6
    %v2448 = vrot.slane %v2442, 7
    %v2449 = vrot.slane %v2442, 1
    %v2450 = vrot.slane %v2442, 2
    %v2451 = vrot.slane %v2442, 3
    %v2452 = vrot.slane %v2442, 4
    %v2461 = vmul.f32 %v2218, %v2446
    %v2462 = vmul.f32 %v2220, %v2447
    %v2463 = vmul.f32 %v2222, %v2448
    %v2464 = vmul.f32 %v2224, %v2442
    %v2465 = vmul.f32 %v2226, %v2449
    %v2466 = vmul.f32 %v2228, %v2450
    %v2467 = vmul.f32 %v2230, %v2451
    %v2468 = vmul.f32 %v2232, %v2452
    %v2469 = vadd.f32 %v548, %v2461
    %v2470 = vadd.f32 %v558, %v2462
    %v2471 = vadd.f32 %v568, %v2463
    %v2472 = vadd.f32 %v578, %v2464
    %v2473 = vadd.f32 %v588, %v2465
    %v2474 = vadd.f32 %v598, %v2466
    %v2475 = vadd.f32 %v608, %v2467
    %v2476 = vadd.f32 %v618, %v2468
    %v2477 = vtanh.pop %v2469
    %v2478 = vtanh.pop %v2470
    %v2479 = vtanh.pop %v2471
    %v2480 = vtanh.pop %v2472
    %v2481 = vtanh.pop %v2473
    %v2482 = vtanh.pop %v2474
    %v2483 = vtanh.pop %v2475
    %v2484 = vtanh.pop %v2476
    %v2493 = vrot.slane %v2477, 1
    %v2494 = vrot.slane %v2478, 1
    %v2495 = vrot.slane %v2479, 1
    %v2496 = vrot.slane %v2480, 1
    %v2497 = vrot.slane %v2481, 1
    %v2498 = vrot.slane %v2482, 1
    %v2499 = vrot.slane %v2483, 1
    %v2500 = vrot.slane %v2484, 1
    %v2509 = vsub.f32 %v2059, %v2493
    %v2510 = vsub.f32 %v2060, %v2494
    %v2511 = vsub.f32 %v2061, %v2495
    %v2512 = vsub.f32 %v2062, %v2496
    %v2513 = vsub.f32 %v2063, %v2497
    %v2514 = vsub.f32 %v2064, %v2498
    %v2515 = vsub.f32 %v2065, %v2499
    %v2516 = vsub.f32 %v2066, %v2500
    %v2525 = vrot.slane %v2509, 7
    %v2526 = vrot.slane %v2510, 7
    %v2527 = vrot.slane %v2511, 7
    %v2528 = vrot.slane %v2512, 7
    %v2529 = vrot.slane %v2513, 7
    %v2530 = vrot.slane %v2514, 7
    %v2531 = vrot.slane %v2515, 7
    %v2532 = vrot.slane %v2516, 7
    %v2541 = vmul.f32 %v2360, %v2525
    %v2542 = vmul.f32 %v2362, %v2526
    %v2543 = vmul.f32 %v2364, %v2527
    %v2544 = vmul.f32 %v2366, %v2528
    %v2545 = vmul.f32 %v2368, %v2529
    %v2546 = vmul.f32 %v2370, %v2530
    %v2547 = vmul.f32 %v2372, %v2531
    %v2548 = vmul.f32 %v2374, %v2532
    %v2549 = vadd.f32 %v2477, %v2541
    %v2550 = vadd.f32 %v2478, %v2542
    %v2551 = vadd.f32 %v2479, %v2543
    %v2552 = vadd.f32 %v2480, %v2544
    %v2553 = vadd.f32 %v2481, %v2545
    %v2554 = vadd.f32 %v2482, %v2546
    %v2555 = vadd.f32 %v2483, %v2547
    %v2556 = vadd.f32 %v2484, %v2548
    %v2565 = vrot.slane %v2549, 3
    %v2566 = vrot.slane %v2550, 2
    %v2567 = vsel %vm1033, %v2566, %v2565
    %v2568 = vrot.slane %v2551, 1
    %v2569 = vsel %vm1036, %v2568, %v2567
    %v2570 = vsel %vm1039, %v2552, %v2569
    %v2571 = vrot.slane %v2553, 7
    %v2572 = vsel %vm1042, %v2571, %v2570
    %v2573 = vrot.slane %v2554, 6
    %v2574 = vsel %vm1045, %v2573, %v2572
    %v2575 = vrot.slane %v2555, 5
    %v2576 = vsel %vm1048, %v2575, %v2574
    %v2577 = vrot.slane %v2556, 4
    %v2578 = vsel %vm1051, %v2577, %v2576
    %v2579 = vsel %vm116, %v2578, 0
    %2581 = vmatprep.subr.mxu0 0.0
    %2582 = vmatpush1.msra.mxu0 %v68
    %2583 = vmatprep.subr.mxu0 0.0
    %2584 = vmatpush1.msra.mxu0 %v69
    %2585 = vmatprep.subr.mxu0 0.0
    %2586 = vmatpush1.msra.mxu0 %v70
    %2587 = vmatprep.subr.mxu0 0.0
    %2588 = vmatpush1.msra.mxu0 %v71
    %2589 = vmatprep.subr.mxu0 0.0
    %2590 = vmatpush1.msra.mxu0 0.0
    %2591 = vmatprep.subr.mxu0 0.0
    %2592 = vmatpush1.msra.mxu0 0.0
    %2593 = vmatprep.subr.mxu0 0.0
    %2594 = vmatpush1.msra.mxu0 0.0
    %2595 = vmatprep.subr.mxu0 0.0
    %2596 = vmatpush1.msra.mxu0 0.0
    %2597 = vmatprep.subr.mxu0 0.0
    %2598 = vmatpush1.msra.mxu0 0.0
    %2599 = vmatprep.subr.mxu0 0.0
    %2600 = vmatpush1.msra.mxu0 0.0
    %2601 = vmatprep.subr.mxu0 0.0
    %2602 = vmatpush1.msra.mxu0 0.0
    %2603 = vmatprep.subr.mxu0 0.0
    %2604 = vmatpush1.msra.mxu0 0.0
    %2605 = vmatprep.subr.mxu0 0.0
    %2606 = vmatpush1.msra.mxu0 0.0
    %2607 = vmatprep.subr.mxu0 0.0
    %2608 = vmatpush1.msra.mxu0 0.0
    %2609 = vmatprep.subr.mxu0 0.0
    %2610 = vmatpush1.msra.mxu0 0.0
    %2611 = vmatprep.subr.mxu0 0.0
    %2612 = vmatpush1.msra.mxu0 0.0
    %2613 = vmatprep.subr.mxu0 0.0
    %2614 = vmatpush1.msra.mxu0 0.0
    %2615 = vmatprep.subr.mxu0 0.0
    %2616 = vmatpush1.msra.mxu0 0.0
    %2617 = vmatprep.subr.mxu0 0.0
    %2618 = vmatpush1.msra.mxu0 0.0
    %2619 = vmatprep.subr.mxu0 0.0
    %2620 = vmatpush1.msra.mxu0 0.0
    %2621 = vmatprep.subr.mxu0 0.0
    %2622 = vmatpush1.msra.mxu0 0.0
    %2623 = vmatprep.subr.mxu0 0.0
    %2624 = vmatpush1.msra.mxu0 0.0
    %2625 = vmatprep.subr.mxu0 0.0
    %2626 = vmatpush1.msra.mxu0 0.0
    %2627 = vmatprep.subr.mxu0 0.0
    %2628 = vmatpush1.msra.mxu0 0.0
    %2629 = vmatprep.subr.mxu0 0.0
    %2630 = vmatpush1.msra.mxu0 0.0
    %2631 = vmatprep.subr.mxu0 0.0
    %2632 = vmatpush1.msra.mxu0 0.0
    %2633 = vmatprep.subr.mxu0 0.0
    %2634 = vmatpush1.msra.mxu0 0.0
    %2635 = vmatprep.subr.mxu0 0.0
    %2636 = vmatpush1.msra.mxu0 0.0
    %2637 = vmatprep.subr.mxu0 0.0
    %2638 = vmatpush1.msra.mxu0 0.0
    %2639 = vmatprep.subr.mxu0 0.0
    %2640 = vmatpush1.msra.mxu0 0.0
    %2641 = vmatprep.subr.mxu0 0.0
    %2642 = vmatpush1.msra.mxu0 0.0
    %2643 = vmatprep.subr.mxu0 0.0
    %2644 = vmatpush1.msra.mxu0 0.0
    %2645 = vmatprep.mubr.f32.mxu0 0.0
    %2646 = vmatmul.mubr.f32.gmra.mrb[0].mxu0 %v2579
    %v2647 = vpop.f32.mrb[0].mxu0
    %v2648 = vadd.f32 0.0, %v2647
    %v2649 = vpop.f32.mrb[0].mxu0
    %2650 = vdwg.mxu0
    %v2652 = vrot.slane %v2648, 4
    %v2653 = vrot.slane %v2648, 5
    %v2654 = vrot.slane %v2648, 6
    %v2655 = vrot.slane %v2648, 7
    %v2656 = vrot.slane %v2648, 1
    %v2657 = vrot.slane %v2648, 2
    %v2658 = vrot.slane %v2648, 3
    %v2667 = vadd.f32 %v232, %v2652
    %v2668 = vadd.f32 %v242, %v2653
    %v2669 = vadd.f32 %v252, %v2654
    %v2670 = vadd.f32 %v262, %v2655
    %v2671 = vadd.f32 %v272, %v2648
    %v2672 = vadd.f32 %v282, %v2656
    %v2673 = vadd.f32 %v292, %v2657
    %v2674 = vadd.f32 %v302, %v2658
    %v2675 = vxor.u32 %v2667, 2147483648
    %v2676 = vxor.u32 %v2668, 2147483648
    %v2677 = vxor.u32 %v2669, 2147483648
    %v2678 = vxor.u32 %v2670, 2147483648
    %v2679 = vxor.u32 %v2671, 2147483648
    %v2680 = vxor.u32 %v2672, 2147483648
    %v2681 = vxor.u32 %v2673, 2147483648
    %v2682 = vxor.u32 %v2674, 2147483648
    %v2683 = vmul.f32 %v2675, 1.442695
    %v2684 = vpow.pop %v2683
    %v2685 = vmul.f32 %v2676, 1.442695
    %v2686 = vpow.pop %v2685
    %v2687 = vmul.f32 %v2677, 1.442695
    %v2688 = vpow.pop %v2687
    %v2689 = vmul.f32 %v2678, 1.442695
    %v2690 = vpow.pop %v2689
    %v2691 = vmul.f32 %v2679, 1.442695
    %v2692 = vpow.pop %v2691
    %v2693 = vmul.f32 %v2680, 1.442695
    %v2694 = vpow.pop %v2693
    %v2695 = vmul.f32 %v2681, 1.442695
    %v2696 = vpow.pop %v2695
    %v2697 = vmul.f32 %v2682, 1.442695
    %v2698 = vpow.pop %v2697
    %v2699 = vadd.f32 %v2684, 1.0
    %v2700 = vadd.f32 %v2686, 1.0
    %v2701 = vadd.f32 %v2688, 1.0
    %v2702 = vadd.f32 %v2690, 1.0
    %v2703 = vadd.f32 %v2692, 1.0
    %v2704 = vadd.f32 %v2694, 1.0
    %v2705 = vadd.f32 %v2696, 1.0
    %v2706 = vadd.f32 %v2698, 1.0
    %v2707 = vrcp.pop %v2699
    %v2708 = vmul.f32 1.0, %v2707
    %v2709 = vrcp.pop %v2700
    %v2710 = vmul.f32 1.0, %v2709
    %v2711 = vrcp.pop %v2701
    %v2712 = vmul.f32 1.0, %v2711
    %v2713 = vrcp.pop %v2702
    %v2714 = vmul.f32 1.0, %v2713
    %v2715 = vrcp.pop %v2703
    %v2716 = vmul.f32 1.0, %v2715
    %v2717 = vrcp.pop %v2704
    %v2718 = vmul.f32 1.0, %v2717
    %v2719 = vrcp.pop %v2705
    %v2720 = vmul.f32 1.0, %v2719
    %v2721 = vrcp.pop %v2706
    %v2722 = vmul.f32 1.0, %v2721
    %2723 = vmatprep.subr.mxu0 0.0
    %2724 = vmatpush1.msra.mxu0 %v73
    %2725 = vmatprep.subr.mxu0 0.0
    %2726 = vmatpush1.msra.mxu0 %v74
    %2727 = vmatprep.subr.mxu0 0.0
    %2728 = vmatpush1.msra.mxu0 %v75
    %2729 = vmatprep.subr.mxu0 0.0
    %2730 = vmatpush1.msra.mxu0 %v76
    %2731 = vmatprep.subr.mxu0 0.0
    %2732 = vmatpush1.msra.mxu0 0.0
    %2733 = vmatprep.subr.mxu0 0.0
    %2734 = vmatpush1.msra.mxu0 0.0
    %2735 = vmatprep.subr.mxu0 0.0
    %2736 = vmatpush1.msra.mxu0 0.0
    %2737 = vmatprep.subr.mxu0 0.0
    %2738 = vmatpush1.msra.mxu0 0.0
    %2739 = vmatprep.subr.mxu0 0.0
    %2740 = vmatpush1.msra.mxu0 0.0
    %2741 = vmatprep.subr.mxu0 0.0
    %2742 = vmatpush1.msra.mxu0 0.0
    %2743 = vmatprep.subr.mxu0 0.0
    %2744 = vmatpush1.msra.mxu0 0.0
    %2745 = vmatprep.subr.mxu0 0.0
    %2746 = vmatpush1.msra.mxu0 0.0
    %2747 = vmatprep.subr.mxu0 0.0
    %2748 = vmatpush1.msra.mxu0 0.0
    %2749 = vmatprep.subr.mxu0 0.0
    %2750 = vmatpush1.msra.mxu0 0.0
    %2751 = vmatprep.subr.mxu0 0.0
    %2752 = vmatpush1.msra.mxu0 0.0
    %2753 = vmatprep.subr.mxu0 0.0
    %2754 = vmatpush1.msra.mxu0 0.0
    %2755 = vmatprep.subr.mxu0 0.0
    %2756 = vmatpush1.msra.mxu0 0.0
    %2757 = vmatprep.subr.mxu0 0.0
    %2758 = vmatpush1.msra.mxu0 0.0
    %2759 = vmatprep.subr.mxu0 0.0
    %2760 = vmatpush1.msra.mxu0 0.0
    %2761 = vmatprep.subr.mxu0 0.0
    %2762 = vmatpush1.msra.mxu0 0.0
    %2763 = vmatprep.subr.mxu0 0.0
    %2764 = vmatpush1.msra.mxu0 0.0
    %2765 = vmatprep.subr.mxu0 0.0
    %2766 = vmatpush1.msra.mxu0 0.0
    %2767 = vmatprep.subr.mxu0 0.0
    %2768 = vmatpush1.msra.mxu0 0.0
    %2769 = vmatprep.subr.mxu0 0.0
    %2770 = vmatpush1.msra.mxu0 0.0
    %2771 = vmatprep.subr.mxu0 0.0
    %2772 = vmatpush1.msra.mxu0 0.0
    %2773 = vmatprep.subr.mxu0 0.0
    %2774 = vmatpush1.msra.mxu0 0.0
    %2775 = vmatprep.subr.mxu0 0.0
    %2776 = vmatpush1.msra.mxu0 0.0
    %2777 = vmatprep.subr.mxu0 0.0
    %2778 = vmatpush1.msra.mxu0 0.0
    %2779 = vmatprep.subr.mxu0 0.0
    %2780 = vmatpush1.msra.mxu0 0.0
    %2781 = vmatprep.subr.mxu0 0.0
    %2782 = vmatpush1.msra.mxu0 0.0
    %2783 = vmatprep.subr.mxu0 0.0
    %2784 = vmatpush1.msra.mxu0 0.0
    %2785 = vmatprep.subr.mxu0 0.0
    %2786 = vmatpush1.msra.mxu0 0.0
    %2787 = vmatprep.mubr.f32.mxu0 0.0
    %2788 = vmatmul.mubr.f32.gmra.mrb[0].mxu0 %v2579
    %v2789 = vpop.f32.mrb[0].mxu0
    %v2790 = vadd.f32 0.0, %v2789
    %v2791 = vpop.f32.mrb[0].mxu0
    %2792 = vdwg.mxu0
    %v2794 = vrot.slane %v2790, 4
    %v2795 = vrot.slane %v2790, 5
    %v2796 = vrot.slane %v2790, 6
    %v2797 = vrot.slane %v2790, 7
    %v2798 = vrot.slane %v2790, 1
    %v2799 = vrot.slane %v2790, 2
    %v2800 = vrot.slane %v2790, 3
    %v2809 = vadd.f32 %v390, %v2794
    %v2810 = vadd.f32 %v400, %v2795
    %v2811 = vadd.f32 %v410, %v2796
    %v2812 = vadd.f32 %v420, %v2797
    %v2813 = vadd.f32 %v430, %v2790
    %v2814 = vadd.f32 %v440, %v2798
    %v2815 = vadd.f32 %v450, %v2799
    %v2816 = vadd.f32 %v460, %v2800
    %v2817 = vxor.u32 %v2809, 2147483648
    %v2818 = vxor.u32 %v2810, 2147483648
    %v2819 = vxor.u32 %v2811, 2147483648
    %v2820 = vxor.u32 %v2812, 2147483648
    %v2821 = vxor.u32 %v2813, 2147483648
    %v2822 = vxor.u32 %v2814, 2147483648
    %v2823 = vxor.u32 %v2815, 2147483648
    %v2824 = vxor.u32 %v2816, 2147483648
    %v2825 = vmul.f32 %v2817, 1.442695
    %v2826 = vpow.pop %v2825
    %v2827 = vmul.f32 %v2818, 1.442695
    %v2828 = vpow.pop %v2827
    %v2829 = vmul.f32 %v2819, 1.442695
    %v2830 = vpow.pop %v2829
    %v2831 = vmul.f32 %v2820, 1.442695
    %v2832 = vpow.pop %v2831
    %v2833 = vmul.f32 %v2821, 1.442695
    %v2834 = vpow.pop %v2833
    %v2835 = vmul.f32 %v2822, 1.442695
    %v2836 = vpow.pop %v2835
    %v2837 = vmul.f32 %v2823, 1.442695
    %v2838 = vpow.pop %v2837
    %v2839 = vmul.f32 %v2824, 1.442695
    %v2840 = vpow.pop %v2839
    %v2841 = vadd.f32 %v2826, 1.0
    %v2842 = vadd.f32 %v2828, 1.0
    %v2843 = vadd.f32 %v2830, 1.0
    %v2844 = vadd.f32 %v2832, 1.0
    %v2845 = vadd.f32 %v2834, 1.0
    %v2846 = vadd.f32 %v2836, 1.0
    %v2847 = vadd.f32 %v2838, 1.0
    %v2848 = vadd.f32 %v2840, 1.0
    %v2849 = vrcp.pop %v2841
    %v2850 = vmul.f32 1.0, %v2849
    %v2851 = vrcp.pop %v2842
    %v2852 = vmul.f32 1.0, %v2851
    %v2853 = vrcp.pop %v2843
    %v2854 = vmul.f32 1.0, %v2853
    %v2855 = vrcp.pop %v2844
    %v2856 = vmul.f32 1.0, %v2855
    %v2857 = vrcp.pop %v2845
    %v2858 = vmul.f32 1.0, %v2857
    %v2859 = vrcp.pop %v2846
    %v2860 = vmul.f32 1.0, %v2859
    %v2861 = vrcp.pop %v2847
    %v2862 = vmul.f32 1.0, %v2861
    %v2863 = vrcp.pop %v2848
    %v2864 = vmul.f32 1.0, %v2863
    %2865 = vmatprep.subr.mxu0 0.0
    %2866 = vmatpush1.msra.mxu0 %v78
    %2867 = vmatprep.subr.mxu0 0.0
    %2868 = vmatpush1.msra.mxu0 %v79
    %2869 = vmatprep.subr.mxu0 0.0
    %2870 = vmatpush1.msra.mxu0 %v80
    %2871 = vmatprep.subr.mxu0 0.0
    %2872 = vmatpush1.msra.mxu0 %v81
    %2873 = vmatprep.subr.mxu0 0.0
    %2874 = vmatpush1.msra.mxu0 0.0
    %2875 = vmatprep.subr.mxu0 0.0
    %2876 = vmatpush1.msra.mxu0 0.0
    %2877 = vmatprep.subr.mxu0 0.0
    %2878 = vmatpush1.msra.mxu0 0.0
    %2879 = vmatprep.subr.mxu0 0.0
    %2880 = vmatpush1.msra.mxu0 0.0
    %2881 = vmatprep.subr.mxu0 0.0
    %2882 = vmatpush1.msra.mxu0 0.0
    %2883 = vmatprep.subr.mxu0 0.0
    %2884 = vmatpush1.msra.mxu0 0.0
    %2885 = vmatprep.subr.mxu0 0.0
    %2886 = vmatpush1.msra.mxu0 0.0
    %2887 = vmatprep.subr.mxu0 0.0
    %2888 = vmatpush1.msra.mxu0 0.0
    %2889 = vmatprep.subr.mxu0 0.0
    %2890 = vmatpush1.msra.mxu0 0.0
    %2891 = vmatprep.subr.mxu0 0.0
    %2892 = vmatpush1.msra.mxu0 0.0
    %2893 = vmatprep.subr.mxu0 0.0
    %2894 = vmatpush1.msra.mxu0 0.0
    %2895 = vmatprep.subr.mxu0 0.0
    %2896 = vmatpush1.msra.mxu0 0.0
    %2897 = vmatprep.subr.mxu0 0.0
    %2898 = vmatpush1.msra.mxu0 0.0
    %2899 = vmatprep.subr.mxu0 0.0
    %2900 = vmatpush1.msra.mxu0 0.0
    %2901 = vmatprep.subr.mxu0 0.0
    %2902 = vmatpush1.msra.mxu0 0.0
    %2903 = vmatprep.subr.mxu0 0.0
    %2904 = vmatpush1.msra.mxu0 0.0
    %2905 = vmatprep.subr.mxu0 0.0
    %2906 = vmatpush1.msra.mxu0 0.0
    %2907 = vmatprep.subr.mxu0 0.0
    %2908 = vmatpush1.msra.mxu0 0.0
    %2909 = vmatprep.subr.mxu0 0.0
    %2910 = vmatpush1.msra.mxu0 0.0
    %2911 = vmatprep.subr.mxu0 0.0
    %2912 = vmatpush1.msra.mxu0 0.0
    %2913 = vmatprep.subr.mxu0 0.0
    %2914 = vmatpush1.msra.mxu0 0.0
    %2915 = vmatprep.subr.mxu0 0.0
    %2916 = vmatpush1.msra.mxu0 0.0
    %2917 = vmatprep.subr.mxu0 0.0
    %2918 = vmatpush1.msra.mxu0 0.0
    %2919 = vmatprep.subr.mxu0 0.0
    %2920 = vmatpush1.msra.mxu0 0.0
    %2921 = vmatprep.subr.mxu0 0.0
    %2922 = vmatpush1.msra.mxu0 0.0
    %2923 = vmatprep.subr.mxu0 0.0
    %2924 = vmatpush1.msra.mxu0 0.0
    %2925 = vmatprep.subr.mxu0 0.0
    %2926 = vmatpush1.msra.mxu0 0.0
    %2927 = vmatprep.subr.mxu0 0.0
    %2928 = vmatpush1.msra.mxu0 0.0
    %2929 = vmatprep.mubr.f32.mxu0 0.0
    %2930 = vmatmul.mubr.f32.gmra.mrb[0].mxu0 %v2579
    %v2931 = vpop.f32.mrb[0].mxu0
    %v2932 = vadd.f32 %v87, %v2931
    %v2933 = vpop.f32.mrb[0].mxu0
    %2934 = vdwg.mxu0
    %v2936 = vrot.slane %v2932, 4
    %v2937 = vrot.slane %v2932, 5
    %v2938 = vrot.slane %v2932, 6
    %v2939 = vrot.slane %v2932, 7
    %v2940 = vrot.slane %v2932, 1
    %v2941 = vrot.slane %v2932, 2
    %v2942 = vrot.slane %v2932, 3
    %v2951 = vmul.f32 %v2708, %v2936
    %v2952 = vmul.f32 %v2710, %v2937
    %v2953 = vmul.f32 %v2712, %v2938
    %v2954 = vmul.f32 %v2714, %v2939
    %v2955 = vmul.f32 %v2716, %v2932
    %v2956 = vmul.f32 %v2718, %v2940
    %v2957 = vmul.f32 %v2720, %v2941
    %v2958 = vmul.f32 %v2722, %v2942
    %v2959 = vadd.f32 %v548, %v2951
    %v2960 = vadd.f32 %v558, %v2952
    %v2961 = vadd.f32 %v568, %v2953
    %v2962 = vadd.f32 %v578, %v2954
    %v2963 = vadd.f32 %v588, %v2955
    %v2964 = vadd.f32 %v598, %v2956
    %v2965 = vadd.f32 %v608, %v2957
    %v2966 = vadd.f32 %v618, %v2958
    %v2967 = vtanh.pop %v2959
    %v2968 = vtanh.pop %v2960
    %v2969 = vtanh.pop %v2961
    %v2970 = vtanh.pop %v2962
    %v2971 = vtanh.pop %v2963
    %v2972 = vtanh.pop %v2964
    %v2973 = vtanh.pop %v2965
    %v2974 = vtanh.pop %v2966
    %v2983 = vrot.slane %v2967, 1
    %v2984 = vrot.slane %v2968, 1
    %v2985 = vrot.slane %v2969, 1
    %v2986 = vrot.slane %v2970, 1
    %v2987 = vrot.slane %v2971, 1
    %v2988 = vrot.slane %v2972, 1
    %v2989 = vrot.slane %v2973, 1
    %v2990 = vrot.slane %v2974, 1
    %v2999 = vsub.f32 %v2549, %v2983
    %v3000 = vsub.f32 %v2550, %v2984
    %v3001 = vsub.f32 %v2551, %v2985
    %v3002 = vsub.f32 %v2552, %v2986
    %v3003 = vsub.f32 %v2553, %v2987
    %v3004 = vsub.f32 %v2554, %v2988
    %v3005 = vsub.f32 %v2555, %v2989
    %v3006 = vsub.f32 %v2556, %v2990
    %v3015 = vrot.slane %v2999, 7
    %v3016 = vrot.slane %v3000, 7
    %v3017 = vrot.slane %v3001, 7
    %v3018 = vrot.slane %v3002, 7
    %v3019 = vrot.slane %v3003, 7
    %v3020 = vrot.slane %v3004, 7
    %v3021 = vrot.slane %v3005, 7
    %v3022 = vrot.slane %v3006, 7
    %v3031 = vmul.f32 %v2850, %v3015
    %v3032 = vmul.f32 %v2852, %v3016
    %v3033 = vmul.f32 %v2854, %v3017
    %v3034 = vmul.f32 %v2856, %v3018
    %v3035 = vmul.f32 %v2858, %v3019
    %v3036 = vmul.f32 %v2860, %v3020
    %v3037 = vmul.f32 %v2862, %v3021
    %v3038 = vmul.f32 %v2864, %v3022
    %v3039 = vadd.f32 %v2967, %v3031
    %v3040 = vadd.f32 %v2968, %v3032
    %v3041 = vadd.f32 %v2969, %v3033
    %v3042 = vadd.f32 %v2970, %v3034
    %v3043 = vadd.f32 %v2971, %v3035
    %v3044 = vadd.f32 %v2972, %v3036
    %v3045 = vadd.f32 %v2973, %v3037
    %v3046 = vadd.f32 %v2974, %v3038
    %v3055 = vrot.slane %v3039, 4
    %v3056 = vrot.slane %v3040, 3
    %v3057 = vsel %vm1033, %v3056, %v3055
    %v3058 = vrot.slane %v3041, 2
    %v3059 = vsel %vm1036, %v3058, %v3057
    %v3060 = vrot.slane %v3042, 1
    %v3061 = vsel %vm1039, %v3060, %v3059
    %v3062 = vsel %vm1042, %v3043, %v3061
    %v3063 = vrot.slane %v3044, 7
    %v3064 = vsel %vm1045, %v3063, %v3062
    %v3065 = vrot.slane %v3045, 6
    %v3066 = vsel %vm1048, %v3065, %v3064
    %v3067 = vrot.slane %v3046, 5
    %v3068 = vsel %vm1051, %v3067, %v3066
    %v3069 = vsel %vm116, %v3068, 0
    %3071 = vmatprep.subr.mxu0 0.0
    %3072 = vmatpush1.msra.mxu0 %v68
    %3073 = vmatprep.subr.mxu0 0.0
    %3074 = vmatpush1.msra.mxu0 %v69
    %3075 = vmatprep.subr.mxu0 0.0
    %3076 = vmatpush1.msra.mxu0 %v70
    %3077 = vmatprep.subr.mxu0 0.0
    %3078 = vmatpush1.msra.mxu0 %v71
    %3079 = vmatprep.subr.mxu0 0.0
    %3080 = vmatpush1.msra.mxu0 0.0
    %3081 = vmatprep.subr.mxu0 0.0
    %3082 = vmatpush1.msra.mxu0 0.0
    %3083 = vmatprep.subr.mxu0 0.0
    %3084 = vmatpush1.msra.mxu0 0.0
    %3085 = vmatprep.subr.mxu0 0.0
    %3086 = vmatpush1.msra.mxu0 0.0
    %3087 = vmatprep.subr.mxu0 0.0
    %3088 = vmatpush1.msra.mxu0 0.0
    %3089 = vmatprep.subr.mxu0 0.0
    %3090 = vmatpush1.msra.mxu0 0.0
    %3091 = vmatprep.subr.mxu0 0.0
    %3092 = vmatpush1.msra.mxu0 0.0
    %3093 = vmatprep.subr.mxu0 0.0
    %3094 = vmatpush1.msra.mxu0 0.0
    %3095 = vmatprep.subr.mxu0 0.0
    %3096 = vmatpush1.msra.mxu0 0.0
    %3097 = vmatprep.subr.mxu0 0.0
    %3098 = vmatpush1.msra.mxu0 0.0
    %3099 = vmatprep.subr.mxu0 0.0
    %3100 = vmatpush1.msra.mxu0 0.0
    %3101 = vmatprep.subr.mxu0 0.0
    %3102 = vmatpush1.msra.mxu0 0.0
    %3103 = vmatprep.subr.mxu0 0.0
    %3104 = vmatpush1.msra.mxu0 0.0
    %3105 = vmatprep.subr.mxu0 0.0
    %3106 = vmatpush1.msra.mxu0 0.0
    %3107 = vmatprep.subr.mxu0 0.0
    %3108 = vmatpush1.msra.mxu0 0.0
    %3109 = vmatprep.subr.mxu0 0.0
    %3110 = vmatpush1.msra.mxu0 0.0
    %3111 = vmatprep.subr.mxu0 0.0
    %3112 = vmatpush1.msra.mxu0 0.0
    %3113 = vmatprep.subr.mxu0 0.0
    %3114 = vmatpush1.msra.mxu0 0.0
    %3115 = vmatprep.subr.mxu0 0.0
    %3116 = vmatpush1.msra.mxu0 0.0
    %3117 = vmatprep.subr.mxu0 0.0
    %3118 = vmatpush1.msra.mxu0 0.0
    %3119 = vmatprep.subr.mxu0 0.0
    %3120 = vmatpush1.msra.mxu0 0.0
    %3121 = vmatprep.subr.mxu0 0.0
    %3122 = vmatpush1.msra.mxu0 0.0
    %3123 = vmatprep.subr.mxu0 0.0
    %3124 = vmatpush1.msra.mxu0 0.0
    %3125 = vmatprep.subr.mxu0 0.0
    %3126 = vmatpush1.msra.mxu0 0.0
    %3127 = vmatprep.subr.mxu0 0.0
    %3128 = vmatpush1.msra.mxu0 0.0
    %3129 = vmatprep.subr.mxu0 0.0
    %3130 = vmatpush1.msra.mxu0 0.0
    %3131 = vmatprep.subr.mxu0 0.0
    %3132 = vmatpush1.msra.mxu0 0.0
    %3133 = vmatprep.subr.mxu0 0.0
    %3134 = vmatpush1.msra.mxu0 0.0
    %3135 = vmatprep.mubr.f32.mxu0 0.0
    %3136 = vmatmul.mubr.f32.gmra.mrb[0].mxu0 %v3069
    %v3137 = vpop.f32.mrb[0].mxu0
    %v3138 = vadd.f32 0.0, %v3137
    %v3139 = vpop.f32.mrb[0].mxu0
    %3140 = vdwg.mxu0
    %v3142 = vrot.slane %v3138, 3
    %v3143 = vrot.slane %v3138, 4
    %v3144 = vrot.slane %v3138, 5
    %v3145 = vrot.slane %v3138, 6
    %v3146 = vrot.slane %v3138, 7
    %v3147 = vrot.slane %v3138, 1
    %v3148 = vrot.slane %v3138, 2
    %v3157 = vadd.f32 %v232, %v3142
    %v3158 = vadd.f32 %v242, %v3143
    %v3159 = vadd.f32 %v252, %v3144
    %v3160 = vadd.f32 %v262, %v3145
    %v3161 = vadd.f32 %v272, %v3146
    %v3162 = vadd.f32 %v282, %v3138
    %v3163 = vadd.f32 %v292, %v3147
    %v3164 = vadd.f32 %v302, %v3148
    %v3165 = vxor.u32 %v3157, 2147483648
    %v3166 = vxor.u32 %v3158, 2147483648
    %v3167 = vxor.u32 %v3159, 2147483648
    %v3168 = vxor.u32 %v3160, 2147483648
    %v3169 = vxor.u32 %v3161, 2147483648
    %v3170 = vxor.u32 %v3162, 2147483648
    %v3171 = vxor.u32 %v3163, 2147483648
    %v3172 = vxor.u32 %v3164, 2147483648
    %v3173 = vmul.f32 %v3165, 1.442695
    %v3174 = vpow.pop %v3173
    %v3175 = vmul.f32 %v3166, 1.442695
    %v3176 = vpow.pop %v3175
    %v3177 = vmul.f32 %v3167, 1.442695
    %v3178 = vpow.pop %v3177
    %v3179 = vmul.f32 %v3168, 1.442695
    %v3180 = vpow.pop %v3179
    %v3181 = vmul.f32 %v3169, 1.442695
    %v3182 = vpow.pop %v3181
    %v3183 = vmul.f32 %v3170, 1.442695
    %v3184 = vpow.pop %v3183
    %v3185 = vmul.f32 %v3171, 1.442695
    %v3186 = vpow.pop %v3185
    %v3187 = vmul.f32 %v3172, 1.442695
    %v3188 = vpow.pop %v3187
    %v3189 = vadd.f32 %v3174, 1.0
    %v3190 = vadd.f32 %v3176, 1.0
    %v3191 = vadd.f32 %v3178, 1.0
    %v3192 = vadd.f32 %v3180, 1.0
    %v3193 = vadd.f32 %v3182, 1.0
    %v3194 = vadd.f32 %v3184, 1.0
    %v3195 = vadd.f32 %v3186, 1.0
    %v3196 = vadd.f32 %v3188, 1.0
    %v3197 = vrcp.pop %v3189
    %v3198 = vmul.f32 1.0, %v3197
    %v3199 = vrcp.pop %v3190
    %v3200 = vmul.f32 1.0, %v3199
    %v3201 = vrcp.pop %v3191
    %v3202 = vmul.f32 1.0, %v3201
    %v3203 = vrcp.pop %v3192
    %v3204 = vmul.f32 1.0, %v3203
    %v3205 = vrcp.pop %v3193
    %v3206 = vmul.f32 1.0, %v3205
    %v3207 = vrcp.pop %v3194
    %v3208 = vmul.f32 1.0, %v3207
    %v3209 = vrcp.pop %v3195
    %v3210 = vmul.f32 1.0, %v3209
    %v3211 = vrcp.pop %v3196
    %v3212 = vmul.f32 1.0, %v3211
    %3213 = vmatprep.subr.mxu0 0.0
    %3214 = vmatpush1.msra.mxu0 %v73
    %3215 = vmatprep.subr.mxu0 0.0
    %3216 = vmatpush1.msra.mxu0 %v74
    %3217 = vmatprep.subr.mxu0 0.0
    %3218 = vmatpush1.msra.mxu0 %v75
    %3219 = vmatprep.subr.mxu0 0.0
    %3220 = vmatpush1.msra.mxu0 %v76
    %3221 = vmatprep.subr.mxu0 0.0
    %3222 = vmatpush1.msra.mxu0 0.0
    %3223 = vmatprep.subr.mxu0 0.0
    %3224 = vmatpush1.msra.mxu0 0.0
    %3225 = vmatprep.subr.mxu0 0.0
    %3226 = vmatpush1.msra.mxu0 0.0
    %3227 = vmatprep.subr.mxu0 0.0
    %3228 = vmatpush1.msra.mxu0 0.0
    %3229 = vmatprep.subr.mxu0 0.0
    %3230 = vmatpush1.msra.mxu0 0.0
    %3231 = vmatprep.subr.mxu0 0.0
    %3232 = vmatpush1.msra.mxu0 0.0
    %3233 = vmatprep.subr.mxu0 0.0
    %3234 = vmatpush1.msra.mxu0 0.0
    %3235 = vmatprep.subr.mxu0 0.0
    %3236 = vmatpush1.msra.mxu0 0.0
    %3237 = vmatprep.subr.mxu0 0.0
    %3238 = vmatpush1.msra.mxu0 0.0
    %3239 = vmatprep.subr.mxu0 0.0
    %3240 = vmatpush1.msra.mxu0 0.0
    %3241 = vmatprep.subr.mxu0 0.0
    %3242 = vmatpush1.msra.mxu0 0.0
    %3243 = vmatprep.subr.mxu0 0.0
    %3244 = vmatpush1.msra.mxu0 0.0
    %3245 = vmatprep.subr.mxu0 0.0
    %3246 = vmatpush1.msra.mxu0 0.0
    %3247 = vmatprep.subr.mxu0 0.0
    %3248 = vmatpush1.msra.mxu0 0.0
    %3249 = vmatprep.subr.mxu0 0.0
    %3250 = vmatpush1.msra.mxu0 0.0
    %3251 = vmatprep.subr.mxu0 0.0
    %3252 = vmatpush1.msra.mxu0 0.0
    %3253 = vmatprep.subr.mxu0 0.0
    %3254 = vmatpush1.msra.mxu0 0.0
    %3255 = vmatprep.subr.mxu0 0.0
    %3256 = vmatpush1.msra.mxu0 0.0
    %3257 = vmatprep.subr.mxu0 0.0
    %3258 = vmatpush1.msra.mxu0 0.0
    %3259 = vmatprep.subr.mxu0 0.0
    %3260 = vmatpush1.msra.mxu0 0.0
    %3261 = vmatprep.subr.mxu0 0.0
    %3262 = vmatpush1.msra.mxu0 0.0
    %3263 = vmatprep.subr.mxu0 0.0
    %3264 = vmatpush1.msra.mxu0 0.0
    %3265 = vmatprep.subr.mxu0 0.0
    %3266 = vmatpush1.msra.mxu0 0.0
    %3267 = vmatprep.subr.mxu0 0.0
    %3268 = vmatpush1.msra.mxu0 0.0
    %3269 = vmatprep.subr.mxu0 0.0
    %3270 = vmatpush1.msra.mxu0 0.0
    %3271 = vmatprep.subr.mxu0 0.0
    %3272 = vmatpush1.msra.mxu0 0.0
    %3273 = vmatprep.subr.mxu0 0.0
    %3274 = vmatpush1.msra.mxu0 0.0
    %3275 = vmatprep.subr.mxu0 0.0
    %3276 = vmatpush1.msra.mxu0 0.0
    %3277 = vmatprep.mubr.f32.mxu0 0.0
    %3278 = vmatmul.mubr.f32.gmra.mrb[0].mxu0 %v3069
    %v3279 = vpop.f32.mrb[0].mxu0
    %v3280 = vadd.f32 0.0, %v3279
    %v3281 = vpop.f32.mrb[0].mxu0
    %3282 = vdwg.mxu0
    %v3284 = vrot.slane %v3280, 3
    %v3285 = vrot.slane %v3280, 4
    %v3286 = vrot.slane %v3280, 5
    %v3287 = vrot.slane %v3280, 6
    %v3288 = vrot.slane %v3280, 7
    %v3289 = vrot.slane %v3280, 1
    %v3290 = vrot.slane %v3280, 2
    %v3299 = vadd.f32 %v390, %v3284
    %v3300 = vadd.f32 %v400, %v3285
    %v3301 = vadd.f32 %v410, %v3286
    %v3302 = vadd.f32 %v420, %v3287
    %v3303 = vadd.f32 %v430, %v3288
    %v3304 = vadd.f32 %v440, %v3280
    %v3305 = vadd.f32 %v450, %v3289
    %v3306 = vadd.f32 %v460, %v3290
    %v3307 = vxor.u32 %v3299, 2147483648
    %v3308 = vxor.u32 %v3300, 2147483648
    %v3309 = vxor.u32 %v3301, 2147483648
    %v3310 = vxor.u32 %v3302, 2147483648
    %v3311 = vxor.u32 %v3303, 2147483648
    %v3312 = vxor.u32 %v3304, 2147483648
    %v3313 = vxor.u32 %v3305, 2147483648
    %v3314 = vxor.u32 %v3306, 2147483648
    %v3315 = vmul.f32 %v3307, 1.442695
    %v3316 = vpow.pop %v3315
    %v3317 = vmul.f32 %v3308, 1.442695
    %v3318 = vpow.pop %v3317
    %v3319 = vmul.f32 %v3309, 1.442695
    %v3320 = vpow.pop %v3319
    %v3321 = vmul.f32 %v3310, 1.442695
    %v3322 = vpow.pop %v3321
    %v3323 = vmul.f32 %v3311, 1.442695
    %v3324 = vpow.pop %v3323
    %v3325 = vmul.f32 %v3312, 1.442695
    %v3326 = vpow.pop %v3325
    %v3327 = vmul.f32 %v3313, 1.442695
    %v3328 = vpow.pop %v3327
    %v3329 = vmul.f32 %v3314, 1.442695
    %v3330 = vpow.pop %v3329
    %v3331 = vadd.f32 %v3316, 1.0
    %v3332 = vadd.f32 %v3318, 1.0
    %v3333 = vadd.f32 %v3320, 1.0
    %v3334 = vadd.f32 %v3322, 1.0
    %v3335 = vadd.f32 %v3324, 1.0
    %v3336 = vadd.f32 %v3326, 1.0
    %v3337 = vadd.f32 %v3328, 1.0
    %v3338 = vadd.f32 %v3330, 1.0
    %v3339 = vrcp.pop %v3331
    %v3340 = vmul.f32 1.0, %v3339
    %v3341 = vrcp.pop %v3332
    %v3342 = vmul.f32 1.0, %v3341
    %v3343 = vrcp.pop %v3333
    %v3344 = vmul.f32 1.0, %v3343
    %v3345 = vrcp.pop %v3334
    %v3346 = vmul.f32 1.0, %v3345
    %v3347 = vrcp.pop %v3335
    %v3348 = vmul.f32 1.0, %v3347
    %v3349 = vrcp.pop %v3336
    %v3350 = vmul.f32 1.0, %v3349
    %v3351 = vrcp.pop %v3337
    %v3352 = vmul.f32 1.0, %v3351
    %v3353 = vrcp.pop %v3338
    %v3354 = vmul.f32 1.0, %v3353
    %3355 = vmatprep.subr.mxu0 0.0
    %3356 = vmatpush1.msra.mxu0 %v78
    %3357 = vmatprep.subr.mxu0 0.0
    %3358 = vmatpush1.msra.mxu0 %v79
    %3359 = vmatprep.subr.mxu0 0.0
    %3360 = vmatpush1.msra.mxu0 %v80
    %3361 = vmatprep.subr.mxu0 0.0
    %3362 = vmatpush1.msra.mxu0 %v81
    %3363 = vmatprep.subr.mxu0 0.0
    %3364 = vmatpush1.msra.mxu0 0.0
    %3365 = vmatprep.subr.mxu0 0.0
    %3366 = vmatpush1.msra.mxu0 0.0
    %3367 = vmatprep.subr.mxu0 0.0
    %3368 = vmatpush1.msra.mxu0 0.0
    %3369 = vmatprep.subr.mxu0 0.0
    %3370 = vmatpush1.msra.mxu0 0.0
    %3371 = vmatprep.subr.mxu0 0.0
    %3372 = vmatpush1.msra.mxu0 0.0
    %3373 = vmatprep.subr.mxu0 0.0
    %3374 = vmatpush1.msra.mxu0 0.0
    %3375 = vmatprep.subr.mxu0 0.0
    %3376 = vmatpush1.msra.mxu0 0.0
    %3377 = vmatprep.subr.mxu0 0.0
    %3378 = vmatpush1.msra.mxu0 0.0
    %3379 = vmatprep.subr.mxu0 0.0
    %3380 = vmatpush1.msra.mxu0 0.0
    %3381 = vmatprep.subr.mxu0 0.0
    %3382 = vmatpush1.msra.mxu0 0.0
    %3383 = vmatprep.subr.mxu0 0.0
    %3384 = vmatpush1.msra.mxu0 0.0
    %3385 = vmatprep.subr.mxu0 0.0
    %3386 = vmatpush1.msra.mxu0 0.0
    %3387 = vmatprep.subr.mxu0 0.0
    %3388 = vmatpush1.msra.mxu0 0.0
    %3389 = vmatprep.subr.mxu0 0.0
    %3390 = vmatpush1.msra.mxu0 0.0
    %3391 = vmatprep.subr.mxu0 0.0
    %3392 = vmatpush1.msra.mxu0 0.0
    %3393 = vmatprep.subr.mxu0 0.0
    %3394 = vmatpush1.msra.mxu0 0.0
    %3395 = vmatprep.subr.mxu0 0.0
    %3396 = vmatpush1.msra.mxu0 0.0
    %3397 = vmatprep.subr.mxu0 0.0
    %3398 = vmatpush1.msra.mxu0 0.0
    %3399 = vmatprep.subr.mxu0 0.0
    %3400 = vmatpush1.msra.mxu0 0.0
    %3401 = vmatprep.subr.mxu0 0.0
    %3402 = vmatpush1.msra.mxu0 0.0
    %3403 = vmatprep.subr.mxu0 0.0
    %3404 = vmatpush1.msra.mxu0 0.0
    %3405 = vmatprep.subr.mxu0 0.0
    %3406 = vmatpush1.msra.mxu0 0.0
    %3407 = vmatprep.subr.mxu0 0.0
    %3408 = vmatpush1.msra.mxu0 0.0
    %3409 = vmatprep.subr.mxu0 0.0
    %3410 = vmatpush1.msra.mxu0 0.0
    %3411 = vmatprep.subr.mxu0 0.0
    %3412 = vmatpush1.msra.mxu0 0.0
    %3413 = vmatprep.subr.mxu0 0.0
    %3414 = vmatpush1.msra.mxu0 0.0
    %3415 = vmatprep.subr.mxu0 0.0
    %3416 = vmatpush1.msra.mxu0 0.0
    %3417 = vmatprep.subr.mxu0 0.0
    %3418 = vmatpush1.msra.mxu0 0.0
    %3419 = vmatprep.mubr.f32.mxu0 0.0
    %3420 = vmatmul.mubr.f32.gmra.mrb[0].mxu0 %v3069
    %v3421 = vpop.f32.mrb[0].mxu0
    %v3422 = vadd.f32 %v87, %v3421
    %v3423 = vpop.f32.mrb[0].mxu0
    %3424 = vdwg.mxu0
    %v3426 = vrot.slane %v3422, 3
    %v3427 = vrot.slane %v3422, 4
    %v3428 = vrot.slane %v3422, 5
    %v3429 = vrot.slane %v3422, 6
    %v3430 = vrot.slane %v3422, 7
    %v3431 = vrot.slane %v3422, 1
    %v3432 = vrot.slane %v3422, 2
    %v3441 = vmul.f32 %v3198, %v3426
    %v3442 = vmul.f32 %v3200, %v3427
    %v3443 = vmul.f32 %v3202, %v3428
    %v3444 = vmul.f32 %v3204, %v3429
    %v3445 = vmul.f32 %v3206, %v3430
    %v3446 = vmul.f32 %v3208, %v3422
    %v3447 = vmul.f32 %v3210, %v3431
    %v3448 = vmul.f32 %v3212, %v3432
    %v3449 = vadd.f32 %v548, %v3441
    %v3450 = vadd.f32 %v558, %v3442
    %v3451 = vadd.f32 %v568, %v3443
    %v3452 = vadd.f32 %v578, %v3444
    %v3453 = vadd.f32 %v588, %v3445
    %v3454 = vadd.f32 %v598, %v3446
    %v3455 = vadd.f32 %v608, %v3447
    %v3456 = vadd.f32 %v618, %v3448
    %v3457 = vtanh.pop %v3449
    %v3458 = vtanh.pop %v3450
    %v3459 = vtanh.pop %v3451
    %v3460 = vtanh.pop %v3452
    %v3461 = vtanh.pop %v3453
    %v3462 = vtanh.pop %v3454
    %v3463 = vtanh.pop %v3455
    %v3464 = vtanh.pop %v3456
    %v3473 = vrot.slane %v3457, 1
    %v3474 = vrot.slane %v3458, 1
    %v3475 = vrot.slane %v3459, 1
    %v3476 = vrot.slane %v3460, 1
    %v3477 = vrot.slane %v3461, 1
    %v3478 = vrot.slane %v3462, 1
    %v3479 = vrot.slane %v3463, 1
    %v3480 = vrot.slane %v3464, 1
    %v3489 = vsub.f32 %v3039, %v3473
    %v3490 = vsub.f32 %v3040, %v3474
    %v3491 = vsub.f32 %v3041, %v3475
    %v3492 = vsub.f32 %v3042, %v3476
    %v3493 = vsub.f32 %v3043, %v3477
    %v3494 = vsub.f32 %v3044, %v3478
    %v3495 = vsub.f32 %v3045, %v3479
    %v3496 = vsub.f32 %v3046, %v3480
    %v3505 = vrot.slane %v3489, 7
    %v3506 = vrot.slane %v3490, 7
    %v3507 = vrot.slane %v3491, 7
    %v3508 = vrot.slane %v3492, 7
    %v3509 = vrot.slane %v3493, 7
    %v3510 = vrot.slane %v3494, 7
    %v3511 = vrot.slane %v3495, 7
    %v3512 = vrot.slane %v3496, 7
    %v3521 = vmul.f32 %v3340, %v3505
    %v3522 = vmul.f32 %v3342, %v3506
    %v3523 = vmul.f32 %v3344, %v3507
    %v3524 = vmul.f32 %v3346, %v3508
    %v3525 = vmul.f32 %v3348, %v3509
    %v3526 = vmul.f32 %v3350, %v3510
    %v3527 = vmul.f32 %v3352, %v3511
    %v3528 = vmul.f32 %v3354, %v3512
    %v3529 = vadd.f32 %v3457, %v3521
    %v3530 = vadd.f32 %v3458, %v3522
    %v3531 = vadd.f32 %v3459, %v3523
    %v3532 = vadd.f32 %v3460, %v3524
    %v3533 = vadd.f32 %v3461, %v3525
    %v3534 = vadd.f32 %v3462, %v3526
    %v3535 = vadd.f32 %v3463, %v3527
    %v3536 = vadd.f32 %v3464, %v3528
    %v3545 = vrot.slane %v3529, 5
    %v3546 = vrot.slane %v3530, 4
    %v3547 = vsel %vm1033, %v3546, %v3545
    %v3548 = vrot.slane %v3531, 3
    %v3549 = vsel %vm1036, %v3548, %v3547
    %v3550 = vrot.slane %v3532, 2
    %v3551 = vsel %vm1039, %v3550, %v3549
    %v3552 = vrot.slane %v3533, 1
    %v3553 = vsel %vm1042, %v3552, %v3551
    %v3554 = vsel %vm1045, %v3534, %v3553
    %v3555 = vrot.slane %v3535, 7
    %v3556 = vsel %vm1048, %v3555, %v3554
    %v3557 = vrot.slane %v3536, 6
    %v3558 = vsel %vm1051, %v3557, %v3556
    %v3559 = vsel %vm116, %v3558, 0
    %3561 = vmatprep.subr.mxu0 0.0
    %3562 = vmatpush1.msra.mxu0 %v68
    %3563 = vmatprep.subr.mxu0 0.0
    %3564 = vmatpush1.msra.mxu0 %v69
    %3565 = vmatprep.subr.mxu0 0.0
    %3566 = vmatpush1.msra.mxu0 %v70
    %3567 = vmatprep.subr.mxu0 0.0
    %3568 = vmatpush1.msra.mxu0 %v71
    %3569 = vmatprep.subr.mxu0 0.0
    %3570 = vmatpush1.msra.mxu0 0.0
    %3571 = vmatprep.subr.mxu0 0.0
    %3572 = vmatpush1.msra.mxu0 0.0
    %3573 = vmatprep.subr.mxu0 0.0
    %3574 = vmatpush1.msra.mxu0 0.0
    %3575 = vmatprep.subr.mxu0 0.0
    %3576 = vmatpush1.msra.mxu0 0.0
    %3577 = vmatprep.subr.mxu0 0.0
    %3578 = vmatpush1.msra.mxu0 0.0
    %3579 = vmatprep.subr.mxu0 0.0
    %3580 = vmatpush1.msra.mxu0 0.0
    %3581 = vmatprep.subr.mxu0 0.0
    %3582 = vmatpush1.msra.mxu0 0.0
    %3583 = vmatprep.subr.mxu0 0.0
    %3584 = vmatpush1.msra.mxu0 0.0
    %3585 = vmatprep.subr.mxu0 0.0
    %3586 = vmatpush1.msra.mxu0 0.0
    %3587 = vmatprep.subr.mxu0 0.0
    %3588 = vmatpush1.msra.mxu0 0.0
    %3589 = vmatprep.subr.mxu0 0.0
    %3590 = vmatpush1.msra.mxu0 0.0
    %3591 = vmatprep.subr.mxu0 0.0
    %3592 = vmatpush1.msra.mxu0 0.0
    %3593 = vmatprep.subr.mxu0 0.0
    %3594 = vmatpush1.msra.mxu0 0.0
    %3595 = vmatprep.subr.mxu0 0.0
    %3596 = vmatpush1.msra.mxu0 0.0
    %3597 = vmatprep.subr.mxu0 0.0
    %3598 = vmatpush1.msra.mxu0 0.0
    %3599 = vmatprep.subr.mxu0 0.0
    %3600 = vmatpush1.msra.mxu0 0.0
    %3601 = vmatprep.subr.mxu0 0.0
    %3602 = vmatpush1.msra.mxu0 0.0
    %3603 = vmatprep.subr.mxu0 0.0
    %3604 = vmatpush1.msra.mxu0 0.0
    %3605 = vmatprep.subr.mxu0 0.0
    %3606 = vmatpush1.msra.mxu0 0.0
    %3607 = vmatprep.subr.mxu0 0.0
    %3608 = vmatpush1.msra.mxu0 0.0
    %3609 = vmatprep.subr.mxu0 0.0
    %3610 = vmatpush1.msra.mxu0 0.0
    %3611 = vmatprep.subr.mxu0 0.0
    %3612 = vmatpush1.msra.mxu0 0.0
    %3613 = vmatprep.subr.mxu0 0.0
    %3614 = vmatpush1.msra.mxu0 0.0
    %3615 = vmatprep.subr.mxu0 0.0
    %3616 = vmatpush1.msra.mxu0 0.0
    %3617 = vmatprep.subr.mxu0 0.0
    %3618 = vmatpush1.msra.mxu0 0.0
    %3619 = vmatprep.subr.mxu0 0.0
    %3620 = vmatpush1.msra.mxu0 0.0
    %3621 = vmatprep.subr.mxu0 0.0
    %3622 = vmatpush1.msra.mxu0 0.0
    %3623 = vmatprep.subr.mxu0 0.0
    %3624 = vmatpush1.msra.mxu0 0.0
    %3625 = vmatprep.mubr.f32.mxu0 0.0
    %3626 = vmatmul.mubr.f32.gmra.mrb[0].mxu0 %v3559
    %v3627 = vpop.f32.mrb[0].mxu0
    %v3628 = vadd.f32 0.0, %v3627
    %v3629 = vpop.f32.mrb[0].mxu0
    %3630 = vdwg.mxu0
    %v3632 = vrot.slane %v3628, 2
    %v3633 = vrot.slane %v3628, 3
    %v3634 = vrot.slane %v3628, 4
    %v3635 = vrot.slane %v3628, 5
    %v3636 = vrot.slane %v3628, 6
    %v3637 = vrot.slane %v3628, 7
    %v3638 = vrot.slane %v3628, 1
    %v3647 = vadd.f32 %v232, %v3632
    %v3648 = vadd.f32 %v242, %v3633
    %v3649 = vadd.f32 %v252, %v3634
    %v3650 = vadd.f32 %v262, %v3635
    %v3651 = vadd.f32 %v272, %v3636
    %v3652 = vadd.f32 %v282, %v3637
    %v3653 = vadd.f32 %v292, %v3628
    %v3654 = vadd.f32 %v302, %v3638
    %v3655 = vxor.u32 %v3647, 2147483648
    %v3656 = vxor.u32 %v3648, 2147483648
    %v3657 = vxor.u32 %v3649, 2147483648
    %v3658 = vxor.u32 %v3650, 2147483648
    %v3659 = vxor.u32 %v3651, 2147483648
    %v3660 = vxor.u32 %v3652, 2147483648
    %v3661 = vxor.u32 %v3653, 2147483648
    %v3662 = vxor.u32 %v3654, 2147483648
    %v3663 = vmul.f32 %v3655, 1.442695
    %v3664 = vpow.pop %v3663
    %v3665 = vmul.f32 %v3656, 1.442695
    %v3666 = vpow.pop %v3665
    %v3667 = vmul.f32 %v3657, 1.442695
    %v3668 = vpow.pop %v3667
    %v3669 = vmul.f32 %v3658, 1.442695
    %v3670 = vpow.pop %v3669
    %v3671 = vmul.f32 %v3659, 1.442695
    %v3672 = vpow.pop %v3671
    %v3673 = vmul.f32 %v3660, 1.442695
    %v3674 = vpow.pop %v3673
    %v3675 = vmul.f32 %v3661, 1.442695
    %v3676 = vpow.pop %v3675
    %v3677 = vmul.f32 %v3662, 1.442695
    %v3678 = vpow.pop %v3677
    %v3679 = vadd.f32 %v3664, 1.0
    %v3680 = vadd.f32 %v3666, 1.0
    %v3681 = vadd.f32 %v3668, 1.0
    %v3682 = vadd.f32 %v3670, 1.0
    %v3683 = vadd.f32 %v3672, 1.0
    %v3684 = vadd.f32 %v3674, 1.0
    %v3685 = vadd.f32 %v3676, 1.0
    %v3686 = vadd.f32 %v3678, 1.0
    %v3687 = vrcp.pop %v3679
    %v3688 = vmul.f32 1.0, %v3687
    %v3689 = vrcp.pop %v3680
    %v3690 = vmul.f32 1.0, %v3689
    %v3691 = vrcp.pop %v3681
    %v3692 = vmul.f32 1.0, %v3691
    %v3693 = vrcp.pop %v3682
    %v3694 = vmul.f32 1.0, %v3693
    %v3695 = vrcp.pop %v3683
    %v3696 = vmul.f32 1.0, %v3695
    %v3697 = vrcp.pop %v3684
    %v3698 = vmul.f32 1.0, %v3697
    %v3699 = vrcp.pop %v3685
    %v3700 = vmul.f32 1.0, %v3699
    %v3701 = vrcp.pop %v3686
    %v3702 = vmul.f32 1.0, %v3701
    %3703 = vmatprep.subr.mxu0 0.0
    %3704 = vmatpush1.msra.mxu0 %v73
    %3705 = vmatprep.subr.mxu0 0.0
    %3706 = vmatpush1.msra.mxu0 %v74
    %3707 = vmatprep.subr.mxu0 0.0
    %3708 = vmatpush1.msra.mxu0 %v75
    %3709 = vmatprep.subr.mxu0 0.0
    %3710 = vmatpush1.msra.mxu0 %v76
    %3711 = vmatprep.subr.mxu0 0.0
    %3712 = vmatpush1.msra.mxu0 0.0
    %3713 = vmatprep.subr.mxu0 0.0
    %3714 = vmatpush1.msra.mxu0 0.0
    %3715 = vmatprep.subr.mxu0 0.0
    %3716 = vmatpush1.msra.mxu0 0.0
    %3717 = vmatprep.subr.mxu0 0.0
    %3718 = vmatpush1.msra.mxu0 0.0
    %3719 = vmatprep.subr.mxu0 0.0
    %3720 = vmatpush1.msra.mxu0 0.0
    %3721 = vmatprep.subr.mxu0 0.0
    %3722 = vmatpush1.msra.mxu0 0.0
    %3723 = vmatprep.subr.mxu0 0.0
    %3724 = vmatpush1.msra.mxu0 0.0
    %3725 = vmatprep.subr.mxu0 0.0
    %3726 = vmatpush1.msra.mxu0 0.0
    %3727 = vmatprep.subr.mxu0 0.0
    %3728 = vmatpush1.msra.mxu0 0.0
    %3729 = vmatprep.subr.mxu0 0.0
    %3730 = vmatpush1.msra.mxu0 0.0
    %3731 = vmatprep.subr.mxu0 0.0
    %3732 = vmatpush1.msra.mxu0 0.0
    %3733 = vmatprep.subr.mxu0 0.0
    %3734 = vmatpush1.msra.mxu0 0.0
    %3735 = vmatprep.subr.mxu0 0.0
    %3736 = vmatpush1.msra.mxu0 0.0
    %3737 = vmatprep.subr.mxu0 0.0
    %3738 = vmatpush1.msra.mxu0 0.0
    %3739 = vmatprep.subr.mxu0 0.0
    %3740 = vmatpush1.msra.mxu0 0.0
    %3741 = vmatprep.subr.mxu0 0.0
    %3742 = vmatpush1.msra.mxu0 0.0
    %3743 = vmatprep.subr.mxu0 0.0
    %3744 = vmatpush1.msra.mxu0 0.0
    %3745 = vmatprep.subr.mxu0 0.0
    %3746 = vmatpush1.msra.mxu0 0.0
    %3747 = vmatprep.subr.mxu0 0.0
    %3748 = vmatpush1.msra.mxu0 0.0
    %3749 = vmatprep.subr.mxu0 0.0
    %3750 = vmatpush1.msra.mxu0 0.0
    %3751 = vmatprep.subr.mxu0 0.0
    %3752 = vmatpush1.msra.mxu0 0.0
    %3753 = vmatprep.subr.mxu0 0.0
    %3754 = vmatpush1.msra.mxu0 0.0
    %3755 = vmatprep.subr.mxu0 0.0
    %3756 = vmatpush1.msra.mxu0 0.0
    %3757 = vmatprep.subr.mxu0 0.0
    %3758 = vmatpush1.msra.mxu0 0.0
    %3759 = vmatprep.subr.mxu0 0.0
    %3760 = vmatpush1.msra.mxu0 0.0
    %3761 = vmatprep.subr.mxu0 0.0
    %3762 = vmatpush1.msra.mxu0 0.0
    %3763 = vmatprep.subr.mxu0 0.0
    %3764 = vmatpush1.msra.mxu0 0.0
    %3765 = vmatprep.subr.mxu0 0.0
    %3766 = vmatpush1.msra.mxu0 0.0
    %3767 = vmatprep.mubr.f32.mxu0 0.0
    %3768 = vmatmul.mubr.f32.gmra.mrb[0].mxu0 %v3559
    %v3769 = vpop.f32.mrb[0].mxu0
    %v3770 = vadd.f32 0.0, %v3769
    %v3771 = vpop.f32.mrb[0].mxu0
    %3772 = vdwg.mxu0
    %v3774 = vrot.slane %v3770, 2
    %v3775 = vrot.slane %v3770, 3
    %v3776 = vrot.slane %v3770, 4
    %v3777 = vrot.slane %v3770, 5
    %v3778 = vrot.slane %v3770, 6
    %v3779 = vrot.slane %v3770, 7
    %v3780 = vrot.slane %v3770, 1
    %v3789 = vadd.f32 %v390, %v3774
    %v3790 = vadd.f32 %v400, %v3775
    %v3791 = vadd.f32 %v410, %v3776
    %v3792 = vadd.f32 %v420, %v3777
    %v3793 = vadd.f32 %v430, %v3778
    %v3794 = vadd.f32 %v440, %v3779
    %v3795 = vadd.f32 %v450, %v3770
    %v3796 = vadd.f32 %v460, %v3780
    %v3797 = vxor.u32 %v3789, 2147483648
    %v3798 = vxor.u32 %v3790, 2147483648
    %v3799 = vxor.u32 %v3791, 2147483648
    %v3800 = vxor.u32 %v3792, 2147483648
    %v3801 = vxor.u32 %v3793, 2147483648
    %v3802 = vxor.u32 %v3794, 2147483648
    %v3803 = vxor.u32 %v3795, 2147483648
    %v3804 = vxor.u32 %v3796, 2147483648
    %v3805 = vmul.f32 %v3797, 1.442695
    %v3806 = vpow.pop %v3805
    %v3807 = vmul.f32 %v3798, 1.442695
    %v3808 = vpow.pop %v3807
    %v3809 = vmul.f32 %v3799, 1.442695
    %v3810 = vpow.pop %v3809
    %v3811 = vmul.f32 %v3800, 1.442695
    %v3812 = vpow.pop %v3811
    %v3813 = vmul.f32 %v3801, 1.442695
    %v3814 = vpow.pop %v3813
    %v3815 = vmul.f32 %v3802, 1.442695
    %v3816 = vpow.pop %v3815
    %v3817 = vmul.f32 %v3803, 1.442695
    %v3818 = vpow.pop %v3817
    %v3819 = vmul.f32 %v3804, 1.442695
    %v3820 = vpow.pop %v3819
    %v3821 = vadd.f32 %v3806, 1.0
    %v3822 = vadd.f32 %v3808, 1.0
    %v3823 = vadd.f32 %v3810, 1.0
    %v3824 = vadd.f32 %v3812, 1.0
    %v3825 = vadd.f32 %v3814, 1.0
    %v3826 = vadd.f32 %v3816, 1.0
    %v3827 = vadd.f32 %v3818, 1.0
    %v3828 = vadd.f32 %v3820, 1.0
    %v3829 = vrcp.pop %v3821
    %v3830 = vmul.f32 1.0, %v3829
    %v3831 = vrcp.pop %v3822
    %v3832 = vmul.f32 1.0, %v3831
    %v3833 = vrcp.pop %v3823
    %v3834 = vmul.f32 1.0, %v3833
    %v3835 = vrcp.pop %v3824
    %v3836 = vmul.f32 1.0, %v3835
    %v3837 = vrcp.pop %v3825
    %v3838 = vmul.f32 1.0, %v3837
    %v3839 = vrcp.pop %v3826
    %v3840 = vmul.f32 1.0, %v3839
    %v3841 = vrcp.pop %v3827
    %v3842 = vmul.f32 1.0, %v3841
    %v3843 = vrcp.pop %v3828
    %v3844 = vmul.f32 1.0, %v3843
    %3845 = vmatprep.subr.mxu0 0.0
    %3846 = vmatpush1.msra.mxu0 %v78
    %3847 = vmatprep.subr.mxu0 0.0
    %3848 = vmatpush1.msra.mxu0 %v79
    %3849 = vmatprep.subr.mxu0 0.0
    %3850 = vmatpush1.msra.mxu0 %v80
    %3851 = vmatprep.subr.mxu0 0.0
    %3852 = vmatpush1.msra.mxu0 %v81
    %3853 = vmatprep.subr.mxu0 0.0
    %3854 = vmatpush1.msra.mxu0 0.0
    %3855 = vmatprep.subr.mxu0 0.0
    %3856 = vmatpush1.msra.mxu0 0.0
    %3857 = vmatprep.subr.mxu0 0.0
    %3858 = vmatpush1.msra.mxu0 0.0
    %3859 = vmatprep.subr.mxu0 0.0
    %3860 = vmatpush1.msra.mxu0 0.0
    %3861 = vmatprep.subr.mxu0 0.0
    %3862 = vmatpush1.msra.mxu0 0.0
    %3863 = vmatprep.subr.mxu0 0.0
    %3864 = vmatpush1.msra.mxu0 0.0
    %3865 = vmatprep.subr.mxu0 0.0
    %3866 = vmatpush1.msra.mxu0 0.0
    %3867 = vmatprep.subr.mxu0 0.0
    %3868 = vmatpush1.msra.mxu0 0.0
    %3869 = vmatprep.subr.mxu0 0.0
    %3870 = vmatpush1.msra.mxu0 0.0
    %3871 = vmatprep.subr.mxu0 0.0
    %3872 = vmatpush1.msra.mxu0 0.0
    %3873 = vmatprep.subr.mxu0 0.0
    %3874 = vmatpush1.msra.mxu0 0.0
    %3875 = vmatprep.subr.mxu0 0.0
    %3876 = vmatpush1.msra.mxu0 0.0
    %3877 = vmatprep.subr.mxu0 0.0
    %3878 = vmatpush1.msra.mxu0 0.0
    %3879 = vmatprep.subr.mxu0 0.0
    %3880 = vmatpush1.msra.mxu0 0.0
    %3881 = vmatprep.subr.mxu0 0.0
    %3882 = vmatpush1.msra.mxu0 0.0
    %3883 = vmatprep.subr.mxu0 0.0
    %3884 = vmatpush1.msra.mxu0 0.0
    %3885 = vmatprep.subr.mxu0 0.0
    %3886 = vmatpush1.msra.mxu0 0.0
    %3887 = vmatprep.subr.mxu0 0.0
    %3888 = vmatpush1.msra.mxu0 0.0
    %3889 = vmatprep.subr.mxu0 0.0
    %3890 = vmatpush1.msra.mxu0 0.0
    %3891 = vmatprep.subr.mxu0 0.0
    %3892 = vmatpush1.msra.mxu0 0.0
    %3893 = vmatprep.subr.mxu0 0.0
    %3894 = vmatpush1.msra.mxu0 0.0
    %3895 = vmatprep.subr.mxu0 0.0
    %3896 = vmatpush1.msra.mxu0 0.0
    %3897 = vmatprep.subr.mxu0 0.0
    %3898 = vmatpush1.msra.mxu0 0.0
    %3899 = vmatprep.subr.mxu0 0.0
    %3900 = vmatpush1.msra.mxu0 0.0
    %3901 = vmatprep.subr.mxu0 0.0
    %3902 = vmatpush1.msra.mxu0 0.0
    %3903 = vmatprep.subr.mxu0 0.0
    %3904 = vmatpush1.msra.mxu0 0.0
    %3905 = vmatprep.subr.mxu0 0.0
    %3906 = vmatpush1.msra.mxu0 0.0
    %3907 = vmatprep.subr.mxu0 0.0
    %3908 = vmatpush1.msra.mxu0 0.0
    %3909 = vmatprep.mubr.f32.mxu0 0.0
    %3910 = vmatmul.mubr.f32.gmra.mrb[0].mxu0 %v3559
    %v3911 = vpop.f32.mrb[0].mxu0
    %v3912 = vadd.f32 %v87, %v3911
    %v3913 = vpop.f32.mrb[0].mxu0
    %3914 = vdwg.mxu0
    %v3916 = vrot.slane %v3912, 2
    %v3917 = vrot.slane %v3912, 3
    %v3918 = vrot.slane %v3912, 4
    %v3919 = vrot.slane %v3912, 5
    %v3920 = vrot.slane %v3912, 6
    %v3921 = vrot.slane %v3912, 7
    %v3922 = vrot.slane %v3912, 1
    %v3931 = vmul.f32 %v3688, %v3916
    %v3932 = vmul.f32 %v3690, %v3917
    %v3933 = vmul.f32 %v3692, %v3918
    %v3934 = vmul.f32 %v3694, %v3919
    %v3935 = vmul.f32 %v3696, %v3920
    %v3936 = vmul.f32 %v3698, %v3921
    %v3937 = vmul.f32 %v3700, %v3912
    %v3938 = vmul.f32 %v3702, %v3922
    %v3939 = vadd.f32 %v548, %v3931
    %v3940 = vadd.f32 %v558, %v3932
    %v3941 = vadd.f32 %v568, %v3933
    %v3942 = vadd.f32 %v578, %v3934
    %v3943 = vadd.f32 %v588, %v3935
    %v3944 = vadd.f32 %v598, %v3936
    %v3945 = vadd.f32 %v608, %v3937
    %v3946 = vadd.f32 %v618, %v3938
    %v3947 = vtanh.pop %v3939
    %v3948 = vtanh.pop %v3940
    %v3949 = vtanh.pop %v3941
    %v3950 = vtanh.pop %v3942
    %v3951 = vtanh.pop %v3943
    %v3952 = vtanh.pop %v3944
    %v3953 = vtanh.pop %v3945
    %v3954 = vtanh.pop %v3946
    %v3963 = vrot.slane %v3947, 1
    %v3964 = vrot.slane %v3948, 1
    %v3965 = vrot.slane %v3949, 1
    %v3966 = vrot.slane %v3950, 1
    %v3967 = vrot.slane %v3951, 1
    %v3968 = vrot.slane %v3952, 1
    %v3969 = vrot.slane %v3953, 1
    %v3970 = vrot.slane %v3954, 1
    %v3979 = vsub.f32 %v3529, %v3963
    %v3980 = vsub.f32 %v3530, %v3964
    %v3981 = vsub.f32 %v3531, %v3965
    %v3982 = vsub.f32 %v3532, %v3966
    %v3983 = vsub.f32 %v3533, %v3967
    %v3984 = vsub.f32 %v3534, %v3968
    %v3985 = vsub.f32 %v3535, %v3969
    %v3986 = vsub.f32 %v3536, %v3970
    %v3995 = vrot.slane %v3979, 7
    %v3996 = vrot.slane %v3980, 7
    %v3997 = vrot.slane %v3981, 7
    %v3998 = vrot.slane %v3982, 7
    %v3999 = vrot.slane %v3983, 7
    %v4000 = vrot.slane %v3984, 7
    %v4001 = vrot.slane %v3985, 7
    %v4002 = vrot.slane %v3986, 7
    %v4011 = vmul.f32 %v3830, %v3995
    %v4012 = vmul.f32 %v3832, %v3996
    %v4013 = vmul.f32 %v3834, %v3997
    %v4014 = vmul.f32 %v3836, %v3998
    %v4015 = vmul.f32 %v3838, %v3999
    %v4016 = vmul.f32 %v3840, %v4000
    %v4017 = vmul.f32 %v3842, %v4001
    %v4018 = vmul.f32 %v3844, %v4002
    %v4019 = vadd.f32 %v3947, %v4011
    %v4020 = vadd.f32 %v3948, %v4012
    %v4021 = vadd.f32 %v3949, %v4013
    %v4022 = vadd.f32 %v3950, %v4014
    %v4023 = vadd.f32 %v3951, %v4015
    %v4024 = vadd.f32 %v3952, %v4016
    %v4025 = vadd.f32 %v3953, %v4017
    %v4026 = vadd.f32 %v3954, %v4018
    %v4035 = vrot.slane %v4019, 6
    %v4036 = vrot.slane %v4020, 5
    %v4037 = vsel %vm1033, %v4036, %v4035
    %v4038 = vrot.slane %v4021, 4
    %v4039 = vsel %vm1036, %v4038, %v4037
    %v4040 = vrot.slane %v4022, 3
    %v4041 = vsel %vm1039, %v4040, %v4039
    %v4042 = vrot.slane %v4023, 2
    %v4043 = vsel %vm1042, %v4042, %v4041
    %v4044 = vrot.slane %v4024, 1
    %v4045 = vsel %vm1045, %v4044, %v4043
    %v4046 = vsel %vm1048, %v4025, %v4045
    %v4047 = vrot.slane %v4026, 7
    %v4048 = vsel %vm1051, %v4047, %v4046
    %v4049 = vsel %vm116, %v4048, 0
    %4051 = vmatprep.subr.mxu0 0.0
    %4052 = vmatpush1.msra.mxu0 %v68
    %4053 = vmatprep.subr.mxu0 0.0
    %4054 = vmatpush1.msra.mxu0 %v69
    %4055 = vmatprep.subr.mxu0 0.0
    %4056 = vmatpush1.msra.mxu0 %v70
    %4057 = vmatprep.subr.mxu0 0.0
    %4058 = vmatpush1.msra.mxu0 %v71
    %4059 = vmatprep.subr.mxu0 0.0
    %4060 = vmatpush1.msra.mxu0 0.0
    %4061 = vmatprep.subr.mxu0 0.0
    %4062 = vmatpush1.msra.mxu0 0.0
    %4063 = vmatprep.subr.mxu0 0.0
    %4064 = vmatpush1.msra.mxu0 0.0
    %4065 = vmatprep.subr.mxu0 0.0
    %4066 = vmatpush1.msra.mxu0 0.0
    %4067 = vmatprep.subr.mxu0 0.0
    %4068 = vmatpush1.msra.mxu0 0.0
    %4069 = vmatprep.subr.mxu0 0.0
    %4070 = vmatpush1.msra.mxu0 0.0
    %4071 = vmatprep.subr.mxu0 0.0
    %4072 = vmatpush1.msra.mxu0 0.0
    %4073 = vmatprep.subr.mxu0 0.0
    %4074 = vmatpush1.msra.mxu0 0.0
    %4075 = vmatprep.subr.mxu0 0.0
    %4076 = vmatpush1.msra.mxu0 0.0
    %4077 = vmatprep.subr.mxu0 0.0
    %4078 = vmatpush1.msra.mxu0 0.0
    %4079 = vmatprep.subr.mxu0 0.0
    %4080 = vmatpush1.msra.mxu0 0.0
    %4081 = vmatprep.subr.mxu0 0.0
    %4082 = vmatpush1.msra.mxu0 0.0
    %4083 = vmatprep.subr.mxu0 0.0
    %4084 = vmatpush1.msra.mxu0 0.0
    %4085 = vmatprep.subr.mxu0 0.0
    %4086 = vmatpush1.msra.mxu0 0.0
    %4087 = vmatprep.subr.mxu0 0.0
    %4088 = vmatpush1.msra.mxu0 0.0
    %4089 = vmatprep.subr.mxu0 0.0
    %4090 = vmatpush1.msra.mxu0 0.0
    %4091 = vmatprep.subr.mxu0 0.0
    %4092 = vmatpush1.msra.mxu0 0.0
    %4093 = vmatprep.subr.mxu0 0.0
    %4094 = vmatpush1.msra.mxu0 0.0
    %4095 = vmatprep.subr.mxu0 0.0
    %4096 = vmatpush1.msra.mxu0 0.0
    %4097 = vmatprep.subr.mxu0 0.0
    %4098 = vmatpush1.msra.mxu0 0.0
    %4099 = vmatprep.subr.mxu0 0.0
    %4100 = vmatpush1.msra.mxu0 0.0
    %4101 = vmatprep.subr.mxu0 0.0
    %4102 = vmatpush1.msra.mxu0 0.0
    %4103 = vmatprep.subr.mxu0 0.0
    %4104 = vmatpush1.msra.mxu0 0.0
    %4105 = vmatprep.subr.mxu0 0.0
    %4106 = vmatpush1.msra.mxu0 0.0
    %4107 = vmatprep.subr.mxu0 0.0
    %4108 = vmatpush1.msra.mxu0 0.0
    %4109 = vmatprep.subr.mxu0 0.0
    %4110 = vmatpush1.msra.mxu0 0.0
    %4111 = vmatprep.subr.mxu0 0.0
    %4112 = vmatpush1.msra.mxu0 0.0
    %4113 = vmatprep.subr.mxu0 0.0
    %4114 = vmatpush1.msra.mxu0 0.0
    %4115 = vmatprep.mubr.f32.mxu0 0.0
    %4116 = vmatmul.mubr.f32.gmra.mrb[0].mxu0 %v4049
    %v4117 = vpop.f32.mrb[0].mxu0
    %v4118 = vadd.f32 0.0, %v4117
    %v4119 = vpop.f32.mrb[0].mxu0
    %4120 = vdwg.mxu0
    %v4122 = vrot.slane %v4118, 1
    %v4123 = vrot.slane %v4118, 2
    %v4124 = vrot.slane %v4118, 3
    %v4125 = vrot.slane %v4118, 4
    %v4126 = vrot.slane %v4118, 5
    %v4127 = vrot.slane %v4118, 6
    %v4128 = vrot.slane %v4118, 7
    %v4137 = vadd.f32 %v232, %v4122
    %v4138 = vadd.f32 %v242, %v4123
    %v4139 = vadd.f32 %v252, %v4124
    %v4140 = vadd.f32 %v262, %v4125
    %v4141 = vadd.f32 %v272, %v4126
    %v4142 = vadd.f32 %v282, %v4127
    %v4143 = vadd.f32 %v292, %v4128
    %v4144 = vadd.f32 %v302, %v4118
    %v4145 = vxor.u32 %v4137, 2147483648
    %v4146 = vxor.u32 %v4138, 2147483648
    %v4147 = vxor.u32 %v4139, 2147483648
    %v4148 = vxor.u32 %v4140, 2147483648
    %v4149 = vxor.u32 %v4141, 2147483648
    %v4150 = vxor.u32 %v4142, 2147483648
    %v4151 = vxor.u32 %v4143, 2147483648
    %v4152 = vxor.u32 %v4144, 2147483648
    %v4153 = vmul.f32 %v4145, 1.442695
    %v4154 = vpow.pop %v4153
    %v4155 = vmul.f32 %v4146, 1.442695
    %v4156 = vpow.pop %v4155
    %v4157 = vmul.f32 %v4147, 1.442695
    %v4158 = vpow.pop %v4157
    %v4159 = vmul.f32 %v4148, 1.442695
    %v4160 = vpow.pop %v4159
    %v4161 = vmul.f32 %v4149, 1.442695
    %v4162 = vpow.pop %v4161
    %v4163 = vmul.f32 %v4150, 1.442695
    %v4164 = vpow.pop %v4163
    %v4165 = vmul.f32 %v4151, 1.442695
    %v4166 = vpow.pop %v4165
    %v4167 = vmul.f32 %v4152, 1.442695
    %v4168 = vpow.pop %v4167
    %v4169 = vadd.f32 %v4154, 1.0
    %v4170 = vadd.f32 %v4156, 1.0
    %v4171 = vadd.f32 %v4158, 1.0
    %v4172 = vadd.f32 %v4160, 1.0
    %v4173 = vadd.f32 %v4162, 1.0
    %v4174 = vadd.f32 %v4164, 1.0
    %v4175 = vadd.f32 %v4166, 1.0
    %v4176 = vadd.f32 %v4168, 1.0
    %v4177 = vrcp.pop %v4169
    %v4178 = vmul.f32 1.0, %v4177
    %v4179 = vrcp.pop %v4170
    %v4180 = vmul.f32 1.0, %v4179
    %v4181 = vrcp.pop %v4171
    %v4182 = vmul.f32 1.0, %v4181
    %v4183 = vrcp.pop %v4172
    %v4184 = vmul.f32 1.0, %v4183
    %v4185 = vrcp.pop %v4173
    %v4186 = vmul.f32 1.0, %v4185
    %v4187 = vrcp.pop %v4174
    %v4188 = vmul.f32 1.0, %v4187
    %v4189 = vrcp.pop %v4175
    %v4190 = vmul.f32 1.0, %v4189
    %v4191 = vrcp.pop %v4176
    %v4192 = vmul.f32 1.0, %v4191
    %4193 = vmatprep.subr.mxu0 0.0
    %4194 = vmatpush1.msra.mxu0 %v73
    %4195 = vmatprep.subr.mxu0 0.0
    %4196 = vmatpush1.msra.mxu0 %v74
    %4197 = vmatprep.subr.mxu0 0.0
    %4198 = vmatpush1.msra.mxu0 %v75
    %4199 = vmatprep.subr.mxu0 0.0
    %4200 = vmatpush1.msra.mxu0 %v76
    %4201 = vmatprep.subr.mxu0 0.0
    %4202 = vmatpush1.msra.mxu0 0.0
    %4203 = vmatprep.subr.mxu0 0.0
    %4204 = vmatpush1.msra.mxu0 0.0
    %4205 = vmatprep.subr.mxu0 0.0
    %4206 = vmatpush1.msra.mxu0 0.0
    %4207 = vmatprep.subr.mxu0 0.0
    %4208 = vmatpush1.msra.mxu0 0.0
    %4209 = vmatprep.subr.mxu0 0.0
    %4210 = vmatpush1.msra.mxu0 0.0
    %4211 = vmatprep.subr.mxu0 0.0
    %4212 = vmatpush1.msra.mxu0 0.0
    %4213 = vmatprep.subr.mxu0 0.0
    %4214 = vmatpush1.msra.mxu0 0.0
    %4215 = vmatprep.subr.mxu0 0.0
    %4216 = vmatpush1.msra.mxu0 0.0
    %4217 = vmatprep.subr.mxu0 0.0
    %4218 = vmatpush1.msra.mxu0 0.0
    %4219 = vmatprep.subr.mxu0 0.0
    %4220 = vmatpush1.msra.mxu0 0.0
    %4221 = vmatprep.subr.mxu0 0.0
    %4222 = vmatpush1.msra.mxu0 0.0
    %4223 = vmatprep.subr.mxu0 0.0
    %4224 = vmatpush1.msra.mxu0 0.0
    %4225 = vmatprep.subr.mxu0 0.0
    %4226 = vmatpush1.msra.mxu0 0.0
    %4227 = vmatprep.subr.mxu0 0.0
    %4228 = vmatpush1.msra.mxu0 0.0
    %4229 = vmatprep.subr.mxu0 0.0
    %4230 = vmatpush1.msra.mxu0 0.0
    %4231 = vmatprep.subr.mxu0 0.0
    %4232 = vmatpush1.msra.mxu0 0.0
    %4233 = vmatprep.subr.mxu0 0.0
    %4234 = vmatpush1.msra.mxu0 0.0
    %4235 = vmatprep.subr.mxu0 0.0
    %4236 = vmatpush1.msra.mxu0 0.0
    %4237 = vmatprep.subr.mxu0 0.0
    %4238 = vmatpush1.msra.mxu0 0.0
    %4239 = vmatprep.subr.mxu0 0.0
    %4240 = vmatpush1.msra.mxu0 0.0
    %4241 = vmatprep.subr.mxu0 0.0
    %4242 = vmatpush1.msra.mxu0 0.0
    %4243 = vmatprep.subr.mxu0 0.0
    %4244 = vmatpush1.msra.mxu0 0.0
    %4245 = vmatprep.subr.mxu0 0.0
    %4246 = vmatpush1.msra.mxu0 0.0
    %4247 = vmatprep.subr.mxu0 0.0
    %4248 = vmatpush1.msra.mxu0 0.0
    %4249 = vmatprep.subr.mxu0 0.0
    %4250 = vmatpush1.msra.mxu0 0.0
    %4251 = vmatprep.subr.mxu0 0.0
    %4252 = vmatpush1.msra.mxu0 0.0
    %4253 = vmatprep.subr.mxu0 0.0
    %4254 = vmatpush1.msra.mxu0 0.0
    %4255 = vmatprep.subr.mxu0 0.0
    %4256 = vmatpush1.msra.mxu0 0.0
    %4257 = vmatprep.mubr.f32.mxu0 0.0
    %4258 = vmatmul.mubr.f32.gmra.mrb[0].mxu0 %v4049
    %v4259 = vpop.f32.mrb[0].mxu0
    %v4260 = vadd.f32 0.0, %v4259
    %v4261 = vpop.f32.mrb[0].mxu0
    %4262 = vdwg.mxu0
    %v4264 = vrot.slane %v4260, 1
    %v4265 = vrot.slane %v4260, 2
    %v4266 = vrot.slane %v4260, 3
    %v4267 = vrot.slane %v4260, 4
    %v4268 = vrot.slane %v4260, 5
    %v4269 = vrot.slane %v4260, 6
    %v4270 = vrot.slane %v4260, 7
    %v4279 = vadd.f32 %v390, %v4264
    %v4280 = vadd.f32 %v400, %v4265
    %v4281 = vadd.f32 %v410, %v4266
    %v4282 = vadd.f32 %v420, %v4267
    %v4283 = vadd.f32 %v430, %v4268
    %v4284 = vadd.f32 %v440, %v4269
    %v4285 = vadd.f32 %v450, %v4270
    %v4286 = vadd.f32 %v460, %v4260
    %v4287 = vxor.u32 %v4279, 2147483648
    %v4288 = vxor.u32 %v4280, 2147483648
    %v4289 = vxor.u32 %v4281, 2147483648
    %v4290 = vxor.u32 %v4282, 2147483648
    %v4291 = vxor.u32 %v4283, 2147483648
    %v4292 = vxor.u32 %v4284, 2147483648
    %v4293 = vxor.u32 %v4285, 2147483648
    %v4294 = vxor.u32 %v4286, 2147483648
    %v4295 = vmul.f32 %v4287, 1.442695
    %v4296 = vpow.pop %v4295
    %v4297 = vmul.f32 %v4288, 1.442695
    %v4298 = vpow.pop %v4297
    %v4299 = vmul.f32 %v4289, 1.442695
    %v4300 = vpow.pop %v4299
    %v4301 = vmul.f32 %v4290, 1.442695
    %v4302 = vpow.pop %v4301
    %v4303 = vmul.f32 %v4291, 1.442695
    %v4304 = vpow.pop %v4303
    %v4305 = vmul.f32 %v4292, 1.442695
    %v4306 = vpow.pop %v4305
    %v4307 = vmul.f32 %v4293, 1.442695
    %v4308 = vpow.pop %v4307
    %v4309 = vmul.f32 %v4294, 1.442695
    %v4310 = vpow.pop %v4309
    %v4311 = vadd.f32 %v4296, 1.0
    %v4312 = vadd.f32 %v4298, 1.0
    %v4313 = vadd.f32 %v4300, 1.0
    %v4314 = vadd.f32 %v4302, 1.0
    %v4315 = vadd.f32 %v4304, 1.0
    %v4316 = vadd.f32 %v4306, 1.0
    %v4317 = vadd.f32 %v4308, 1.0
    %v4318 = vadd.f32 %v4310, 1.0
    %v4319 = vrcp.pop %v4311
    %v4320 = vmul.f32 1.0, %v4319
    %v4321 = vrcp.pop %v4312
    %v4322 = vmul.f32 1.0, %v4321
    %v4323 = vrcp.pop %v4313
    %v4324 = vmul.f32 1.0, %v4323
    %v4325 = vrcp.pop %v4314
    %v4326 = vmul.f32 1.0, %v4325
    %v4327 = vrcp.pop %v4315
    %v4328 = vmul.f32 1.0, %v4327
    %v4329 = vrcp.pop %v4316
    %v4330 = vmul.f32 1.0, %v4329
    %v4331 = vrcp.pop %v4317
    %v4332 = vmul.f32 1.0, %v4331
    %v4333 = vrcp.pop %v4318
    %v4334 = vmul.f32 1.0, %v4333
    %4335 = vmatprep.subr.mxu0 0.0
    %4336 = vmatpush1.msra.mxu0 %v78
    %4337 = vmatprep.subr.mxu0 0.0
    %4338 = vmatpush1.msra.mxu0 %v79
    %4339 = vmatprep.subr.mxu0 0.0
    %4340 = vmatpush1.msra.mxu0 %v80
    %4341 = vmatprep.subr.mxu0 0.0
    %4342 = vmatpush1.msra.mxu0 %v81
    %4343 = vmatprep.subr.mxu0 0.0
    %4344 = vmatpush1.msra.mxu0 0.0
    %4345 = vmatprep.subr.mxu0 0.0
    %4346 = vmatpush1.msra.mxu0 0.0
    %4347 = vmatprep.subr.mxu0 0.0
    %4348 = vmatpush1.msra.mxu0 0.0
    %4349 = vmatprep.subr.mxu0 0.0
    %4350 = vmatpush1.msra.mxu0 0.0
    %4351 = vmatprep.subr.mxu0 0.0
    %4352 = vmatpush1.msra.mxu0 0.0
    %4353 = vmatprep.subr.mxu0 0.0
    %4354 = vmatpush1.msra.mxu0 0.0
    %4355 = vmatprep.subr.mxu0 0.0
    %4356 = vmatpush1.msra.mxu0 0.0
    %4357 = vmatprep.subr.mxu0 0.0
    %4358 = vmatpush1.msra.mxu0 0.0
    %4359 = vmatprep.subr.mxu0 0.0
    %4360 = vmatpush1.msra.mxu0 0.0
    %4361 = vmatprep.subr.mxu0 0.0
    %4362 = vmatpush1.msra.mxu0 0.0
    %4363 = vmatprep.subr.mxu0 0.0
    %4364 = vmatpush1.msra.mxu0 0.0
    %4365 = vmatprep.subr.mxu0 0.0
    %4366 = vmatpush1.msra.mxu0 0.0
    %4367 = vmatprep.subr.mxu0 0.0
    %4368 = vmatpush1.msra.mxu0 0.0
    %4369 = vmatprep.subr.mxu0 0.0
    %4370 = vmatpush1.msra.mxu0 0.0
    %4371 = vmatprep.subr.mxu0 0.0
    %4372 = vmatpush1.msra.mxu0 0.0
    %4373 = vmatprep.subr.mxu0 0.0
    %4374 = vmatpush1.msra.mxu0 0.0
    %4375 = vmatprep.subr.mxu0 0.0
    %4376 = vmatpush1.msra.mxu0 0.0
    %4377 = vmatprep.subr.mxu0 0.0
    %4378 = vmatpush1.msra.mxu0 0.0
    %4379 = vmatprep.subr.mxu0 0.0
    %4380 = vmatpush1.msra.mxu0 0.0
    %4381 = vmatprep.subr.mxu0 0.0
    %4382 = vmatpush1.msra.mxu0 0.0
    %4383 = vmatprep.subr.mxu0 0.0
    %4384 = vmatpush1.msra.mxu0 0.0
    %4385 = vmatprep.subr.mxu0 0.0
    %4386 = vmatpush1.msra.mxu0 0.0
    %4387 = vmatprep.subr.mxu0 0.0
    %4388 = vmatpush1.msra.mxu0 0.0
    %4389 = vmatprep.subr.mxu0 0.0
    %4390 = vmatpush1.msra.mxu0 0.0
    %4391 = vmatprep.subr.mxu0 0.0
    %4392 = vmatpush1.msra.mxu0 0.0
    %4393 = vmatprep.subr.mxu0 0.0
    %4394 = vmatpush1.msra.mxu0 0.0
    %4395 = vmatprep.subr.mxu0 0.0
    %4396 = vmatpush1.msra.mxu0 0.0
    %4397 = vmatprep.subr.mxu0 0.0
    %4398 = vmatpush1.msra.mxu0 0.0
    %4399 = vmatprep.mubr.f32.mxu0 0.0
    %4400 = vmatmul.mubr.f32.gmra.mrb[0].mxu0 %v4049
    %v4401 = vpop.f32.mrb[0].mxu0
    %v4402 = vadd.f32 %v87, %v4401
    %v4403 = vpop.f32.mrb[0].mxu0
    %4404 = vdwg.mxu0
    %v4406 = vrot.slane %v4402, 1
    %v4407 = vrot.slane %v4402, 2
    %v4408 = vrot.slane %v4402, 3
    %v4409 = vrot.slane %v4402, 4
    %v4410 = vrot.slane %v4402, 5
    %v4411 = vrot.slane %v4402, 6
    %v4412 = vrot.slane %v4402, 7
    %v4421 = vmul.f32 %v4178, %v4406
    %v4422 = vmul.f32 %v4180, %v4407
    %v4423 = vmul.f32 %v4182, %v4408
    %v4424 = vmul.f32 %v4184, %v4409
    %v4425 = vmul.f32 %v4186, %v4410
    %v4426 = vmul.f32 %v4188, %v4411
    %v4427 = vmul.f32 %v4190, %v4412
    %v4428 = vmul.f32 %v4192, %v4402
    %v4429 = vadd.f32 %v548, %v4421
    %v4430 = vadd.f32 %v558, %v4422
    %v4431 = vadd.f32 %v568, %v4423
    %v4432 = vadd.f32 %v578, %v4424
    %v4433 = vadd.f32 %v588, %v4425
    %v4434 = vadd.f32 %v598, %v4426
    %v4435 = vadd.f32 %v608, %v4427
    %v4436 = vadd.f32 %v618, %v4428
    %v4437 = vtanh.pop %v4429
    %v4438 = vtanh.pop %v4430
    %v4439 = vtanh.pop %v4431
    %v4440 = vtanh.pop %v4432
    %v4441 = vtanh.pop %v4433
    %v4442 = vtanh.pop %v4434
    %v4443 = vtanh.pop %v4435
    %v4444 = vtanh.pop %v4436
    %v4453 = vrot.slane %v4437, 1
    %v4454 = vrot.slane %v4438, 1
    %v4455 = vrot.slane %v4439, 1
    %v4456 = vrot.slane %v4440, 1
    %v4457 = vrot.slane %v4441, 1
    %v4458 = vrot.slane %v4442, 1
    %v4459 = vrot.slane %v4443, 1
    %v4460 = vrot.slane %v4444, 1
    %v4469 = vsub.f32 %v4019, %v4453
    %v4470 = vsub.f32 %v4020, %v4454
    %v4471 = vsub.f32 %v4021, %v4455
    %v4472 = vsub.f32 %v4022, %v4456
    %v4473 = vsub.f32 %v4023, %v4457
    %v4474 = vsub.f32 %v4024, %v4458
    %v4475 = vsub.f32 %v4025, %v4459
    %v4476 = vsub.f32 %v4026, %v4460
    %v4485 = vrot.slane %v4469, 7
    %v4486 = vrot.slane %v4470, 7
    %v4487 = vrot.slane %v4471, 7
    %v4488 = vrot.slane %v4472, 7
    %v4489 = vrot.slane %v4473, 7
    %v4490 = vrot.slane %v4474, 7
    %v4491 = vrot.slane %v4475, 7
    %v4492 = vrot.slane %v4476, 7
    %v4501 = vmul.f32 %v4320, %v4485
    %v4502 = vmul.f32 %v4322, %v4486
    %v4503 = vmul.f32 %v4324, %v4487
    %v4504 = vmul.f32 %v4326, %v4488
    %v4505 = vmul.f32 %v4328, %v4489
    %v4506 = vmul.f32 %v4330, %v4490
    %v4507 = vmul.f32 %v4332, %v4491
    %v4508 = vmul.f32 %v4334, %v4492
    %v4509 = vadd.f32 %v4437, %v4501
    %v4510 = vadd.f32 %v4438, %v4502
    %v4511 = vadd.f32 %v4439, %v4503
    %v4512 = vadd.f32 %v4440, %v4504
    %v4513 = vadd.f32 %v4441, %v4505
    %v4514 = vadd.f32 %v4442, %v4506
    %v4515 = vadd.f32 %v4443, %v4507
    %v4516 = vadd.f32 %v4444, %v4508
    %v4525 = vrot.slane %v4509, 7
    %v4526 = vrot.slane %v4510, 6
    %v4527 = vsel %vm1033, %v4526, %v4525
    %v4528 = vrot.slane %v4511, 5
    %v4529 = vsel %vm1036, %v4528, %v4527
    %v4530 = vrot.slane %v4512, 4
    %v4531 = vsel %vm1039, %v4530, %v4529
    %v4532 = vrot.slane %v4513, 3
    %v4533 = vsel %vm1042, %v4532, %v4531
    %v4534 = vrot.slane %v4514, 2
    %v4535 = vsel %vm1045, %v4534, %v4533
    %v4536 = vrot.slane %v4515, 1
    %v4537 = vsel %vm1048, %v4536, %v4535
    %v4538 = vsel %vm1051, %v4516, %v4537
    %v4539 = vsel %vm116, %v4538, 0
    %4541 = vmatprep.subr.mxu0 0.0
    %4542 = vmatpush1.msra.mxu0 %v68
    %4543 = vmatprep.subr.mxu0 0.0
    %4544 = vmatpush1.msra.mxu0 %v69
    %4545 = vmatprep.subr.mxu0 0.0
    %4546 = vmatpush1.msra.mxu0 %v70
    %4547 = vmatprep.subr.mxu0 0.0
    %4548 = vmatpush1.msra.mxu0 %v71
    %4549 = vmatprep.subr.mxu0 0.0
    %4550 = vmatpush1.msra.mxu0 0.0
    %4551 = vmatprep.subr.mxu0 0.0
    %4552 = vmatpush1.msra.mxu0 0.0
    %4553 = vmatprep.subr.mxu0 0.0
    %4554 = vmatpush1.msra.mxu0 0.0
    %4555 = vmatprep.subr.mxu0 0.0
    %4556 = vmatpush1.msra.mxu0 0.0
    %4557 = vmatprep.subr.mxu0 0.0
    %4558 = vmatpush1.msra.mxu0 0.0
    %4559 = vmatprep.subr.mxu0 0.0
    %4560 = vmatpush1.msra.mxu0 0.0
    %4561 = vmatprep.subr.mxu0 0.0
    %4562 = vmatpush1.msra.mxu0 0.0
    %4563 = vmatprep.subr.mxu0 0.0
    %4564 = vmatpush1.msra.mxu0 0.0
    %4565 = vmatprep.subr.mxu0 0.0
    %4566 = vmatpush1.msra.mxu0 0.0
    %4567 = vmatprep.subr.mxu0 0.0
    %4568 = vmatpush1.msra.mxu0 0.0
    %4569 = vmatprep.subr.mxu0 0.0
    %4570 = vmatpush1.msra.mxu0 0.0
    %4571 = vmatprep.subr.mxu0 0.0
    %4572 = vmatpush1.msra.mxu0 0.0
    %4573 = vmatprep.subr.mxu0 0.0
    %4574 = vmatpush1.msra.mxu0 0.0
    %4575 = vmatprep.subr.mxu0 0.0
    %4576 = vmatpush1.msra.mxu0 0.0
    %4577 = vmatprep.subr.mxu0 0.0
    %4578 = vmatpush1.msra.mxu0 0.0
    %4579 = vmatprep.subr.mxu0 0.0
    %4580 = vmatpush1.msra.mxu0 0.0
    %4581 = vmatprep.subr.mxu0 0.0
    %4582 = vmatpush1.msra.mxu0 0.0
    %4583 = vmatprep.subr.mxu0 0.0
    %4584 = vmatpush1.msra.mxu0 0.0
    %4585 = vmatprep.subr.mxu0 0.0
    %4586 = vmatpush1.msra.mxu0 0.0
    %4587 = vmatprep.subr.mxu0 0.0
    %4588 = vmatpush1.msra.mxu0 0.0
    %4589 = vmatprep.subr.mxu0 0.0
    %4590 = vmatpush1.msra.mxu0 0.0
    %4591 = vmatprep.subr.mxu0 0.0
    %4592 = vmatpush1.msra.mxu0 0.0
    %4593 = vmatprep.subr.mxu0 0.0
    %4594 = vmatpush1.msra.mxu0 0.0
    %4595 = vmatprep.subr.mxu0 0.0
    %4596 = vmatpush1.msra.mxu0 0.0
    %4597 = vmatprep.subr.mxu0 0.0
    %4598 = vmatpush1.msra.mxu0 0.0
    %4599 = vmatprep.subr.mxu0 0.0
    %4600 = vmatpush1.msra.mxu0 0.0
    %4601 = vmatprep.subr.mxu0 0.0
    %4602 = vmatpush1.msra.mxu0 0.0
    %4603 = vmatprep.subr.mxu0 0.0
    %4604 = vmatpush1.msra.mxu0 0.0
    %4605 = vmatprep.mubr.f32.mxu0 0.0
    %4606 = vmatmul.mubr.f32.gmra.mrb[0].mxu0 %v4539
    %v4607 = vpop.f32.mrb[0].mxu0
    %v4608 = vadd.f32 0.0, %v4607
    %v4609 = vpop.f32.mrb[0].mxu0
    %4610 = vdwg.mxu0
    %v4612 = vrot.slane %v4608, 1
    %v4613 = vrot.slane %v4608, 2
    %v4614 = vrot.slane %v4608, 3
    %v4615 = vrot.slane %v4608, 4
    %v4616 = vrot.slane %v4608, 5
    %v4617 = vrot.slane %v4608, 6
    %v4618 = vrot.slane %v4608, 7
    %v4627 = vadd.f32 %v237, %v4608
    %v4628 = vadd.f32 %v247, %v4612
    %v4629 = vadd.f32 %v257, %v4613
    %v4630 = vadd.f32 %v267, %v4614
    %v4631 = vadd.f32 %v277, %v4615
    %v4632 = vadd.f32 %v287, %v4616
    %v4633 = vadd.f32 %v297, %v4617
    %v4634 = vadd.f32 %v307, %v4618
    %v4635 = vxor.u32 %v4627, 2147483648
    %v4636 = vxor.u32 %v4628, 2147483648
    %v4637 = vxor.u32 %v4629, 2147483648
    %v4638 = vxor.u32 %v4630, 2147483648
    %v4639 = vxor.u32 %v4631, 2147483648
    %v4640 = vxor.u32 %v4632, 2147483648
    %v4641 = vxor.u32 %v4633, 2147483648
    %v4642 = vxor.u32 %v4634, 2147483648
    %v4643 = vmul.f32 %v4635, 1.442695
    %v4644 = vpow.pop %v4643
    %v4645 = vmul.f32 %v4636, 1.442695
    %v4646 = vpow.pop %v4645
    %v4647 = vmul.f32 %v4637, 1.442695
    %v4648 = vpow.pop %v4647
    %v4649 = vmul.f32 %v4638, 1.442695
    %v4650 = vpow.pop %v4649
    %v4651 = vmul.f32 %v4639, 1.442695
    %v4652 = vpow.pop %v4651
    %v4653 = vmul.f32 %v4640, 1.442695
    %v4654 = vpow.pop %v4653
    %v4655 = vmul.f32 %v4641, 1.442695
    %v4656 = vpow.pop %v4655
    %v4657 = vmul.f32 %v4642, 1.442695
    %v4658 = vpow.pop %v4657
    %v4659 = vadd.f32 %v4644, 1.0
    %v4660 = vadd.f32 %v4646, 1.0
    %v4661 = vadd.f32 %v4648, 1.0
    %v4662 = vadd.f32 %v4650, 1.0
    %v4663 = vadd.f32 %v4652, 1.0
    %v4664 = vadd.f32 %v4654, 1.0
    %v4665 = vadd.f32 %v4656, 1.0
    %v4666 = vadd.f32 %v4658, 1.0
    %v4667 = vrcp.pop %v4659
    %v4668 = vmul.f32 1.0, %v4667
    %v4669 = vrcp.pop %v4660
    %v4670 = vmul.f32 1.0, %v4669
    %v4671 = vrcp.pop %v4661
    %v4672 = vmul.f32 1.0, %v4671
    %v4673 = vrcp.pop %v4662
    %v4674 = vmul.f32 1.0, %v4673
    %v4675 = vrcp.pop %v4663
    %v4676 = vmul.f32 1.0, %v4675
    %v4677 = vrcp.pop %v4664
    %v4678 = vmul.f32 1.0, %v4677
    %v4679 = vrcp.pop %v4665
    %v4680 = vmul.f32 1.0, %v4679
    %v4681 = vrcp.pop %v4666
    %v4682 = vmul.f32 1.0, %v4681
    %4683 = vmatprep.subr.mxu0 0.0
    %4684 = vmatpush1.msra.mxu0 %v73
    %4685 = vmatprep.subr.mxu0 0.0
    %4686 = vmatpush1.msra.mxu0 %v74
    %4687 = vmatprep.subr.mxu0 0.0
    %4688 = vmatpush1.msra.mxu0 %v75
    %4689 = vmatprep.subr.mxu0 0.0
    %4690 = vmatpush1.msra.mxu0 %v76
    %4691 = vmatprep.subr.mxu0 0.0
    %4692 = vmatpush1.msra.mxu0 0.0
    %4693 = vmatprep.subr.mxu0 0.0
    %4694 = vmatpush1.msra.mxu0 0.0
    %4695 = vmatprep.subr.mxu0 0.0
    %4696 = vmatpush1.msra.mxu0 0.0
    %4697 = vmatprep.subr.mxu0 0.0
    %4698 = vmatpush1.msra.mxu0 0.0
    %4699 = vmatprep.subr.mxu0 0.0
    %4700 = vmatpush1.msra.mxu0 0.0
    %4701 = vmatprep.subr.mxu0 0.0
    %4702 = vmatpush1.msra.mxu0 0.0
    %4703 = vmatprep.subr.mxu0 0.0
    %4704 = vmatpush1.msra.mxu0 0.0
    %4705 = vmatprep.subr.mxu0 0.0
    %4706 = vmatpush1.msra.mxu0 0.0
    %4707 = vmatprep.subr.mxu0 0.0
    %4708 = vmatpush1.msra.mxu0 0.0
    %4709 = vmatprep.subr.mxu0 0.0
    %4710 = vmatpush1.msra.mxu0 0.0
    %4711 = vmatprep.subr.mxu0 0.0
    %4712 = vmatpush1.msra.mxu0 0.0
    %4713 = vmatprep.subr.mxu0 0.0
    %4714 = vmatpush1.msra.mxu0 0.0
    %4715 = vmatprep.subr.mxu0 0.0
    %4716 = vmatpush1.msra.mxu0 0.0
    %4717 = vmatprep.subr.mxu0 0.0
    %4718 = vmatpush1.msra.mxu0 0.0
    %4719 = vmatprep.subr.mxu0 0.0
    %4720 = vmatpush1.msra.mxu0 0.0
    %4721 = vmatprep.subr.mxu0 0.0
    %4722 = vmatpush1.msra.mxu0 0.0
    %4723 = vmatprep.subr.mxu0 0.0
    %4724 = vmatpush1.msra.mxu0 0.0
    %4725 = vmatprep.subr.mxu0 0.0
    %4726 = vmatpush1.msra.mxu0 0.0
    %4727 = vmatprep.subr.mxu0 0.0
    %4728 = vmatpush1.msra.mxu0 0.0
    %4729 = vmatprep.subr.mxu0 0.0
    %4730 = vmatpush1.msra.mxu0 0.0
    %4731 = vmatprep.subr.mxu0 0.0
    %4732 = vmatpush1.msra.mxu0 0.0
    %4733 = vmatprep.subr.mxu0 0.0
    %4734 = vmatpush1.msra.mxu0 0.0
    %4735 = vmatprep.subr.mxu0 0.0
    %4736 = vmatpush1.msra.mxu0 0.0
    %4737 = vmatprep.subr.mxu0 0.0
    %4738 = vmatpush1.msra.mxu0 0.0
    %4739 = vmatprep.subr.mxu0 0.0
    %4740 = vmatpush1.msra.mxu0 0.0
    %4741 = vmatprep.subr.mxu0 0.0
    %4742 = vmatpush1.msra.mxu0 0.0
    %4743 = vmatprep.subr.mxu0 0.0
    %4744 = vmatpush1.msra.mxu0 0.0
    %4745 = vmatprep.subr.mxu0 0.0
    %4746 = vmatpush1.msra.mxu0 0.0
    %4747 = vmatprep.mubr.f32.mxu0 0.0
    %4748 = vmatmul.mubr.f32.gmra.mrb[0].mxu0 %v4539
    %v4749 = vpop.f32.mrb[0].mxu0
    %v4750 = vadd.f32 0.0, %v4749
    %v4751 = vpop.f32.mrb[0].mxu0
    %4752 = vdwg.mxu0
    %v4754 = vrot.slane %v4750, 1
    %v4755 = vrot.slane %v4750, 2
    %v4756 = vrot.slane %v4750, 3
    %v4757 = vrot.slane %v4750, 4
    %v4758 = vrot.slane %v4750, 5
    %v4759 = vrot.slane %v4750, 6
    %v4760 = vrot.slane %v4750, 7
    %v4769 = vadd.f32 %v395, %v4750
    %v4770 = vadd.f32 %v405, %v4754
    %v4771 = vadd.f32 %v415, %v4755
    %v4772 = vadd.f32 %v425, %v4756
    %v4773 = vadd.f32 %v435, %v4757
    %v4774 = vadd.f32 %v445, %v4758
    %v4775 = vadd.f32 %v455, %v4759
    %v4776 = vadd.f32 %v465, %v4760
    %v4777 = vxor.u32 %v4769, 2147483648
    %v4778 = vxor.u32 %v4770, 2147483648
    %v4779 = vxor.u32 %v4771, 2147483648
    %v4780 = vxor.u32 %v4772, 2147483648
    %v4781 = vxor.u32 %v4773, 2147483648
    %v4782 = vxor.u32 %v4774, 2147483648
    %v4783 = vxor.u32 %v4775, 2147483648
    %v4784 = vxor.u32 %v4776, 2147483648
    %v4785 = vmul.f32 %v4777, 1.442695
    %v4786 = vpow.pop %v4785
    %v4787 = vmul.f32 %v4778, 1.442695
    %v4788 = vpow.pop %v4787
    %v4789 = vmul.f32 %v4779, 1.442695
    %v4790 = vpow.pop %v4789
    %v4791 = vmul.f32 %v4780, 1.442695
    %v4792 = vpow.pop %v4791
    %v4793 = vmul.f32 %v4781, 1.442695
    %v4794 = vpow.pop %v4793
    %v4795 = vmul.f32 %v4782, 1.442695
    %v4796 = vpow.pop %v4795
    %v4797 = vmul.f32 %v4783, 1.442695
    %v4798 = vpow.pop %v4797
    %v4799 = vmul.f32 %v4784, 1.442695
    %v4800 = vpow.pop %v4799
    %v4801 = vadd.f32 %v4786, 1.0
    %v4802 = vadd.f32 %v4788, 1.0
    %v4803 = vadd.f32 %v4790, 1.0
    %v4804 = vadd.f32 %v4792, 1.0
    %v4805 = vadd.f32 %v4794, 1.0
    %v4806 = vadd.f32 %v4796, 1.0
    %v4807 = vadd.f32 %v4798, 1.0
    %v4808 = vadd.f32 %v4800, 1.0
    %v4809 = vrcp.pop %v4801
    %v4810 = vmul.f32 1.0, %v4809
    %v4811 = vrcp.pop %v4802
    %v4812 = vmul.f32 1.0, %v4811
    %v4813 = vrcp.pop %v4803
    %v4814 = vmul.f32 1.0, %v4813
    %v4815 = vrcp.pop %v4804
    %v4816 = vmul.f32 1.0, %v4815
    %v4817 = vrcp.pop %v4805
    %v4818 = vmul.f32 1.0, %v4817
    %v4819 = vrcp.pop %v4806
    %v4820 = vmul.f32 1.0, %v4819
    %v4821 = vrcp.pop %v4807
    %v4822 = vmul.f32 1.0, %v4821
    %v4823 = vrcp.pop %v4808
    %v4824 = vmul.f32 1.0, %v4823
    %4825 = vmatprep.subr.mxu0 0.0
    %4826 = vmatpush1.msra.mxu0 %v78
    %4827 = vmatprep.subr.mxu0 0.0
    %4828 = vmatpush1.msra.mxu0 %v79
    %4829 = vmatprep.subr.mxu0 0.0
    %4830 = vmatpush1.msra.mxu0 %v80
    %4831 = vmatprep.subr.mxu0 0.0
    %4832 = vmatpush1.msra.mxu0 %v81
    %4833 = vmatprep.subr.mxu0 0.0
    %4834 = vmatpush1.msra.mxu0 0.0
    %4835 = vmatprep.subr.mxu0 0.0
    %4836 = vmatpush1.msra.mxu0 0.0
    %4837 = vmatprep.subr.mxu0 0.0
    %4838 = vmatpush1.msra.mxu0 0.0
    %4839 = vmatprep.subr.mxu0 0.0
    %4840 = vmatpush1.msra.mxu0 0.0
    %4841 = vmatprep.subr.mxu0 0.0
    %4842 = vmatpush1.msra.mxu0 0.0
    %4843 = vmatprep.subr.mxu0 0.0
    %4844 = vmatpush1.msra.mxu0 0.0
    %4845 = vmatprep.subr.mxu0 0.0
    %4846 = vmatpush1.msra.mxu0 0.0
    %4847 = vmatprep.subr.mxu0 0.0
    %4848 = vmatpush1.msra.mxu0 0.0
    %4849 = vmatprep.subr.mxu0 0.0
    %4850 = vmatpush1.msra.mxu0 0.0
    %4851 = vmatprep.subr.mxu0 0.0
    %4852 = vmatpush1.msra.mxu0 0.0
    %4853 = vmatprep.subr.mxu0 0.0
    %4854 = vmatpush1.msra.mxu0 0.0
    %4855 = vmatprep.subr.mxu0 0.0
    %4856 = vmatpush1.msra.mxu0 0.0
    %4857 = vmatprep.subr.mxu0 0.0
    %4858 = vmatpush1.msra.mxu0 0.0
    %4859 = vmatprep.subr.mxu0 0.0
    %4860 = vmatpush1.msra.mxu0 0.0
    %4861 = vmatprep.subr.mxu0 0.0
    %4862 = vmatpush1.msra.mxu0 0.0
    %4863 = vmatprep.subr.mxu0 0.0
    %4864 = vmatpush1.msra.mxu0 0.0
    %4865 = vmatprep.subr.mxu0 0.0
    %4866 = vmatpush1.msra.mxu0 0.0
    %4867 = vmatprep.subr.mxu0 0.0
    %4868 = vmatpush1.msra.mxu0 0.0
    %4869 = vmatprep.subr.mxu0 0.0
    %4870 = vmatpush1.msra.mxu0 0.0
    %4871 = vmatprep.subr.mxu0 0.0
    %4872 = vmatpush1.msra.mxu0 0.0
    %4873 = vmatprep.subr.mxu0 0.0
    %4874 = vmatpush1.msra.mxu0 0.0
    %4875 = vmatprep.subr.mxu0 0.0
    %4876 = vmatpush1.msra.mxu0 0.0
    %4877 = vmatprep.subr.mxu0 0.0
    %4878 = vmatpush1.msra.mxu0 0.0
    %4879 = vmatprep.subr.mxu0 0.0
    %4880 = vmatpush1.msra.mxu0 0.0
    %4881 = vmatprep.subr.mxu0 0.0
    %4882 = vmatpush1.msra.mxu0 0.0
    %4883 = vmatprep.subr.mxu0 0.0
    %4884 = vmatpush1.msra.mxu0 0.0
    %4885 = vmatprep.subr.mxu0 0.0
    %4886 = vmatpush1.msra.mxu0 0.0
    %4887 = vmatprep.subr.mxu0 0.0
    %4888 = vmatpush1.msra.mxu0 0.0
    %4889 = vmatprep.mubr.f32.mxu0 0.0
    %4890 = vmatmul.mubr.f32.gmra.mrb[0].mxu0 %v4539
    %v4891 = vpop.f32.mrb[0].mxu0
    %v4892 = vadd.f32 %v87, %v4891
    %v4893 = vpop.f32.mrb[0].mxu0
    %4894 = vdwg.mxu0
    %v4896 = vrot.slane %v4892, 1
    %v4897 = vrot.slane %v4892, 2
    %v4898 = vrot.slane %v4892, 3
    %v4899 = vrot.slane %v4892, 4
    %v4900 = vrot.slane %v4892, 5
    %v4901 = vrot.slane %v4892, 6
    %v4902 = vrot.slane %v4892, 7
    %v4911 = vmul.f32 %v4668, %v4892
    %v4912 = vmul.f32 %v4670, %v4896
    %v4913 = vmul.f32 %v4672, %v4897
    %v4914 = vmul.f32 %v4674, %v4898
    %v4915 = vmul.f32 %v4676, %v4899
    %v4916 = vmul.f32 %v4678, %v4900
    %v4917 = vmul.f32 %v4680, %v4901
    %v4918 = vmul.f32 %v4682, %v4902
    %v4919 = vadd.f32 %v553, %v4911
    %v4920 = vadd.f32 %v563, %v4912
    %v4921 = vadd.f32 %v573, %v4913
    %v4922 = vadd.f32 %v583, %v4914
    %v4923 = vadd.f32 %v593, %v4915
    %v4924 = vadd.f32 %v603, %v4916
    %v4925 = vadd.f32 %v613, %v4917
    %v4926 = vadd.f32 %v623, %v4918
    %v4927 = vtanh.pop %v4919
    %v4928 = vtanh.pop %v4920
    %v4929 = vtanh.pop %v4921
    %v4930 = vtanh.pop %v4922
    %v4931 = vtanh.pop %v4923
    %v4932 = vtanh.pop %v4924
    %v4933 = vtanh.pop %v4925
    %v4934 = vtanh.pop %v4926
    %v4943 = vrot.slane %v4927, 1
    %v4944 = vrot.slane %v4928, 1
    %v4945 = vrot.slane %v4929, 1
    %v4946 = vrot.slane %v4930, 1
    %v4947 = vrot.slane %v4931, 1
    %v4948 = vrot.slane %v4932, 1
    %v4949 = vrot.slane %v4933, 1
    %v4950 = vrot.slane %v4934, 1
    %v4959 = vsub.f32 %v4509, %v4943
    %v4960 = vsub.f32 %v4510, %v4944
    %v4961 = vsub.f32 %v4511, %v4945
    %v4962 = vsub.f32 %v4512, %v4946
    %v4963 = vsub.f32 %v4513, %v4947
    %v4964 = vsub.f32 %v4514, %v4948
    %v4965 = vsub.f32 %v4515, %v4949
    %v4966 = vsub.f32 %v4516, %v4950
    %v4975 = vrot.slane %v4959, 7
    %v4976 = vrot.slane %v4960, 7
    %v4977 = vrot.slane %v4961, 7
    %v4978 = vrot.slane %v4962, 7
    %v4979 = vrot.slane %v4963, 7
    %v4980 = vrot.slane %v4964, 7
    %v4981 = vrot.slane %v4965, 7
    %v4982 = vrot.slane %v4966, 7
    %v4991 = vmul.f32 %v4810, %v4975
    %v4992 = vmul.f32 %v4812, %v4976
    %v4993 = vmul.f32 %v4814, %v4977
    %v4994 = vmul.f32 %v4816, %v4978
    %v4995 = vmul.f32 %v4818, %v4979
    %v4996 = vmul.f32 %v4820, %v4980
    %v4997 = vmul.f32 %v4822, %v4981
    %v4998 = vmul.f32 %v4824, %v4982
    %v4999 = vadd.f32 %v4927, %v4991
    %v5000 = vadd.f32 %v4928, %v4992
    %v5001 = vadd.f32 %v4929, %v4993
    %v5002 = vadd.f32 %v4930, %v4994
    %v5003 = vadd.f32 %v4931, %v4995
    %v5004 = vadd.f32 %v4932, %v4996
    %v5005 = vadd.f32 %v4933, %v4997
    %v5006 = vadd.f32 %v4934, %v4998
    %v5015 = vrot.slane %v5000, 7
    %v5016 = vsel %vm1033, %v5015, %v4999
    %v5017 = vrot.slane %v5001, 6
    %v5018 = vsel %vm1036, %v5017, %v5016
    %v5019 = vrot.slane %v5002, 5
    %v5020 = vsel %vm1039, %v5019, %v5018
    %v5021 = vrot.slane %v5003, 4
    %v5022 = vsel %vm1042, %v5021, %v5020
    %v5023 = vrot.slane %v5004, 3
    %v5024 = vsel %vm1045, %v5023, %v5022
    %v5025 = vrot.slane %v5005, 2
    %v5026 = vsel %vm1048, %v5025, %v5024
    %v5027 = vrot.slane %v5006, 1
    %v5028 = vsel %vm1051, %v5027, %v5026
    %v5029 = vsel %vm116, %v5028, 0
    %5031 = vmatprep.subr.mxu0 0.0
    %5032 = vmatpush1.msra.mxu0 %v68
    %5033 = vmatprep.subr.mxu0 0.0
    %5034 = vmatpush1.msra.mxu0 %v69
    %5035 = vmatprep.subr.mxu0 0.0
    %5036 = vmatpush1.msra.mxu0 %v70
    %5037 = vmatprep.subr.mxu0 0.0
    %5038 = vmatpush1.msra.mxu0 %v71
    %5039 = vmatprep.subr.mxu0 0.0
    %5040 = vmatpush1.msra.mxu0 0.0
    %5041 = vmatprep.subr.mxu0 0.0
    %5042 = vmatpush1.msra.mxu0 0.0
    %5043 = vmatprep.subr.mxu0 0.0
    %5044 = vmatpush1.msra.mxu0 0.0
    %5045 = vmatprep.subr.mxu0 0.0
    %5046 = vmatpush1.msra.mxu0 0.0
    %5047 = vmatprep.subr.mxu0 0.0
    %5048 = vmatpush1.msra.mxu0 0.0
    %5049 = vmatprep.subr.mxu0 0.0
    %5050 = vmatpush1.msra.mxu0 0.0
    %5051 = vmatprep.subr.mxu0 0.0
    %5052 = vmatpush1.msra.mxu0 0.0
    %5053 = vmatprep.subr.mxu0 0.0
    %5054 = vmatpush1.msra.mxu0 0.0
    %5055 = vmatprep.subr.mxu0 0.0
    %5056 = vmatpush1.msra.mxu0 0.0
    %5057 = vmatprep.subr.mxu0 0.0
    %5058 = vmatpush1.msra.mxu0 0.0
    %5059 = vmatprep.subr.mxu0 0.0
    %5060 = vmatpush1.msra.mxu0 0.0
    %5061 = vmatprep.subr.mxu0 0.0
    %5062 = vmatpush1.msra.mxu0 0.0
    %5063 = vmatprep.subr.mxu0 0.0
    %5064 = vmatpush1.msra.mxu0 0.0
    %5065 = vmatprep.subr.mxu0 0.0
    %5066 = vmatpush1.msra.mxu0 0.0
    %5067 = vmatprep.subr.mxu0 0.0
    %5068 = vmatpush1.msra.mxu0 0.0
    %5069 = vmatprep.subr.mxu0 0.0
    %5070 = vmatpush1.msra.mxu0 0.0
    %5071 = vmatprep.subr.mxu0 0.0
    %5072 = vmatpush1.msra.mxu0 0.0
    %5073 = vmatprep.subr.mxu0 0.0
    %5074 = vmatpush1.msra.mxu0 0.0
    %5075 = vmatprep.subr.mxu0 0.0
    %5076 = vmatpush1.msra.mxu0 0.0
    %5077 = vmatprep.subr.mxu0 0.0
    %5078 = vmatpush1.msra.mxu0 0.0
    %5079 = vmatprep.subr.mxu0 0.0
    %5080 = vmatpush1.msra.mxu0 0.0
    %5081 = vmatprep.subr.mxu0 0.0
    %5082 = vmatpush1.msra.mxu0 0.0
    %5083 = vmatprep.subr.mxu0 0.0
    %5084 = vmatpush1.msra.mxu0 0.0
    %5085 = vmatprep.subr.mxu0 0.0
    %5086 = vmatpush1.msra.mxu0 0.0
    %5087 = vmatprep.subr.mxu0 0.0
    %5088 = vmatpush1.msra.mxu0 0.0
    %5089 = vmatprep.subr.mxu0 0.0
    %5090 = vmatpush1.msra.mxu0 0.0
    %5091 = vmatprep.subr.mxu0 0.0
    %5092 = vmatpush1.msra.mxu0 0.0
    %5093 = vmatprep.subr.mxu0 0.0
    %5094 = vmatpush1.msra.mxu0 0.0
    %5095 = vmatprep.mubr.f32.mxu0 0.0
    %5096 = vmatmul.mubr.f32.gmra.mrb[0].mxu0 %v5029
    %v5097 = vpop.f32.mrb[0].mxu0
    %v5098 = vadd.f32 0.0, %v5097
    %v5099 = vpop.f32.mrb[0].mxu0
    %5100 = vdwg.mxu0
    %v5102 = vrot.slane %v5098, 7
    %v5103 = vrot.slane %v5098, 1
    %v5104 = vrot.slane %v5098, 2
    %v5105 = vrot.slane %v5098, 3
    %v5106 = vrot.slane %v5098, 4
    %v5107 = vrot.slane %v5098, 5
    %v5108 = vrot.slane %v5098, 6
    %v5117 = vadd.f32 %v237, %v5102
    %v5118 = vadd.f32 %v247, %v5098
    %v5119 = vadd.f32 %v257, %v5103
    %v5120 = vadd.f32 %v267, %v5104
    %v5121 = vadd.f32 %v277, %v5105
    %v5122 = vadd.f32 %v287, %v5106
    %v5123 = vadd.f32 %v297, %v5107
    %v5124 = vadd.f32 %v307, %v5108
    %v5125 = vxor.u32 %v5117, 2147483648
    %v5126 = vxor.u32 %v5118, 2147483648
    %v5127 = vxor.u32 %v5119, 2147483648
    %v5128 = vxor.u32 %v5120, 2147483648
    %v5129 = vxor.u32 %v5121, 2147483648
    %v5130 = vxor.u32 %v5122, 2147483648
    %v5131 = vxor.u32 %v5123, 2147483648
    %v5132 = vxor.u32 %v5124, 2147483648
    %v5133 = vmul.f32 %v5125, 1.442695
    %v5134 = vpow.pop %v5133
    %v5135 = vmul.f32 %v5126, 1.442695
    %v5136 = vpow.pop %v5135
    %v5137 = vmul.f32 %v5127, 1.442695
    %v5138 = vpow.pop %v5137
    %v5139 = vmul.f32 %v5128, 1.442695
    %v5140 = vpow.pop %v5139
    %v5141 = vmul.f32 %v5129, 1.442695
    %v5142 = vpow.pop %v5141
    %v5143 = vmul.f32 %v5130, 1.442695
    %v5144 = vpow.pop %v5143
    %v5145 = vmul.f32 %v5131, 1.442695
    %v5146 = vpow.pop %v5145
    %v5147 = vmul.f32 %v5132, 1.442695
    %v5148 = vpow.pop %v5147
    %v5149 = vadd.f32 %v5134, 1.0
    %v5150 = vadd.f32 %v5136, 1.0
    %v5151 = vadd.f32 %v5138, 1.0
    %v5152 = vadd.f32 %v5140, 1.0
    %v5153 = vadd.f32 %v5142, 1.0
    %v5154 = vadd.f32 %v5144, 1.0
    %v5155 = vadd.f32 %v5146, 1.0
    %v5156 = vadd.f32 %v5148, 1.0
    %v5157 = vrcp.pop %v5149
    %v5158 = vmul.f32 1.0, %v5157
    %v5159 = vrcp.pop %v5150
    %v5160 = vmul.f32 1.0, %v5159
    %v5161 = vrcp.pop %v5151
    %v5162 = vmul.f32 1.0, %v5161
    %v5163 = vrcp.pop %v5152
    %v5164 = vmul.f32 1.0, %v5163
    %v5165 = vrcp.pop %v5153
    %v5166 = vmul.f32 1.0, %v5165
    %v5167 = vrcp.pop %v5154
    %v5168 = vmul.f32 1.0, %v5167
    %v5169 = vrcp.pop %v5155
    %v5170 = vmul.f32 1.0, %v5169
    %v5171 = vrcp.pop %v5156
    %v5172 = vmul.f32 1.0, %v5171
    %5173 = vmatprep.subr.mxu0 0.0
    %5174 = vmatpush1.msra.mxu0 %v73
    %5175 = vmatprep.subr.mxu0 0.0
    %5176 = vmatpush1.msra.mxu0 %v74
    %5177 = vmatprep.subr.mxu0 0.0
    %5178 = vmatpush1.msra.mxu0 %v75
    %5179 = vmatprep.subr.mxu0 0.0
    %5180 = vmatpush1.msra.mxu0 %v76
    %5181 = vmatprep.subr.mxu0 0.0
    %5182 = vmatpush1.msra.mxu0 0.0
    %5183 = vmatprep.subr.mxu0 0.0
    %5184 = vmatpush1.msra.mxu0 0.0
    %5185 = vmatprep.subr.mxu0 0.0
    %5186 = vmatpush1.msra.mxu0 0.0
    %5187 = vmatprep.subr.mxu0 0.0
    %5188 = vmatpush1.msra.mxu0 0.0
    %5189 = vmatprep.subr.mxu0 0.0
    %5190 = vmatpush1.msra.mxu0 0.0
    %5191 = vmatprep.subr.mxu0 0.0
    %5192 = vmatpush1.msra.mxu0 0.0
    %5193 = vmatprep.subr.mxu0 0.0
    %5194 = vmatpush1.msra.mxu0 0.0
    %5195 = vmatprep.subr.mxu0 0.0
    %5196 = vmatpush1.msra.mxu0 0.0
    %5197 = vmatprep.subr.mxu0 0.0
    %5198 = vmatpush1.msra.mxu0 0.0
    %5199 = vmatprep.subr.mxu0 0.0
    %5200 = vmatpush1.msra.mxu0 0.0
    %5201 = vmatprep.subr.mxu0 0.0
    %5202 = vmatpush1.msra.mxu0 0.0
    %5203 = vmatprep.subr.mxu0 0.0
    %5204 = vmatpush1.msra.mxu0 0.0
    %5205 = vmatprep.subr.mxu0 0.0
    %5206 = vmatpush1.msra.mxu0 0.0
    %5207 = vmatprep.subr.mxu0 0.0
    %5208 = vmatpush1.msra.mxu0 0.0
    %5209 = vmatprep.subr.mxu0 0.0
    %5210 = vmatpush1.msra.mxu0 0.0
    %5211 = vmatprep.subr.mxu0 0.0
    %5212 = vmatpush1.msra.mxu0 0.0
    %5213 = vmatprep.subr.mxu0 0.0
    %5214 = vmatpush1.msra.mxu0 0.0
    %5215 = vmatprep.subr.mxu0 0.0
    %5216 = vmatpush1.msra.mxu0 0.0
    %5217 = vmatprep.subr.mxu0 0.0
    %5218 = vmatpush1.msra.mxu0 0.0
    %5219 = vmatprep.subr.mxu0 0.0
    %5220 = vmatpush1.msra.mxu0 0.0
    %5221 = vmatprep.subr.mxu0 0.0
    %5222 = vmatpush1.msra.mxu0 0.0
    %5223 = vmatprep.subr.mxu0 0.0
    %5224 = vmatpush1.msra.mxu0 0.0
    %5225 = vmatprep.subr.mxu0 0.0
    %5226 = vmatpush1.msra.mxu0 0.0
    %5227 = vmatprep.subr.mxu0 0.0
    %5228 = vmatpush1.msra.mxu0 0.0
    %5229 = vmatprep.subr.mxu0 0.0
    %5230 = vmatpush1.msra.mxu0 0.0
    %5231 = vmatprep.subr.mxu0 0.0
    %5232 = vmatpush1.msra.mxu0 0.0
    %5233 = vmatprep.subr.mxu0 0.0
    %5234 = vmatpush1.msra.mxu0 0.0
    %5235 = vmatprep.subr.mxu0 0.0
    %5236 = vmatpush1.msra.mxu0 0.0
    %5237 = vmatprep.mubr.f32.mxu0 0.0
    %5238 = vmatmul.mubr.f32.gmra.mrb[0].mxu0 %v5029
    %v5239 = vpop.f32.mrb[0].mxu0
    %v5240 = vadd.f32 0.0, %v5239
    %v5241 = vpop.f32.mrb[0].mxu0
    %5242 = vdwg.mxu0
    %v5244 = vrot.slane %v5240, 7
    %v5245 = vrot.slane %v5240, 1
    %v5246 = vrot.slane %v5240, 2
    %v5247 = vrot.slane %v5240, 3
    %v5248 = vrot.slane %v5240, 4
    %v5249 = vrot.slane %v5240, 5
    %v5250 = vrot.slane %v5240, 6
    %v5259 = vadd.f32 %v395, %v5244
    %v5260 = vadd.f32 %v405, %v5240
    %v5261 = vadd.f32 %v415, %v5245
    %v5262 = vadd.f32 %v425, %v5246
    %v5263 = vadd.f32 %v435, %v5247
    %v5264 = vadd.f32 %v445, %v5248
    %v5265 = vadd.f32 %v455, %v5249
    %v5266 = vadd.f32 %v465, %v5250
    %v5267 = vxor.u32 %v5259, 2147483648
    %v5268 = vxor.u32 %v5260, 2147483648
    %v5269 = vxor.u32 %v5261, 2147483648
    %v5270 = vxor.u32 %v5262, 2147483648
    %v5271 = vxor.u32 %v5263, 2147483648
    %v5272 = vxor.u32 %v5264, 2147483648
    %v5273 = vxor.u32 %v5265, 2147483648
    %v5274 = vxor.u32 %v5266, 2147483648
    %v5275 = vmul.f32 %v5267, 1.442695
    %v5276 = vpow.pop %v5275
    %v5277 = vmul.f32 %v5268, 1.442695
    %v5278 = vpow.pop %v5277
    %v5279 = vmul.f32 %v5269, 1.442695
    %v5280 = vpow.pop %v5279
    %v5281 = vmul.f32 %v5270, 1.442695
    %v5282 = vpow.pop %v5281
    %v5283 = vmul.f32 %v5271, 1.442695
    %v5284 = vpow.pop %v5283
    %v5285 = vmul.f32 %v5272, 1.442695
    %v5286 = vpow.pop %v5285
    %v5287 = vmul.f32 %v5273, 1.442695
    %v5288 = vpow.pop %v5287
    %v5289 = vmul.f32 %v5274, 1.442695
    %v5290 = vpow.pop %v5289
    %v5291 = vadd.f32 %v5276, 1.0
    %v5292 = vadd.f32 %v5278, 1.0
    %v5293 = vadd.f32 %v5280, 1.0
    %v5294 = vadd.f32 %v5282, 1.0
    %v5295 = vadd.f32 %v5284, 1.0
    %v5296 = vadd.f32 %v5286, 1.0
    %v5297 = vadd.f32 %v5288, 1.0
    %v5298 = vadd.f32 %v5290, 1.0
    %v5299 = vrcp.pop %v5291
    %v5300 = vmul.f32 1.0, %v5299
    %v5301 = vrcp.pop %v5292
    %v5302 = vmul.f32 1.0, %v5301
    %v5303 = vrcp.pop %v5293
    %v5304 = vmul.f32 1.0, %v5303
    %v5305 = vrcp.pop %v5294
    %v5306 = vmul.f32 1.0, %v5305
    %v5307 = vrcp.pop %v5295
    %v5308 = vmul.f32 1.0, %v5307
    %v5309 = vrcp.pop %v5296
    %v5310 = vmul.f32 1.0, %v5309
    %v5311 = vrcp.pop %v5297
    %v5312 = vmul.f32 1.0, %v5311
    %v5313 = vrcp.pop %v5298
    %v5314 = vmul.f32 1.0, %v5313
    %5315 = vmatprep.subr.mxu0 0.0
    %5316 = vmatpush1.msra.mxu0 %v78
    %5317 = vmatprep.subr.mxu0 0.0
    %5318 = vmatpush1.msra.mxu0 %v79
    %5319 = vmatprep.subr.mxu0 0.0
    %5320 = vmatpush1.msra.mxu0 %v80
    %5321 = vmatprep.subr.mxu0 0.0
    %5322 = vmatpush1.msra.mxu0 %v81
    %5323 = vmatprep.subr.mxu0 0.0
    %5324 = vmatpush1.msra.mxu0 0.0
    %5325 = vmatprep.subr.mxu0 0.0
    %5326 = vmatpush1.msra.mxu0 0.0
    %5327 = vmatprep.subr.mxu0 0.0
    %5328 = vmatpush1.msra.mxu0 0.0
    %5329 = vmatprep.subr.mxu0 0.0
    %5330 = vmatpush1.msra.mxu0 0.0
    %5331 = vmatprep.subr.mxu0 0.0
    %5332 = vmatpush1.msra.mxu0 0.0
    %5333 = vmatprep.subr.mxu0 0.0
    %5334 = vmatpush1.msra.mxu0 0.0
    %5335 = vmatprep.subr.mxu0 0.0
    %5336 = vmatpush1.msra.mxu0 0.0
    %5337 = vmatprep.subr.mxu0 0.0
    %5338 = vmatpush1.msra.mxu0 0.0
    %5339 = vmatprep.subr.mxu0 0.0
    %5340 = vmatpush1.msra.mxu0 0.0
    %5341 = vmatprep.subr.mxu0 0.0
    %5342 = vmatpush1.msra.mxu0 0.0
    %5343 = vmatprep.subr.mxu0 0.0
    %5344 = vmatpush1.msra.mxu0 0.0
    %5345 = vmatprep.subr.mxu0 0.0
    %5346 = vmatpush1.msra.mxu0 0.0
    %5347 = vmatprep.subr.mxu0 0.0
    %5348 = vmatpush1.msra.mxu0 0.0
    %5349 = vmatprep.subr.mxu0 0.0
    %5350 = vmatpush1.msra.mxu0 0.0
    %5351 = vmatprep.subr.mxu0 0.0
    %5352 = vmatpush1.msra.mxu0 0.0
    %5353 = vmatprep.subr.mxu0 0.0
    %5354 = vmatpush1.msra.mxu0 0.0
    %5355 = vmatprep.subr.mxu0 0.0
    %5356 = vmatpush1.msra.mxu0 0.0
    %5357 = vmatprep.subr.mxu0 0.0
    %5358 = vmatpush1.msra.mxu0 0.0
    %5359 = vmatprep.subr.mxu0 0.0
    %5360 = vmatpush1.msra.mxu0 0.0
    %5361 = vmatprep.subr.mxu0 0.0
    %5362 = vmatpush1.msra.mxu0 0.0
    %5363 = vmatprep.subr.mxu0 0.0
    %5364 = vmatpush1.msra.mxu0 0.0
    %5365 = vmatprep.subr.mxu0 0.0
    %5366 = vmatpush1.msra.mxu0 0.0
    %5367 = vmatprep.subr.mxu0 0.0
    %5368 = vmatpush1.msra.mxu0 0.0
    %5369 = vmatprep.subr.mxu0 0.0
    %5370 = vmatpush1.msra.mxu0 0.0
    %5371 = vmatprep.subr.mxu0 0.0
    %5372 = vmatpush1.msra.mxu0 0.0
    %5373 = vmatprep.subr.mxu0 0.0
    %5374 = vmatpush1.msra.mxu0 0.0
    %5375 = vmatprep.subr.mxu0 0.0
    %5376 = vmatpush1.msra.mxu0 0.0
    %5377 = vmatprep.subr.mxu0 0.0
    %5378 = vmatpush1.msra.mxu0 0.0
    %5379 = vmatprep.mubr.f32.mxu0 0.0
    %5380 = vmatmul.mubr.f32.gmra.mrb[0].mxu0 %v5029
    %v5381 = vpop.f32.mrb[0].mxu0
    %v5382 = vadd.f32 %v87, %v5381
    %v5383 = vpop.f32.mrb[0].mxu0
    %5384 = vdwg.mxu0
    %v5386 = vrot.slane %v5382, 7
    %v5387 = vrot.slane %v5382, 1
    %v5388 = vrot.slane %v5382, 2
    %v5389 = vrot.slane %v5382, 3
    %v5390 = vrot.slane %v5382, 4
    %v5391 = vrot.slane %v5382, 5
    %v5392 = vrot.slane %v5382, 6
    %v5401 = vmul.f32 %v5158, %v5386
    %v5402 = vmul.f32 %v5160, %v5382
    %v5403 = vmul.f32 %v5162, %v5387
    %v5404 = vmul.f32 %v5164, %v5388
    %v5405 = vmul.f32 %v5166, %v5389
    %v5406 = vmul.f32 %v5168, %v5390
    %v5407 = vmul.f32 %v5170, %v5391
    %v5408 = vmul.f32 %v5172, %v5392
    %v5409 = vadd.f32 %v553, %v5401
    %v5410 = vadd.f32 %v563, %v5402
    %v5411 = vadd.f32 %v573, %v5403
    %v5412 = vadd.f32 %v583, %v5404
    %v5413 = vadd.f32 %v593, %v5405
    %v5414 = vadd.f32 %v603, %v5406
    %v5415 = vadd.f32 %v613, %v5407
    %v5416 = vadd.f32 %v623, %v5408
    %v5417 = vtanh.pop %v5409
    %v5418 = vtanh.pop %v5410
    %v5419 = vtanh.pop %v5411
    %v5420 = vtanh.pop %v5412
    %v5421 = vtanh.pop %v5413
    %v5422 = vtanh.pop %v5414
    %v5423 = vtanh.pop %v5415
    %v5424 = vtanh.pop %v5416
    %v5433 = vrot.slane %v5417, 1
    %v5434 = vrot.slane %v5418, 1
    %v5435 = vrot.slane %v5419, 1
    %v5436 = vrot.slane %v5420, 1
    %v5437 = vrot.slane %v5421, 1
    %v5438 = vrot.slane %v5422, 1
    %v5439 = vrot.slane %v5423, 1
    %v5440 = vrot.slane %v5424, 1
    %v5449 = vsub.f32 %v4999, %v5433
    %v5450 = vsub.f32 %v5000, %v5434
    %v5451 = vsub.f32 %v5001, %v5435
    %v5452 = vsub.f32 %v5002, %v5436
    %v5453 = vsub.f32 %v5003, %v5437
    %v5454 = vsub.f32 %v5004, %v5438
    %v5455 = vsub.f32 %v5005, %v5439
    %v5456 = vsub.f32 %v5006, %v5440
    %v5465 = vrot.slane %v5449, 7
    %v5466 = vrot.slane %v5450, 7
    %v5467 = vrot.slane %v5451, 7
    %v5468 = vrot.slane %v5452, 7
    %v5469 = vrot.slane %v5453, 7
    %v5470 = vrot.slane %v5454, 7
    %v5471 = vrot.slane %v5455, 7
    %v5472 = vrot.slane %v5456, 7
    %v5481 = vmul.f32 %v5300, %v5465
    %v5482 = vmul.f32 %v5302, %v5466
    %v5483 = vmul.f32 %v5304, %v5467
    %v5484 = vmul.f32 %v5306, %v5468
    %v5485 = vmul.f32 %v5308, %v5469
    %v5486 = vmul.f32 %v5310, %v5470
    %v5487 = vmul.f32 %v5312, %v5471
    %v5488 = vmul.f32 %v5314, %v5472
    %v5489 = vadd.f32 %v5417, %v5481
    %v5490 = vadd.f32 %v5418, %v5482
    %v5491 = vadd.f32 %v5419, %v5483
    %v5492 = vadd.f32 %v5420, %v5484
    %v5493 = vadd.f32 %v5421, %v5485
    %v5494 = vadd.f32 %v5422, %v5486
    %v5495 = vadd.f32 %v5423, %v5487
    %v5496 = vadd.f32 %v5424, %v5488
    %v5505 = vrot.slane %v5489, 1
    %v5506 = vsel %vm1033, %v5490, %v5505
    %v5507 = vrot.slane %v5491, 7
    %v5508 = vsel %vm1036, %v5507, %v5506
    %v5509 = vrot.slane %v5492, 6
    %v5510 = vsel %vm1039, %v5509, %v5508
    %v5511 = vrot.slane %v5493, 5
    %v5512 = vsel %vm1042, %v5511, %v5510
    %v5513 = vrot.slane %v5494, 4
    %v5514 = vsel %vm1045, %v5513, %v5512
    %v5515 = vrot.slane %v5495, 3
    %v5516 = vsel %vm1048, %v5515, %v5514
    %v5517 = vrot.slane %v5496, 2
    %v5518 = vsel %vm1051, %v5517, %v5516
    %v5519 = vsel %vm116, %v5518, 0
    %5521 = vmatprep.subr.mxu0 0.0
    %5522 = vmatpush1.msra.mxu0 %v68
    %5523 = vmatprep.subr.mxu0 0.0
    %5524 = vmatpush1.msra.mxu0 %v69
    %5525 = vmatprep.subr.mxu0 0.0
    %5526 = vmatpush1.msra.mxu0 %v70
    %5527 = vmatprep.subr.mxu0 0.0
    %5528 = vmatpush1.msra.mxu0 %v71
    %5529 = vmatprep.subr.mxu0 0.0
    %5530 = vmatpush1.msra.mxu0 0.0
    %5531 = vmatprep.subr.mxu0 0.0
    %5532 = vmatpush1.msra.mxu0 0.0
    %5533 = vmatprep.subr.mxu0 0.0
    %5534 = vmatpush1.msra.mxu0 0.0
    %5535 = vmatprep.subr.mxu0 0.0
    %5536 = vmatpush1.msra.mxu0 0.0
    %5537 = vmatprep.subr.mxu0 0.0
    %5538 = vmatpush1.msra.mxu0 0.0
    %5539 = vmatprep.subr.mxu0 0.0
    %5540 = vmatpush1.msra.mxu0 0.0
    %5541 = vmatprep.subr.mxu0 0.0
    %5542 = vmatpush1.msra.mxu0 0.0
    %5543 = vmatprep.subr.mxu0 0.0
    %5544 = vmatpush1.msra.mxu0 0.0
    %5545 = vmatprep.subr.mxu0 0.0
    %5546 = vmatpush1.msra.mxu0 0.0
    %5547 = vmatprep.subr.mxu0 0.0
    %5548 = vmatpush1.msra.mxu0 0.0
    %5549 = vmatprep.subr.mxu0 0.0
    %5550 = vmatpush1.msra.mxu0 0.0
    %5551 = vmatprep.subr.mxu0 0.0
    %5552 = vmatpush1.msra.mxu0 0.0
    %5553 = vmatprep.subr.mxu0 0.0
    %5554 = vmatpush1.msra.mxu0 0.0
    %5555 = vmatprep.subr.mxu0 0.0
    %5556 = vmatpush1.msra.mxu0 0.0
    %5557 = vmatprep.subr.mxu0 0.0
    %5558 = vmatpush1.msra.mxu0 0.0
    %5559 = vmatprep.subr.mxu0 0.0
    %5560 = vmatpush1.msra.mxu0 0.0
    %5561 = vmatprep.subr.mxu0 0.0
    %5562 = vmatpush1.msra.mxu0 0.0
    %5563 = vmatprep.subr.mxu0 0.0
    %5564 = vmatpush1.msra.mxu0 0.0
    %5565 = vmatprep.subr.mxu0 0.0
    %5566 = vmatpush1.msra.mxu0 0.0
    %5567 = vmatprep.subr.mxu0 0.0
    %5568 = vmatpush1.msra.mxu0 0.0
    %5569 = vmatprep.subr.mxu0 0.0
    %5570 = vmatpush1.msra.mxu0 0.0
    %5571 = vmatprep.subr.mxu0 0.0
    %5572 = vmatpush1.msra.mxu0 0.0
    %5573 = vmatprep.subr.mxu0 0.0
    %5574 = vmatpush1.msra.mxu0 0.0
    %5575 = vmatprep.subr.mxu0 0.0
    %5576 = vmatpush1.msra.mxu0 0.0
    %5577 = vmatprep.subr.mxu0 0.0
    %5578 = vmatpush1.msra.mxu0 0.0
    %5579 = vmatprep.subr.mxu0 0.0
    %5580 = vmatpush1.msra.mxu0 0.0
    %5581 = vmatprep.subr.mxu0 0.0
    %5582 = vmatpush1.msra.mxu0 0.0
    %5583 = vmatprep.subr.mxu0 0.0
    %5584 = vmatpush1.msra.mxu0 0.0
    %5585 = vmatprep.mubr.f32.mxu0 0.0
    %5586 = vmatmul.mubr.f32.gmra.mrb[0].mxu0 %v5519
    %v5587 = vpop.f32.mrb[0].mxu0
    %v5588 = vadd.f32 0.0, %v5587
    %v5589 = vpop.f32.mrb[0].mxu0
    %5590 = vdwg.mxu0
    %v5592 = vrot.slane %v5588, 6
    %v5593 = vrot.slane %v5588, 7
    %v5594 = vrot.slane %v5588, 1
    %v5595 = vrot.slane %v5588, 2
    %v5596 = vrot.slane %v5588, 3
    %v5597 = vrot.slane %v5588, 4
    %v5598 = vrot.slane %v5588, 5
    %v5607 = vadd.f32 %v237, %v5592
    %v5608 = vadd.f32 %v247, %v5593
    %v5609 = vadd.f32 %v257, %v5588
    %v5610 = vadd.f32 %v267, %v5594
    %v5611 = vadd.f32 %v277, %v5595
    %v5612 = vadd.f32 %v287, %v5596
    %v5613 = vadd.f32 %v297, %v5597
    %v5614 = vadd.f32 %v307, %v5598
    %v5615 = vxor.u32 %v5607, 2147483648
    %v5616 = vxor.u32 %v5608, 2147483648
    %v5617 = vxor.u32 %v5609, 2147483648
    %v5618 = vxor.u32 %v5610, 2147483648
    %v5619 = vxor.u32 %v5611, 2147483648
    %v5620 = vxor.u32 %v5612, 2147483648
    %v5621 = vxor.u32 %v5613, 2147483648
    %v5622 = vxor.u32 %v5614, 2147483648
    %v5623 = vmul.f32 %v5615, 1.442695
    %v5624 = vpow.pop %v5623
    %v5625 = vmul.f32 %v5616, 1.442695
    %v5626 = vpow.pop %v5625
    %v5627 = vmul.f32 %v5617, 1.442695
    %v5628 = vpow.pop %v5627
    %v5629 = vmul.f32 %v5618, 1.442695
    %v5630 = vpow.pop %v5629
    %v5631 = vmul.f32 %v5619, 1.442695
    %v5632 = vpow.pop %v5631
    %v5633 = vmul.f32 %v5620, 1.442695
    %v5634 = vpow.pop %v5633
    %v5635 = vmul.f32 %v5621, 1.442695
    %v5636 = vpow.pop %v5635
    %v5637 = vmul.f32 %v5622, 1.442695
    %v5638 = vpow.pop %v5637
    %v5639 = vadd.f32 %v5624, 1.0
    %v5640 = vadd.f32 %v5626, 1.0
    %v5641 = vadd.f32 %v5628, 1.0
    %v5642 = vadd.f32 %v5630, 1.0
    %v5643 = vadd.f32 %v5632, 1.0
    %v5644 = vadd.f32 %v5634, 1.0
    %v5645 = vadd.f32 %v5636, 1.0
    %v5646 = vadd.f32 %v5638, 1.0
    %v5647 = vrcp.pop %v5639
    %v5648 = vmul.f32 1.0, %v5647
    %v5649 = vrcp.pop %v5640
    %v5650 = vmul.f32 1.0, %v5649
    %v5651 = vrcp.pop %v5641
    %v5652 = vmul.f32 1.0, %v5651
    %v5653 = vrcp.pop %v5642
    %v5654 = vmul.f32 1.0, %v5653
    %v5655 = vrcp.pop %v5643
    %v5656 = vmul.f32 1.0, %v5655
    %v5657 = vrcp.pop %v5644
    %v5658 = vmul.f32 1.0, %v5657
    %v5659 = vrcp.pop %v5645
    %v5660 = vmul.f32 1.0, %v5659
    %v5661 = vrcp.pop %v5646
    %v5662 = vmul.f32 1.0, %v5661
    %5663 = vmatprep.subr.mxu0 0.0
    %5664 = vmatpush1.msra.mxu0 %v73
    %5665 = vmatprep.subr.mxu0 0.0
    %5666 = vmatpush1.msra.mxu0 %v74
    %5667 = vmatprep.subr.mxu0 0.0
    %5668 = vmatpush1.msra.mxu0 %v75
    %5669 = vmatprep.subr.mxu0 0.0
    %5670 = vmatpush1.msra.mxu0 %v76
    %5671 = vmatprep.subr.mxu0 0.0
    %5672 = vmatpush1.msra.mxu0 0.0
    %5673 = vmatprep.subr.mxu0 0.0
    %5674 = vmatpush1.msra.mxu0 0.0
    %5675 = vmatprep.subr.mxu0 0.0
    %5676 = vmatpush1.msra.mxu0 0.0
    %5677 = vmatprep.subr.mxu0 0.0
    %5678 = vmatpush1.msra.mxu0 0.0
    %5679 = vmatprep.subr.mxu0 0.0
    %5680 = vmatpush1.msra.mxu0 0.0
    %5681 = vmatprep.subr.mxu0 0.0
    %5682 = vmatpush1.msra.mxu0 0.0
    %5683 = vmatprep.subr.mxu0 0.0
    %5684 = vmatpush1.msra.mxu0 0.0
    %5685 = vmatprep.subr.mxu0 0.0
    %5686 = vmatpush1.msra.mxu0 0.0
    %5687 = vmatprep.subr.mxu0 0.0
    %5688 = vmatpush1.msra.mxu0 0.0
    %5689 = vmatprep.subr.mxu0 0.0
    %5690 = vmatpush1.msra.mxu0 0.0
    %5691 = vmatprep.subr.mxu0 0.0
    %5692 = vmatpush1.msra.mxu0 0.0
    %5693 = vmatprep.subr.mxu0 0.0
    %5694 = vmatpush1.msra.mxu0 0.0
    %5695 = vmatprep.subr.mxu0 0.0
    %5696 = vmatpush1.msra.mxu0 0.0
    %5697 = vmatprep.subr.mxu0 0.0
    %5698 = vmatpush1.msra.mxu0 0.0
    %5699 = vmatprep.subr.mxu0 0.0
    %5700 = vmatpush1.msra.mxu0 0.0
    %5701 = vmatprep.subr.mxu0 0.0
    %5702 = vmatpush1.msra.mxu0 0.0
    %5703 = vmatprep.subr.mxu0 0.0
    %5704 = vmatpush1.msra.mxu0 0.0
    %5705 = vmatprep.subr.mxu0 0.0
    %5706 = vmatpush1.msra.mxu0 0.0
    %5707 = vmatprep.subr.mxu0 0.0
    %5708 = vmatpush1.msra.mxu0 0.0
    %5709 = vmatprep.subr.mxu0 0.0
    %5710 = vmatpush1.msra.mxu0 0.0
    %5711 = vmatprep.subr.mxu0 0.0
    %5712 = vmatpush1.msra.mxu0 0.0
    %5713 = vmatprep.subr.mxu0 0.0
    %5714 = vmatpush1.msra.mxu0 0.0
    %5715 = vmatprep.subr.mxu0 0.0
    %5716 = vmatpush1.msra.mxu0 0.0
    %5717 = vmatprep.subr.mxu0 0.0
    %5718 = vmatpush1.msra.mxu0 0.0
    %5719 = vmatprep.subr.mxu0 0.0
    %5720 = vmatpush1.msra.mxu0 0.0
    %5721 = vmatprep.subr.mxu0 0.0
    %5722 = vmatpush1.msra.mxu0 0.0
    %5723 = vmatprep.subr.mxu0 0.0
    %5724 = vmatpush1.msra.mxu0 0.0
    %5725 = vmatprep.subr.mxu0 0.0
    %5726 = vmatpush1.msra.mxu0 0.0
    %5727 = vmatprep.mubr.f32.mxu0 0.0
    %5728 = vmatmul.mubr.f32.gmra.mrb[0].mxu0 %v5519
    %v5729 = vpop.f32.mrb[0].mxu0
    %v5730 = vadd.f32 0.0, %v5729
    %v5731 = vpop.f32.mrb[0].mxu0
    %5732 = vdwg.mxu0
    %v5734 = vrot.slane %v5730, 6
    %v5735 = vrot.slane %v5730, 7
    %v5736 = vrot.slane %v5730, 1
    %v5737 = vrot.slane %v5730, 2
    %v5738 = vrot.slane %v5730, 3
    %v5739 = vrot.slane %v5730, 4
    %v5740 = vrot.slane %v5730, 5
    %v5749 = vadd.f32 %v395, %v5734
    %v5750 = vadd.f32 %v405, %v5735
    %v5751 = vadd.f32 %v415, %v5730
    %v5752 = vadd.f32 %v425, %v5736
    %v5753 = vadd.f32 %v435, %v5737
    %v5754 = vadd.f32 %v445, %v5738
    %v5755 = vadd.f32 %v455, %v5739
    %v5756 = vadd.f32 %v465, %v5740
    %v5757 = vxor.u32 %v5749, 2147483648
    %v5758 = vxor.u32 %v5750, 2147483648
    %v5759 = vxor.u32 %v5751, 2147483648
    %v5760 = vxor.u32 %v5752, 2147483648
    %v5761 = vxor.u32 %v5753, 2147483648
    %v5762 = vxor.u32 %v5754, 2147483648
    %v5763 = vxor.u32 %v5755, 2147483648
    %v5764 = vxor.u32 %v5756, 2147483648
    %v5765 = vmul.f32 %v5757, 1.442695
    %v5766 = vpow.pop %v5765
    %v5767 = vmul.f32 %v5758, 1.442695
    %v5768 = vpow.pop %v5767
    %v5769 = vmul.f32 %v5759, 1.442695
    %v5770 = vpow.pop %v5769
    %v5771 = vmul.f32 %v5760, 1.442695
    %v5772 = vpow.pop %v5771
    %v5773 = vmul.f32 %v5761, 1.442695
    %v5774 = vpow.pop %v5773
    %v5775 = vmul.f32 %v5762, 1.442695
    %v5776 = vpow.pop %v5775
    %v5777 = vmul.f32 %v5763, 1.442695
    %v5778 = vpow.pop %v5777
    %v5779 = vmul.f32 %v5764, 1.442695
    %v5780 = vpow.pop %v5779
    %v5781 = vadd.f32 %v5766, 1.0
    %v5782 = vadd.f32 %v5768, 1.0
    %v5783 = vadd.f32 %v5770, 1.0
    %v5784 = vadd.f32 %v5772, 1.0
    %v5785 = vadd.f32 %v5774, 1.0
    %v5786 = vadd.f32 %v5776, 1.0
    %v5787 = vadd.f32 %v5778, 1.0
    %v5788 = vadd.f32 %v5780, 1.0
    %v5789 = vrcp.pop %v5781
    %v5790 = vmul.f32 1.0, %v5789
    %v5791 = vrcp.pop %v5782
    %v5792 = vmul.f32 1.0, %v5791
    %v5793 = vrcp.pop %v5783
    %v5794 = vmul.f32 1.0, %v5793
    %v5795 = vrcp.pop %v5784
    %v5796 = vmul.f32 1.0, %v5795
    %v5797 = vrcp.pop %v5785
    %v5798 = vmul.f32 1.0, %v5797
    %v5799 = vrcp.pop %v5786
    %v5800 = vmul.f32 1.0, %v5799
    %v5801 = vrcp.pop %v5787
    %v5802 = vmul.f32 1.0, %v5801
    %v5803 = vrcp.pop %v5788
    %v5804 = vmul.f32 1.0, %v5803
    %5805 = vmatprep.subr.mxu0 0.0
    %5806 = vmatpush1.msra.mxu0 %v78
    %5807 = vmatprep.subr.mxu0 0.0
    %5808 = vmatpush1.msra.mxu0 %v79
    %5809 = vmatprep.subr.mxu0 0.0
    %5810 = vmatpush1.msra.mxu0 %v80
    %5811 = vmatprep.subr.mxu0 0.0
    %5812 = vmatpush1.msra.mxu0 %v81
    %5813 = vmatprep.subr.mxu0 0.0
    %5814 = vmatpush1.msra.mxu0 0.0
    %5815 = vmatprep.subr.mxu0 0.0
    %5816 = vmatpush1.msra.mxu0 0.0
    %5817 = vmatprep.subr.mxu0 0.0
    %5818 = vmatpush1.msra.mxu0 0.0
    %5819 = vmatprep.subr.mxu0 0.0
    %5820 = vmatpush1.msra.mxu0 0.0
    %5821 = vmatprep.subr.mxu0 0.0
    %5822 = vmatpush1.msra.mxu0 0.0
    %5823 = vmatprep.subr.mxu0 0.0
    %5824 = vmatpush1.msra.mxu0 0.0
    %5825 = vmatprep.subr.mxu0 0.0
    %5826 = vmatpush1.msra.mxu0 0.0
    %5827 = vmatprep.subr.mxu0 0.0
    %5828 = vmatpush1.msra.mxu0 0.0
    %5829 = vmatprep.subr.mxu0 0.0
    %5830 = vmatpush1.msra.mxu0 0.0
    %5831 = vmatprep.subr.mxu0 0.0
    %5832 = vmatpush1.msra.mxu0 0.0
    %5833 = vmatprep.subr.mxu0 0.0
    %5834 = vmatpush1.msra.mxu0 0.0
    %5835 = vmatprep.subr.mxu0 0.0
    %5836 = vmatpush1.msra.mxu0 0.0
    %5837 = vmatprep.subr.mxu0 0.0
    %5838 = vmatpush1.msra.mxu0 0.0
    %5839 = vmatprep.subr.mxu0 0.0
    %5840 = vmatpush1.msra.mxu0 0.0
    %5841 = vmatprep.subr.mxu0 0.0
    %5842 = vmatpush1.msra.mxu0 0.0
    %5843 = vmatprep.subr.mxu0 0.0
    %5844 = vmatpush1.msra.mxu0 0.0
    %5845 = vmatprep.subr.mxu0 0.0
    %5846 = vmatpush1.msra.mxu0 0.0
    %5847 = vmatprep.subr.mxu0 0.0
    %5848 = vmatpush1.msra.mxu0 0.0
    %5849 = vmatprep.subr.mxu0 0.0
    %5850 = vmatpush1.msra.mxu0 0.0
    %5851 = vmatprep.subr.mxu0 0.0
    %5852 = vmatpush1.msra.mxu0 0.0
    %5853 = vmatprep.subr.mxu0 0.0
    %5854 = vmatpush1.msra.mxu0 0.0
    %5855 = vmatprep.subr.mxu0 0.0
    %5856 = vmatpush1.msra.mxu0 0.0
    %5857 = vmatprep.subr.mxu0 0.0
    %5858 = vmatpush1.msra.mxu0 0.0
    %5859 = vmatprep.subr.mxu0 0.0
    %5860 = vmatpush1.msra.mxu0 0.0
    %5861 = vmatprep.subr.mxu0 0.0
    %5862 = vmatpush1.msra.mxu0 0.0
    %5863 = vmatprep.subr.mxu0 0.0
    %5864 = vmatpush1.msra.mxu0 0.0
    %5865 = vmatprep.subr.mxu0 0.0
    %5866 = vmatpush1.msra.mxu0 0.0
    %5867 = vmatprep.subr.mxu0 0.0
    %5868 = vmatpush1.msra.mxu0 0.0
    %5869 = vmatprep.mubr.f32.mxu0 0.0
    %5870 = vmatmul.mubr.f32.gmra.mrb[0].mxu0 %v5519
    %v5871 = vpop.f32.mrb[0].mxu0
    %v5872 = vadd.f32 %v87, %v5871
    %v5873 = vpop.f32.mrb[0].mxu0
    %5874 = vdwg.mxu0
    %v5876 = vrot.slane %v5872, 6
    %v5877 = vrot.slane %v5872, 7
    %v5878 = vrot.slane %v5872, 1
    %v5879 = vrot.slane %v5872, 2
    %v5880 = vrot.slane %v5872, 3
    %v5881 = vrot.slane %v5872, 4
    %v5882 = vrot.slane %v5872, 5
    %v5891 = vmul.f32 %v5648, %v5876
    %v5892 = vmul.f32 %v5650, %v5877
    %v5893 = vmul.f32 %v5652, %v5872
    %v5894 = vmul.f32 %v5654, %v5878
    %v5895 = vmul.f32 %v5656, %v5879
    %v5896 = vmul.f32 %v5658, %v5880
    %v5897 = vmul.f32 %v5660, %v5881
    %v5898 = vmul.f32 %v5662, %v5882
    %v5899 = vadd.f32 %v553, %v5891
    %v5900 = vadd.f32 %v563, %v5892
    %v5901 = vadd.f32 %v573, %v5893
    %v5902 = vadd.f32 %v583, %v5894
    %v5903 = vadd.f32 %v593, %v5895
    %v5904 = vadd.f32 %v603, %v5896
    %v5905 = vadd.f32 %v613, %v5897
    %v5906 = vadd.f32 %v623, %v5898
    %v5907 = vtanh.pop %v5899
    %v5908 = vtanh.pop %v5900
    %v5909 = vtanh.pop %v5901
    %v5910 = vtanh.pop %v5902
    %v5911 = vtanh.pop %v5903
    %v5912 = vtanh.pop %v5904
    %v5913 = vtanh.pop %v5905
    %v5914 = vtanh.pop %v5906
    %v5923 = vrot.slane %v5907, 1
    %v5924 = vrot.slane %v5908, 1
    %v5925 = vrot.slane %v5909, 1
    %v5926 = vrot.slane %v5910, 1
    %v5927 = vrot.slane %v5911, 1
    %v5928 = vrot.slane %v5912, 1
    %v5929 = vrot.slane %v5913, 1
    %v5930 = vrot.slane %v5914, 1
    %v5939 = vsub.f32 %v5489, %v5923
    %v5940 = vsub.f32 %v5490, %v5924
    %v5941 = vsub.f32 %v5491, %v5925
    %v5942 = vsub.f32 %v5492, %v5926
    %v5943 = vsub.f32 %v5493, %v5927
    %v5944 = vsub.f32 %v5494, %v5928
    %v5945 = vsub.f32 %v5495, %v5929
    %v5946 = vsub.f32 %v5496, %v5930
    %v5955 = vrot.slane %v5939, 7
    %v5956 = vrot.slane %v5940, 7
    %v5957 = vrot.slane %v5941, 7
    %v5958 = vrot.slane %v5942, 7
    %v5959 = vrot.slane %v5943, 7
    %v5960 = vrot.slane %v5944, 7
    %v5961 = vrot.slane %v5945, 7
    %v5962 = vrot.slane %v5946, 7
    %v5971 = vmul.f32 %v5790, %v5955
    %v5972 = vmul.f32 %v5792, %v5956
    %v5973 = vmul.f32 %v5794, %v5957
    %v5974 = vmul.f32 %v5796, %v5958
    %v5975 = vmul.f32 %v5798, %v5959
    %v5976 = vmul.f32 %v5800, %v5960
    %v5977 = vmul.f32 %v5802, %v5961
    %v5978 = vmul.f32 %v5804, %v5962
    %v5979 = vadd.f32 %v5907, %v5971
    %v5980 = vadd.f32 %v5908, %v5972
    %v5981 = vadd.f32 %v5909, %v5973
    %v5982 = vadd.f32 %v5910, %v5974
    %v5983 = vadd.f32 %v5911, %v5975
    %v5984 = vadd.f32 %v5912, %v5976
    %v5985 = vadd.f32 %v5913, %v5977
    %v5986 = vadd.f32 %v5914, %v5978
    %v5995 = vrot.slane %v5979, 2
    %v5996 = vrot.slane %v5980, 1
    %v5997 = vsel %vm1033, %v5996, %v5995
    %v5998 = vsel %vm1036, %v5981, %v5997
    %v5999 = vrot.slane %v5982, 7
    %v6000 = vsel %vm1039, %v5999, %v5998
    %v6001 = vrot.slane %v5983, 6
    %v6002 = vsel %vm1042, %v6001, %v6000
    %v6003 = vrot.slane %v5984, 5
    %v6004 = vsel %vm1045, %v6003, %v6002
    %v6005 = vrot.slane %v5985, 4
    %v6006 = vsel %vm1048, %v6005, %v6004
    %v6007 = vrot.slane %v5986, 3
    %v6008 = vsel %vm1051, %v6007, %v6006
    %v6009 = vsel %vm116, %v6008, 0
    %6011 = vmatprep.subr.mxu0 0.0
    %6012 = vmatpush1.msra.mxu0 %v68
    %6013 = vmatprep.subr.mxu0 0.0
    %6014 = vmatpush1.msra.mxu0 %v69
    %6015 = vmatprep.subr.mxu0 0.0
    %6016 = vmatpush1.msra.mxu0 %v70
    %6017 = vmatprep.subr.mxu0 0.0
    %6018 = vmatpush1.msra.mxu0 %v71
    %6019 = vmatprep.subr.mxu0 0.0
    %6020 = vmatpush1.msra.mxu0 0.0
    %6021 = vmatprep.subr.mxu0 0.0
    %6022 = vmatpush1.msra.mxu0 0.0
    %6023 = vmatprep.subr.mxu0 0.0
    %6024 = vmatpush1.msra.mxu0 0.0
    %6025 = vmatprep.subr.mxu0 0.0
    %6026 = vmatpush1.msra.mxu0 0.0
    %6027 = vmatprep.subr.mxu0 0.0
    %6028 = vmatpush1.msra.mxu0 0.0
    %6029 = vmatprep.subr.mxu0 0.0
    %6030 = vmatpush1.msra.mxu0 0.0
    %6031 = vmatprep.subr.mxu0 0.0
    %6032 = vmatpush1.msra.mxu0 0.0
    %6033 = vmatprep.subr.mxu0 0.0
    %6034 = vmatpush1.msra.mxu0 0.0
    %6035 = vmatprep.subr.mxu0 0.0
    %6036 = vmatpush1.msra.mxu0 0.0
    %6037 = vmatprep.subr.mxu0 0.0
    %6038 = vmatpush1.msra.mxu0 0.0
    %6039 = vmatprep.subr.mxu0 0.0
    %6040 = vmatpush1.msra.mxu0 0.0
    %6041 = vmatprep.subr.mxu0 0.0
    %6042 = vmatpush1.msra.mxu0 0.0
    %6043 = vmatprep.subr.mxu0 0.0
    %6044 = vmatpush1.msra.mxu0 0.0
    %6045 = vmatprep.subr.mxu0 0.0
    %6046 = vmatpush1.msra.mxu0 0.0
    %6047 = vmatprep.subr.mxu0 0.0
    %6048 = vmatpush1.msra.mxu0 0.0
    %6049 = vmatprep.subr.mxu0 0.0
    %6050 = vmatpush1.msra.mxu0 0.0
    %6051 = vmatprep.subr.mxu0 0.0
    %6052 = vmatpush1.msra.mxu0 0.0
    %6053 = vmatprep.subr.mxu0 0.0
    %6054 = vmatpush1.msra.mxu0 0.0
    %6055 = vmatprep.subr.mxu0 0.0
    %6056 = vmatpush1.msra.mxu0 0.0
    %6057 = vmatprep.subr.mxu0 0.0
    %6058 = vmatpush1.msra.mxu0 0.0
    %6059 = vmatprep.subr.mxu0 0.0
    %6060 = vmatpush1.msra.mxu0 0.0
    %6061 = vmatprep.subr.mxu0 0.0
    %6062 = vmatpush1.msra.mxu0 0.0
    %6063 = vmatprep.subr.mxu0 0.0
    %6064 = vmatpush1.msra.mxu0 0.0
    %6065 = vmatprep.subr.mxu0 0.0
    %6066 = vmatpush1.msra.mxu0 0.0
    %6067 = vmatprep.subr.mxu0 0.0
    %6068 = vmatpush1.msra.mxu0 0.0
    %6069 = vmatprep.subr.mxu0 0.0
    %6070 = vmatpush1.msra.mxu0 0.0
    %6071 = vmatprep.subr.mxu0 0.0
    %6072 = vmatpush1.msra.mxu0 0.0
    %6073 = vmatprep.subr.mxu0 0.0
    %6074 = vmatpush1.msra.mxu0 0.0
    %6075 = vmatprep.mubr.f32.mxu0 0.0
    %6076 = vmatmul.mubr.f32.gmra.mrb[0].mxu0 %v6009
    %v6077 = vpop.f32.mrb[0].mxu0
    %v6078 = vadd.f32 0.0, %v6077
    %v6079 = vpop.f32.mrb[0].mxu0
    %6080 = vdwg.mxu0
    %v6082 = vrot.slane %v6078, 5
    %v6083 = vrot.slane %v6078, 6
    %v6084 = vrot.slane %v6078, 7
    %v6085 = vrot.slane %v6078, 1
    %v6086 = vrot.slane %v6078, 2
    %v6087 = vrot.slane %v6078, 3
    %v6088 = vrot.slane %v6078, 4
    %v6097 = vadd.f32 %v237, %v6082
    %v6098 = vadd.f32 %v247, %v6083
    %v6099 = vadd.f32 %v257, %v6084
    %v6100 = vadd.f32 %v267, %v6078
    %v6101 = vadd.f32 %v277, %v6085
    %v6102 = vadd.f32 %v287, %v6086
    %v6103 = vadd.f32 %v297, %v6087
    %v6104 = vadd.f32 %v307, %v6088
    %v6105 = vxor.u32 %v6097, 2147483648
    %v6106 = vxor.u32 %v6098, 2147483648
    %v6107 = vxor.u32 %v6099, 2147483648
    %v6108 = vxor.u32 %v6100, 2147483648
    %v6109 = vxor.u32 %v6101, 2147483648
    %v6110 = vxor.u32 %v6102, 2147483648
    %v6111 = vxor.u32 %v6103, 2147483648
    %v6112 = vxor.u32 %v6104, 2147483648
    %v6113 = vmul.f32 %v6105, 1.442695
    %v6114 = vpow.pop %v6113
    %v6115 = vmul.f32 %v6106, 1.442695
    %v6116 = vpow.pop %v6115
    %v6117 = vmul.f32 %v6107, 1.442695
    %v6118 = vpow.pop %v6117
    %v6119 = vmul.f32 %v6108, 1.442695
    %v6120 = vpow.pop %v6119
    %v6121 = vmul.f32 %v6109, 1.442695
    %v6122 = vpow.pop %v6121
    %v6123 = vmul.f32 %v6110, 1.442695
    %v6124 = vpow.pop %v6123
    %v6125 = vmul.f32 %v6111, 1.442695
    %v6126 = vpow.pop %v6125
    %v6127 = vmul.f32 %v6112, 1.442695
    %v6128 = vpow.pop %v6127
    %v6129 = vadd.f32 %v6114, 1.0
    %v6130 = vadd.f32 %v6116, 1.0
    %v6131 = vadd.f32 %v6118, 1.0
    %v6132 = vadd.f32 %v6120, 1.0
    %v6133 = vadd.f32 %v6122, 1.0
    %v6134 = vadd.f32 %v6124, 1.0
    %v6135 = vadd.f32 %v6126, 1.0
    %v6136 = vadd.f32 %v6128, 1.0
    %v6137 = vrcp.pop %v6129
    %v6138 = vmul.f32 1.0, %v6137
    %v6139 = vrcp.pop %v6130
    %v6140 = vmul.f32 1.0, %v6139
    %v6141 = vrcp.pop %v6131
    %v6142 = vmul.f32 1.0, %v6141
    %v6143 = vrcp.pop %v6132
    %v6144 = vmul.f32 1.0, %v6143
    %v6145 = vrcp.pop %v6133
    %v6146 = vmul.f32 1.0, %v6145
    %v6147 = vrcp.pop %v6134
    %v6148 = vmul.f32 1.0, %v6147
    %v6149 = vrcp.pop %v6135
    %v6150 = vmul.f32 1.0, %v6149
    %v6151 = vrcp.pop %v6136
    %v6152 = vmul.f32 1.0, %v6151
    %6153 = vmatprep.subr.mxu0 0.0
    %6154 = vmatpush1.msra.mxu0 %v73
    %6155 = vmatprep.subr.mxu0 0.0
    %6156 = vmatpush1.msra.mxu0 %v74
    %6157 = vmatprep.subr.mxu0 0.0
    %6158 = vmatpush1.msra.mxu0 %v75
    %6159 = vmatprep.subr.mxu0 0.0
    %6160 = vmatpush1.msra.mxu0 %v76
    %6161 = vmatprep.subr.mxu0 0.0
    %6162 = vmatpush1.msra.mxu0 0.0
    %6163 = vmatprep.subr.mxu0 0.0
    %6164 = vmatpush1.msra.mxu0 0.0
    %6165 = vmatprep.subr.mxu0 0.0
    %6166 = vmatpush1.msra.mxu0 0.0
    %6167 = vmatprep.subr.mxu0 0.0
    %6168 = vmatpush1.msra.mxu0 0.0
    %6169 = vmatprep.subr.mxu0 0.0
    %6170 = vmatpush1.msra.mxu0 0.0
    %6171 = vmatprep.subr.mxu0 0.0
    %6172 = vmatpush1.msra.mxu0 0.0
    %6173 = vmatprep.subr.mxu0 0.0
    %6174 = vmatpush1.msra.mxu0 0.0
    %6175 = vmatprep.subr.mxu0 0.0
    %6176 = vmatpush1.msra.mxu0 0.0
    %6177 = vmatprep.subr.mxu0 0.0
    %6178 = vmatpush1.msra.mxu0 0.0
    %6179 = vmatprep.subr.mxu0 0.0
    %6180 = vmatpush1.msra.mxu0 0.0
    %6181 = vmatprep.subr.mxu0 0.0
    %6182 = vmatpush1.msra.mxu0 0.0
    %6183 = vmatprep.subr.mxu0 0.0
    %6184 = vmatpush1.msra.mxu0 0.0
    %6185 = vmatprep.subr.mxu0 0.0
    %6186 = vmatpush1.msra.mxu0 0.0
    %6187 = vmatprep.subr.mxu0 0.0
    %6188 = vmatpush1.msra.mxu0 0.0
    %6189 = vmatprep.subr.mxu0 0.0
    %6190 = vmatpush1.msra.mxu0 0.0
    %6191 = vmatprep.subr.mxu0 0.0
    %6192 = vmatpush1.msra.mxu0 0.0
    %6193 = vmatprep.subr.mxu0 0.0
    %6194 = vmatpush1.msra.mxu0 0.0
    %6195 = vmatprep.subr.mxu0 0.0
    %6196 = vmatpush1.msra.mxu0 0.0
    %6197 = vmatprep.subr.mxu0 0.0
    %6198 = vmatpush1.msra.mxu0 0.0
    %6199 = vmatprep.subr.mxu0 0.0
    %6200 = vmatpush1.msra.mxu0 0.0
    %6201 = vmatprep.subr.mxu0 0.0
    %6202 = vmatpush1.msra.mxu0 0.0
    %6203 = vmatprep.subr.mxu0 0.0
    %6204 = vmatpush1.msra.mxu0 0.0
    %6205 = vmatprep.subr.mxu0 0.0
    %6206 = vmatpush1.msra.mxu0 0.0
    %6207 = vmatprep.subr.mxu0 0.0
    %6208 = vmatpush1.msra.mxu0 0.0
    %6209 = vmatprep.subr.mxu0 0.0
    %6210 = vmatpush1.msra.mxu0 0.0
    %6211 = vmatprep.subr.mxu0 0.0
    %6212 = vmatpush1.msra.mxu0 0.0
    %6213 = vmatprep.subr.mxu0 0.0
    %6214 = vmatpush1.msra.mxu0 0.0
    %6215 = vmatprep.subr.mxu0 0.0
    %6216 = vmatpush1.msra.mxu0 0.0
    %6217 = vmatprep.mubr.f32.mxu0 0.0
    %6218 = vmatmul.mubr.f32.gmra.mrb[0].mxu0 %v6009
    %v6219 = vpop.f32.mrb[0].mxu0
    %v6220 = vadd.f32 0.0, %v6219
    %v6221 = vpop.f32.mrb[0].mxu0
    %6222 = vdwg.mxu0
    %v6224 = vrot.slane %v6220, 5
    %v6225 = vrot.slane %v6220, 6
    %v6226 = vrot.slane %v6220, 7
    %v6227 = vrot.slane %v6220, 1
    %v6228 = vrot.slane %v6220, 2
    %v6229 = vrot.slane %v6220, 3
    %v6230 = vrot.slane %v6220, 4
    %v6239 = vadd.f32 %v395, %v6224
    %v6240 = vadd.f32 %v405, %v6225
    %v6241 = vadd.f32 %v415, %v6226
    %v6242 = vadd.f32 %v425, %v6220
    %v6243 = vadd.f32 %v435, %v6227
    %v6244 = vadd.f32 %v445, %v6228
    %v6245 = vadd.f32 %v455, %v6229
    %v6246 = vadd.f32 %v465, %v6230
    %v6247 = vxor.u32 %v6239, 2147483648
    %v6248 = vxor.u32 %v6240, 2147483648
    %v6249 = vxor.u32 %v6241, 2147483648
    %v6250 = vxor.u32 %v6242, 2147483648
    %v6251 = vxor.u32 %v6243, 2147483648
    %v6252 = vxor.u32 %v6244, 2147483648
    %v6253 = vxor.u32 %v6245, 2147483648
    %v6254 = vxor.u32 %v6246, 2147483648
    %v6255 = vmul.f32 %v6247, 1.442695
    %v6256 = vpow.pop %v6255
    %v6257 = vmul.f32 %v6248, 1.442695
    %v6258 = vpow.pop %v6257
    %v6259 = vmul.f32 %v6249, 1.442695
    %v6260 = vpow.pop %v6259
    %v6261 = vmul.f32 %v6250, 1.442695
    %v6262 = vpow.pop %v6261
    %v6263 = vmul.f32 %v6251, 1.442695
    %v6264 = vpow.pop %v6263
    %v6265 = vmul.f32 %v6252, 1.442695
    %v6266 = vpow.pop %v6265
    %v6267 = vmul.f32 %v6253, 1.442695
    %v6268 = vpow.pop %v6267
    %v6269 = vmul.f32 %v6254, 1.442695
    %v6270 = vpow.pop %v6269
    %v6271 = vadd.f32 %v6256, 1.0
    %v6272 = vadd.f32 %v6258, 1.0
    %v6273 = vadd.f32 %v6260, 1.0
    %v6274 = vadd.f32 %v6262, 1.0
    %v6275 = vadd.f32 %v6264, 1.0
    %v6276 = vadd.f32 %v6266, 1.0
    %v6277 = vadd.f32 %v6268, 1.0
    %v6278 = vadd.f32 %v6270, 1.0
    %v6279 = vrcp.pop %v6271
    %v6280 = vmul.f32 1.0, %v6279
    %v6281 = vrcp.pop %v6272
    %v6282 = vmul.f32 1.0, %v6281
    %v6283 = vrcp.pop %v6273
    %v6284 = vmul.f32 1.0, %v6283
    %v6285 = vrcp.pop %v6274
    %v6286 = vmul.f32 1.0, %v6285
    %v6287 = vrcp.pop %v6275
    %v6288 = vmul.f32 1.0, %v6287
    %v6289 = vrcp.pop %v6276
    %v6290 = vmul.f32 1.0, %v6289
    %v6291 = vrcp.pop %v6277
    %v6292 = vmul.f32 1.0, %v6291
    %v6293 = vrcp.pop %v6278
    %v6294 = vmul.f32 1.0, %v6293
    %6295 = vmatprep.subr.mxu0 0.0
    %6296 = vmatpush1.msra.mxu0 %v78
    %6297 = vmatprep.subr.mxu0 0.0
    %6298 = vmatpush1.msra.mxu0 %v79
    %6299 = vmatprep.subr.mxu0 0.0
    %6300 = vmatpush1.msra.mxu0 %v80
    %6301 = vmatprep.subr.mxu0 0.0
    %6302 = vmatpush1.msra.mxu0 %v81
    %6303 = vmatprep.subr.mxu0 0.0
    %6304 = vmatpush1.msra.mxu0 0.0
    %6305 = vmatprep.subr.mxu0 0.0
    %6306 = vmatpush1.msra.mxu0 0.0
    %6307 = vmatprep.subr.mxu0 0.0
    %6308 = vmatpush1.msra.mxu0 0.0
    %6309 = vmatprep.subr.mxu0 0.0
    %6310 = vmatpush1.msra.mxu0 0.0
    %6311 = vmatprep.subr.mxu0 0.0
    %6312 = vmatpush1.msra.mxu0 0.0
    %6313 = vmatprep.subr.mxu0 0.0
    %6314 = vmatpush1.msra.mxu0 0.0
    %6315 = vmatprep.subr.mxu0 0.0
    %6316 = vmatpush1.msra.mxu0 0.0
    %6317 = vmatprep.subr.mxu0 0.0
    %6318 = vmatpush1.msra.mxu0 0.0
    %6319 = vmatprep.subr.mxu0 0.0
    %6320 = vmatpush1.msra.mxu0 0.0
    %6321 = vmatprep.subr.mxu0 0.0
    %6322 = vmatpush1.msra.mxu0 0.0
    %6323 = vmatprep.subr.mxu0 0.0
    %6324 = vmatpush1.msra.mxu0 0.0
    %6325 = vmatprep.subr.mxu0 0.0
    %6326 = vmatpush1.msra.mxu0 0.0
    %6327 = vmatprep.subr.mxu0 0.0
    %6328 = vmatpush1.msra.mxu0 0.0
    %6329 = vmatprep.subr.mxu0 0.0
    %6330 = vmatpush1.msra.mxu0 0.0
    %6331 = vmatprep.subr.mxu0 0.0
    %6332 = vmatpush1.msra.mxu0 0.0
    %6333 = vmatprep.subr.mxu0 0.0
    %6334 = vmatpush1.msra.mxu0 0.0
    %6335 = vmatprep.subr.mxu0 0.0
    %6336 = vmatpush1.msra.mxu0 0.0
    %6337 = vmatprep.subr.mxu0 0.0
    %6338 = vmatpush1.msra.mxu0 0.0
    %6339 = vmatprep.subr.mxu0 0.0
    %6340 = vmatpush1.msra.mxu0 0.0
    %6341 = vmatprep.subr.mxu0 0.0
    %6342 = vmatpush1.msra.mxu0 0.0
    %6343 = vmatprep.subr.mxu0 0.0
    %6344 = vmatpush1.msra.mxu0 0.0
    %6345 = vmatprep.subr.mxu0 0.0
    %6346 = vmatpush1.msra.mxu0 0.0
    %6347 = vmatprep.subr.mxu0 0.0
    %6348 = vmatpush1.msra.mxu0 0.0
    %6349 = vmatprep.subr.mxu0 0.0
    %6350 = vmatpush1.msra.mxu0 0.0
    %6351 = vmatprep.subr.mxu0 0.0
    %6352 = vmatpush1.msra.mxu0 0.0
    %6353 = vmatprep.subr.mxu0 0.0
    %6354 = vmatpush1.msra.mxu0 0.0
    %6355 = vmatprep.subr.mxu0 0.0
    %6356 = vmatpush1.msra.mxu0 0.0
    %6357 = vmatprep.subr.mxu0 0.0
    %6358 = vmatpush1.msra.mxu0 0.0
    %6359 = vmatprep.mubr.f32.mxu0 0.0
    %6360 = vmatmul.mubr.f32.gmra.mrb[0].mxu0 %v6009
    %v6361 = vpop.f32.mrb[0].mxu0
    %v6362 = vadd.f32 %v87, %v6361
    %v6363 = vpop.f32.mrb[0].mxu0
    %6364 = vdwg.mxu0
    %v6366 = vrot.slane %v6362, 5
    %v6367 = vrot.slane %v6362, 6
    %v6368 = vrot.slane %v6362, 7
    %v6369 = vrot.slane %v6362, 1
    %v6370 = vrot.slane %v6362, 2
    %v6371 = vrot.slane %v6362, 3
    %v6372 = vrot.slane %v6362, 4
    %v6381 = vmul.f32 %v6138, %v6366
    %v6382 = vmul.f32 %v6140, %v6367
    %v6383 = vmul.f32 %v6142, %v6368
    %v6384 = vmul.f32 %v6144, %v6362
    %v6385 = vmul.f32 %v6146, %v6369
    %v6386 = vmul.f32 %v6148, %v6370
    %v6387 = vmul.f32 %v6150, %v6371
    %v6388 = vmul.f32 %v6152, %v6372
    %v6389 = vadd.f32 %v553, %v6381
    %v6390 = vadd.f32 %v563, %v6382
    %v6391 = vadd.f32 %v573, %v6383
    %v6392 = vadd.f32 %v583, %v6384
    %v6393 = vadd.f32 %v593, %v6385
    %v6394 = vadd.f32 %v603, %v6386
    %v6395 = vadd.f32 %v613, %v6387
    %v6396 = vadd.f32 %v623, %v6388
    %v6397 = vtanh.pop %v6389
    %v6398 = vtanh.pop %v6390
    %v6399 = vtanh.pop %v6391
    %v6400 = vtanh.pop %v6392
    %v6401 = vtanh.pop %v6393
    %v6402 = vtanh.pop %v6394
    %v6403 = vtanh.pop %v6395
    %v6404 = vtanh.pop %v6396
    %v6413 = vrot.slane %v6397, 1
    %v6414 = vrot.slane %v6398, 1
    %v6415 = vrot.slane %v6399, 1
    %v6416 = vrot.slane %v6400, 1
    %v6417 = vrot.slane %v6401, 1
    %v6418 = vrot.slane %v6402, 1
    %v6419 = vrot.slane %v6403, 1
    %v6420 = vrot.slane %v6404, 1
    %v6429 = vsub.f32 %v5979, %v6413
    %v6430 = vsub.f32 %v5980, %v6414
    %v6431 = vsub.f32 %v5981, %v6415
    %v6432 = vsub.f32 %v5982, %v6416
    %v6433 = vsub.f32 %v5983, %v6417
    %v6434 = vsub.f32 %v5984, %v6418
    %v6435 = vsub.f32 %v5985, %v6419
    %v6436 = vsub.f32 %v5986, %v6420
    %v6445 = vrot.slane %v6429, 7
    %v6446 = vrot.slane %v6430, 7
    %v6447 = vrot.slane %v6431, 7
    %v6448 = vrot.slane %v6432, 7
    %v6449 = vrot.slane %v6433, 7
    %v6450 = vrot.slane %v6434, 7
    %v6451 = vrot.slane %v6435, 7
    %v6452 = vrot.slane %v6436, 7
    %v6461 = vmul.f32 %v6280, %v6445
    %v6462 = vmul.f32 %v6282, %v6446
    %v6463 = vmul.f32 %v6284, %v6447
    %v6464 = vmul.f32 %v6286, %v6448
    %v6465 = vmul.f32 %v6288, %v6449
    %v6466 = vmul.f32 %v6290, %v6450
    %v6467 = vmul.f32 %v6292, %v6451
    %v6468 = vmul.f32 %v6294, %v6452
    %v6469 = vadd.f32 %v6397, %v6461
    %v6470 = vadd.f32 %v6398, %v6462
    %v6471 = vadd.f32 %v6399, %v6463
    %v6472 = vadd.f32 %v6400, %v6464
    %v6473 = vadd.f32 %v6401, %v6465
    %v6474 = vadd.f32 %v6402, %v6466
    %v6475 = vadd.f32 %v6403, %v6467
    %v6476 = vadd.f32 %v6404, %v6468
    %v6485 = vrot.slane %v6469, 3
    %v6486 = vrot.slane %v6470, 2
    %v6487 = vsel %vm1033, %v6486, %v6485
    %v6488 = vrot.slane %v6471, 1
    %v6489 = vsel %vm1036, %v6488, %v6487
    %v6490 = vsel %vm1039, %v6472, %v6489
    %v6491 = vrot.slane %v6473, 7
    %v6492 = vsel %vm1042, %v6491, %v6490
    %v6493 = vrot.slane %v6474, 6
    %v6494 = vsel %vm1045, %v6493, %v6492
    %v6495 = vrot.slane %v6475, 5
    %v6496 = vsel %vm1048, %v6495, %v6494
    %v6497 = vrot.slane %v6476, 4
    %v6498 = vsel %vm1051, %v6497, %v6496
    %v6499 = vsel %vm116, %v6498, 0
    %6501 = vmatprep.subr.mxu0 0.0
    %6502 = vmatpush1.msra.mxu0 %v68
    %6503 = vmatprep.subr.mxu0 0.0
    %6504 = vmatpush1.msra.mxu0 %v69
    %6505 = vmatprep.subr.mxu0 0.0
    %6506 = vmatpush1.msra.mxu0 %v70
    %6507 = vmatprep.subr.mxu0 0.0
    %6508 = vmatpush1.msra.mxu0 %v71
    %6509 = vmatprep.subr.mxu0 0.0
    %6510 = vmatpush1.msra.mxu0 0.0
    %6511 = vmatprep.subr.mxu0 0.0
    %6512 = vmatpush1.msra.mxu0 0.0
    %6513 = vmatprep.subr.mxu0 0.0
    %6514 = vmatpush1.msra.mxu0 0.0
    %6515 = vmatprep.subr.mxu0 0.0
    %6516 = vmatpush1.msra.mxu0 0.0
    %6517 = vmatprep.subr.mxu0 0.0
    %6518 = vmatpush1.msra.mxu0 0.0
    %6519 = vmatprep.subr.mxu0 0.0
    %6520 = vmatpush1.msra.mxu0 0.0
    %6521 = vmatprep.subr.mxu0 0.0
    %6522 = vmatpush1.msra.mxu0 0.0
    %6523 = vmatprep.subr.mxu0 0.0
    %6524 = vmatpush1.msra.mxu0 0.0
    %6525 = vmatprep.subr.mxu0 0.0
    %6526 = vmatpush1.msra.mxu0 0.0
    %6527 = vmatprep.subr.mxu0 0.0
    %6528 = vmatpush1.msra.mxu0 0.0
    %6529 = vmatprep.subr.mxu0 0.0
    %6530 = vmatpush1.msra.mxu0 0.0
    %6531 = vmatprep.subr.mxu0 0.0
    %6532 = vmatpush1.msra.mxu0 0.0
    %6533 = vmatprep.subr.mxu0 0.0
    %6534 = vmatpush1.msra.mxu0 0.0
    %6535 = vmatprep.subr.mxu0 0.0
    %6536 = vmatpush1.msra.mxu0 0.0
    %6537 = vmatprep.subr.mxu0 0.0
    %6538 = vmatpush1.msra.mxu0 0.0
    %6539 = vmatprep.subr.mxu0 0.0
    %6540 = vmatpush1.msra.mxu0 0.0
    %6541 = vmatprep.subr.mxu0 0.0
    %6542 = vmatpush1.msra.mxu0 0.0
    %6543 = vmatprep.subr.mxu0 0.0
    %6544 = vmatpush1.msra.mxu0 0.0
    %6545 = vmatprep.subr.mxu0 0.0
    %6546 = vmatpush1.msra.mxu0 0.0
    %6547 = vmatprep.subr.mxu0 0.0
    %6548 = vmatpush1.msra.mxu0 0.0
    %6549 = vmatprep.subr.mxu0 0.0
    %6550 = vmatpush1.msra.mxu0 0.0
    %6551 = vmatprep.subr.mxu0 0.0
    %6552 = vmatpush1.msra.mxu0 0.0
    %6553 = vmatprep.subr.mxu0 0.0
    %6554 = vmatpush1.msra.mxu0 0.0
    %6555 = vmatprep.subr.mxu0 0.0
    %6556 = vmatpush1.msra.mxu0 0.0
    %6557 = vmatprep.subr.mxu0 0.0
    %6558 = vmatpush1.msra.mxu0 0.0
    %6559 = vmatprep.subr.mxu0 0.0
    %6560 = vmatpush1.msra.mxu0 0.0
    %6561 = vmatprep.subr.mxu0 0.0
    %6562 = vmatpush1.msra.mxu0 0.0
    %6563 = vmatprep.subr.mxu0 0.0
    %6564 = vmatpush1.msra.mxu0 0.0
    %6565 = vmatprep.mubr.f32.mxu0 0.0
    %6566 = vmatmul.mubr.f32.gmra.mrb[0].mxu0 %v6499
    %v6567 = vpop.f32.mrb[0].mxu0
    %v6568 = vadd.f32 0.0, %v6567
    %v6569 = vpop.f32.mrb[0].mxu0
    %6570 = vdwg.mxu0
    %v6572 = vrot.slane %v6568, 4
    %v6573 = vrot.slane %v6568, 5
    %v6574 = vrot.slane %v6568, 6
    %v6575 = vrot.slane %v6568, 7
    %v6576 = vrot.slane %v6568, 1
    %v6577 = vrot.slane %v6568, 2
    %v6578 = vrot.slane %v6568, 3
    %v6587 = vadd.f32 %v237, %v6572
    %v6588 = vadd.f32 %v247, %v6573
    %v6589 = vadd.f32 %v257, %v6574
    %v6590 = vadd.f32 %v267, %v6575
    %v6591 = vadd.f32 %v277, %v6568
    %v6592 = vadd.f32 %v287, %v6576
    %v6593 = vadd.f32 %v297, %v6577
    %v6594 = vadd.f32 %v307, %v6578
    %v6595 = vxor.u32 %v6587, 2147483648
    %v6596 = vxor.u32 %v6588, 2147483648
    %v6597 = vxor.u32 %v6589, 2147483648
    %v6598 = vxor.u32 %v6590, 2147483648
    %v6599 = vxor.u32 %v6591, 2147483648
    %v6600 = vxor.u32 %v6592, 2147483648
    %v6601 = vxor.u32 %v6593, 2147483648
    %v6602 = vxor.u32 %v6594, 2147483648
    %v6603 = vmul.f32 %v6595, 1.442695
    %v6604 = vpow.pop %v6603
    %v6605 = vmul.f32 %v6596, 1.442695
    %v6606 = vpow.pop %v6605
    %v6607 = vmul.f32 %v6597, 1.442695
    %v6608 = vpow.pop %v6607
    %v6609 = vmul.f32 %v6598, 1.442695
    %v6610 = vpow.pop %v6609
    %v6611 = vmul.f32 %v6599, 1.442695
    %v6612 = vpow.pop %v6611
    %v6613 = vmul.f32 %v6600, 1.442695
    %v6614 = vpow.pop %v6613
    %v6615 = vmul.f32 %v6601, 1.442695
    %v6616 = vpow.pop %v6615
    %v6617 = vmul.f32 %v6602, 1.442695
    %v6618 = vpow.pop %v6617
    %v6619 = vadd.f32 %v6604, 1.0
    %v6620 = vadd.f32 %v6606, 1.0
    %v6621 = vadd.f32 %v6608, 1.0
    %v6622 = vadd.f32 %v6610, 1.0
    %v6623 = vadd.f32 %v6612, 1.0
    %v6624 = vadd.f32 %v6614, 1.0
    %v6625 = vadd.f32 %v6616, 1.0
    %v6626 = vadd.f32 %v6618, 1.0
    %v6627 = vrcp.pop %v6619
    %v6628 = vmul.f32 1.0, %v6627
    %v6629 = vrcp.pop %v6620
    %v6630 = vmul.f32 1.0, %v6629
    %v6631 = vrcp.pop %v6621
    %v6632 = vmul.f32 1.0, %v6631
    %v6633 = vrcp.pop %v6622
    %v6634 = vmul.f32 1.0, %v6633
    %v6635 = vrcp.pop %v6623
    %v6636 = vmul.f32 1.0, %v6635
    %v6637 = vrcp.pop %v6624
    %v6638 = vmul.f32 1.0, %v6637
    %v6639 = vrcp.pop %v6625
    %v6640 = vmul.f32 1.0, %v6639
    %v6641 = vrcp.pop %v6626
    %v6642 = vmul.f32 1.0, %v6641
    %6643 = vmatprep.subr.mxu0 0.0
    %6644 = vmatpush1.msra.mxu0 %v73
    %6645 = vmatprep.subr.mxu0 0.0
    %6646 = vmatpush1.msra.mxu0 %v74
    %6647 = vmatprep.subr.mxu0 0.0
    %6648 = vmatpush1.msra.mxu0 %v75
    %6649 = vmatprep.subr.mxu0 0.0
    %6650 = vmatpush1.msra.mxu0 %v76
    %6651 = vmatprep.subr.mxu0 0.0
    %6652 = vmatpush1.msra.mxu0 0.0
    %6653 = vmatprep.subr.mxu0 0.0
    %6654 = vmatpush1.msra.mxu0 0.0
    %6655 = vmatprep.subr.mxu0 0.0
    %6656 = vmatpush1.msra.mxu0 0.0
    %6657 = vmatprep.subr.mxu0 0.0
    %6658 = vmatpush1.msra.mxu0 0.0
    %6659 = vmatprep.subr.mxu0 0.0
    %6660 = vmatpush1.msra.mxu0 0.0
    %6661 = vmatprep.subr.mxu0 0.0
    %6662 = vmatpush1.msra.mxu0 0.0
    %6663 = vmatprep.subr.mxu0 0.0
    %6664 = vmatpush1.msra.mxu0 0.0
    %6665 = vmatprep.subr.mxu0 0.0
    %6666 = vmatpush1.msra.mxu0 0.0
    %6667 = vmatprep.subr.mxu0 0.0
    %6668 = vmatpush1.msra.mxu0 0.0
    %6669 = vmatprep.subr.mxu0 0.0
    %6670 = vmatpush1.msra.mxu0 0.0
    %6671 = vmatprep.subr.mxu0 0.0
    %6672 = vmatpush1.msra.mxu0 0.0
    %6673 = vmatprep.subr.mxu0 0.0
    %6674 = vmatpush1.msra.mxu0 0.0
    %6675 = vmatprep.subr.mxu0 0.0
    %6676 = vmatpush1.msra.mxu0 0.0
    %6677 = vmatprep.subr.mxu0 0.0
    %6678 = vmatpush1.msra.mxu0 0.0
    %6679 = vmatprep.subr.mxu0 0.0
    %6680 = vmatpush1.msra.mxu0 0.0
    %6681 = vmatprep.subr.mxu0 0.0
    %6682 = vmatpush1.msra.mxu0 0.0
    %6683 = vmatprep.subr.mxu0 0.0
    %6684 = vmatpush1.msra.mxu0 0.0
    %6685 = vmatprep.subr.mxu0 0.0
    %6686 = vmatpush1.msra.mxu0 0.0
    %6687 = vmatprep.subr.mxu0 0.0
    %6688 = vmatpush1.msra.mxu0 0.0
    %6689 = vmatprep.subr.mxu0 0.0
    %6690 = vmatpush1.msra.mxu0 0.0
    %6691 = vmatprep.subr.mxu0 0.0
    %6692 = vmatpush1.msra.mxu0 0.0
    %6693 = vmatprep.subr.mxu0 0.0
    %6694 = vmatpush1.msra.mxu0 0.0
    %6695 = vmatprep.subr.mxu0 0.0
    %6696 = vmatpush1.msra.mxu0 0.0
    %6697 = vmatprep.subr.mxu0 0.0
    %6698 = vmatpush1.msra.mxu0 0.0
    %6699 = vmatprep.subr.mxu0 0.0
    %6700 = vmatpush1.msra.mxu0 0.0
    %6701 = vmatprep.subr.mxu0 0.0
    %6702 = vmatpush1.msra.mxu0 0.0
    %6703 = vmatprep.subr.mxu0 0.0
    %6704 = vmatpush1.msra.mxu0 0.0
    %6705 = vmatprep.subr.mxu0 0.0
    %6706 = vmatpush1.msra.mxu0 0.0
    %6707 = vmatprep.mubr.f32.mxu0 0.0
    %6708 = vmatmul.mubr.f32.gmra.mrb[0].mxu0 %v6499
    %v6709 = vpop.f32.mrb[0].mxu0
    %v6710 = vadd.f32 0.0, %v6709
    %v6711 = vpop.f32.mrb[0].mxu0
    %6712 = vdwg.mxu0
    %v6714 = vrot.slane %v6710, 4
    %v6715 = vrot.slane %v6710, 5
    %v6716 = vrot.slane %v6710, 6
    %v6717 = vrot.slane %v6710, 7
    %v6718 = vrot.slane %v6710, 1
    %v6719 = vrot.slane %v6710, 2
    %v6720 = vrot.slane %v6710, 3
    %v6729 = vadd.f32 %v395, %v6714
    %v6730 = vadd.f32 %v405, %v6715
    %v6731 = vadd.f32 %v415, %v6716
    %v6732 = vadd.f32 %v425, %v6717
    %v6733 = vadd.f32 %v435, %v6710
    %v6734 = vadd.f32 %v445, %v6718
    %v6735 = vadd.f32 %v455, %v6719
    %v6736 = vadd.f32 %v465, %v6720
    %v6737 = vxor.u32 %v6729, 2147483648
    %v6738 = vxor.u32 %v6730, 2147483648
    %v6739 = vxor.u32 %v6731, 2147483648
    %v6740 = vxor.u32 %v6732, 2147483648
    %v6741 = vxor.u32 %v6733, 2147483648
    %v6742 = vxor.u32 %v6734, 2147483648
    %v6743 = vxor.u32 %v6735, 2147483648
    %v6744 = vxor.u32 %v6736, 2147483648
    %v6745 = vmul.f32 %v6737, 1.442695
    %v6746 = vpow.pop %v6745
    %v6747 = vmul.f32 %v6738, 1.442695
    %v6748 = vpow.pop %v6747
    %v6749 = vmul.f32 %v6739, 1.442695
    %v6750 = vpow.pop %v6749
    %v6751 = vmul.f32 %v6740, 1.442695
    %v6752 = vpow.pop %v6751
    %v6753 = vmul.f32 %v6741, 1.442695
    %v6754 = vpow.pop %v6753
    %v6755 = vmul.f32 %v6742, 1.442695
    %v6756 = vpow.pop %v6755
    %v6757 = vmul.f32 %v6743, 1.442695
    %v6758 = vpow.pop %v6757
    %v6759 = vmul.f32 %v6744, 1.442695
    %v6760 = vpow.pop %v6759
    %v6761 = vadd.f32 %v6746, 1.0
    %v6762 = vadd.f32 %v6748, 1.0
    %v6763 = vadd.f32 %v6750, 1.0
    %v6764 = vadd.f32 %v6752, 1.0
    %v6765 = vadd.f32 %v6754, 1.0
    %v6766 = vadd.f32 %v6756, 1.0
    %v6767 = vadd.f32 %v6758, 1.0
    %v6768 = vadd.f32 %v6760, 1.0
    %v6769 = vrcp.pop %v6761
    %v6770 = vmul.f32 1.0, %v6769
    %v6771 = vrcp.pop %v6762
    %v6772 = vmul.f32 1.0, %v6771
    %v6773 = vrcp.pop %v6763
    %v6774 = vmul.f32 1.0, %v6773
    %v6775 = vrcp.pop %v6764
    %v6776 = vmul.f32 1.0, %v6775
    %v6777 = vrcp.pop %v6765
    %v6778 = vmul.f32 1.0, %v6777
    %v6779 = vrcp.pop %v6766
    %v6780 = vmul.f32 1.0, %v6779
    %v6781 = vrcp.pop %v6767
    %v6782 = vmul.f32 1.0, %v6781
    %v6783 = vrcp.pop %v6768
    %v6784 = vmul.f32 1.0, %v6783
    %6785 = vmatprep.subr.mxu0 0.0
    %6786 = vmatpush1.msra.mxu0 %v78
    %6787 = vmatprep.subr.mxu0 0.0
    %6788 = vmatpush1.msra.mxu0 %v79
    %6789 = vmatprep.subr.mxu0 0.0
    %6790 = vmatpush1.msra.mxu0 %v80
    %6791 = vmatprep.subr.mxu0 0.0
    %6792 = vmatpush1.msra.mxu0 %v81
    %6793 = vmatprep.subr.mxu0 0.0
    %6794 = vmatpush1.msra.mxu0 0.0
    %6795 = vmatprep.subr.mxu0 0.0
    %6796 = vmatpush1.msra.mxu0 0.0
    %6797 = vmatprep.subr.mxu0 0.0
    %6798 = vmatpush1.msra.mxu0 0.0
    %6799 = vmatprep.subr.mxu0 0.0
    %6800 = vmatpush1.msra.mxu0 0.0
    %6801 = vmatprep.subr.mxu0 0.0
    %6802 = vmatpush1.msra.mxu0 0.0
    %6803 = vmatprep.subr.mxu0 0.0
    %6804 = vmatpush1.msra.mxu0 0.0
    %6805 = vmatprep.subr.mxu0 0.0
    %6806 = vmatpush1.msra.mxu0 0.0
    %6807 = vmatprep.subr.mxu0 0.0
    %6808 = vmatpush1.msra.mxu0 0.0
    %6809 = vmatprep.subr.mxu0 0.0
    %6810 = vmatpush1.msra.mxu0 0.0
    %6811 = vmatprep.subr.mxu0 0.0
    %6812 = vmatpush1.msra.mxu0 0.0
    %6813 = vmatprep.subr.mxu0 0.0
    %6814 = vmatpush1.msra.mxu0 0.0
    %6815 = vmatprep.subr.mxu0 0.0
    %6816 = vmatpush1.msra.mxu0 0.0
    %6817 = vmatprep.subr.mxu0 0.0
    %6818 = vmatpush1.msra.mxu0 0.0
    %6819 = vmatprep.subr.mxu0 0.0
    %6820 = vmatpush1.msra.mxu0 0.0
    %6821 = vmatprep.subr.mxu0 0.0
    %6822 = vmatpush1.msra.mxu0 0.0
    %6823 = vmatprep.subr.mxu0 0.0
    %6824 = vmatpush1.msra.mxu0 0.0
    %6825 = vmatprep.subr.mxu0 0.0
    %6826 = vmatpush1.msra.mxu0 0.0
    %6827 = vmatprep.subr.mxu0 0.0
    %6828 = vmatpush1.msra.mxu0 0.0
    %6829 = vmatprep.subr.mxu0 0.0
    %6830 = vmatpush1.msra.mxu0 0.0
    %6831 = vmatprep.subr.mxu0 0.0
    %6832 = vmatpush1.msra.mxu0 0.0
    %6833 = vmatprep.subr.mxu0 0.0
    %6834 = vmatpush1.msra.mxu0 0.0
    %6835 = vmatprep.subr.mxu0 0.0
    %6836 = vmatpush1.msra.mxu0 0.0
    %6837 = vmatprep.subr.mxu0 0.0
    %6838 = vmatpush1.msra.mxu0 0.0
    %6839 = vmatprep.subr.mxu0 0.0
    %6840 = vmatpush1.msra.mxu0 0.0
    %6841 = vmatprep.subr.mxu0 0.0
    %6842 = vmatpush1.msra.mxu0 0.0
    %6843 = vmatprep.subr.mxu0 0.0
    %6844 = vmatpush1.msra.mxu0 0.0
    %6845 = vmatprep.subr.mxu0 0.0
    %6846 = vmatpush1.msra.mxu0 0.0
    %6847 = vmatprep.subr.mxu0 0.0
    %6848 = vmatpush1.msra.mxu0 0.0
    %6849 = vmatprep.mubr.f32.mxu0 0.0
    %6850 = vmatmul.mubr.f32.gmra.mrb[0].mxu0 %v6499
    %v6851 = vpop.f32.mrb[0].mxu0
    %v6852 = vadd.f32 %v87, %v6851
    %v6853 = vpop.f32.mrb[0].mxu0
    %6854 = vdwg.mxu0
    %v6856 = vrot.slane %v6852, 4
    %v6857 = vrot.slane %v6852, 5
    %v6858 = vrot.slane %v6852, 6
    %v6859 = vrot.slane %v6852, 7
    %v6860 = vrot.slane %v6852, 1
    %v6861 = vrot.slane %v6852, 2
    %v6862 = vrot.slane %v6852, 3
    %v6871 = vmul.f32 %v6628, %v6856
    %v6872 = vmul.f32 %v6630, %v6857
    %v6873 = vmul.f32 %v6632, %v6858
    %v6874 = vmul.f32 %v6634, %v6859
    %v6875 = vmul.f32 %v6636, %v6852
    %v6876 = vmul.f32 %v6638, %v6860
    %v6877 = vmul.f32 %v6640, %v6861
    %v6878 = vmul.f32 %v6642, %v6862
    %v6879 = vadd.f32 %v553, %v6871
    %v6880 = vadd.f32 %v563, %v6872
    %v6881 = vadd.f32 %v573, %v6873
    %v6882 = vadd.f32 %v583, %v6874
    %v6883 = vadd.f32 %v593, %v6875
    %v6884 = vadd.f32 %v603, %v6876
    %v6885 = vadd.f32 %v613, %v6877
    %v6886 = vadd.f32 %v623, %v6878
    %v6887 = vtanh.pop %v6879
    %v6888 = vtanh.pop %v6880
    %v6889 = vtanh.pop %v6881
    %v6890 = vtanh.pop %v6882
    %v6891 = vtanh.pop %v6883
    %v6892 = vtanh.pop %v6884
    %v6893 = vtanh.pop %v6885
    %v6894 = vtanh.pop %v6886
    %v6903 = vrot.slane %v6887, 1
    %v6904 = vrot.slane %v6888, 1
    %v6905 = vrot.slane %v6889, 1
    %v6906 = vrot.slane %v6890, 1
    %v6907 = vrot.slane %v6891, 1
    %v6908 = vrot.slane %v6892, 1
    %v6909 = vrot.slane %v6893, 1
    %v6910 = vrot.slane %v6894, 1
    %v6919 = vsub.f32 %v6469, %v6903
    %v6920 = vsub.f32 %v6470, %v6904
    %v6921 = vsub.f32 %v6471, %v6905
    %v6922 = vsub.f32 %v6472, %v6906
    %v6923 = vsub.f32 %v6473, %v6907
    %v6924 = vsub.f32 %v6474, %v6908
    %v6925 = vsub.f32 %v6475, %v6909
    %v6926 = vsub.f32 %v6476, %v6910
    %v6935 = vrot.slane %v6919, 7
    %v6936 = vrot.slane %v6920, 7
    %v6937 = vrot.slane %v6921, 7
    %v6938 = vrot.slane %v6922, 7
    %v6939 = vrot.slane %v6923, 7
    %v6940 = vrot.slane %v6924, 7
    %v6941 = vrot.slane %v6925, 7
    %v6942 = vrot.slane %v6926, 7
    %v6951 = vmul.f32 %v6770, %v6935
    %v6952 = vmul.f32 %v6772, %v6936
    %v6953 = vmul.f32 %v6774, %v6937
    %v6954 = vmul.f32 %v6776, %v6938
    %v6955 = vmul.f32 %v6778, %v6939
    %v6956 = vmul.f32 %v6780, %v6940
    %v6957 = vmul.f32 %v6782, %v6941
    %v6958 = vmul.f32 %v6784, %v6942
    %v6959 = vadd.f32 %v6887, %v6951
    %v6960 = vadd.f32 %v6888, %v6952
    %v6961 = vadd.f32 %v6889, %v6953
    %v6962 = vadd.f32 %v6890, %v6954
    %v6963 = vadd.f32 %v6891, %v6955
    %v6964 = vadd.f32 %v6892, %v6956
    %v6965 = vadd.f32 %v6893, %v6957
    %v6966 = vadd.f32 %v6894, %v6958
    %v6975 = vrot.slane %v6959, 4
    %v6976 = vrot.slane %v6960, 3
    %v6977 = vsel %vm1033, %v6976, %v6975
    %v6978 = vrot.slane %v6961, 2
    %v6979 = vsel %vm1036, %v6978, %v6977
    %v6980 = vrot.slane %v6962, 1
    %v6981 = vsel %vm1039, %v6980, %v6979
    %v6982 = vsel %vm1042, %v6963, %v6981
    %v6983 = vrot.slane %v6964, 7
    %v6984 = vsel %vm1045, %v6983, %v6982
    %v6985 = vrot.slane %v6965, 6
    %v6986 = vsel %vm1048, %v6985, %v6984
    %v6987 = vrot.slane %v6966, 5
    %v6988 = vsel %vm1051, %v6987, %v6986
    %v6989 = vsel %vm116, %v6988, 0
    %6991 = vmatprep.subr.mxu0 0.0
    %6992 = vmatpush1.msra.mxu0 %v68
    %6993 = vmatprep.subr.mxu0 0.0
    %6994 = vmatpush1.msra.mxu0 %v69
    %6995 = vmatprep.subr.mxu0 0.0
    %6996 = vmatpush1.msra.mxu0 %v70
    %6997 = vmatprep.subr.mxu0 0.0
    %6998 = vmatpush1.msra.mxu0 %v71
    %6999 = vmatprep.subr.mxu0 0.0
    %7000 = vmatpush1.msra.mxu0 0.0
    %7001 = vmatprep.subr.mxu0 0.0
    %7002 = vmatpush1.msra.mxu0 0.0
    %7003 = vmatprep.subr.mxu0 0.0
    %7004 = vmatpush1.msra.mxu0 0.0
    %7005 = vmatprep.subr.mxu0 0.0
    %7006 = vmatpush1.msra.mxu0 0.0
    %7007 = vmatprep.subr.mxu0 0.0
    %7008 = vmatpush1.msra.mxu0 0.0
    %7009 = vmatprep.subr.mxu0 0.0
    %7010 = vmatpush1.msra.mxu0 0.0
    %7011 = vmatprep.subr.mxu0 0.0
    %7012 = vmatpush1.msra.mxu0 0.0
    %7013 = vmatprep.subr.mxu0 0.0
    %7014 = vmatpush1.msra.mxu0 0.0
    %7015 = vmatprep.subr.mxu0 0.0
    %7016 = vmatpush1.msra.mxu0 0.0
    %7017 = vmatprep.subr.mxu0 0.0
    %7018 = vmatpush1.msra.mxu0 0.0
    %7019 = vmatprep.subr.mxu0 0.0
    %7020 = vmatpush1.msra.mxu0 0.0
    %7021 = vmatprep.subr.mxu0 0.0
    %7022 = vmatpush1.msra.mxu0 0.0
    %7023 = vmatprep.subr.mxu0 0.0
    %7024 = vmatpush1.msra.mxu0 0.0
    %7025 = vmatprep.subr.mxu0 0.0
    %7026 = vmatpush1.msra.mxu0 0.0
    %7027 = vmatprep.subr.mxu0 0.0
    %7028 = vmatpush1.msra.mxu0 0.0
    %7029 = vmatprep.subr.mxu0 0.0
    %7030 = vmatpush1.msra.mxu0 0.0
    %7031 = vmatprep.subr.mxu0 0.0
    %7032 = vmatpush1.msra.mxu0 0.0
    %7033 = vmatprep.subr.mxu0 0.0
    %7034 = vmatpush1.msra.mxu0 0.0
    %7035 = vmatprep.subr.mxu0 0.0
    %7036 = vmatpush1.msra.mxu0 0.0
    %7037 = vmatprep.subr.mxu0 0.0
    %7038 = vmatpush1.msra.mxu0 0.0
    %7039 = vmatprep.subr.mxu0 0.0
    %7040 = vmatpush1.msra.mxu0 0.0
    %7041 = vmatprep.subr.mxu0 0.0
    %7042 = vmatpush1.msra.mxu0 0.0
    %7043 = vmatprep.subr.mxu0 0.0
    %7044 = vmatpush1.msra.mxu0 0.0
    %7045 = vmatprep.subr.mxu0 0.0
    %7046 = vmatpush1.msra.mxu0 0.0
    %7047 = vmatprep.subr.mxu0 0.0
    %7048 = vmatpush1.msra.mxu0 0.0
    %7049 = vmatprep.subr.mxu0 0.0
    %7050 = vmatpush1.msra.mxu0 0.0
    %7051 = vmatprep.subr.mxu0 0.0
    %7052 = vmatpush1.msra.mxu0 0.0
    %7053 = vmatprep.subr.mxu0 0.0
    %7054 = vmatpush1.msra.mxu0 0.0
    %7055 = vmatprep.mubr.f32.mxu0 0.0
    %7056 = vmatmul.mubr.f32.gmra.mrb[0].mxu0 %v6989
    %v7057 = vpop.f32.mrb[0].mxu0
    %v7058 = vadd.f32 0.0, %v7057
    %v7059 = vpop.f32.mrb[0].mxu0
    %7060 = vdwg.mxu0
    %v7062 = vrot.slane %v7058, 3
    %v7063 = vrot.slane %v7058, 4
    %v7064 = vrot.slane %v7058, 5
    %v7065 = vrot.slane %v7058, 6
    %v7066 = vrot.slane %v7058, 7
    %v7067 = vrot.slane %v7058, 1
    %v7068 = vrot.slane %v7058, 2
    %v7077 = vadd.f32 %v237, %v7062
    %v7078 = vadd.f32 %v247, %v7063
    %v7079 = vadd.f32 %v257, %v7064
    %v7080 = vadd.f32 %v267, %v7065
    %v7081 = vadd.f32 %v277, %v7066
    %v7082 = vadd.f32 %v287, %v7058
    %v7083 = vadd.f32 %v297, %v7067
    %v7084 = vadd.f32 %v307, %v7068
    %v7085 = vxor.u32 %v7077, 2147483648
    %v7086 = vxor.u32 %v7078, 2147483648
    %v7087 = vxor.u32 %v7079, 2147483648
    %v7088 = vxor.u32 %v7080, 2147483648
    %v7089 = vxor.u32 %v7081, 2147483648
    %v7090 = vxor.u32 %v7082, 2147483648
    %v7091 = vxor.u32 %v7083, 2147483648
    %v7092 = vxor.u32 %v7084, 2147483648
    %v7093 = vmul.f32 %v7085, 1.442695
    %v7094 = vpow.pop %v7093
    %v7095 = vmul.f32 %v7086, 1.442695
    %v7096 = vpow.pop %v7095
    %v7097 = vmul.f32 %v7087, 1.442695
    %v7098 = vpow.pop %v7097
    %v7099 = vmul.f32 %v7088, 1.442695
    %v7100 = vpow.pop %v7099
    %v7101 = vmul.f32 %v7089, 1.442695
    %v7102 = vpow.pop %v7101
    %v7103 = vmul.f32 %v7090, 1.442695
    %v7104 = vpow.pop %v7103
    %v7105 = vmul.f32 %v7091, 1.442695
    %v7106 = vpow.pop %v7105
    %v7107 = vmul.f32 %v7092, 1.442695
    %v7108 = vpow.pop %v7107
    %v7109 = vadd.f32 %v7094, 1.0
    %v7110 = vadd.f32 %v7096, 1.0
    %v7111 = vadd.f32 %v7098, 1.0
    %v7112 = vadd.f32 %v7100, 1.0
    %v7113 = vadd.f32 %v7102, 1.0
    %v7114 = vadd.f32 %v7104, 1.0
    %v7115 = vadd.f32 %v7106, 1.0
    %v7116 = vadd.f32 %v7108, 1.0
    %v7117 = vrcp.pop %v7109
    %v7118 = vmul.f32 1.0, %v7117
    %v7119 = vrcp.pop %v7110
    %v7120 = vmul.f32 1.0, %v7119
    %v7121 = vrcp.pop %v7111
    %v7122 = vmul.f32 1.0, %v7121
    %v7123 = vrcp.pop %v7112
    %v7124 = vmul.f32 1.0, %v7123
    %v7125 = vrcp.pop %v7113
    %v7126 = vmul.f32 1.0, %v7125
    %v7127 = vrcp.pop %v7114
    %v7128 = vmul.f32 1.0, %v7127
    %v7129 = vrcp.pop %v7115
    %v7130 = vmul.f32 1.0, %v7129
    %v7131 = vrcp.pop %v7116
    %v7132 = vmul.f32 1.0, %v7131
    %7133 = vmatprep.subr.mxu0 0.0
    %7134 = vmatpush1.msra.mxu0 %v73
    %7135 = vmatprep.subr.mxu0 0.0
    %7136 = vmatpush1.msra.mxu0 %v74
    %7137 = vmatprep.subr.mxu0 0.0
    %7138 = vmatpush1.msra.mxu0 %v75
    %7139 = vmatprep.subr.mxu0 0.0
    %7140 = vmatpush1.msra.mxu0 %v76
    %7141 = vmatprep.subr.mxu0 0.0
    %7142 = vmatpush1.msra.mxu0 0.0
    %7143 = vmatprep.subr.mxu0 0.0
    %7144 = vmatpush1.msra.mxu0 0.0
    %7145 = vmatprep.subr.mxu0 0.0
    %7146 = vmatpush1.msra.mxu0 0.0
    %7147 = vmatprep.subr.mxu0 0.0
    %7148 = vmatpush1.msra.mxu0 0.0
    %7149 = vmatprep.subr.mxu0 0.0
    %7150 = vmatpush1.msra.mxu0 0.0
    %7151 = vmatprep.subr.mxu0 0.0
    %7152 = vmatpush1.msra.mxu0 0.0
    %7153 = vmatprep.subr.mxu0 0.0
    %7154 = vmatpush1.msra.mxu0 0.0
    %7155 = vmatprep.subr.mxu0 0.0
    %7156 = vmatpush1.msra.mxu0 0.0
    %7157 = vmatprep.subr.mxu0 0.0
    %7158 = vmatpush1.msra.mxu0 0.0
    %7159 = vmatprep.subr.mxu0 0.0
    %7160 = vmatpush1.msra.mxu0 0.0
    %7161 = vmatprep.subr.mxu0 0.0
    %7162 = vmatpush1.msra.mxu0 0.0
    %7163 = vmatprep.subr.mxu0 0.0
    %7164 = vmatpush1.msra.mxu0 0.0
    %7165 = vmatprep.subr.mxu0 0.0
    %7166 = vmatpush1.msra.mxu0 0.0
    %7167 = vmatprep.subr.mxu0 0.0
    %7168 = vmatpush1.msra.mxu0 0.0
    %7169 = vmatprep.subr.mxu0 0.0
    %7170 = vmatpush1.msra.mxu0 0.0
    %7171 = vmatprep.subr.mxu0 0.0
    %7172 = vmatpush1.msra.mxu0 0.0
    %7173 = vmatprep.subr.mxu0 0.0
    %7174 = vmatpush1.msra.mxu0 0.0
    %7175 = vmatprep.subr.mxu0 0.0
    %7176 = vmatpush1.msra.mxu0 0.0
    %7177 = vmatprep.subr.mxu0 0.0
    %7178 = vmatpush1.msra.mxu0 0.0
    %7179 = vmatprep.subr.mxu0 0.0
    %7180 = vmatpush1.msra.mxu0 0.0
    %7181 = vmatprep.subr.mxu0 0.0
    %7182 = vmatpush1.msra.mxu0 0.0
    %7183 = vmatprep.subr.mxu0 0.0
    %7184 = vmatpush1.msra.mxu0 0.0
    %7185 = vmatprep.subr.mxu0 0.0
    %7186 = vmatpush1.msra.mxu0 0.0
    %7187 = vmatprep.subr.mxu0 0.0
    %7188 = vmatpush1.msra.mxu0 0.0
    %7189 = vmatprep.subr.mxu0 0.0
    %7190 = vmatpush1.msra.mxu0 0.0
    %7191 = vmatprep.subr.mxu0 0.0
    %7192 = vmatpush1.msra.mxu0 0.0
    %7193 = vmatprep.subr.mxu0 0.0
    %7194 = vmatpush1.msra.mxu0 0.0
    %7195 = vmatprep.subr.mxu0 0.0
    %7196 = vmatpush1.msra.mxu0 0.0
    %7197 = vmatprep.mubr.f32.mxu0 0.0
    %7198 = vmatmul.mubr.f32.gmra.mrb[0].mxu0 %v6989
    %v7199 = vpop.f32.mrb[0].mxu0
    %v7200 = vadd.f32 0.0, %v7199
    %v7201 = vpop.f32.mrb[0].mxu0
    %7202 = vdwg.mxu0
    %v7204 = vrot.slane %v7200, 3
    %v7205 = vrot.slane %v7200, 4
    %v7206 = vrot.slane %v7200, 5
    %v7207 = vrot.slane %v7200, 6
    %v7208 = vrot.slane %v7200, 7
    %v7209 = vrot.slane %v7200, 1
    %v7210 = vrot.slane %v7200, 2
    %v7219 = vadd.f32 %v395, %v7204
    %v7220 = vadd.f32 %v405, %v7205
    %v7221 = vadd.f32 %v415, %v7206
    %v7222 = vadd.f32 %v425, %v7207
    %v7223 = vadd.f32 %v435, %v7208
    %v7224 = vadd.f32 %v445, %v7200
    %v7225 = vadd.f32 %v455, %v7209
    %v7226 = vadd.f32 %v465, %v7210
    %v7227 = vxor.u32 %v7219, 2147483648
    %v7228 = vxor.u32 %v7220, 2147483648
    %v7229 = vxor.u32 %v7221, 2147483648
    %v7230 = vxor.u32 %v7222, 2147483648
    %v7231 = vxor.u32 %v7223, 2147483648
    %v7232 = vxor.u32 %v7224, 2147483648
    %v7233 = vxor.u32 %v7225, 2147483648
    %v7234 = vxor.u32 %v7226, 2147483648
    %v7235 = vmul.f32 %v7227, 1.442695
    %v7236 = vpow.pop %v7235
    %v7237 = vmul.f32 %v7228, 1.442695
    %v7238 = vpow.pop %v7237
    %v7239 = vmul.f32 %v7229, 1.442695
    %v7240 = vpow.pop %v7239
    %v7241 = vmul.f32 %v7230, 1.442695
    %v7242 = vpow.pop %v7241
    %v7243 = vmul.f32 %v7231, 1.442695
    %v7244 = vpow.pop %v7243
    %v7245 = vmul.f32 %v7232, 1.442695
    %v7246 = vpow.pop %v7245
    %v7247 = vmul.f32 %v7233, 1.442695
    %v7248 = vpow.pop %v7247
    %v7249 = vmul.f32 %v7234, 1.442695
    %v7250 = vpow.pop %v7249
    %v7251 = vadd.f32 %v7236, 1.0
    %v7252 = vadd.f32 %v7238, 1.0
    %v7253 = vadd.f32 %v7240, 1.0
    %v7254 = vadd.f32 %v7242, 1.0
    %v7255 = vadd.f32 %v7244, 1.0
    %v7256 = vadd.f32 %v7246, 1.0
    %v7257 = vadd.f32 %v7248, 1.0
    %v7258 = vadd.f32 %v7250, 1.0
    %v7259 = vrcp.pop %v7251
    %v7260 = vmul.f32 1.0, %v7259
    %v7261 = vrcp.pop %v7252
    %v7262 = vmul.f32 1.0, %v7261
    %v7263 = vrcp.pop %v7253
    %v7264 = vmul.f32 1.0, %v7263
    %v7265 = vrcp.pop %v7254
    %v7266 = vmul.f32 1.0, %v7265
    %v7267 = vrcp.pop %v7255
    %v7268 = vmul.f32 1.0, %v7267
    %v7269 = vrcp.pop %v7256
    %v7270 = vmul.f32 1.0, %v7269
    %v7271 = vrcp.pop %v7257
    %v7272 = vmul.f32 1.0, %v7271
    %v7273 = vrcp.pop %v7258
    %v7274 = vmul.f32 1.0, %v7273
    %7275 = vmatprep.subr.mxu0 0.0
    %7276 = vmatpush1.msra.mxu0 %v78
    %7277 = vmatprep.subr.mxu0 0.0
    %7278 = vmatpush1.msra.mxu0 %v79
    %7279 = vmatprep.subr.mxu0 0.0
    %7280 = vmatpush1.msra.mxu0 %v80
    %7281 = vmatprep.subr.mxu0 0.0
    %7282 = vmatpush1.msra.mxu0 %v81
    %7283 = vmatprep.subr.mxu0 0.0
    %7284 = vmatpush1.msra.mxu0 0.0
    %7285 = vmatprep.subr.mxu0 0.0
    %7286 = vmatpush1.msra.mxu0 0.0
    %7287 = vmatprep.subr.mxu0 0.0
    %7288 = vmatpush1.msra.mxu0 0.0
    %7289 = vmatprep.subr.mxu0 0.0
    %7290 = vmatpush1.msra.mxu0 0.0
    %7291 = vmatprep.subr.mxu0 0.0
    %7292 = vmatpush1.msra.mxu0 0.0
    %7293 = vmatprep.subr.mxu0 0.0
    %7294 = vmatpush1.msra.mxu0 0.0
    %7295 = vmatprep.subr.mxu0 0.0
    %7296 = vmatpush1.msra.mxu0 0.0
    %7297 = vmatprep.subr.mxu0 0.0
    %7298 = vmatpush1.msra.mxu0 0.0
    %7299 = vmatprep.subr.mxu0 0.0
    %7300 = vmatpush1.msra.mxu0 0.0
    %7301 = vmatprep.subr.mxu0 0.0
    %7302 = vmatpush1.msra.mxu0 0.0
    %7303 = vmatprep.subr.mxu0 0.0
    %7304 = vmatpush1.msra.mxu0 0.0
    %7305 = vmatprep.subr.mxu0 0.0
    %7306 = vmatpush1.msra.mxu0 0.0
    %7307 = vmatprep.subr.mxu0 0.0
    %7308 = vmatpush1.msra.mxu0 0.0
    %7309 = vmatprep.subr.mxu0 0.0
    %7310 = vmatpush1.msra.mxu0 0.0
    %7311 = vmatprep.subr.mxu0 0.0
    %7312 = vmatpush1.msra.mxu0 0.0
    %7313 = vmatprep.subr.mxu0 0.0
    %7314 = vmatpush1.msra.mxu0 0.0
    %7315 = vmatprep.subr.mxu0 0.0
    %7316 = vmatpush1.msra.mxu0 0.0
    %7317 = vmatprep.subr.mxu0 0.0
    %7318 = vmatpush1.msra.mxu0 0.0
    %7319 = vmatprep.subr.mxu0 0.0
    %7320 = vmatpush1.msra.mxu0 0.0
    %7321 = vmatprep.subr.mxu0 0.0
    %7322 = vmatpush1.msra.mxu0 0.0
    %7323 = vmatprep.subr.mxu0 0.0
    %7324 = vmatpush1.msra.mxu0 0.0
    %7325 = vmatprep.subr.mxu0 0.0
    %7326 = vmatpush1.msra.mxu0 0.0
    %7327 = vmatprep.subr.mxu0 0.0
    %7328 = vmatpush1.msra.mxu0 0.0
    %7329 = vmatprep.subr.mxu0 0.0
    %7330 = vmatpush1.msra.mxu0 0.0
    %7331 = vmatprep.subr.mxu0 0.0
    %7332 = vmatpush1.msra.mxu0 0.0
    %7333 = vmatprep.subr.mxu0 0.0
    %7334 = vmatpush1.msra.mxu0 0.0
    %7335 = vmatprep.subr.mxu0 0.0
    %7336 = vmatpush1.msra.mxu0 0.0
    %7337 = vmatprep.subr.mxu0 0.0
    %7338 = vmatpush1.msra.mxu0 0.0
    %7339 = vmatprep.mubr.f32.mxu0 0.0
    %7340 = vmatmul.mubr.f32.gmra.mrb[0].mxu0 %v6989
    %v7341 = vpop.f32.mrb[0].mxu0
    %v7342 = vadd.f32 %v87, %v7341
    %v7343 = vpop.f32.mrb[0].mxu0
    %7344 = vdwg.mxu0
    %v7346 = vrot.slane %v7342, 3
    %v7347 = vrot.slane %v7342, 4
    %v7348 = vrot.slane %v7342, 5
    %v7349 = vrot.slane %v7342, 6
    %v7350 = vrot.slane %v7342, 7
    %v7351 = vrot.slane %v7342, 1
    %v7352 = vrot.slane %v7342, 2
    %v7361 = vmul.f32 %v7118, %v7346
    %v7362 = vmul.f32 %v7120, %v7347
    %v7363 = vmul.f32 %v7122, %v7348
    %v7364 = vmul.f32 %v7124, %v7349
    %v7365 = vmul.f32 %v7126, %v7350
    %v7366 = vmul.f32 %v7128, %v7342
    %v7367 = vmul.f32 %v7130, %v7351
    %v7368 = vmul.f32 %v7132, %v7352
    %v7369 = vadd.f32 %v553, %v7361
    %v7370 = vadd.f32 %v563, %v7362
    %v7371 = vadd.f32 %v573, %v7363
    %v7372 = vadd.f32 %v583, %v7364
    %v7373 = vadd.f32 %v593, %v7365
    %v7374 = vadd.f32 %v603, %v7366
    %v7375 = vadd.f32 %v613, %v7367
    %v7376 = vadd.f32 %v623, %v7368
    %v7377 = vtanh.pop %v7369
    %v7378 = vtanh.pop %v7370
    %v7379 = vtanh.pop %v7371
    %v7380 = vtanh.pop %v7372
    %v7381 = vtanh.pop %v7373
    %v7382 = vtanh.pop %v7374
    %v7383 = vtanh.pop %v7375
    %v7384 = vtanh.pop %v7376
    %v7393 = vrot.slane %v7377, 1
    %v7394 = vrot.slane %v7378, 1
    %v7395 = vrot.slane %v7379, 1
    %v7396 = vrot.slane %v7380, 1
    %v7397 = vrot.slane %v7381, 1
    %v7398 = vrot.slane %v7382, 1
    %v7399 = vrot.slane %v7383, 1
    %v7400 = vrot.slane %v7384, 1
    %v7409 = vsub.f32 %v6959, %v7393
    %v7410 = vsub.f32 %v6960, %v7394
    %v7411 = vsub.f32 %v6961, %v7395
    %v7412 = vsub.f32 %v6962, %v7396
    %v7413 = vsub.f32 %v6963, %v7397
    %v7414 = vsub.f32 %v6964, %v7398
    %v7415 = vsub.f32 %v6965, %v7399
    %v7416 = vsub.f32 %v6966, %v7400
    %v7425 = vrot.slane %v7409, 7
    %v7426 = vrot.slane %v7410, 7
    %v7427 = vrot.slane %v7411, 7
    %v7428 = vrot.slane %v7412, 7
    %v7429 = vrot.slane %v7413, 7
    %v7430 = vrot.slane %v7414, 7
    %v7431 = vrot.slane %v7415, 7
    %v7432 = vrot.slane %v7416, 7
    %v7441 = vmul.f32 %v7260, %v7425
    %v7442 = vmul.f32 %v7262, %v7426
    %v7443 = vmul.f32 %v7264, %v7427
    %v7444 = vmul.f32 %v7266, %v7428
    %v7445 = vmul.f32 %v7268, %v7429
    %v7446 = vmul.f32 %v7270, %v7430
    %v7447 = vmul.f32 %v7272, %v7431
    %v7448 = vmul.f32 %v7274, %v7432
    %v7449 = vadd.f32 %v7377, %v7441
    %v7450 = vadd.f32 %v7378, %v7442
    %v7451 = vadd.f32 %v7379, %v7443
    %v7452 = vadd.f32 %v7380, %v7444
    %v7453 = vadd.f32 %v7381, %v7445
    %v7454 = vadd.f32 %v7382, %v7446
    %v7455 = vadd.f32 %v7383, %v7447
    %v7456 = vadd.f32 %v7384, %v7448
    %v7465 = vrot.slane %v7449, 5
    %v7466 = vrot.slane %v7450, 4
    %v7467 = vsel %vm1033, %v7466, %v7465
    %v7468 = vrot.slane %v7451, 3
    %v7469 = vsel %vm1036, %v7468, %v7467
    %v7470 = vrot.slane %v7452, 2
    %v7471 = vsel %vm1039, %v7470, %v7469
    %v7472 = vrot.slane %v7453, 1
    %v7473 = vsel %vm1042, %v7472, %v7471
    %v7474 = vsel %vm1045, %v7454, %v7473
    %v7475 = vrot.slane %v7455, 7
    %v7476 = vsel %vm1048, %v7475, %v7474
    %v7477 = vrot.slane %v7456, 6
    %v7478 = vsel %vm1051, %v7477, %v7476
    %v7479 = vsel %vm116, %v7478, 0
    %7481 = vmatprep.subr.mxu0 0.0
    %7482 = vmatpush1.msra.mxu0 %v68
    %7483 = vmatprep.subr.mxu0 0.0
    %7484 = vmatpush1.msra.mxu0 %v69
    %7485 = vmatprep.subr.mxu0 0.0
    %7486 = vmatpush1.msra.mxu0 %v70
    %7487 = vmatprep.subr.mxu0 0.0
    %7488 = vmatpush1.msra.mxu0 %v71
    %7489 = vmatprep.subr.mxu0 0.0
    %7490 = vmatpush1.msra.mxu0 0.0
    %7491 = vmatprep.subr.mxu0 0.0
    %7492 = vmatpush1.msra.mxu0 0.0
    %7493 = vmatprep.subr.mxu0 0.0
    %7494 = vmatpush1.msra.mxu0 0.0
    %7495 = vmatprep.subr.mxu0 0.0
    %7496 = vmatpush1.msra.mxu0 0.0
    %7497 = vmatprep.subr.mxu0 0.0
    %7498 = vmatpush1.msra.mxu0 0.0
    %7499 = vmatprep.subr.mxu0 0.0
    %7500 = vmatpush1.msra.mxu0 0.0
    %7501 = vmatprep.subr.mxu0 0.0
    %7502 = vmatpush1.msra.mxu0 0.0
    %7503 = vmatprep.subr.mxu0 0.0
    %7504 = vmatpush1.msra.mxu0 0.0
    %7505 = vmatprep.subr.mxu0 0.0
    %7506 = vmatpush1.msra.mxu0 0.0
    %7507 = vmatprep.subr.mxu0 0.0
    %7508 = vmatpush1.msra.mxu0 0.0
    %7509 = vmatprep.subr.mxu0 0.0
    %7510 = vmatpush1.msra.mxu0 0.0
    %7511 = vmatprep.subr.mxu0 0.0
    %7512 = vmatpush1.msra.mxu0 0.0
    %7513 = vmatprep.subr.mxu0 0.0
    %7514 = vmatpush1.msra.mxu0 0.0
    %7515 = vmatprep.subr.mxu0 0.0
    %7516 = vmatpush1.msra.mxu0 0.0
    %7517 = vmatprep.subr.mxu0 0.0
    %7518 = vmatpush1.msra.mxu0 0.0
    %7519 = vmatprep.subr.mxu0 0.0
    %7520 = vmatpush1.msra.mxu0 0.0
    %7521 = vmatprep.subr.mxu0 0.0
    %7522 = vmatpush1.msra.mxu0 0.0
    %7523 = vmatprep.subr.mxu0 0.0
    %7524 = vmatpush1.msra.mxu0 0.0
    %7525 = vmatprep.subr.mxu0 0.0
    %7526 = vmatpush1.msra.mxu0 0.0
    %7527 = vmatprep.subr.mxu0 0.0
    %7528 = vmatpush1.msra.mxu0 0.0
    %7529 = vmatprep.subr.mxu0 0.0
    %7530 = vmatpush1.msra.mxu0 0.0
    %7531 = vmatprep.subr.mxu0 0.0
    %7532 = vmatpush1.msra.mxu0 0.0
    %7533 = vmatprep.subr.mxu0 0.0
    %7534 = vmatpush1.msra.mxu0 0.0
    %7535 = vmatprep.subr.mxu0 0.0
    %7536 = vmatpush1.msra.mxu0 0.0
    %7537 = vmatprep.subr.mxu0 0.0
    %7538 = vmatpush1.msra.mxu0 0.0
    %7539 = vmatprep.subr.mxu0 0.0
    %7540 = vmatpush1.msra.mxu0 0.0
    %7541 = vmatprep.subr.mxu0 0.0
    %7542 = vmatpush1.msra.mxu0 0.0
    %7543 = vmatprep.subr.mxu0 0.0
    %7544 = vmatpush1.msra.mxu0 0.0
    %7545 = vmatprep.mubr.f32.mxu0 0.0
    %7546 = vmatmul.mubr.f32.gmra.mrb[0].mxu0 %v7479
    %v7547 = vpop.f32.mrb[0].mxu0
    %v7548 = vadd.f32 0.0, %v7547
    %v7549 = vpop.f32.mrb[0].mxu0
    %7550 = vdwg.mxu0
    %v7552 = vrot.slane %v7548, 2
    %v7553 = vrot.slane %v7548, 3
    %v7554 = vrot.slane %v7548, 4
    %v7555 = vrot.slane %v7548, 5
    %v7556 = vrot.slane %v7548, 6
    %v7557 = vrot.slane %v7548, 7
    %v7558 = vrot.slane %v7548, 1
    %v7567 = vadd.f32 %v237, %v7552
    %v7568 = vadd.f32 %v247, %v7553
    %v7569 = vadd.f32 %v257, %v7554
    %v7570 = vadd.f32 %v267, %v7555
    %v7571 = vadd.f32 %v277, %v7556
    %v7572 = vadd.f32 %v287, %v7557
    %v7573 = vadd.f32 %v297, %v7548
    %v7574 = vadd.f32 %v307, %v7558
    %v7575 = vxor.u32 %v7567, 2147483648
    %v7576 = vxor.u32 %v7568, 2147483648
    %v7577 = vxor.u32 %v7569, 2147483648
    %v7578 = vxor.u32 %v7570, 2147483648
    %v7579 = vxor.u32 %v7571, 2147483648
    %v7580 = vxor.u32 %v7572, 2147483648
    %v7581 = vxor.u32 %v7573, 2147483648
    %v7582 = vxor.u32 %v7574, 2147483648
    %v7583 = vmul.f32 %v7575, 1.442695
    %v7584 = vpow.pop %v7583
    %v7585 = vmul.f32 %v7576, 1.442695
    %v7586 = vpow.pop %v7585
    %v7587 = vmul.f32 %v7577, 1.442695
    %v7588 = vpow.pop %v7587
    %v7589 = vmul.f32 %v7578, 1.442695
    %v7590 = vpow.pop %v7589
    %v7591 = vmul.f32 %v7579, 1.442695
    %v7592 = vpow.pop %v7591
    %v7593 = vmul.f32 %v7580, 1.442695
    %v7594 = vpow.pop %v7593
    %v7595 = vmul.f32 %v7581, 1.442695
    %v7596 = vpow.pop %v7595
    %v7597 = vmul.f32 %v7582, 1.442695
    %v7598 = vpow.pop %v7597
    %v7599 = vadd.f32 %v7584, 1.0
    %v7600 = vadd.f32 %v7586, 1.0
    %v7601 = vadd.f32 %v7588, 1.0
    %v7602 = vadd.f32 %v7590, 1.0
    %v7603 = vadd.f32 %v7592, 1.0
    %v7604 = vadd.f32 %v7594, 1.0
    %v7605 = vadd.f32 %v7596, 1.0
    %v7606 = vadd.f32 %v7598, 1.0
    %v7607 = vrcp.pop %v7599
    %v7608 = vmul.f32 1.0, %v7607
    %v7609 = vrcp.pop %v7600
    %v7610 = vmul.f32 1.0, %v7609
    %v7611 = vrcp.pop %v7601
    %v7612 = vmul.f32 1.0, %v7611
    %v7613 = vrcp.pop %v7602
    %v7614 = vmul.f32 1.0, %v7613
    %v7615 = vrcp.pop %v7603
    %v7616 = vmul.f32 1.0, %v7615
    %v7617 = vrcp.pop %v7604
    %v7618 = vmul.f32 1.0, %v7617
    %v7619 = vrcp.pop %v7605
    %v7620 = vmul.f32 1.0, %v7619
    %v7621 = vrcp.pop %v7606
    %v7622 = vmul.f32 1.0, %v7621
    %7623 = vmatprep.subr.mxu0 0.0
    %7624 = vmatpush1.msra.mxu0 %v73
    %7625 = vmatprep.subr.mxu0 0.0
    %7626 = vmatpush1.msra.mxu0 %v74
    %7627 = vmatprep.subr.mxu0 0.0
    %7628 = vmatpush1.msra.mxu0 %v75
    %7629 = vmatprep.subr.mxu0 0.0
    %7630 = vmatpush1.msra.mxu0 %v76
    %7631 = vmatprep.subr.mxu0 0.0
    %7632 = vmatpush1.msra.mxu0 0.0
    %7633 = vmatprep.subr.mxu0 0.0
    %7634 = vmatpush1.msra.mxu0 0.0
    %7635 = vmatprep.subr.mxu0 0.0
    %7636 = vmatpush1.msra.mxu0 0.0
    %7637 = vmatprep.subr.mxu0 0.0
    %7638 = vmatpush1.msra.mxu0 0.0
    %7639 = vmatprep.subr.mxu0 0.0
    %7640 = vmatpush1.msra.mxu0 0.0
    %7641 = vmatprep.subr.mxu0 0.0
    %7642 = vmatpush1.msra.mxu0 0.0
    %7643 = vmatprep.subr.mxu0 0.0
    %7644 = vmatpush1.msra.mxu0 0.0
    %7645 = vmatprep.subr.mxu0 0.0
    %7646 = vmatpush1.msra.mxu0 0.0
    %7647 = vmatprep.subr.mxu0 0.0
    %7648 = vmatpush1.msra.mxu0 0.0
    %7649 = vmatprep.subr.mxu0 0.0
    %7650 = vmatpush1.msra.mxu0 0.0
    %7651 = vmatprep.subr.mxu0 0.0
    %7652 = vmatpush1.msra.mxu0 0.0
    %7653 = vmatprep.subr.mxu0 0.0
    %7654 = vmatpush1.msra.mxu0 0.0
    %7655 = vmatprep.subr.mxu0 0.0
    %7656 = vmatpush1.msra.mxu0 0.0
    %7657 = vmatprep.subr.mxu0 0.0
    %7658 = vmatpush1.msra.mxu0 0.0
    %7659 = vmatprep.subr.mxu0 0.0
    %7660 = vmatpush1.msra.mxu0 0.0
    %7661 = vmatprep.subr.mxu0 0.0
    %7662 = vmatpush1.msra.mxu0 0.0
    %7663 = vmatprep.subr.mxu0 0.0
    %7664 = vmatpush1.msra.mxu0 0.0
    %7665 = vmatprep.subr.mxu0 0.0
    %7666 = vmatpush1.msra.mxu0 0.0
    %7667 = vmatprep.subr.mxu0 0.0
    %7668 = vmatpush1.msra.mxu0 0.0
    %7669 = vmatprep.subr.mxu0 0.0
    %7670 = vmatpush1.msra.mxu0 0.0
    %7671 = vmatprep.subr.mxu0 0.0
    %7672 = vmatpush1.msra.mxu0 0.0
    %7673 = vmatprep.subr.mxu0 0.0
    %7674 = vmatpush1.msra.mxu0 0.0
    %7675 = vmatprep.subr.mxu0 0.0
    %7676 = vmatpush1.msra.mxu0 0.0
    %7677 = vmatprep.subr.mxu0 0.0
    %7678 = vmatpush1.msra.mxu0 0.0
    %7679 = vmatprep.subr.mxu0 0.0
    %7680 = vmatpush1.msra.mxu0 0.0
    %7681 = vmatprep.subr.mxu0 0.0
    %7682 = vmatpush1.msra.mxu0 0.0
    %7683 = vmatprep.subr.mxu0 0.0
    %7684 = vmatpush1.msra.mxu0 0.0
    %7685 = vmatprep.subr.mxu0 0.0
    %7686 = vmatpush1.msra.mxu0 0.0
    %7687 = vmatprep.mubr.f32.mxu0 0.0
    %7688 = vmatmul.mubr.f32.gmra.mrb[0].mxu0 %v7479
    %v7689 = vpop.f32.mrb[0].mxu0
    %v7690 = vadd.f32 0.0, %v7689
    %v7691 = vpop.f32.mrb[0].mxu0
    %7692 = vdwg.mxu0
    %v7694 = vrot.slane %v7690, 2
    %v7695 = vrot.slane %v7690, 3
    %v7696 = vrot.slane %v7690, 4
    %v7697 = vrot.slane %v7690, 5
    %v7698 = vrot.slane %v7690, 6
    %v7699 = vrot.slane %v7690, 7
    %v7700 = vrot.slane %v7690, 1
    %v7709 = vadd.f32 %v395, %v7694
    %v7710 = vadd.f32 %v405, %v7695
    %v7711 = vadd.f32 %v415, %v7696
    %v7712 = vadd.f32 %v425, %v7697
    %v7713 = vadd.f32 %v435, %v7698
    %v7714 = vadd.f32 %v445, %v7699
    %v7715 = vadd.f32 %v455, %v7690
    %v7716 = vadd.f32 %v465, %v7700
    %v7717 = vxor.u32 %v7709, 2147483648
    %v7718 = vxor.u32 %v7710, 2147483648
    %v7719 = vxor.u32 %v7711, 2147483648
    %v7720 = vxor.u32 %v7712, 2147483648
    %v7721 = vxor.u32 %v7713, 2147483648
    %v7722 = vxor.u32 %v7714, 2147483648
    %v7723 = vxor.u32 %v7715, 2147483648
    %v7724 = vxor.u32 %v7716, 2147483648
    %v7725 = vmul.f32 %v7717, 1.442695
    %v7726 = vpow.pop %v7725
    %v7727 = vmul.f32 %v7718, 1.442695
    %v7728 = vpow.pop %v7727
    %v7729 = vmul.f32 %v7719, 1.442695
    %v7730 = vpow.pop %v7729
    %v7731 = vmul.f32 %v7720, 1.442695
    %v7732 = vpow.pop %v7731
    %v7733 = vmul.f32 %v7721, 1.442695
    %v7734 = vpow.pop %v7733
    %v7735 = vmul.f32 %v7722, 1.442695
    %v7736 = vpow.pop %v7735
    %v7737 = vmul.f32 %v7723, 1.442695
    %v7738 = vpow.pop %v7737
    %v7739 = vmul.f32 %v7724, 1.442695
    %v7740 = vpow.pop %v7739
    %v7741 = vadd.f32 %v7726, 1.0
    %v7742 = vadd.f32 %v7728, 1.0
    %v7743 = vadd.f32 %v7730, 1.0
    %v7744 = vadd.f32 %v7732, 1.0
    %v7745 = vadd.f32 %v7734, 1.0
    %v7746 = vadd.f32 %v7736, 1.0
    %v7747 = vadd.f32 %v7738, 1.0
    %v7748 = vadd.f32 %v7740, 1.0
    %v7749 = vrcp.pop %v7741
    %v7750 = vmul.f32 1.0, %v7749
    %v7751 = vrcp.pop %v7742
    %v7752 = vmul.f32 1.0, %v7751
    %v7753 = vrcp.pop %v7743
    %v7754 = vmul.f32 1.0, %v7753
    %v7755 = vrcp.pop %v7744
    %v7756 = vmul.f32 1.0, %v7755
    %v7757 = vrcp.pop %v7745
    %v7758 = vmul.f32 1.0, %v7757
    %v7759 = vrcp.pop %v7746
    %v7760 = vmul.f32 1.0, %v7759
    %v7761 = vrcp.pop %v7747
    %v7762 = vmul.f32 1.0, %v7761
    %v7763 = vrcp.pop %v7748
    %v7764 = vmul.f32 1.0, %v7763
    %7765 = vmatprep.subr.mxu0 0.0
    %7766 = vmatpush1.msra.mxu0 %v78
    %7767 = vmatprep.subr.mxu0 0.0
    %7768 = vmatpush1.msra.mxu0 %v79
    %7769 = vmatprep.subr.mxu0 0.0
    %7770 = vmatpush1.msra.mxu0 %v80
    %7771 = vmatprep.subr.mxu0 0.0
    %7772 = vmatpush1.msra.mxu0 %v81
    %7773 = vmatprep.subr.mxu0 0.0
    %7774 = vmatpush1.msra.mxu0 0.0
    %7775 = vmatprep.subr.mxu0 0.0
    %7776 = vmatpush1.msra.mxu0 0.0
    %7777 = vmatprep.subr.mxu0 0.0
    %7778 = vmatpush1.msra.mxu0 0.0
    %7779 = vmatprep.subr.mxu0 0.0
    %7780 = vmatpush1.msra.mxu0 0.0
    %7781 = vmatprep.subr.mxu0 0.0
    %7782 = vmatpush1.msra.mxu0 0.0
    %7783 = vmatprep.subr.mxu0 0.0
    %7784 = vmatpush1.msra.mxu0 0.0
    %7785 = vmatprep.subr.mxu0 0.0
    %7786 = vmatpush1.msra.mxu0 0.0
    %7787 = vmatprep.subr.mxu0 0.0
    %7788 = vmatpush1.msra.mxu0 0.0
    %7789 = vmatprep.subr.mxu0 0.0
    %7790 = vmatpush1.msra.mxu0 0.0
    %7791 = vmatprep.subr.mxu0 0.0
    %7792 = vmatpush1.msra.mxu0 0.0
    %7793 = vmatprep.subr.mxu0 0.0
    %7794 = vmatpush1.msra.mxu0 0.0
    %7795 = vmatprep.subr.mxu0 0.0
    %7796 = vmatpush1.msra.mxu0 0.0
    %7797 = vmatprep.subr.mxu0 0.0
    %7798 = vmatpush1.msra.mxu0 0.0
    %7799 = vmatprep.subr.mxu0 0.0
    %7800 = vmatpush1.msra.mxu0 0.0
    %7801 = vmatprep.subr.mxu0 0.0
    %7802 = vmatpush1.msra.mxu0 0.0
    %7803 = vmatprep.subr.mxu0 0.0
    %7804 = vmatpush1.msra.mxu0 0.0
    %7805 = vmatprep.subr.mxu0 0.0
    %7806 = vmatpush1.msra.mxu0 0.0
    %7807 = vmatprep.subr.mxu0 0.0
    %7808 = vmatpush1.msra.mxu0 0.0
    %7809 = vmatprep.subr.mxu0 0.0
    %7810 = vmatpush1.msra.mxu0 0.0
    %7811 = vmatprep.subr.mxu0 0.0
    %7812 = vmatpush1.msra.mxu0 0.0
    %7813 = vmatprep.subr.mxu0 0.0
    %7814 = vmatpush1.msra.mxu0 0.0
    %7815 = vmatprep.subr.mxu0 0.0
    %7816 = vmatpush1.msra.mxu0 0.0
    %7817 = vmatprep.subr.mxu0 0.0
    %7818 = vmatpush1.msra.mxu0 0.0
    %7819 = vmatprep.subr.mxu0 0.0
    %7820 = vmatpush1.msra.mxu0 0.0
    %7821 = vmatprep.subr.mxu0 0.0
    %7822 = vmatpush1.msra.mxu0 0.0
    %7823 = vmatprep.subr.mxu0 0.0
    %7824 = vmatpush1.msra.mxu0 0.0
    %7825 = vmatprep.subr.mxu0 0.0
    %7826 = vmatpush1.msra.mxu0 0.0
    %7827 = vmatprep.subr.mxu0 0.0
    %7828 = vmatpush1.msra.mxu0 0.0
    %7829 = vmatprep.mubr.f32.mxu0 0.0
    %7830 = vmatmul.mubr.f32.gmra.mrb[0].mxu0 %v7479
    %v7831 = vpop.f32.mrb[0].mxu0
    %v7832 = vadd.f32 %v87, %v7831
    %v7833 = vpop.f32.mrb[0].mxu0
    %7834 = vdwg.mxu0
    %v7836 = vrot.slane %v7832, 2
    %v7837 = vrot.slane %v7832, 3
    %v7838 = vrot.slane %v7832, 4
    %v7839 = vrot.slane %v7832, 5
    %v7840 = vrot.slane %v7832, 6
    %v7841 = vrot.slane %v7832, 7
    %v7842 = vrot.slane %v7832, 1
    %v7851 = vmul.f32 %v7608, %v7836
    %v7852 = vmul.f32 %v7610, %v7837
    %v7853 = vmul.f32 %v7612, %v7838
    %v7854 = vmul.f32 %v7614, %v7839
    %v7855 = vmul.f32 %v7616, %v7840
    %v7856 = vmul.f32 %v7618, %v7841
    %v7857 = vmul.f32 %v7620, %v7832
    %v7858 = vmul.f32 %v7622, %v7842
    %v7859 = vadd.f32 %v553, %v7851
    %v7860 = vadd.f32 %v563, %v7852
    %v7861 = vadd.f32 %v573, %v7853
    %v7862 = vadd.f32 %v583, %v7854
    %v7863 = vadd.f32 %v593, %v7855
    %v7864 = vadd.f32 %v603, %v7856
    %v7865 = vadd.f32 %v613, %v7857
    %v7866 = vadd.f32 %v623, %v7858
    %v7867 = vtanh.pop %v7859
    %v7868 = vtanh.pop %v7860
    %v7869 = vtanh.pop %v7861
    %v7870 = vtanh.pop %v7862
    %v7871 = vtanh.pop %v7863
    %v7872 = vtanh.pop %v7864
    %v7873 = vtanh.pop %v7865
    %v7874 = vtanh.pop %v7866
    %v7883 = vrot.slane %v7867, 1
    %v7884 = vrot.slane %v7868, 1
    %v7885 = vrot.slane %v7869, 1
    %v7886 = vrot.slane %v7870, 1
    %v7887 = vrot.slane %v7871, 1
    %v7888 = vrot.slane %v7872, 1
    %v7889 = vrot.slane %v7873, 1
    %v7890 = vrot.slane %v7874, 1
    %v7899 = vsub.f32 %v7449, %v7883
    %v7900 = vsub.f32 %v7450, %v7884
    %v7901 = vsub.f32 %v7451, %v7885
    %v7902 = vsub.f32 %v7452, %v7886
    %v7903 = vsub.f32 %v7453, %v7887
    %v7904 = vsub.f32 %v7454, %v7888
    %v7905 = vsub.f32 %v7455, %v7889
    %v7906 = vsub.f32 %v7456, %v7890
    %v7915 = vrot.slane %v7899, 7
    %v7916 = vrot.slane %v7900, 7
    %v7917 = vrot.slane %v7901, 7
    %v7918 = vrot.slane %v7902, 7
    %v7919 = vrot.slane %v7903, 7
    %v7920 = vrot.slane %v7904, 7
    %v7921 = vrot.slane %v7905, 7
    %v7922 = vrot.slane %v7906, 7
    %v7931 = vmul.f32 %v7750, %v7915
    %v7932 = vmul.f32 %v7752, %v7916
    %v7933 = vmul.f32 %v7754, %v7917
    %v7934 = vmul.f32 %v7756, %v7918
    %v7935 = vmul.f32 %v7758, %v7919
    %v7936 = vmul.f32 %v7760, %v7920
    %v7937 = vmul.f32 %v7762, %v7921
    %v7938 = vmul.f32 %v7764, %v7922
    %v7939 = vadd.f32 %v7867, %v7931
    %v7940 = vadd.f32 %v7868, %v7932
    %v7941 = vadd.f32 %v7869, %v7933
    %v7942 = vadd.f32 %v7870, %v7934
    %v7943 = vadd.f32 %v7871, %v7935
    %v7944 = vadd.f32 %v7872, %v7936
    %v7945 = vadd.f32 %v7873, %v7937
    %v7946 = vadd.f32 %v7874, %v7938
    %v7955 = vrot.slane %v7939, 6
    %v7956 = vrot.slane %v7940, 5
    %v7957 = vsel %vm1033, %v7956, %v7955
    %v7958 = vrot.slane %v7941, 4
    %v7959 = vsel %vm1036, %v7958, %v7957
    %v7960 = vrot.slane %v7942, 3
    %v7961 = vsel %vm1039, %v7960, %v7959
    %v7962 = vrot.slane %v7943, 2
    %v7963 = vsel %vm1042, %v7962, %v7961
    %v7964 = vrot.slane %v7944, 1
    %v7965 = vsel %vm1045, %v7964, %v7963
    %v7966 = vsel %vm1048, %v7945, %v7965
    %v7967 = vrot.slane %v7946, 7
    %v7968 = vsel %vm1051, %v7967, %v7966
    %v7969 = vsel %vm116, %v7968, 0
    %7971 = vmatprep.subr.mxu0 0.0
    %7972 = vmatpush1.msra.mxu0 %v68
    %7973 = vmatprep.subr.mxu0 0.0
    %7974 = vmatpush1.msra.mxu0 %v69
    %7975 = vmatprep.subr.mxu0 0.0
    %7976 = vmatpush1.msra.mxu0 %v70
    %7977 = vmatprep.subr.mxu0 0.0
    %7978 = vmatpush1.msra.mxu0 %v71
    %7979 = vmatprep.subr.mxu0 0.0
    %7980 = vmatpush1.msra.mxu0 0.0
    %7981 = vmatprep.subr.mxu0 0.0
    %7982 = vmatpush1.msra.mxu0 0.0
    %7983 = vmatprep.subr.mxu0 0.0
    %7984 = vmatpush1.msra.mxu0 0.0
    %7985 = vmatprep.subr.mxu0 0.0
    %7986 = vmatpush1.msra.mxu0 0.0
    %7987 = vmatprep.subr.mxu0 0.0
    %7988 = vmatpush1.msra.mxu0 0.0
    %7989 = vmatprep.subr.mxu0 0.0
    %7990 = vmatpush1.msra.mxu0 0.0
    %7991 = vmatprep.subr.mxu0 0.0
    %7992 = vmatpush1.msra.mxu0 0.0
    %7993 = vmatprep.subr.mxu0 0.0
    %7994 = vmatpush1.msra.mxu0 0.0
    %7995 = vmatprep.subr.mxu0 0.0
    %7996 = vmatpush1.msra.mxu0 0.0
    %7997 = vmatprep.subr.mxu0 0.0
    %7998 = vmatpush1.msra.mxu0 0.0
    %7999 = vmatprep.subr.mxu0 0.0
    %8000 = vmatpush1.msra.mxu0 0.0
    %8001 = vmatprep.subr.mxu0 0.0
    %8002 = vmatpush1.msra.mxu0 0.0
    %8003 = vmatprep.subr.mxu0 0.0
    %8004 = vmatpush1.msra.mxu0 0.0
    %8005 = vmatprep.subr.mxu0 0.0
    %8006 = vmatpush1.msra.mxu0 0.0
    %8007 = vmatprep.subr.mxu0 0.0
    %8008 = vmatpush1.msra.mxu0 0.0
    %8009 = vmatprep.subr.mxu0 0.0
    %8010 = vmatpush1.msra.mxu0 0.0
    %8011 = vmatprep.subr.mxu0 0.0
    %8012 = vmatpush1.msra.mxu0 0.0
    %8013 = vmatprep.subr.mxu0 0.0
    %8014 = vmatpush1.msra.mxu0 0.0
    %8015 = vmatprep.subr.mxu0 0.0
    %8016 = vmatpush1.msra.mxu0 0.0
    %8017 = vmatprep.subr.mxu0 0.0
    %8018 = vmatpush1.msra.mxu0 0.0
    %8019 = vmatprep.subr.mxu0 0.0
    %8020 = vmatpush1.msra.mxu0 0.0
    %8021 = vmatprep.subr.mxu0 0.0
    %8022 = vmatpush1.msra.mxu0 0.0
    %8023 = vmatprep.subr.mxu0 0.0
    %8024 = vmatpush1.msra.mxu0 0.0
    %8025 = vmatprep.subr.mxu0 0.0
    %8026 = vmatpush1.msra.mxu0 0.0
    %8027 = vmatprep.subr.mxu0 0.0
    %8028 = vmatpush1.msra.mxu0 0.0
    %8029 = vmatprep.subr.mxu0 0.0
    %8030 = vmatpush1.msra.mxu0 0.0
    %8031 = vmatprep.subr.mxu0 0.0
    %8032 = vmatpush1.msra.mxu0 0.0
    %8033 = vmatprep.subr.mxu0 0.0
    %8034 = vmatpush1.msra.mxu0 0.0
    %8035 = vmatprep.mubr.f32.mxu0 0.0
    %8036 = vmatmul.mubr.f32.gmra.mrb[0].mxu0 %v7969
    %v8037 = vpop.f32.mrb[0].mxu0
    %v8038 = vadd.f32 0.0, %v8037
    %v8039 = vpop.f32.mrb[0].mxu0
    %8040 = vdwg.mxu0
    %v8042 = vrot.slane %v8038, 1
    %v8043 = vrot.slane %v8038, 2
    %v8044 = vrot.slane %v8038, 3
    %v8045 = vrot.slane %v8038, 4
    %v8046 = vrot.slane %v8038, 5
    %v8047 = vrot.slane %v8038, 6
    %v8048 = vrot.slane %v8038, 7
    %v8057 = vadd.f32 %v237, %v8042
    %v8058 = vadd.f32 %v247, %v8043
    %v8059 = vadd.f32 %v257, %v8044
    %v8060 = vadd.f32 %v267, %v8045
    %v8061 = vadd.f32 %v277, %v8046
    %v8062 = vadd.f32 %v287, %v8047
    %v8063 = vadd.f32 %v297, %v8048
    %v8064 = vadd.f32 %v307, %v8038
    %v8065 = vxor.u32 %v8057, 2147483648
    %v8066 = vxor.u32 %v8058, 2147483648
    %v8067 = vxor.u32 %v8059, 2147483648
    %v8068 = vxor.u32 %v8060, 2147483648
    %v8069 = vxor.u32 %v8061, 2147483648
    %v8070 = vxor.u32 %v8062, 2147483648
    %v8071 = vxor.u32 %v8063, 2147483648
    %v8072 = vxor.u32 %v8064, 2147483648
    %v8073 = vmul.f32 %v8065, 1.442695
    %v8074 = vpow.pop %v8073
    %v8075 = vmul.f32 %v8066, 1.442695
    %v8076 = vpow.pop %v8075
    %v8077 = vmul.f32 %v8067, 1.442695
    %v8078 = vpow.pop %v8077
    %v8079 = vmul.f32 %v8068, 1.442695
    %v8080 = vpow.pop %v8079
    %v8081 = vmul.f32 %v8069, 1.442695
    %v8082 = vpow.pop %v8081
    %v8083 = vmul.f32 %v8070, 1.442695
    %v8084 = vpow.pop %v8083
    %v8085 = vmul.f32 %v8071, 1.442695
    %v8086 = vpow.pop %v8085
    %v8087 = vmul.f32 %v8072, 1.442695
    %v8088 = vpow.pop %v8087
    %v8089 = vadd.f32 %v8074, 1.0
    %v8090 = vadd.f32 %v8076, 1.0
    %v8091 = vadd.f32 %v8078, 1.0
    %v8092 = vadd.f32 %v8080, 1.0
    %v8093 = vadd.f32 %v8082, 1.0
    %v8094 = vadd.f32 %v8084, 1.0
    %v8095 = vadd.f32 %v8086, 1.0
    %v8096 = vadd.f32 %v8088, 1.0
    %v8097 = vrcp.pop %v8089
    %v8098 = vmul.f32 1.0, %v8097
    %v8099 = vrcp.pop %v8090
    %v8100 = vmul.f32 1.0, %v8099
    %v8101 = vrcp.pop %v8091
    %v8102 = vmul.f32 1.0, %v8101
    %v8103 = vrcp.pop %v8092
    %v8104 = vmul.f32 1.0, %v8103
    %v8105 = vrcp.pop %v8093
    %v8106 = vmul.f32 1.0, %v8105
    %v8107 = vrcp.pop %v8094
    %v8108 = vmul.f32 1.0, %v8107
    %v8109 = vrcp.pop %v8095
    %v8110 = vmul.f32 1.0, %v8109
    %v8111 = vrcp.pop %v8096
    %v8112 = vmul.f32 1.0, %v8111
    %8113 = vmatprep.subr.mxu0 0.0
    %8114 = vmatpush1.msra.mxu0 %v73
    %8115 = vmatprep.subr.mxu0 0.0
    %8116 = vmatpush1.msra.mxu0 %v74
    %8117 = vmatprep.subr.mxu0 0.0
    %8118 = vmatpush1.msra.mxu0 %v75
    %8119 = vmatprep.subr.mxu0 0.0
    %8120 = vmatpush1.msra.mxu0 %v76
    %8121 = vmatprep.subr.mxu0 0.0
    %8122 = vmatpush1.msra.mxu0 0.0
    %8123 = vmatprep.subr.mxu0 0.0
    %8124 = vmatpush1.msra.mxu0 0.0
    %8125 = vmatprep.subr.mxu0 0.0
    %8126 = vmatpush1.msra.mxu0 0.0
    %8127 = vmatprep.subr.mxu0 0.0
    %8128 = vmatpush1.msra.mxu0 0.0
    %8129 = vmatprep.subr.mxu0 0.0
    %8130 = vmatpush1.msra.mxu0 0.0
    %8131 = vmatprep.subr.mxu0 0.0
    %8132 = vmatpush1.msra.mxu0 0.0
    %8133 = vmatprep.subr.mxu0 0.0
    %8134 = vmatpush1.msra.mxu0 0.0
    %8135 = vmatprep.subr.mxu0 0.0
    %8136 = vmatpush1.msra.mxu0 0.0
    %8137 = vmatprep.subr.mxu0 0.0
    %8138 = vmatpush1.msra.mxu0 0.0
    %8139 = vmatprep.subr.mxu0 0.0
    %8140 = vmatpush1.msra.mxu0 0.0
    %8141 = vmatprep.subr.mxu0 0.0
    %8142 = vmatpush1.msra.mxu0 0.0
    %8143 = vmatprep.subr.mxu0 0.0
    %8144 = vmatpush1.msra.mxu0 0.0
    %8145 = vmatprep.subr.mxu0 0.0
    %8146 = vmatpush1.msra.mxu0 0.0
    %8147 = vmatprep.subr.mxu0 0.0
    %8148 = vmatpush1.msra.mxu0 0.0
    %8149 = vmatprep.subr.mxu0 0.0
    %8150 = vmatpush1.msra.mxu0 0.0
    %8151 = vmatprep.subr.mxu0 0.0
    %8152 = vmatpush1.msra.mxu0 0.0
    %8153 = vmatprep.subr.mxu0 0.0
    %8154 = vmatpush1.msra.mxu0 0.0
    %8155 = vmatprep.subr.mxu0 0.0
    %8156 = vmatpush1.msra.mxu0 0.0
    %8157 = vmatprep.subr.mxu0 0.0
    %8158 = vmatpush1.msra.mxu0 0.0
    %8159 = vmatprep.subr.mxu0 0.0
    %8160 = vmatpush1.msra.mxu0 0.0
    %8161 = vmatprep.subr.mxu0 0.0
    %8162 = vmatpush1.msra.mxu0 0.0
    %8163 = vmatprep.subr.mxu0 0.0
    %8164 = vmatpush1.msra.mxu0 0.0
    %8165 = vmatprep.subr.mxu0 0.0
    %8166 = vmatpush1.msra.mxu0 0.0
    %8167 = vmatprep.subr.mxu0 0.0
    %8168 = vmatpush1.msra.mxu0 0.0
    %8169 = vmatprep.subr.mxu0 0.0
    %8170 = vmatpush1.msra.mxu0 0.0
    %8171 = vmatprep.subr.mxu0 0.0
    %8172 = vmatpush1.msra.mxu0 0.0
    %8173 = vmatprep.subr.mxu0 0.0
    %8174 = vmatpush1.msra.mxu0 0.0
    %8175 = vmatprep.subr.mxu0 0.0
    %8176 = vmatpush1.msra.mxu0 0.0
    %8177 = vmatprep.mubr.f32.mxu0 0.0
    %8178 = vmatmul.mubr.f32.gmra.mrb[0].mxu0 %v7969
    %v8179 = vpop.f32.mrb[0].mxu0
    %v8180 = vadd.f32 0.0, %v8179
    %v8181 = vpop.f32.mrb[0].mxu0
    %8182 = vdwg.mxu0
    %v8184 = vrot.slane %v8180, 1
    %v8185 = vrot.slane %v8180, 2
    %v8186 = vrot.slane %v8180, 3
    %v8187 = vrot.slane %v8180, 4
    %v8188 = vrot.slane %v8180, 5
    %v8189 = vrot.slane %v8180, 6
    %v8190 = vrot.slane %v8180, 7
    %v8199 = vadd.f32 %v395, %v8184
    %v8200 = vadd.f32 %v405, %v8185
    %v8201 = vadd.f32 %v415, %v8186
    %v8202 = vadd.f32 %v425, %v8187
    %v8203 = vadd.f32 %v435, %v8188
    %v8204 = vadd.f32 %v445, %v8189
    %v8205 = vadd.f32 %v455, %v8190
    %v8206 = vadd.f32 %v465, %v8180
    %v8207 = vxor.u32 %v8199, 2147483648
    %v8208 = vxor.u32 %v8200, 2147483648
    %v8209 = vxor.u32 %v8201, 2147483648
    %v8210 = vxor.u32 %v8202, 2147483648
    %v8211 = vxor.u32 %v8203, 2147483648
    %v8212 = vxor.u32 %v8204, 2147483648
    %v8213 = vxor.u32 %v8205, 2147483648
    %v8214 = vxor.u32 %v8206, 2147483648
    %v8215 = vmul.f32 %v8207, 1.442695
    %v8216 = vpow.pop %v8215
    %v8217 = vmul.f32 %v8208, 1.442695
    %v8218 = vpow.pop %v8217
    %v8219 = vmul.f32 %v8209, 1.442695
    %v8220 = vpow.pop %v8219
    %v8221 = vmul.f32 %v8210, 1.442695
    %v8222 = vpow.pop %v8221
    %v8223 = vmul.f32 %v8211, 1.442695
    %v8224 = vpow.pop %v8223
    %v8225 = vmul.f32 %v8212, 1.442695
    %v8226 = vpow.pop %v8225
    %v8227 = vmul.f32 %v8213, 1.442695
    %v8228 = vpow.pop %v8227
    %v8229 = vmul.f32 %v8214, 1.442695
    %v8230 = vpow.pop %v8229
    %v8231 = vadd.f32 %v8216, 1.0
    %v8232 = vadd.f32 %v8218, 1.0
    %v8233 = vadd.f32 %v8220, 1.0
    %v8234 = vadd.f32 %v8222, 1.0
    %v8235 = vadd.f32 %v8224, 1.0
    %v8236 = vadd.f32 %v8226, 1.0
    %v8237 = vadd.f32 %v8228, 1.0
    %v8238 = vadd.f32 %v8230, 1.0
    %v8239 = vrcp.pop %v8231
    %v8240 = vmul.f32 1.0, %v8239
    %v8241 = vrcp.pop %v8232
    %v8242 = vmul.f32 1.0, %v8241
    %v8243 = vrcp.pop %v8233
    %v8244 = vmul.f32 1.0, %v8243
    %v8245 = vrcp.pop %v8234
    %v8246 = vmul.f32 1.0, %v8245
    %v8247 = vrcp.pop %v8235
    %v8248 = vmul.f32 1.0, %v8247
    %v8249 = vrcp.pop %v8236
    %v8250 = vmul.f32 1.0, %v8249
    %v8251 = vrcp.pop %v8237
    %v8252 = vmul.f32 1.0, %v8251
    %v8253 = vrcp.pop %v8238
    %v8254 = vmul.f32 1.0, %v8253
    %8255 = vmatprep.subr.mxu0 0.0
    %8256 = vmatpush1.msra.mxu0 %v78
    %8257 = vmatprep.subr.mxu0 0.0
    %8258 = vmatpush1.msra.mxu0 %v79
    %8259 = vmatprep.subr.mxu0 0.0
    %8260 = vmatpush1.msra.mxu0 %v80
    %8261 = vmatprep.subr.mxu0 0.0
    %8262 = vmatpush1.msra.mxu0 %v81
    %8263 = vmatprep.subr.mxu0 0.0
    %8264 = vmatpush1.msra.mxu0 0.0
    %8265 = vmatprep.subr.mxu0 0.0
    %8266 = vmatpush1.msra.mxu0 0.0
    %8267 = vmatprep.subr.mxu0 0.0
    %8268 = vmatpush1.msra.mxu0 0.0
    %8269 = vmatprep.subr.mxu0 0.0
    %8270 = vmatpush1.msra.mxu0 0.0
    %8271 = vmatprep.subr.mxu0 0.0
    %8272 = vmatpush1.msra.mxu0 0.0
    %8273 = vmatprep.subr.mxu0 0.0
    %8274 = vmatpush1.msra.mxu0 0.0
    %8275 = vmatprep.subr.mxu0 0.0
    %8276 = vmatpush1.msra.mxu0 0.0
    %8277 = vmatprep.subr.mxu0 0.0
    %8278 = vmatpush1.msra.mxu0 0.0
    %8279 = vmatprep.subr.mxu0 0.0
    %8280 = vmatpush1.msra.mxu0 0.0
    %8281 = vmatprep.subr.mxu0 0.0
    %8282 = vmatpush1.msra.mxu0 0.0
    %8283 = vmatprep.subr.mxu0 0.0
    %8284 = vmatpush1.msra.mxu0 0.0
    %8285 = vmatprep.subr.mxu0 0.0
    %8286 = vmatpush1.msra.mxu0 0.0
    %8287 = vmatprep.subr.mxu0 0.0
    %8288 = vmatpush1.msra.mxu0 0.0
    %8289 = vmatprep.subr.mxu0 0.0
    %8290 = vmatpush1.msra.mxu0 0.0
    %8291 = vmatprep.subr.mxu0 0.0
    %8292 = vmatpush1.msra.mxu0 0.0
    %8293 = vmatprep.subr.mxu0 0.0
    %8294 = vmatpush1.msra.mxu0 0.0
    %8295 = vmatprep.subr.mxu0 0.0
    %8296 = vmatpush1.msra.mxu0 0.0
    %8297 = vmatprep.subr.mxu0 0.0
    %8298 = vmatpush1.msra.mxu0 0.0
    %8299 = vmatprep.subr.mxu0 0.0
    %8300 = vmatpush1.msra.mxu0 0.0
    %8301 = vmatprep.subr.mxu0 0.0
    %8302 = vmatpush1.msra.mxu0 0.0
    %8303 = vmatprep.subr.mxu0 0.0
    %8304 = vmatpush1.msra.mxu0 0.0
    %8305 = vmatprep.subr.mxu0 0.0
    %8306 = vmatpush1.msra.mxu0 0.0
    %8307 = vmatprep.subr.mxu0 0.0
    %8308 = vmatpush1.msra.mxu0 0.0
    %8309 = vmatprep.subr.mxu0 0.0
    %8310 = vmatpush1.msra.mxu0 0.0
    %8311 = vmatprep.subr.mxu0 0.0
    %8312 = vmatpush1.msra.mxu0 0.0
    %8313 = vmatprep.subr.mxu0 0.0
    %8314 = vmatpush1.msra.mxu0 0.0
    %8315 = vmatprep.subr.mxu0 0.0
    %8316 = vmatpush1.msra.mxu0 0.0
    %8317 = vmatprep.subr.mxu0 0.0
    %8318 = vmatpush1.msra.mxu0 0.0
    %8319 = vmatprep.mubr.f32.mxu0 0.0
    %8320 = vmatmul.mubr.f32.gmra.mrb[0].mxu0 %v7969
    %v8321 = vpop.f32.mrb[0].mxu0
    %v8322 = vadd.f32 %v87, %v8321
    %v8323 = vpop.f32.mrb[0].mxu0
    %8324 = vdwg.mxu0
    %v8326 = vrot.slane %v8322, 1
    %v8327 = vrot.slane %v8322, 2
    %v8328 = vrot.slane %v8322, 3
    %v8329 = vrot.slane %v8322, 4
    %v8330 = vrot.slane %v8322, 5
    %v8331 = vrot.slane %v8322, 6
    %v8332 = vrot.slane %v8322, 7
    %v8341 = vmul.f32 %v8098, %v8326
    %v8342 = vmul.f32 %v8100, %v8327
    %v8343 = vmul.f32 %v8102, %v8328
    %v8344 = vmul.f32 %v8104, %v8329
    %v8345 = vmul.f32 %v8106, %v8330
    %v8346 = vmul.f32 %v8108, %v8331
    %v8347 = vmul.f32 %v8110, %v8332
    %v8348 = vmul.f32 %v8112, %v8322
    %v8349 = vadd.f32 %v553, %v8341
    %v8350 = vadd.f32 %v563, %v8342
    %v8351 = vadd.f32 %v573, %v8343
    %v8352 = vadd.f32 %v583, %v8344
    %v8353 = vadd.f32 %v593, %v8345
    %v8354 = vadd.f32 %v603, %v8346
    %v8355 = vadd.f32 %v613, %v8347
    %v8356 = vadd.f32 %v623, %v8348
    %v8357 = vtanh.pop %v8349
    %v8358 = vtanh.pop %v8350
    %v8359 = vtanh.pop %v8351
    %v8360 = vtanh.pop %v8352
    %v8361 = vtanh.pop %v8353
    %v8362 = vtanh.pop %v8354
    %v8363 = vtanh.pop %v8355
    %v8364 = vtanh.pop %v8356
    %v8373 = vrot.slane %v8357, 1
    %v8374 = vrot.slane %v8358, 1
    %v8375 = vrot.slane %v8359, 1
    %v8376 = vrot.slane %v8360, 1
    %v8377 = vrot.slane %v8361, 1
    %v8378 = vrot.slane %v8362, 1
    %v8379 = vrot.slane %v8363, 1
    %v8380 = vrot.slane %v8364, 1
    %v8389 = vsub.f32 %v7939, %v8373
    %v8390 = vsub.f32 %v7940, %v8374
    %v8391 = vsub.f32 %v7941, %v8375
    %v8392 = vsub.f32 %v7942, %v8376
    %v8393 = vsub.f32 %v7943, %v8377
    %v8394 = vsub.f32 %v7944, %v8378
    %v8395 = vsub.f32 %v7945, %v8379
    %v8396 = vsub.f32 %v7946, %v8380
    %v8405 = vrot.slane %v8389, 7
    %v8406 = vrot.slane %v8390, 7
    %v8407 = vrot.slane %v8391, 7
    %v8408 = vrot.slane %v8392, 7
    %v8409 = vrot.slane %v8393, 7
    %v8410 = vrot.slane %v8394, 7
    %v8411 = vrot.slane %v8395, 7
    %v8412 = vrot.slane %v8396, 7
    %v8421 = vmul.f32 %v8240, %v8405
    %v8422 = vmul.f32 %v8242, %v8406
    %v8423 = vmul.f32 %v8244, %v8407
    %v8424 = vmul.f32 %v8246, %v8408
    %v8425 = vmul.f32 %v8248, %v8409
    %v8426 = vmul.f32 %v8250, %v8410
    %v8427 = vmul.f32 %v8252, %v8411
    %v8428 = vmul.f32 %v8254, %v8412
    %v8429 = vadd.f32 %v8357, %v8421
    %v8430 = vadd.f32 %v8358, %v8422
    %v8431 = vadd.f32 %v8359, %v8423
    %v8432 = vadd.f32 %v8360, %v8424
    %v8433 = vadd.f32 %v8361, %v8425
    %v8434 = vadd.f32 %v8362, %v8426
    %v8435 = vadd.f32 %v8363, %v8427
    %v8436 = vadd.f32 %v8364, %v8428
    %v8445 = vrot.slane %v8430, 7
    %v8446 = vrot.slane %v8431, 6
    %v8447 = vsel %vm1033, %v8446, %v8445
    %v8448 = vrot.slane %v8432, 5
    %v8449 = vsel %vm1036, %v8448, %v8447
    %v8450 = vrot.slane %v8433, 4
    %v8451 = vsel %vm1039, %v8450, %v8449
    %v8452 = vrot.slane %v8434, 3
    %v8453 = vsel %vm1042, %v8452, %v8451
    %v8454 = vrot.slane %v8435, 2
    %v8455 = vsel %vm1045, %v8454, %v8453
    %v8456 = vrot.slane %v8436, 1
    %v8457 = vsel %vm1048, %v8456, %v8455
    %vm8460 = vcmask 261127
    %8461 = vst.msk [vmem:[#allocation2 - $0x7] sm:$0x80] %vm8460, %v8429
    %vm8462 = vcmask 260096
    %8463 = vst.msk [vmem:[#allocation2 + $0x1] sm:$0x7f] %vm8462, %v8457
    %v8464 = vrot.slane %v1570, 1
    %v8465 = vrot.slane %v1571, 1
    %v8466 = vrot.slane %v1572, 1
    %v8467 = vrot.slane %v1573, 1
    %v8468 = vrot.slane %v1574, 1
    %v8469 = vrot.slane %v1575, 1
    %v8470 = vrot.slane %v1576, 1
    %v8471 = vrot.slane %v2060, 2
    %v8472 = vrot.slane %v2061, 2
    %v8473 = vrot.slane %v2062, 2
    %v8474 = vrot.slane %v2063, 2
    %v8475 = vrot.slane %v2064, 2
    %v8476 = vrot.slane %v2065, 2
    %v8477 = vrot.slane %v2066, 2
    %v8478 = vrot.slane %v2550, 3
    %v8479 = vrot.slane %v2551, 3
    %v8480 = vrot.slane %v2552, 3
    %v8481 = vrot.slane %v2553, 3
    %v8482 = vrot.slane %v2554, 3
    %v8483 = vrot.slane %v2555, 3
    %v8484 = vrot.slane %v2556, 3
    %v8485 = vrot.slane %v3040, 4
    %v8486 = vrot.slane %v3041, 4
    %v8487 = vrot.slane %v3042, 4
    %v8488 = vrot.slane %v3043, 4
    %v8489 = vrot.slane %v3044, 4
    %v8490 = vrot.slane %v3045, 4
    %v8491 = vrot.slane %v3046, 4
    %v8492 = vrot.slane %v3530, 5
    %v8493 = vrot.slane %v3531, 5
    %v8494 = vrot.slane %v3532, 5
    %v8495 = vrot.slane %v3533, 5
    %v8496 = vrot.slane %v3534, 5
    %v8497 = vrot.slane %v3535, 5
    %v8498 = vrot.slane %v3536, 5
    %v8499 = vrot.slane %v4020, 6
    %v8500 = vrot.slane %v4021, 6
    %v8501 = vrot.slane %v4022, 6
    %v8502 = vrot.slane %v4023, 6
    %v8503 = vrot.slane %v4024, 6
    %v8504 = vrot.slane %v4025, 6
    %v8505 = vrot.slane %v4026, 6
    %v8506 = vrot.slane %v4510, 7
    %v8507 = vrot.slane %v4511, 7
    %v8508 = vrot.slane %v4512, 7
    %v8509 = vrot.slane %v4513, 7
    %v8510 = vrot.slane %v4514, 7
    %v8511 = vrot.slane %v4515, 7
    %v8512 = vrot.slane %v4516, 7
    %v8513 = vrot.slane %v5490, 1
    %v8514 = vrot.slane %v5491, 1
    %v8515 = vrot.slane %v5492, 1
    %v8516 = vrot.slane %v5493, 1
    %v8517 = vrot.slane %v5494, 1
    %v8518 = vrot.slane %v5495, 1
    %v8519 = vrot.slane %v5496, 1
    %v8520 = vrot.slane %v5980, 2
    %v8521 = vrot.slane %v5981, 2
    %v8522 = vrot.slane %v5982, 2
    %v8523 = vrot.slane %v5983, 2
    %v8524 = vrot.slane %v5984, 2
    %v8525 = vrot.slane %v5985, 2
    %v8526 = vrot.slane %v5986, 2
    %v8527 = vrot.slane %v6470, 3
    %v8528 = vrot.slane %v6471, 3
    %v8529 = vrot.slane %v6472, 3
    %v8530 = vrot.slane %v6473, 3
    %v8531 = vrot.slane %v6474, 3
    %v8532 = vrot.slane %v6475, 3
    %v8533 = vrot.slane %v6476, 3
    %v8534 = vrot.slane %v6960, 4
    %v8535 = vrot.slane %v6961, 4
    %v8536 = vrot.slane %v6962, 4
    %v8537 = vrot.slane %v6963, 4
    %v8538 = vrot.slane %v6964, 4
    %v8539 = vrot.slane %v6965, 4
    %v8540 = vrot.slane %v6966, 4
    %v8541 = vrot.slane %v7450, 5
    %v8542 = vrot.slane %v7451, 5
    %v8543 = vrot.slane %v7452, 5
    %v8544 = vrot.slane %v7453, 5
    %v8545 = vrot.slane %v7454, 5
    %v8546 = vrot.slane %v7455, 5
    %v8547 = vrot.slane %v7456, 5
    %v8548 = vrot.slane %v7940, 6
    %v8549 = vrot.slane %v7941, 6
    %v8550 = vrot.slane %v7942, 6
    %v8551 = vrot.slane %v7943, 6
    %v8552 = vrot.slane %v7944, 6
    %v8553 = vrot.slane %v7945, 6
    %v8554 = vrot.slane %v7946, 6
    %v8555 = vrot.slane %v8429, 7
    %v8556 = vrot.slane %v8431, 7
    %v8557 = vrot.slane %v8432, 7
    %v8558 = vrot.slane %v8433, 7
    %v8559 = vrot.slane %v8434, 7
    %v8560 = vrot.slane %v8435, 7
    %v8561 = vrot.slane %v8436, 7
    %v8562 = vrot.slane %v8464, 7
    %v8563 = vsel %vm1033, %v8562, %v1585
    %v8564 = vrot.slane %v8465, 6
    %v8565 = vsel %vm1036, %v8564, %v8563
    %v8566 = vrot.slane %v8466, 5
    %v8567 = vsel %vm1039, %v8566, %v8565
    %v8568 = vrot.slane %v8467, 4
    %v8569 = vsel %vm1042, %v8568, %v8567
    %v8570 = vrot.slane %v8468, 3
    %v8571 = vsel %vm1045, %v8570, %v8569
    %v8572 = vrot.slane %v8469, 2
    %v8573 = vsel %vm1048, %v8572, %v8571
    %v8574 = vrot.slane %v8470, 1
    %v8575 = vsel %vm1051, %v8574, %v8573
    %v8576 = vrot.slane %v8471, 7
    %v8577 = vsel %vm1033, %v8576, %v2075
    %v8578 = vrot.slane %v8472, 6
    %v8579 = vsel %vm1036, %v8578, %v8577
    %v8580 = vrot.slane %v8473, 5
    %v8581 = vsel %vm1039, %v8580, %v8579
    %v8582 = vrot.slane %v8474, 4
    %v8583 = vsel %vm1042, %v8582, %v8581
    %v8584 = vrot.slane %v8475, 3
    %v8585 = vsel %vm1045, %v8584, %v8583
    %v8586 = vrot.slane %v8476, 2
    %v8587 = vsel %vm1048, %v8586, %v8585
    %v8588 = vrot.slane %v8477, 1
    %v8589 = vsel %vm1051, %v8588, %v8587
    %v8590 = vrot.slane %v8478, 7
    %v8591 = vsel %vm1033, %v8590, %v2565
    %v8592 = vrot.slane %v8479, 6
    %v8593 = vsel %vm1036, %v8592, %v8591
    %v8594 = vrot.slane %v8480, 5
    %v8595 = vsel %vm1039, %v8594, %v8593
    %v8596 = vrot.slane %v8481, 4
    %v8597 = vsel %vm1042, %v8596, %v8595
    %v8598 = vrot.slane %v8482, 3
    %v8599 = vsel %vm1045, %v8598, %v8597
    %v8600 = vrot.slane %v8483, 2
    %v8601 = vsel %vm1048, %v8600, %v8599
    %v8602 = vrot.slane %v8484, 1
    %v8603 = vsel %vm1051, %v8602, %v8601
    %v8604 = vrot.slane %v8485, 7
    %v8605 = vsel %vm1033, %v8604, %v3055
    %v8606 = vrot.slane %v8486, 6
    %v8607 = vsel %vm1036, %v8606, %v8605
    %v8608 = vrot.slane %v8487, 5
    %v8609 = vsel %vm1039, %v8608, %v8607
    %v8610 = vrot.slane %v8488, 4
    %v8611 = vsel %vm1042, %v8610, %v8609
    %v8612 = vrot.slane %v8489, 3
    %v8613 = vsel %vm1045, %v8612, %v8611
    %v8614 = vrot.slane %v8490, 2
    %v8615 = vsel %vm1048, %v8614, %v8613
    %v8616 = vrot.slane %v8491, 1
    %v8617 = vsel %vm1051, %v8616, %v8615
    %v8618 = vrot.slane %v8492, 7
    %v8619 = vsel %vm1033, %v8618, %v3545
    %v8620 = vrot.slane %v8493, 6
    %v8621 = vsel %vm1036, %v8620, %v8619
    %v8622 = vrot.slane %v8494, 5
    %v8623 = vsel %vm1039, %v8622, %v8621
    %v8624 = vrot.slane %v8495, 4
    %v8625 = vsel %vm1042, %v8624, %v8623
    %v8626 = vrot.slane %v8496, 3
    %v8627 = vsel %vm1045, %v8626, %v8625
    %v8628 = vrot.slane %v8497, 2
    %v8629 = vsel %vm1048, %v8628, %v8627
    %v8630 = vrot.slane %v8498, 1
    %v8631 = vsel %vm1051, %v8630, %v8629
    %v8632 = vrot.slane %v8499, 7
    %v8633 = vsel %vm1033, %v8632, %v4035
    %v8634 = vrot.slane %v8500, 6
    %v8635 = vsel %vm1036, %v8634, %v8633
    %v8636 = vrot.slane %v8501, 5
    %v8637 = vsel %vm1039, %v8636, %v8635
    %v8638 = vrot.slane %v8502, 4
    %v8639 = vsel %vm1042, %v8638, %v8637
    %v8640 = vrot.slane %v8503, 3
    %v8641 = vsel %vm1045, %v8640, %v8639
    %v8642 = vrot.slane %v8504, 2
    %v8643 = vsel %vm1048, %v8642, %v8641
    %v8644 = vrot.slane %v8505, 1
    %v8645 = vsel %vm1051, %v8644, %v8643
    %v8646 = vrot.slane %v8506, 7
    %v8647 = vsel %vm1033, %v8646, %v4525
    %v8648 = vrot.slane %v8507, 6
    %v8649 = vsel %vm1036, %v8648, %v8647
    %v8650 = vrot.slane %v8508, 5
    %v8651 = vsel %vm1039, %v8650, %v8649
    %v8652 = vrot.slane %v8509, 4
    %v8653 = vsel %vm1042, %v8652, %v8651
    %v8654 = vrot.slane %v8510, 3
    %v8655 = vsel %vm1045, %v8654, %v8653
    %v8656 = vrot.slane %v8511, 2
    %v8657 = vsel %vm1048, %v8656, %v8655
    %v8658 = vrot.slane %v8512, 1
    %v8659 = vsel %vm1051, %v8658, %v8657
    %v8660 = vrot.slane %v8513, 7
    %v8661 = vsel %vm1033, %v8660, %v5505
    %v8662 = vrot.slane %v8514, 6
    %v8663 = vsel %vm1036, %v8662, %v8661
    %v8664 = vrot.slane %v8515, 5
    %v8665 = vsel %vm1039, %v8664, %v8663
    %v8666 = vrot.slane %v8516, 4
    %v8667 = vsel %vm1042, %v8666, %v8665
    %v8668 = vrot.slane %v8517, 3
    %v8669 = vsel %vm1045, %v8668, %v8667
    %v8670 = vrot.slane %v8518, 2
    %v8671 = vsel %vm1048, %v8670, %v8669
    %v8672 = vrot.slane %v8519, 1
    %v8673 = vsel %vm1051, %v8672, %v8671
    %v8674 = vrot.slane %v8520, 7
    %v8675 = vsel %vm1033, %v8674, %v5995
    %v8676 = vrot.slane %v8521, 6
    %v8677 = vsel %vm1036, %v8676, %v8675
    %v8678 = vrot.slane %v8522, 5
    %v8679 = vsel %vm1039, %v8678, %v8677
    %v8680 = vrot.slane %v8523, 4
    %v8681 = vsel %vm1042, %v8680, %v8679
    %v8682 = vrot.slane %v8524, 3
    %v8683 = vsel %vm1045, %v8682, %v8681
    %v8684 = vrot.slane %v8525, 2
    %v8685 = vsel %vm1048, %v8684, %v8683
    %v8686 = vrot.slane %v8526, 1
    %v8687 = vsel %vm1051, %v8686, %v8685
    %v8688 = vrot.slane %v8527, 7
    %v8689 = vsel %vm1033, %v8688, %v6485
    %v8690 = vrot.slane %v8528, 6
    %v8691 = vsel %vm1036, %v8690, %v8689
    %v8692 = vrot.slane %v8529, 5
    %v8693 = vsel %vm1039, %v8692, %v8691
    %v8694 = vrot.slane %v8530, 4
    %v8695 = vsel %vm1042, %v8694, %v8693
    %v8696 = vrot.slane %v8531, 3
    %v8697 = vsel %vm1045, %v8696, %v8695
    %v8698 = vrot.slane %v8532, 2
    %v8699 = vsel %vm1048, %v8698, %v8697
    %v8700 = vrot.slane %v8533, 1
    %v8701 = vsel %vm1051, %v8700, %v8699
    %v8702 = vrot.slane %v8534, 7
    %v8703 = vsel %vm1033, %v8702, %v6975
    %v8704 = vrot.slane %v8535, 6
    %v8705 = vsel %vm1036, %v8704, %v8703
    %v8706 = vrot.slane %v8536, 5
    %v8707 = vsel %vm1039, %v8706, %v8705
    %v8708 = vrot.slane %v8537, 4
    %v8709 = vsel %vm1042, %v8708, %v8707
    %v8710 = vrot.slane %v8538, 3
    %v8711 = vsel %vm1045, %v8710, %v8709
    %v8712 = vrot.slane %v8539, 2
    %v8713 = vsel %vm1048, %v8712, %v8711
    %v8714 = vrot.slane %v8540, 1
    %v8715 = vsel %vm1051, %v8714, %v8713
    %v8716 = vrot.slane %v8541, 7
    %v8717 = vsel %vm1033, %v8716, %v7465
    %v8718 = vrot.slane %v8542, 6
    %v8719 = vsel %vm1036, %v8718, %v8717
    %v8720 = vrot.slane %v8543, 5
    %v8721 = vsel %vm1039, %v8720, %v8719
    %v8722 = vrot.slane %v8544, 4
    %v8723 = vsel %vm1042, %v8722, %v8721
    %v8724 = vrot.slane %v8545, 3
    %v8725 = vsel %vm1045, %v8724, %v8723
    %v8726 = vrot.slane %v8546, 2
    %v8727 = vsel %vm1048, %v8726, %v8725
    %v8728 = vrot.slane %v8547, 1
    %v8729 = vsel %vm1051, %v8728, %v8727
    %v8730 = vrot.slane %v8548, 7
    %v8731 = vsel %vm1033, %v8730, %v7955
    %v8732 = vrot.slane %v8549, 6
    %v8733 = vsel %vm1036, %v8732, %v8731
    %v8734 = vrot.slane %v8550, 5
    %v8735 = vsel %vm1039, %v8734, %v8733
    %v8736 = vrot.slane %v8551, 4
    %v8737 = vsel %vm1042, %v8736, %v8735
    %v8738 = vrot.slane %v8552, 3
    %v8739 = vsel %vm1045, %v8738, %v8737
    %v8740 = vrot.slane %v8553, 2
    %v8741 = vsel %vm1048, %v8740, %v8739
    %v8742 = vrot.slane %v8554, 1
    %v8743 = vsel %vm1051, %v8742, %v8741
    %v8744 = vrot.slane %v8445, 7
    %v8745 = vsel %vm1033, %v8744, %v8555
    %v8746 = vrot.slane %v8556, 6
    %v8747 = vsel %vm1036, %v8746, %v8745
    %v8748 = vrot.slane %v8557, 5
    %v8749 = vsel %vm1039, %v8748, %v8747
    %v8750 = vrot.slane %v8558, 4
    %v8751 = vsel %vm1042, %v8750, %v8749
    %v8752 = vrot.slane %v8559, 3
    %v8753 = vsel %vm1045, %v8752, %v8751
    %v8754 = vrot.slane %v8560, 2
    %v8755 = vsel %vm1048, %v8754, %v8753
    %v8756 = vrot.slane %v8561, 1
    %v8757 = vsel %vm1051, %v8756, %v8755
    %8774 = vst.msk [vmem:[#allocation9] sm:$0xff] %vm116, %v1108
    %8775 = vst.msk [vmem:[#allocation9 + $0x8] sm:$0xff] %vm116, %v8575
    %8776 = vst.msk [vmem:[#allocation9 + $0x10] sm:$0xff] %vm116, %v8589
    %8777 = vst.msk [vmem:[#allocation9 + $0x18] sm:$0xff] %vm116, %v8603
    %8778 = vst.msk [vmem:[#allocation9 + $0x20] sm:$0xff] %vm116, %v8617
    %8779 = vst.msk [vmem:[#allocation9 + $0x28] sm:$0xff] %vm116, %v8631
    %8780 = vst.msk [vmem:[#allocation9 + $0x30] sm:$0xff] %vm116, %v8645
    %8781 = vst.msk [vmem:[#allocation9 + $0x38] sm:$0xff] %vm116, %v8659
    %8782 = vst.msk [vmem:[#allocation9 + $0x40] sm:$0xff] %vm116, %v5028
    %8783 = vst.msk [vmem:[#allocation9 + $0x48] sm:$0xff] %vm116, %v8673
    %8784 = vst.msk [vmem:[#allocation9 + $0x50] sm:$0xff] %vm116, %v8687
    %8785 = vst.msk [vmem:[#allocation9 + $0x58] sm:$0xff] %vm116, %v8701
    %8786 = vst.msk [vmem:[#allocation9 + $0x60] sm:$0xff] %vm116, %v8715
    %8787 = vst.msk [vmem:[#allocation9 + $0x68] sm:$0xff] %vm116, %v8729
    %8788 = vst.msk [vmem:[#allocation9 + $0x70] sm:$0xff] %vm116, %v8743
    %8789 = vst.msk [vmem:[#allocation9 + $0x78] sm:$0xff] %vm116, %v8757
    // Predicated region
    $region38: #{tpu_custom_call.1} parent=1 // pred_check
      _
    $region39: #{tpu_custom_call.1} parent=1 // pred_check_branch
      %8791 = sbr.rel (0) target = $region41
    $region40: #{tpu_custom_call.1} parent=1 // pred_region
      %s8793 = ssub.s32 2048, 2048
      %8794 = vsyncadd [#allocation5], %s8793
      %s8795 = sshll.u32 [#allocation9], 4
      %s8796 = int_to_ptr.vmem [resolvable:$true] %s8795
      %8801 = dma.vmem_to_hbm [thread:$0]  %s8796, 2048, %s5, [#allocation5], 128, 128, 8
    $region41: #{tpu_custom_call.1} parent=1 // pred_fallthru
      _
    // Predicated region
    $region42: #{tpu_custom_call.1} parent=1 // pred_check
      _
    $region43: #{tpu_custom_call.1} parent=1 // pred_check_branch
      %8803 = sbr.rel (0) target = $region45
    $region44: #{tpu_custom_call.1} parent=1 // pred_region
      %8804 = dma.done [#allocation5], 2048
    $region45: #{tpu_custom_call.1} parent=1 // pred_fallthru
      _
    %8805 = vsyncpa [#allocation4], 1
    %8806 = vsyncpa [#allocation7], 1
    %8807 = vsyncpa [#allocation5], 1

</llo_original>
